<compile_context>
chip_gen: v5e
topology: v5e:2x2
jax: 0.10.0
libtpu: 0.0.40
codegen_flags: <defaults>
</compile_context>

<pallas_src>
import functools
import math

import jax
import jax.numpy as jnp
from jax.experimental import pallas as pl
from jax.experimental.pallas import tpu as pltpu


_VMEM_LIMIT = 32 * 1024 * 1024   # safe on v5e (16 MiB default), v6e, v7x (64 MiB phys)
_LN_EPS = 1e-5


# ----------------------------------------------------------------------------
# small static helpers
# ----------------------------------------------------------------------------
def _round_up(x, m):
    return (x + m - 1) // m * m


def _pick_tn(n, pref=512):
    if n % 128 != 0 or n <= pref:
        return n
    tn = pref
    while n % tn != 0:
        tn -= 128
    return tn


def _const_spec(arr):
    """BlockSpec covering the whole array with a constant block index (resident)."""
    nd = arr.ndim
    return pl.BlockSpec(arr.shape, lambda b: (0,) * nd)


def _layernorm(x, g, b, eps=_LN_EPS):
    mu = jnp.mean(x, axis=-1, keepdims=True)
    var = jnp.mean((x - mu) ** 2, axis=-1, keepdims=True)
    return (x - mu) * jax.lax.rsqrt(var + eps) * g + b


# ----------------------------------------------------------------------------
# generic fused linear (LN? -> matmul -> bias -> act?) : bf16 in / bf16 out
# ----------------------------------------------------------------------------
def _linear_kernel(*refs, activation, fuse_ln):
    i = 0
    x_ref = refs[i]; i += 1
    w_ref = refs[i]; i += 1
    b_ref = refs[i]; i += 1
    if fuse_ln:
        g_ref, be_ref = refs[i], refs[i + 1]; i += 2
    o_ref = refs[i]

    x = x_ref[...].astype(jnp.float32)
    if fuse_ln:
        x = _layernorm(x, g_ref[...], be_ref[...])
    y = jnp.dot(x.astype(jnp.bfloat16), w_ref[...],
                preferred_element_type=jnp.float32) + b_ref[...]
    if activation == "quick_gelu":
        # QuickGELU y*sigmoid(1.702 y) == 0.5*y*(1+tanh(0.851 y)) -> 1 EUP op
        y = 0.5 * y * (1.0 + jnp.tanh(0.851 * y))
    o_ref[...] = y.astype(o_ref.dtype)


def pallas_linear(x, w, b, *, ln=None, activation=None, out_dtype=jnp.bfloat16):
    """y = act(LN?(x) @ w + b).  Leading dims flatten into M; bf16 in/out.

    Grid is (N tiles [outer], M tiles [inner]) so the weight block stays
    resident across consecutive steps; small M uses a single tile.
    """
    orig_shape = x.shape
    K = orig_shape[-1]
    M = int(math.prod(orig_shape[:-1]))
    N = w.shape[-1]

    x2 = x.reshape(M, K)
    m_pad = _round_up(M, 8)
    tm = m_pad if m_pad <= 256 else 256
    m_pad = _round_up(m_pad, tm)
    if m_pad != M:
        x2 = jnp.pad(x2, ((0, m_pad - M), (0, 0)))
    tn = _pick_tn(N)

    operands = [x2, w.astype(jnp.bfloat16),
                b.reshape(1, N).astype(jnp.float32)]
    in_specs = [
        pl.BlockSpec((tm, K), lambda j, i: (i, 0)),
        pl.BlockSpec((K, tn), lambda j, i: (0, j)),   # constant across inner M loop
        pl.BlockSpec((1, tn), lambda j, i: (0, j)),
    ]
    fuse_ln = ln is not None
    if fuse_ln:
        g, be = ln
        operands += [g.reshape(1, K).astype(jnp.float32),
                     be.reshape(1, K).astype(jnp.float32)]
        in_specs += [pl.BlockSpec((1, K), lambda j, i: (0, 0)),
                     pl.BlockSpec((1, K), lambda j, i: (0, 0))]

    out = pl.pallas_call(
        functools.partial(_linear_kernel, activation=activation, fuse_ln=fuse_ln),
        out_shape=jax.ShapeDtypeStruct((m_pad, N), out_dtype),
        grid=(N // tn, m_pad // tm),
        in_specs=in_specs,
        out_specs=pl.BlockSpec((tm, tn), lambda j, i: (i, j)),
        compiler_params=pltpu.CompilerParams(
            dimension_semantics=("parallel", "arbitrary"),
            vmem_limit_bytes=_VMEM_LIMIT),
    )(*operands)

    if m_pad != M:
        out = out[:M]
    return out.reshape(*orig_shape[:-1], N)


# ----------------------------------------------------------------------------
# fused attention block: LN1 + per-head QKV + softmax + out-proj + residual
# ----------------------------------------------------------------------------
def _attn_block_kernel(x_ref, wq_ref, wk_ref, wv_ref, bq_ref, bk_ref, bv_ref,
                       wo_ref, bo_ref, g_ref, be_ref, o_ref, *,
                       num_heads, causal, valid_len):
    x = x_ref[...].astype(jnp.float32)                        # [T, D]
    T, D = x.shape
    dh = D // num_heads
    scale = 1.0 / math.sqrt(dh)

    xn = _layernorm(x, g_ref[...], be_ref[...]).astype(jnp.bfloat16)

    if causal or valid_len < T:
        kidx = jax.lax.broadcasted_iota(jnp.int32, (T, T), 1)
        allowed = kidx < valid_len
        if causal:
            qidx = jax.lax.broadcasted_iota(jnp.int32, (T, T), 0)
            allowed = jnp.logical_and(allowed, kidx <= qidx)
        mask_bias = jnp.where(allowed, 0.0, -1e30)
    else:
        mask_bias = None

    acc = jnp.zeros((T, D), jnp.float32)
    for h in range(num_heads):            # static unroll; single live accumulator
        q = jnp.dot(xn, wq_ref[h], preferred_element_type=jnp.float32) + bq_ref[h]
        k = jnp.dot(xn, wk_ref[h], preferred_element_type=jnp.float32) + bk_ref[h]
        v = jnp.dot(xn, wv_ref[h], preferred_element_type=jnp.float32) + bv_ref[h]
        s = jax.lax.dot_general(
            q.astype(jnp.bfloat16), k.astype(jnp.bfloat16),
            (((1,), (1,)), ((), ())),
            preferred_element_type=jnp.float32) * scale
        if mask_bias is not None:
            s = s + mask_bias
        s = s - jnp.max(s, axis=-1, keepdims=True)
        p = jnp.exp(s)
        p = p * pl.reciprocal(jnp.sum(p, axis=-1, keepdims=True), approx=True)
        ctx = jnp.dot(p.astype(jnp.bfloat16), v.astype(jnp.bfloat16),
                      preferred_element_type=jnp.float32)
        acc = acc + jnp.dot(ctx.astype(jnp.bfloat16), wo_ref[h],
                            preferred_element_type=jnp.float32)

    o_ref[...] = (acc + bo_ref[...] + x).astype(o_ref.dtype)


def pallas_attn_block(x, blk, num_heads, *, causal, valid_len):
    """x: [B, T, D] bf16 -> x + MHA(LN1(x)) : [B, T, D] bf16."""
    B, T, D = x.shape
    kern = functools.partial(_attn_block_kernel, num_heads=num_heads,
                             causal=causal, valid_len=valid_len)
    return pl.pallas_call(
        kern,
        out_shape=jax.ShapeDtypeStruct((B, T, D), jnp.bfloat16),
        grid=(B,),
        in_specs=[pl.BlockSpec((None, T, D), lambda b: (b, 0, 0)),
                  _const_spec(blk["wq"]), _const_spec(blk["wk"]),
                  _const_spec(blk["wv"]), _const_spec(blk["bq"]),
                  _const_spec(blk["bk"]), _const_spec(blk["bv"]),
                  _const_spec(blk["wo"]), _const_spec(blk["bo"]),
                  _const_spec(blk["ln1_g"]), _const_spec(blk["ln1_b"])],
        out_specs=pl.BlockSpec((None, T, D), lambda b: (b, 0, 0)),
        compiler_params=pltpu.CompilerParams(
            dimension_semantics=("parallel",),
            vmem_limit_bytes=_VMEM_LIMIT),
    )(x, blk["wq"], blk["wk"], blk["wv"], blk["bq"], blk["bk"], blk["bv"],
      blk["wo"], blk["bo"], blk["ln1_g"], blk["ln1_b"])


# ----------------------------------------------------------------------------
# fused MLP block: LN2 + fc1 + QuickGELU + fc2 + residual
# ----------------------------------------------------------------------------
def _mlp_block_kernel(x_ref, w1_ref, b1_ref, w2_ref, b2_ref, g_ref, be_ref, o_ref):
    x = x_ref[...].astype(jnp.float32)                         # [tm, D]
    xn = _layernorm(x, g_ref[...], be_ref[...])
    h = jnp.dot(xn.astype(jnp.bfloat16), w1_ref[...],
                preferred_element_type=jnp.float32) + b1_ref[...]
    h = 0.5 * h * (1.0 + jnp.tanh(0.851 * h))                  # QuickGELU (tanh form)
    y = jnp.dot(h.astype(jnp.bfloat16), w2_ref[...],
                preferred_element_type=jnp.float32) + b2_ref[...]
    o_ref[...] = (y + x).astype(o_ref.dtype)


def pallas_mlp_block(x, blk):
    """x: [..., D] bf16 -> x + MLP(LN2(x)) : same shape, bf16."""
    orig = x.shape
    D = orig[-1]
    D_hid = blk["w_fc1"].shape[-1]
    M = int(math.prod(orig[:-1]))
    x2 = x.reshape(M, D)
    m_pad = _round_up(M, 8)
    tm = m_pad if m_pad <= 256 else 256
    m_pad = _round_up(m_pad, tm)
    if m_pad != M:
        x2 = jnp.pad(x2, ((0, m_pad - M), (0, 0)))

    out = pl.pallas_call(
        _mlp_block_kernel,
        out_shape=jax.ShapeDtypeStruct((m_pad, D), jnp.bfloat16),
        grid=(m_pad // tm,),
        in_specs=[pl.BlockSpec((tm, D), lambda i: (i, 0)),
                  _const_spec(blk["w_fc1"]), _const_spec(blk["b_fc1"]),
                  _const_spec(blk["w_fc2"]), _const_spec(blk["b_fc2"]),
                  _const_spec(blk["ln2_g"]), _const_spec(blk["ln2_b"])],
        out_specs=pl.BlockSpec((tm, D), lambda i: (i, 0)),
        compiler_params=pltpu.CompilerParams(
            dimension_semantics=("arbitrary",),   # keep MLP weights resident, full tiles
            vmem_limit_bytes=_VMEM_LIMIT),
    )(x2, blk["w_fc1"], blk["b_fc1"], blk["w_fc2"], blk["b_fc2"],
      blk["ln2_g"], blk["ln2_b"])

    if m_pad != M:
        out = out[:M]
    return out.reshape(orig)


# ----------------------------------------------------------------------------
# fused final visual feature: ln_post + vproj + mean over valid tokens
# ----------------------------------------------------------------------------
def _vis_pool_kernel(x_ref, g_ref, be_ref, w_ref, b_ref, o_ref, *, valid_len):
    x = x_ref[...].astype(jnp.float32)                         # [T, Dv]
    T = x.shape[0]
    xn = _layernorm(x, g_ref[...], be_ref[...])
    if valid_len < T:
        ridx = jax.lax.broadcasted_iota(jnp.int32, xn.shape, 0)
        xn = jnp.where(ridx < valid_len, xn, 0.0)
    m = jnp.sum(xn, axis=0, keepdims=True) * (1.0 / valid_len)  # mean over tokens
    f = jnp.dot(m.astype(jnp.bfloat16), w_ref[...],
                preferred_element_type=jnp.float32) + b_ref[...]
    o_ref[...] = f


def pallas_vis_pool(x, vp, *, valid_len):
    """x: [B, T, Dv] bf16 -> mean_T(vproj(ln_post(x))) : [B, Dj] fp32."""
    B, T, Dv = x.shape
    Dj = vp["w_vproj"].shape[-1]
    out = pl.pallas_call(
        functools.partial(_vis_pool_kernel, valid_len=valid_len),
        out_shape=jax.ShapeDtypeStruct((B, 1, Dj), jnp.float32),
        grid=(B,),
        in_specs=[pl.BlockSpec((None, T, Dv), lambda b: (b, 0, 0)),
                  _const_spec(vp["ln_post_g"]), _const_spec(vp["ln_post_b"]),
                  _const_spec(vp["w_vproj"]), _const_spec(vp["b_vproj"])],
        out_specs=pl.BlockSpec((None, 1, Dj), lambda b: (b, 0, 0)),
        compiler_params=pltpu.CompilerParams(
            dimension_semantics=("parallel",),
            vmem_limit_bytes=_VMEM_LIMIT),
    )(x, vp["ln_post_g"], vp["ln_post_b"], vp["w_vproj"], vp["b_vproj"])
    return out.reshape(B, Dj)


# ----------------------------------------------------------------------------
# fused L2-norm + scaled cosine logits
# ----------------------------------------------------------------------------
def _logits_kernel(img_ref, txt_ref, scale_ref, o_ref, *, eps):
    img = img_ref[...].astype(jnp.float32)                     # [1, D]
    txt = txt_ref[...].astype(jnp.float32)                     # [C_pad, D]
    img_n = img * jax.lax.rsqrt(jnp.sum(img * img, axis=-1, keepdims=True) + eps)
    txt_n = txt * jax.lax.rsqrt(jnp.sum(txt * txt, axis=-1, keepdims=True) + eps)
    logits = jax.lax.dot_general(img_n, txt_n, (((1,), (1,)), ((), ())),
                                 preferred_element_type=jnp.float32)
    o_ref[...] = scale_ref[0, 0] * logits


def pallas_logits(img_mean, text_feats, logit_scale, eps=1e-12):
    """img_mean: [B, D] fp32, text_feats: [B, C, D] -> logits [B, C] fp32."""
    B, D = img_mean.shape
    C = text_feats.shape[1]
    c_pad = _round_up(C, 128)
    if c_pad != C:
        text_feats = jnp.pad(text_feats, ((0, 0), (0, c_pad - C), (0, 0)))

    out = pl.pallas_call(
        functools.partial(_logits_kernel, eps=eps),
        out_shape=jax.ShapeDtypeStruct((B, 1, c_pad), jnp.float32),
        grid=(B,),
        in_specs=[
            pl.BlockSpec((None, 1, D), lambda b: (b, 0, 0)),
            pl.BlockSpec((None, c_pad, D), lambda b: (b, 0, 0)),
            pl.BlockSpec((1, 1), lambda b: (0, 0)),
        ],
        out_specs=pl.BlockSpec((None, 1, c_pad), lambda b: (b, 0, 0)),
        compiler_params=pltpu.CompilerParams(
            dimension_semantics=("parallel",),
            vmem_limit_bytes=_VMEM_LIMIT),
    )(img_mean.reshape(B, 1, D), text_feats,
      logit_scale.reshape(1, 1).astype(jnp.float32))
    return out.reshape(B, c_pad)[:, :C]


# ----------------------------------------------------------------------------
# encoders (all heavy math inside Pallas; minimal plain-JAX glue under jit)
# ----------------------------------------------------------------------------
def image_encoder(image, vp, cfg):
    """CLIP-style ViT.  Returns (pooled final features [B,Dj], context tokens)."""
    B, C, H, W = image.shape
    P = cfg["patch"]

    # TODO(synk): the NCHW patchify relayout stays in plain JAX; folding it into
    # the patch-embed matmul's BlockSpec would remove one full-image HBM pass.
    x = image.reshape(B, C, H // P, P, W // P, P)
    x = x.transpose(0, 2, 4, 1, 3, 5).reshape(B, (H // P) * (W // P), C * P * P)
    x = pallas_linear(x.astype(jnp.bfloat16), vp["w_patch"], vp["b_patch"])  # [B,nP,Dv]

    B_, nP, Dv = x.shape
    T_pad = cfg["vis_tokens_pad"]
    valid = nP + 1
    cls = jnp.broadcast_to(vp["cls_token"].astype(jnp.bfloat16), (B, 1, Dv))
    pad = jnp.zeros((B, T_pad - valid, Dv), jnp.bfloat16)
    x = jnp.concatenate([cls, x, pad], axis=1) + vp["pos_embed"].astype(jnp.bfloat16)

    ctxs = []
    for li, blk in enumerate(vp["blocks"]):
        x = pallas_attn_block(x, blk, cfg["vis_heads"], causal=False, valid_len=valid)
        x = pallas_mlp_block(x, blk)
        if li in cfg["prompt_generation_layer_level"]:
            ctxs.append(x[:, 1:1 + cfg["n_ctx_vis"], :])

    # TODO(synk): intermediate return_layer_num vproj features are skipped since
    # forward() only consumes image_features[:, -1]; attention/source not tracked.
    feat = pallas_vis_pool(x, vp, valid_len=valid)            # [B, Dj] fp32
    context_tokens = jnp.stack(ctxs, axis=1)                  # [B, n_pgl, n_ctx, Dv]
    return feat, context_tokens


def text_encoder_batched(prompts, eot_idx, context_tokens, tp, cfg):
    """VP-conditioned text encoder, batched over all B videos at once."""
    B = context_tokens.shape[0]
    n_cls, L, D_txt = prompts.shape

    ctx = context_tokens.reshape(B, -1, context_tokens.shape[-1])   # [B, n*nc, Dv]
    ctx = pallas_linear(ctx, tp["w_v2t"], tp["b_v2t"])              # [B, n*nc, Dt] bf16
    ctx = jnp.mean(ctx.astype(jnp.float32), axis=1)                 # [B, Dt]

    # TODO(synk): TC-CLIP injects visual context as per-layer prompt tokens;
    # approximated here as a single additive conditioning on the prompts.
    x = (prompts[None] + ctx[:, None, None, :]).astype(jnp.bfloat16)  # [B,n_cls,L,Dt]
    x = x.reshape(B * n_cls, L, D_txt)

    for blk in tp["blocks"]:
        x = pallas_attn_block(x, blk, cfg["txt_heads"], causal=True, valid_len=L)
        x = pallas_mlp_block(x, blk)

    # EOT token gather, then ln_final + text projection fused in one kernel.
    x = x[jnp.arange(B * n_cls), jnp.tile(eot_idx, B)]              # [B*n_cls, Dt]
    x = pallas_linear(x, tp["w_tproj"], tp["b_tproj"],
                      ln=(tp["ln_final_g"], tp["ln_final_b"]))      # [B*n_cls, Dj]
    return x.reshape(B, n_cls, -1)


def tcclip_forward(cfg, params, image):
    """Mirrors TCCLIP.forward (return_attention=False, return_source=False)."""
    logit_scale = jnp.exp(params["logit_scale"])
    prompts = params["prompts"]                                     # prompt_learner()

    image_features_mean, context_tokens = image_encoder(
        image.astype(jnp.float32), params["visual"], cfg)

    text_feats = text_encoder_batched(prompts, params["eot_idx"],
                                      context_tokens, params["text"], cfg)

    logits = pallas_logits(image_features_mean, text_feats, logit_scale)
    return {"logits": logits, "attention": None, "source": None}


# ----------------------------------------------------------------------------
# Deterministic parameter construction
# ----------------------------------------------------------------------------
class KeyGen:
    def __init__(self, key):
        self._key = key

    def __call__(self):
        self._key, sub = jax.random.split(self._key)
        return sub


def _w(kg, shape, std=0.02, dtype=jnp.bfloat16):
    return (std * jax.random.normal(kg(), shape, dtype=jnp.float32)).astype(dtype)


def init_block(kg, d, heads, mlp_ratio=4):
    dh = d // heads
    w_qkv = _w(kg, (d, 3 * d), dtype=jnp.float32)
    w_proj = _w(kg, (d, d), dtype=jnp.float32)
    # pre-split per-head weights (head-aligned; no lane slicing in-kernel)
    wq = w_qkv[:, 0 * d:1 * d].reshape(d, heads, dh).transpose(1, 0, 2)
    wk = w_qkv[:, 1 * d:2 * d].reshape(d, heads, dh).transpose(1, 0, 2)
    wv = w_qkv[:, 2 * d:3 * d].reshape(d, heads, dh).transpose(1, 0, 2)
    wo = w_proj.reshape(heads, dh, d)
    return dict(
        ln1_g=jnp.ones((1, d), jnp.float32), ln1_b=jnp.zeros((1, d), jnp.float32),
        wq=wq.astype(jnp.bfloat16), wk=wk.astype(jnp.bfloat16),
        wv=wv.astype(jnp.bfloat16),
        bq=jnp.zeros((heads, 1, dh), jnp.float32),
        bk=jnp.zeros((heads, 1, dh), jnp.float32),
        bv=jnp.zeros((heads, 1, dh), jnp.float32),
        wo=wo.astype(jnp.bfloat16), bo=jnp.zeros((1, d), jnp.float32),
        ln2_g=jnp.ones((1, d), jnp.float32), ln2_b=jnp.zeros((1, d), jnp.float32),
        w_fc1=_w(kg, (d, mlp_ratio * d)),
        b_fc1=jnp.zeros((1, mlp_ratio * d), jnp.float32),
        w_fc2=_w(kg, (mlp_ratio * d, d)),
        b_fc2=jnp.zeros((1, d), jnp.float32),
    )


def init_params(key, *, img_ch=3, img_size=32, patch=8, d_vis=128, vis_heads=4,
                vis_layers=3, n_ctx_vis=8, d_txt=128, txt_heads=4, txt_layers=2,
                n_cls=5, l_txt=8, d_joint=128):
    kg = KeyGen(key)
    n_patch = (img_size // patch) ** 2
    n_tok = n_patch + 1
    n_tok_pad = _round_up(n_tok, 8)

    pos = _w(kg, (1, n_tok, d_vis), dtype=jnp.float32)
    pos = jnp.pad(pos, ((0, 0), (0, n_tok_pad - n_tok), (0, 0)))

    visual = dict(
        w_patch=_w(kg, (img_ch * patch * patch, d_vis)),
        b_patch=jnp.zeros((1, d_vis), jnp.float32),
        cls_token=_w(kg, (1, 1, d_vis), dtype=jnp.float32),
        pos_embed=pos,
        blocks=[init_block(kg, d_vis, vis_heads) for _ in range(vis_layers)],
        ln_post_g=jnp.ones((1, d_vis), jnp.float32),
        ln_post_b=jnp.zeros((1, d_vis), jnp.float32),
        w_vproj=_w(kg, (d_vis, d_joint)),
        b_vproj=jnp.zeros((1, d_joint), jnp.float32),
    )
    text = dict(
        w_v2t=_w(kg, (d_vis, d_txt)),
        b_v2t=jnp.zeros((1, d_txt), jnp.float32),
        blocks=[init_block(kg, d_txt, txt_heads) for _ in range(txt_layers)],
        ln_final_g=jnp.ones((1, d_txt), jnp.float32),
        ln_final_b=jnp.zeros((1, d_txt), jnp.float32),
        w_tproj=_w(kg, (d_txt, d_joint)),
        b_tproj=jnp.zeros((1, d_joint), jnp.float32),
    )
    params = dict(
        visual=visual,
        text=text,
        prompts=_w(kg, (n_cls, l_txt, d_txt), dtype=jnp.float32),   # prompt_learner()
        eot_idx=jnp.full((n_cls,), l_txt - 1, dtype=jnp.int32),     # argmax(tokenized)
        logit_scale=jnp.asarray(math.log(1.0 / 0.07), jnp.float32),
    )
    cfg = dict(
        patch=patch,
        vis_heads=vis_heads,
        txt_heads=txt_heads,
        n_ctx_vis=n_ctx_vis,
        prompt_generation_layer_level=[0, 1],   # + last layer implied (the "11")
        vis_tokens_pad=n_tok_pad,
    )
    return cfg, params


# ----------------------------------------------------------------------------
if __name__ == "__main__":
    root = jax.random.PRNGKey(0)
    pkey, ikey = jax.random.split(root)

    cfg, params = init_params(pkey)
    image = jax.random.normal(ikey, (2, 3, 32, 32), dtype=jnp.float32)  # NCHW

    forward = jax.jit(functools.partial(tcclip_forward, cfg))
    out = forward(params, image)
    jax.block_until_ready(out["logits"])

    assert out["logits"].shape == (2, 5)
    assert bool(jnp.all(jnp.isfinite(out["logits"])))
    print("KERNEL_OK")
</pallas_src>

<mosaic_0001>
module attributes {stable_mosaic.version = 11 : i64} {
  func.func @_linear_kernel(%arg0: i32, %arg1: i32, %arg2: memref<32x192xbf16, #tpu.memory_space<vmem>>, %arg3: memref<192x128xbf16, #tpu.memory_space<vmem>>, %arg4: memref<1x128xf32, #tpu.memory_space<vmem>>, %arg5: memref<32x128xbf16, #tpu.memory_space<vmem>>) attributes {dimension_semantics = [#tpu.dimension_semantics<parallel>, #tpu.dimension_semantics<arbitrary>], iteration_bounds = array<i64: 1, 1>, scalar_prefetch = 0 : i64, scratch_operands = 0 : i64, tpu.core_type = #tpu.core_type<tc>, window_params = [{transform_indices = @transform_0, window_bounds = array<i64: 32, 192>}, {transform_indices = @transform_1, window_bounds = array<i64: 192, 128>}, {transform_indices = @transform_2, window_bounds = array<i64: 1, 128>}, {transform_indices = @transform_3, window_bounds = array<i64: 32, 128>}]} {
    %c0 = arith.constant 0 : index
    %c0_0 = arith.constant 0 : index
    %0 = vector.load %arg2[%c0, %c0_0] : memref<32x192xbf16, #tpu.memory_space<vmem>>, vector<32x192xbf16>
    %1 = arith.extf %0 : vector<32x192xbf16> to vector<32x192xf32>
    %2 = arith.truncf %1 : vector<32x192xf32> to vector<32x192xbf16>
    %c0_1 = arith.constant 0 : index
    %c0_2 = arith.constant 0 : index
    %3 = vector.load %arg3[%c0_1, %c0_2] : memref<192x128xbf16, #tpu.memory_space<vmem>>, vector<192x128xbf16>
    %cst = arith.constant dense<0.000000e+00> : vector<32x128xf32>
    %4 = tpu.matmul %2, %3, %cst {dimension_numbers = #tpu.dot_dimension_numbers<[1], [0], [0], [1], [0, 0, 1, 1], [], []>} : vector<32x192xbf16>, vector<192x128xbf16>, vector<32x128xf32> -> vector<32x128xf32>
    %c0_3 = arith.constant 0 : index
    %c0_4 = arith.constant 0 : index
    %5 = vector.load %arg4[%c0_3, %c0_4] : memref<1x128xf32, #tpu.memory_space<vmem>>, vector<1x128xf32>
    %6 = vector.broadcast %5 : vector<1x128xf32> to vector<32x128xf32>
    %7 = arith.addf %4, %6 : vector<32x128xf32>
    %8 = arith.truncf %7 : vector<32x128xf32> to vector<32x128xbf16>
    %c0_5 = arith.constant 0 : index
    %c0_6 = arith.constant 0 : index
    %9 = vector.load %arg5[%c0_5, %c0_6] : memref<32x128xbf16, #tpu.memory_space<vmem>>, vector<32x128xbf16>
    tpu.vector_store %arg5[%c0_5, %c0_6], %8 {strides = array<i32>} : memref<32x128xbf16, #tpu.memory_space<vmem>>, vector<32x128xbf16>,
    return
  }
  func.func @transform_0(%arg0: i32, %arg1: i32) -> (i32, i32) {
    %c0_i32 = arith.constant 0 : i32
    %c0_i32_0 = arith.constant 0 : i32
    return %arg1, %c0_i32 : i32, i32
  }
  func.func @transform_1(%arg0: i32, %arg1: i32) -> (i32, i32) {
    %c0_i32 = arith.constant 0 : i32
    %c0_i32_0 = arith.constant 0 : i32
    return %c0_i32, %arg0 : i32, i32
  }
  func.func @transform_2(%arg0: i32, %arg1: i32) -> (i32, i32) {
    %c0_i32 = arith.constant 0 : i32
    %c0_i32_0 = arith.constant 0 : i32
    return %c0_i32, %arg0 : i32, i32
  }
  func.func @transform_3(%arg0: i32, %arg1: i32) -> (i32, i32) {
    %c0_i32 = arith.constant 0 : i32
    return %arg1, %arg0 : i32, i32
  }
}

module attributes {stable_mosaic.version = 11 : i64} {
  func.func @_mlp_block_kernel(%arg0: i32, %arg1: memref<48x128xbf16, #tpu.memory_space<vmem>>, %arg2: memref<128x512xbf16, #tpu.memory_space<vmem>>, %arg3: memref<1x512xf32, #tpu.memory_space<vmem>>, %arg4: memref<512x128xbf16, #tpu.memory_space<vmem>>, %arg5: memref<1x128xf32, #tpu.memory_space<vmem>>, %arg6: memref<1x128xf32, #tpu.memory_space<vmem>>, %arg7: memref<1x128xf32, #tpu.memory_space<vmem>>, %arg8: memref<48x128xbf16, #tpu.memory_space<vmem>>) attributes {dimension_semantics = [#tpu.dimension_semantics<arbitrary>], iteration_bounds = array<i64: 1>, scalar_prefetch = 0 : i64, scratch_operands = 0 : i64, tpu.core_type = #tpu.core_type<tc>, window_params = [{transform_indices = @transform_0, window_bounds = array<i64: 48, 128>}, {pipeline_mode = #tpu.pipeline_mode<synchronous>, transform_indices = @transform_1, window_bounds = array<i64: 128, 512>}, {pipeline_mode = #tpu.pipeline_mode<synchronous>, transform_indices = @transform_2, window_bounds = array<i64: 1, 512>}, {pipeline_mode = #tpu.pipeline_mode<synchronous>, transform_indices = @transform_3, window_bounds = array<i64: 512, 128>}, {pipeline_mode = #tpu.pipeline_mode<synchronous>, transform_indices = @transform_4, window_bounds = array<i64: 1, 128>}, {pipeline_mode = #tpu.pipeline_mode<synchronous>, transform_indices = @transform_5, window_bounds = array<i64: 1, 128>}, {pipeline_mode = #tpu.pipeline_mode<synchronous>, transform_indices = @transform_6, window_bounds = array<i64: 1, 128>}, {transform_indices = @transform_7, window_bounds = array<i64: 48, 128>}]} {
    %c0 = arith.constant 0 : index
    %c0_0 = arith.constant 0 : index
    %0 = vector.load %arg1[%c0, %c0_0] : memref<48x128xbf16, #tpu.memory_space<vmem>>, vector<48x128xbf16>
    %1 = arith.extf %0 : vector<48x128xbf16> to vector<48x128xf32>
    %c0_1 = arith.constant 0 : index
    %c0_2 = arith.constant 0 : index
    %2 = vector.load %arg6[%c0_1, %c0_2] : memref<1x128xf32, #tpu.memory_space<vmem>>, vector<1x128xf32>
    %c0_3 = arith.constant 0 : index
    %c0_4 = arith.constant 0 : index
    %3 = vector.load %arg7[%c0_3, %c0_4] : memref<1x128xf32, #tpu.memory_space<vmem>>, vector<1x128xf32>
    %cst = arith.constant dense<0.000000e+00> : vector<48xf32>
    %4 = vector.multi_reduction <add>, %1, %cst [1] : vector<48x128xf32> to vector<48xf32>
    %5 = vector.shape_cast %4 : vector<48xf32> to vector<48x1xf32>
    %cst_5 = arith.constant 1.280000e+02 : f32
    %6 = vector.broadcast %cst_5 : f32 to vector<48x1xf32>
    %7 = arith.divf %5, %6 : vector<48x1xf32>
    %8 = vector.broadcast %7 : vector<48x1xf32> to vector<48x128xf32>
    %9 = arith.subf %1, %8 : vector<48x128xf32>
    %10 = arith.mulf %9, %9 : vector<48x128xf32>
    %cst_6 = arith.constant dense<0.000000e+00> : vector<48xf32>
    %11 = vector.multi_reduction <add>, %10, %cst_6 [1] : vector<48x128xf32> to vector<48xf32>
    %12 = vector.shape_cast %11 : vector<48xf32> to vector<48x1xf32>
    %cst_7 = arith.constant 1.280000e+02 : f32
    %13 = vector.broadcast %cst_7 : f32 to vector<48x1xf32>
    %14 = arith.divf %12, %13 : vector<48x1xf32>
    %15 = vector.broadcast %7 : vector<48x1xf32> to vector<48x128xf32>
    %16 = arith.subf %1, %15 : vector<48x128xf32>
    %cst_8 = arith.constant 9.99999974E-6 : f32
    %17 = vector.broadcast %cst_8 : f32 to vector<48x1xf32>
    %18 = arith.addf %14, %17 : vector<48x1xf32>
    %19 = math.rsqrt %18 : vector<48x1xf32>
    %20 = vector.broadcast %19 : vector<48x1xf32> to vector<48x128xf32>
    %21 = arith.mulf %16, %20 : vector<48x128xf32>
    %22 = vector.broadcast %2 : vector<1x128xf32> to vector<48x128xf32>
    %23 = arith.mulf %21, %22 : vector<48x128xf32>
    %24 = vector.broadcast %3 : vector<1x128xf32> to vector<48x128xf32>
    %25 = arith.addf %23, %24 : vector<48x128xf32>
    %26 = arith.truncf %25 : vector<48x128xf32> to vector<48x128xbf16>
    %c0_9 = arith.constant 0 : index
    %c0_10 = arith.constant 0 : index
    %27 = vector.load %arg2[%c0_9, %c0_10] : memref<128x512xbf16, #tpu.memory_space<vmem>>, vector<128x512xbf16>
    %cst_11 = arith.constant dense<0.000000e+00> : vector<48x512xf32>
    %28 = tpu.matmul %26, %27, %cst_11 {dimension_numbers = #tpu.dot_dimension_numbers<[1], [0], [0], [1], [0, 0, 1, 1], [], []>} : vector<48x128xbf16>, vector<128x512xbf16>, vector<48x512xf32> -> vector<48x512xf32>
    %c0_12 = arith.constant 0 : index
    %c0_13 = arith.constant 0 : index
    %29 = vector.load %arg3[%c0_12, %c0_13] : memref<1x512xf32, #tpu.memory_space<vmem>>, vector<1x512xf32>
    %30 = vector.broadcast %29 : vector<1x512xf32> to vector<48x512xf32>
    %31 = arith.addf %28, %30 : vector<48x512xf32>
    %cst_14 = arith.constant 5.000000e-01 : f32
    %32 = vector.broadcast %cst_14 : f32 to vector<48x512xf32>
    %33 = arith.mulf %32, %31 : vector<48x512xf32>
    %cst_15 = arith.constant 8.510000e-01 : f32
    %34 = vector.broadcast %cst_15 : f32 to vector<48x512xf32>
    %35 = arith.mulf %34, %31 : vector<48x512xf32>
    %36 = math.tanh %35 : vector<48x512xf32>
    %cst_16 = arith.constant 1.000000e+00 : f32
    %37 = vector.broadcast %cst_16 : f32 to vector<48x512xf32>
    %38 = arith.addf %37, %36 : vector<48x512xf32>
    %39 = arith.mulf %33, %38 : vector<48x512xf32>
    %40 = arith.truncf %39 : vector<48x512xf32> to vector<48x512xbf16>
    %c0_17 = arith.constant 0 : index
    %c0_18 = arith.constant 0 : index
    %41 = vector.load %arg4[%c0_17, %c0_18] : memref<512x128xbf16, #tpu.memory_space<vmem>>, vector<512x128xbf16>
    %cst_19 = arith.constant dense<0.000000e+00> : vector<48x128xf32>
    %42 = tpu.matmul %40, %41, %cst_19 {dimension_numbers = #tpu.dot_dimension_numbers<[1], [0], [0], [1], [0, 0, 1, 1], [], []>} : vector<48x512xbf16>, vector<512x128xbf16>, vector<48x128xf32> -> vector<48x128xf32>
    %c0_20 = arith.constant 0 : index
    %c0_21 = arith.constant 0 : index
    %43 = vector.load %arg5[%c0_20, %c0_21] : memref<1x128xf32, #tpu.memory_space<vmem>>, vector<1x128xf32>
    %44 = vector.broadcast %43 : vector<1x128xf32> to vector<48x128xf32>
    %45 = arith.addf %42, %44 : vector<48x128xf32>
    %46 = arith.addf %45, %1 : vector<48x128xf32>
    %47 = arith.truncf %46 : vector<48x128xf32> to vector<48x128xbf16>
    %c0_22 = arith.constant 0 : index
    %c0_23 = arith.constant 0 : index
    %48 = vector.load %arg8[%c0_22, %c0_23] : memref<48x128xbf16, #tpu.memory_space<vmem>>, vector<48x128xbf16>
    tpu.vector_store %arg8[%c0_22, %c0_23], %47 {strides = array<i32>} : memref<48x128xbf16, #tpu.memory_space<vmem>>, vector<48x128xbf16>,
    return
  }
  func.func @transform_0(%arg0: i32) -> (i32, i32) {
    %c0_i32 = arith.constant 0 : i32
    %c0_i32_0 = arith.constant 0 : i32
    return %arg0, %c0_i32 : i32, i32
  }
  func.func @transform_1(%arg0: i32) -> (i32, i32) {
    %c0_i32 = arith.constant 0 : i32
    %c0_i32_0 = arith.constant 0 : i32
    %c0_i32_1 = arith.constant 0 : i32
    return %c0_i32, %c0_i32_0 : i32, i32
  }
  func.func @transform_2(%arg0: i32) -> (i32, i32) {
    %c0_i32 = arith.constant 0 : i32
    %c0_i32_0 = arith.constant 0 : i32
    %c0_i32_1 = arith.constant 0 : i32
    return %c0_i32, %c0_i32_0 : i32, i32
  }
  func.func @transform_3(%arg0: i32) -> (i32, i32) {
    %c0_i32 = arith.constant 0 : i32
    %c0_i32_0 = arith.constant 0 : i32
    %c0_i32_1 = arith.constant 0 : i32
    return %c0_i32, %c0_i32_0 : i32, i32
  }
  func.func @transform_4(%arg0: i32) -> (i32, i32) {
    %c0_i32 = arith.constant 0 : i32
    %c0_i32_0 = arith.constant 0 : i32
    %c0_i32_1 = arith.constant 0 : i32
    return %c0_i32, %c0_i32_0 : i32, i32
  }
  func.func @transform_5(%arg0: i32) -> (i32, i32) {
    %c0_i32 = arith.constant 0 : i32
    %c0_i32_0 = arith.constant 0 : i32
    %c0_i32_1 = arith.constant 0 : i32
    return %c0_i32, %c0_i32_0 : i32, i32
  }
  func.func @transform_6(%arg0: i32) -> (i32, i32) {
    %c0_i32 = arith.constant 0 : i32
    %c0_i32_0 = arith.constant 0 : i32
    %c0_i32_1 = arith.constant 0 : i32
    return %c0_i32, %c0_i32_0 : i32, i32
  }
  func.func @transform_7(%arg0: i32) -> (i32, i32) {
    %c0_i32 = arith.constant 0 : i32
    %c0_i32_0 = arith.constant 0 : i32
    return %arg0, %c0_i32 : i32, i32
  }
}

module attributes {stable_mosaic.version = 11 : i64} {
  func.func @_attn_block_kernel(%arg0: i32, %arg1: memref<1x24x128xbf16, #tpu.memory_space<vmem>>, %arg2: memref<4x128x32xbf16, #tpu.memory_space<vmem>>, %arg3: memref<4x128x32xbf16, #tpu.memory_space<vmem>>, %arg4: memref<4x128x32xbf16, #tpu.memory_space<vmem>>, %arg5: memref<4x1x32xf32, #tpu.memory_space<vmem>>, %arg6: memref<4x1x32xf32, #tpu.memory_space<vmem>>, %arg7: memref<4x1x32xf32, #tpu.memory_space<vmem>>, %arg8: memref<4x32x128xbf16, #tpu.memory_space<vmem>>, %arg9: memref<1x128xf32, #tpu.memory_space<vmem>>, %arg10: memref<1x128xf32, #tpu.memory_space<vmem>>, %arg11: memref<1x128xf32, #tpu.memory_space<vmem>>, %arg12: memref<1x24x128xbf16, #tpu.memory_space<vmem>>) attributes {dimension_semantics = [#tpu.dimension_semantics<parallel>], iteration_bounds = array<i64: 2>, scalar_prefetch = 0 : i64, scratch_operands = 0 : i64, tpu.core_type = #tpu.core_type<tc>, window_params = [{transform_indices = @transform_0, window_bounds = array<i64: 1, 24, 128>}, {pipeline_mode = #tpu.pipeline_mode<synchronous>, transform_indices = @transform_1, window_bounds = array<i64: 4, 128, 32>}, {pipeline_mode = #tpu.pipeline_mode<synchronous>, transform_indices = @transform_2, window_bounds = array<i64: 4, 128, 32>}, {pipeline_mode = #tpu.pipeline_mode<synchronous>, transform_indices = @transform_3, window_bounds = array<i64: 4, 128, 32>}, {pipeline_mode = #tpu.pipeline_mode<synchronous>, transform_indices = @transform_4, window_bounds = array<i64: 4, 1, 32>}, {pipeline_mode = #tpu.pipeline_mode<synchronous>, transform_indices = @transform_5, window_bounds = array<i64: 4, 1, 32>}, {pipeline_mode = #tpu.pipeline_mode<synchronous>, transform_indices = @transform_6, window_bounds = array<i64: 4, 1, 32>}, {pipeline_mode = #tpu.pipeline_mode<synchronous>, transform_indices = @transform_7, window_bounds = array<i64: 4, 32, 128>}, {pipeline_mode = #tpu.pipeline_mode<synchronous>, transform_indices = @transform_8, window_bounds = array<i64: 1, 128>}, {pipeline_mode = #tpu.pipeline_mode<synchronous>, transform_indices = @transform_9, window_bounds = array<i64: 1, 128>}, {pipeline_mode = #tpu.pipeline_mode<synchronous>, transform_indices = @transform_10, window_bounds = array<i64: 1, 128>}, {transform_indices = @transform_11, window_bounds = array<i64: 1, 24, 128>}]} {
    %c0 = arith.constant 0 : index
    %c0_0 = arith.constant 0 : index
    %c0_1 = arith.constant 0 : index
    %0 = vector.load %arg1[%c0, %c0_0, %c0_1] : memref<1x24x128xbf16, #tpu.memory_space<vmem>>, vector<1x24x128xbf16>
    %1 = vector.shape_cast %0 : vector<1x24x128xbf16> to vector<24x128xbf16>
    %2 = arith.extf %1 : vector<24x128xbf16> to vector<24x128xf32>
    %c0_2 = arith.constant 0 : index
    %c0_3 = arith.constant 0 : index
    %3 = vector.load %arg10[%c0_2, %c0_3] : memref<1x128xf32, #tpu.memory_space<vmem>>, vector<1x128xf32>
    %c0_4 = arith.constant 0 : index
    %c0_5 = arith.constant 0 : index
    %4 = vector.load %arg11[%c0_4, %c0_5] : memref<1x128xf32, #tpu.memory_space<vmem>>, vector<1x128xf32>
    %cst = arith.constant dense<0.000000e+00> : vector<24xf32>
    %5 = vector.multi_reduction <add>, %2, %cst [1] : vector<24x128xf32> to vector<24xf32>
    %6 = vector.shape_cast %5 : vector<24xf32> to vector<24x1xf32>
    %cst_6 = arith.constant 1.280000e+02 : f32
    %7 = vector.broadcast %cst_6 : f32 to vector<24x1xf32>
    %8 = arith.divf %6, %7 : vector<24x1xf32>
    %9 = vector.broadcast %8 : vector<24x1xf32> to vector<24x128xf32>
    %10 = arith.subf %2, %9 : vector<24x128xf32>
    %11 = arith.mulf %10, %10 : vector<24x128xf32>
    %cst_7 = arith.constant dense<0.000000e+00> : vector<24xf32>
    %12 = vector.multi_reduction <add>, %11, %cst_7 [1] : vector<24x128xf32> to vector<24xf32>
    %13 = vector.shape_cast %12 : vector<24xf32> to vector<24x1xf32>
    %cst_8 = arith.constant 1.280000e+02 : f32
    %14 = vector.broadcast %cst_8 : f32 to vector<24x1xf32>
    %15 = arith.divf %13, %14 : vector<24x1xf32>
    %16 = vector.broadcast %8 : vector<24x1xf32> to vector<24x128xf32>
    %17 = arith.subf %2, %16 : vector<24x128xf32>
    %cst_9 = arith.constant 9.99999974E-6 : f32
    %18 = vector.broadcast %cst_9 : f32 to vector<24x1xf32>
    %19 = arith.addf %15, %18 : vector<24x1xf32>
    %20 = math.rsqrt %19 : vector<24x1xf32>
    %21 = vector.broadcast %20 : vector<24x1xf32> to vector<24x128xf32>
    %22 = arith.mulf %17, %21 : vector<24x128xf32>
    %23 = vector.broadcast %3 : vector<1x128xf32> to vector<24x128xf32>
    %24 = arith.mulf %22, %23 : vector<24x128xf32>
    %25 = vector.broadcast %4 : vector<1x128xf32> to vector<24x128xf32>
    %26 = arith.addf %24, %25 : vector<24x128xf32>
    %27 = arith.truncf %26 : vector<24x128xf32> to vector<24x128xbf16>
    %28 = tpu.iota {dimensions = array<i32: 1>} : vector<24x24xi32>
    %c17_i32 = arith.constant 17 : i32
    %29 = vector.broadcast %c17_i32 : i32 to vector<24x24xi32>
    %30 = arith.cmpi slt, %28, %29 : vector<24x24xi32>
    %cst_10 = arith.constant 0.000000e+00 : f32
    %cst_11 = arith.constant -1.000000e+30 : f32
    %31 = vector.broadcast %cst_10 : f32 to vector<24x24xf32>
    %32 = vector.broadcast %cst_11 : f32 to vector<24x24xf32>
    %33 = arith.select %30, %31, %32 : vector<24x24xi1>, vector<24x24xf32>
    %cst_12 = arith.constant 0.000000e+00 : f32
    %34 = vector.broadcast %cst_12 : f32 to vector<24x128xf32>
    %c0_13 = arith.constant 0 : index
    %c0_14 = arith.constant 0 : index
    %c0_15 = arith.constant 0 : index
    %35 = vector.load %arg2[%c0_13, %c0_14, %c0_15] : memref<4x128x32xbf16, #tpu.memory_space<vmem>>, vector<1x128x32xbf16>
    %36 = vector.shape_cast %35 : vector<1x128x32xbf16> to vector<128x32xbf16>
    %cst_16 = arith.constant dense<0.000000e+00> : vector<24x32xf32>
    %37 = tpu.matmul %27, %36, %cst_16 {dimension_numbers = #tpu.dot_dimension_numbers<[1], [0], [0], [1], [0, 0, 1, 1], [], []>} : vector<24x128xbf16>, vector<128x32xbf16>, vector<24x32xf32> -> vector<24x32xf32>
    %c0_17 = arith.constant 0 : index
    %c0_18 = arith.constant 0 : index
    %c0_19 = arith.constant 0 : index
    %38 = vector.load %arg5[%c0_17, %c0_18, %c0_19] : memref<4x1x32xf32, #tpu.memory_space<vmem>>, vector<1x1x32xf32>
    %39 = vector.shape_cast %38 : vector<1x1x32xf32> to vector<1x32xf32>
    %40 = vector.broadcast %39 : vector<1x32xf32> to vector<24x32xf32>
    %41 = arith.addf %37, %40 : vector<24x32xf32>
    %c0_20 = arith.constant 0 : index
    %c0_21 = arith.constant 0 : index
    %c0_22 = arith.constant 0 : index
    %42 = vector.load %arg3[%c0_20, %c0_21, %c0_22] : memref<4x128x32xbf16, #tpu.memory_space<vmem>>, vector<1x128x32xbf16>
    %43 = vector.shape_cast %42 : vector<1x128x32xbf16> to vector<128x32xbf16>
    %cst_23 = arith.constant dense<0.000000e+00> : vector<24x32xf32>
    %44 = tpu.matmul %27, %43, %cst_23 {dimension_numbers = #tpu.dot_dimension_numbers<[1], [0], [0], [1], [0, 0, 1, 1], [], []>} : vector<24x128xbf16>, vector<128x32xbf16>, vector<24x32xf32> -> vector<24x32xf32>
    %c0_24 = arith.constant 0 : index
    %c0_25 = arith.constant 0 : index
    %c0_26 = arith.constant 0 : index
    %45 = vector.load %arg6[%c0_24, %c0_25, %c0_26] : memref<4x1x32xf32, #tpu.memory_space<vmem>>, vector<1x1x32xf32>
    %46 = vector.shape_cast %45 : vector<1x1x32xf32> to vector<1x32xf32>
    %47 = vector.broadcast %46 : vector<1x32xf32> to vector<24x32xf32>
    %48 = arith.addf %44, %47 : vector<24x32xf32>
    %c0_27 = arith.constant 0 : index
    %c0_28 = arith.constant 0 : index
    %c0_29 = arith.constant 0 : index
    %49 = vector.load %arg4[%c0_27, %c0_28, %c0_29] : memref<4x128x32xbf16, #tpu.memory_space<vmem>>, vector<1x128x32xbf16>
    %50 = vector.shape_cast %49 : vector<1x128x32xbf16> to vector<128x32xbf16>
    %cst_30 = arith.constant dense<0.000000e+00> : vector<24x32xf32>
    %51 = tpu.matmul %27, %50, %cst_30 {dimension_numbers = #tpu.dot_dimension_numbers<[1], [0], [0], [1], [0, 0, 1, 1], [], []>} : vector<24x128xbf16>, vector<128x32xbf16>, vector<24x32xf32> -> vector<24x32xf32>
    %c0_31 = arith.constant 0 : index
    %c0_32 = arith.constant 0 : index
    %c0_33 = arith.constant 0 : index
    %52 = vector.load %arg7[%c0_31, %c0_32, %c0_33] : memref<4x1x32xf32, #tpu.memory_space<vmem>>, vector<1x1x32xf32>
    %53 = vector.shape_cast %52 : vector<1x1x32xf32> to vector<1x32xf32>
    %54 = vector.broadcast %53 : vector<1x32xf32> to vector<24x32xf32>
    %55 = arith.addf %51, %54 : vector<24x32xf32>
    %56 = arith.truncf %41 : vector<24x32xf32> to vector<24x32xbf16>
    %57 = arith.truncf %48 : vector<24x32xf32> to vector<24x32xbf16>
    %cst_34 = arith.constant dense<0.000000e+00> : vector<24x24xf32>
    %58 = tpu.matmul %56, %57, %cst_34 {dimension_numbers = #tpu.dot_dimension_numbers<[1], [1], [0], [0], [0, 0, 1, 0], [], []>} : vector<24x32xbf16>, vector<24x32xbf16>, vector<24x24xf32> -> vector<24x24xf32>
    %cst_35 = arith.constant 0.176776692 : f32
    %59 = vector.broadcast %cst_35 : f32 to vector<24x24xf32>
    %60 = arith.mulf %58, %59 : vector<24x24xf32>
    %61 = arith.addf %60, %33 : vector<24x24xf32>
    %cst_36 = arith.constant dense<0xFF800000> : vector<24xf32>
    %62 = vector.multi_reduction <maximumf>, %61, %cst_36 [1] : vector<24x24xf32> to vector<24xf32>
    %63 = vector.shape_cast %62 : vector<24xf32> to vector<24x1xf32>
    %64 = vector.broadcast %63 : vector<24x1xf32> to vector<24x24xf32>
    %65 = arith.subf %61, %64 : vector<24x24xf32>
    %66 = math.exp %65 : vector<24x24xf32>
    %cst_37 = arith.constant dense<0.000000e+00> : vector<24xf32>
    %67 = vector.multi_reduction <add>, %66, %cst_37 [1] : vector<24x24xf32> to vector<24xf32>
    %68 = vector.shape_cast %67 : vector<24xf32> to vector<24x1xf32>
    %69 = tpu.reciprocal %68 {approx = true} : vector<24x1xf32> -> vector<24x1xf32>
    %70 = vector.broadcast %69 : vector<24x1xf32> to vector<24x24xf32>
    %71 = arith.mulf %66, %70 : vector<24x24xf32>
    %72 = arith.truncf %71 : vector<24x24xf32> to vector<24x24xbf16>
    %73 = arith.truncf %55 : vector<24x32xf32> to vector<24x32xbf16>
    %cst_38 = arith.constant dense<0.000000e+00> : vector<24x32xf32>
    %74 = tpu.matmul %72, %73, %cst_38 {dimension_numbers = #tpu.dot_dimension_numbers<[1], [0], [0], [1], [0, 0, 1, 1], [], []>} : vector<24x24xbf16>, vector<24x32xbf16>, vector<24x32xf32> -> vector<24x32xf32>
    %75 = arith.truncf %74 : vector<24x32xf32> to vector<24x32xbf16>
    %c0_39 = arith.constant 0 : index
    %c0_40 = arith.constant 0 : index
    %c0_41 = arith.constant 0 : index
    %76 = vector.load %arg8[%c0_39, %c0_40, %c0_41] : memref<4x32x128xbf16, #tpu.memory_space<vmem>>, vector<1x32x128xbf16>
    %77 = vector.shape_cast %76 : vector<1x32x128xbf16> to vector<32x128xbf16>
    %cst_42 = arith.constant dense<0.000000e+00> : vector<24x128xf32>
    %78 = tpu.matmul %75, %77, %cst_42 {dimension_numbers = #tpu.dot_dimension_numbers<[1], [0], [0], [1], [0, 0, 1, 1], [], []>} : vector<24x32xbf16>, vector<32x128xbf16>, vector<24x128xf32> -> vector<24x128xf32>
    %79 = arith.addf %34, %78 : vector<24x128xf32>
    %c1 = arith.constant 1 : index
    %c0_43 = arith.constant 0 : index
    %c0_44 = arith.constant 0 : index
    %80 = vector.load %arg2[%c1, %c0_43, %c0_44] : memref<4x128x32xbf16, #tpu.memory_space<vmem>>, vector<1x128x32xbf16>
    %81 = vector.shape_cast %80 : vector<1x128x32xbf16> to vector<128x32xbf16>
    %cst_45 = arith.constant dense<0.000000e+00> : vector<24x32xf32>
    %82 = tpu.matmul %27, %81, %cst_45 {dimension_numbers = #tpu.dot_dimension_numbers<[1], [0], [0], [1], [0, 0, 1, 1], [], []>} : vector<24x128xbf16>, vector<128x32xbf16>, vector<24x32xf32> -> vector<24x32xf32>
    %c1_46 = arith.constant 1 : index
    %c0_47 = arith.constant 0 : index
    %c0_48 = arith.constant 0 : index
    %83 = vector.load %arg5[%c1_46, %c0_47, %c0_48] : memref<4x1x32xf32, #tpu.memory_space<vmem>>, vector<1x1x32xf32>
    %84 = vector.shape_cast %83 : vector<1x1x32xf32> to vector<1x32xf32>
    %85 = vector.broadcast %84 : vector<1x32xf32> to vector<24x32xf32>
    %86 = arith.addf %82, %85 : vector<24x32xf32>
    %c1_49 = arith.constant 1 : index
    %c0_50 = arith.constant 0 : index
    %c0_51 = arith.constant 0 : index
    %87 = vector.load %arg3[%c1_49, %c0_50, %c0_51] : memref<4x128x32xbf16, #tpu.memory_space<vmem>>, vector<1x128x32xbf16>
    %88 = vector.shape_cast %87 : vector<1x128x32xbf16> to vector<128x32xbf16>
    %cst_52 = arith.constant dense<0.000000e+00> : vector<24x32xf32>
    %89 = tpu.matmul %27, %88, %cst_52 {dimension_numbers = #tpu.dot_dimension_numbers<[1], [0], [0], [1], [0, 0, 1, 1], [], []>} : vector<24x128xbf16>, vector<128x32xbf16>, vector<24x32xf32> -> vector<24x32xf32>
    %c1_53 = arith.constant 1 : index
    %c0_54 = arith.constant 0 : index
    %c0_55 = arith.constant 0 : index
    %90 = vector.load %arg6[%c1_53, %c0_54, %c0_55] : memref<4x1x32xf32, #tpu.memory_space<vmem>>, vector<1x1x32xf32>
    %91 = vector.shape_cast %90 : vector<1x1x32xf32> to vector<1x32xf32>
    %92 = vector.broadcast %91 : vector<1x32xf32> to vector<24x32xf32>
    %93 = arith.addf %89, %92 : vector<24x32xf32>
    %c1_56 = arith.constant 1 : index
    %c0_57 = arith.constant 0 : index
    %c0_58 = arith.constant 0 : index
    %94 = vector.load %arg4[%c1_56, %c0_57, %c0_58] : memref<4x128x32xbf16, #tpu.memory_space<vmem>>, vector<1x128x32xbf16>
    %95 = vector.shape_cast %94 : vector<1x128x32xbf16> to vector<128x32xbf16>
    %cst_59 = arith.constant dense<0.000000e+00> : vector<24x32xf32>
    %96 = tpu.matmul %27, %95, %cst_59 {dimension_numbers = #tpu.dot_dimension_numbers<[1], [0], [0], [1], [0, 0, 1, 1], [], []>} : vector<24x128xbf16>, vector<128x32xbf16>, vector<24x32xf32> -> vector<24x32xf32>
    %c1_60 = arith.constant 1 : index
    %c0_61 = arith.constant 0 : index
    %c0_62 = arith.constant 0 : index
    %97 = vector.load %arg7[%c1_60, %c0_61, %c0_62] : memref<4x1x32xf32, #tpu.memory_space<vmem>>, vector<1x1x32xf32>
    %98 = vector.shape_cast %97 : vector<1x1x32xf32> to vector<1x32xf32>
    %99 = vector.broadcast %98 : vector<1x32xf32> to vector<24x32xf32>
    %100 = arith.addf %96, %99 : vector<24x32xf32>
    %101 = arith.truncf %86 : vector<24x32xf32> to vector<24x32xbf16>
    %102 = arith.truncf %93 : vector<24x32xf32> to vector<24x32xbf16>
    %cst_63 = arith.constant dense<0.000000e+00> : vector<24x24xf32>
    %103 = tpu.matmul %101, %102, %cst_63 {dimension_numbers = #tpu.dot_dimension_numbers<[1], [1], [0], [0], [0, 0, 1, 0], [], []>} : vector<24x32xbf16>, vector<24x32xbf16>, vector<24x24xf32> -> vector<24x24xf32>
    %cst_64 = arith.constant 0.176776692 : f32
    %104 = vector.broadcast %cst_64 : f32 to vector<24x24xf32>
    %105 = arith.mulf %103, %104 : vector<24x24xf32>
    %106 = arith.addf %105, %33 : vector<24x24xf32>
    %cst_65 = arith.constant dense<0xFF800000> : vector<24xf32>
    %107 = vector.multi_reduction <maximumf>, %106, %cst_65 [1] : vector<24x24xf32> to vector<24xf32>
    %108 = vector.shape_cast %107 : vector<24xf32> to vector<24x1xf32>
    %109 = vector.broadcast %108 : vector<24x1xf32> to vector<24x24xf32>
    %110 = arith.subf %106, %109 : vector<24x24xf32>
    %111 = math.exp %110 : vector<24x24xf32>
    %cst_66 = arith.constant dense<0.000000e+00> : vector<24xf32>
    %112 = vector.multi_reduction <add>, %111, %cst_66 [1] : vector<24x24xf32> to vector<24xf32>
    %113 = vector.shape_cast %112 : vector<24xf32> to vector<24x1xf32>
    %114 = tpu.reciprocal %113 {approx = true} : vector<24x1xf32> -> vector<24x1xf32>
    %115 = vector.broadcast %114 : vector<24x1xf32> to vector<24x24xf32>
    %116 = arith.mulf %111, %115 : vector<24x24xf32>
    %117 = arith.truncf %116 : vector<24x24xf32> to vector<24x24xbf16>
    %118 = arith.truncf %100 : vector<24x32xf32> to vector<24x32xbf16>
    %cst_67 = arith.constant dense<0.000000e+00> : vector<24x32xf32>
    %119 = tpu.matmul %117, %118, %cst_67 {dimension_numbers = #tpu.dot_dimension_numbers<[1], [0], [0], [1], [0, 0, 1, 1], [], []>} : vector<24x24xbf16>, vector<24x32xbf16>, vector<24x32xf32> -> vector<24x32xf32>
    %120 = arith.truncf %119 : vector<24x32xf32> to vector<24x32xbf16>
    %c1_68 = arith.constant 1 : index
    %c0_69 = arith.constant 0 : index
    %c0_70 = arith.constant 0 : index
    %121 = vector.load %arg8[%c1_68, %c0_69, %c0_70] : memref<4x32x128xbf16, #tpu.memory_space<vmem>>, vector<1x32x128xbf16>
    %122 = vector.shape_cast %121 : vector<1x32x128xbf16> to vector<32x128xbf16>
    %cst_71 = arith.constant dense<0.000000e+00> : vector<24x128xf32>
    %123 = tpu.matmul %120, %122, %cst_71 {dimension_numbers = #tpu.dot_dimension_numbers<[1], [0], [0], [1], [0, 0, 1, 1], [], []>} : vector<24x32xbf16>, vector<32x128xbf16>, vector<24x128xf32> -> vector<24x128xf32>
    %124 = arith.addf %79, %123 : vector<24x128xf32>
    %c2 = arith.constant 2 : index
    %c0_72 = arith.constant 0 : index
    %c0_73 = arith.constant 0 : index
    %125 = vector.load %arg2[%c2, %c0_72, %c0_73] : memref<4x128x32xbf16, #tpu.memory_space<vmem>>, vector<1x128x32xbf16>
    %126 = vector.shape_cast %125 : vector<1x128x32xbf16> to vector<128x32xbf16>
    %cst_74 = arith.constant dense<0.000000e+00> : vector<24x32xf32>
    %127 = tpu.matmul %27, %126, %cst_74 {dimension_numbers = #tpu.dot_dimension_numbers<[1], [0], [0], [1], [0, 0, 1, 1], [], []>} : vector<24x128xbf16>, vector<128x32xbf16>, vector<24x32xf32> -> vector<24x32xf32>
    %c2_75 = arith.constant 2 : index
    %c0_76 = arith.constant 0 : index
    %c0_77 = arith.constant 0 : index
    %128 = vector.load %arg5[%c2_75, %c0_76, %c0_77] : memref<4x1x32xf32, #tpu.memory_space<vmem>>, vector<1x1x32xf32>
    %129 = vector.shape_cast %128 : vector<1x1x32xf32> to vector<1x32xf32>
    %130 = vector.broadcast %129 : vector<1x32xf32> to vector<24x32xf32>
    %131 = arith.addf %127, %130 : vector<24x32xf32>
    %c2_78 = arith.constant 2 : index
    %c0_79 = arith.constant 0 : index
    %c0_80 = arith.constant 0 : index
    %132 = vector.load %arg3[%c2_78, %c0_79, %c0_80] : memref<4x128x32xbf16, #tpu.memory_space<vmem>>, vector<1x128x32xbf16>
    %133 = vector.shape_cast %132 : vector<1x128x32xbf16> to vector<128x32xbf16>
    %cst_81 = arith.constant dense<0.000000e+00> : vector<24x32xf32>
    %134 = tpu.matmul %27, %133, %cst_81 {dimension_numbers = #tpu.dot_dimension_numbers<[1], [0], [0], [1], [0, 0, 1, 1], [], []>} : vector<24x128xbf16>, vector<128x32xbf16>, vector<24x32xf32> -> vector<24x32xf32>
    %c2_82 = arith.constant 2 : index
    %c0_83 = arith.constant 0 : index
    %c0_84 = arith.constant 0 : index
    %135 = vector.load %arg6[%c2_82, %c0_83, %c0_84] : memref<4x1x32xf32, #tpu.memory_space<vmem>>, vector<1x1x32xf32>
    %136 = vector.shape_cast %135 : vector<1x1x32xf32> to vector<1x32xf32>
    %137 = vector.broadcast %136 : vector<1x32xf32> to vector<24x32xf32>
    %138 = arith.addf %134, %137 : vector<24x32xf32>
    %c2_85 = arith.constant 2 : index
    %c0_86 = arith.constant 0 : index
    %c0_87 = arith.constant 0 : index
    %139 = vector.load %arg4[%c2_85, %c0_86, %c0_87] : memref<4x128x32xbf16, #tpu.memory_space<vmem>>, vector<1x128x32xbf16>
    %140 = vector.shape_cast %139 : vector<1x128x32xbf16> to vector<128x32xbf16>
    %cst_88 = arith.constant dense<0.000000e+00> : vector<24x32xf32>
    %141 = tpu.matmul %27, %140, %cst_88 {dimension_numbers = #tpu.dot_dimension_numbers<[1], [0], [0], [1], [0, 0, 1, 1], [], []>} : vector<24x128xbf16>, vector<128x32xbf16>, vector<24x32xf32> -> vector<24x32xf32>
    %c2_89 = arith.constant 2 : index
    %c0_90 = arith.constant 0 : index
    %c0_91 = arith.constant 0 : index
    %142 = vector.load %arg7[%c2_89, %c0_90, %c0_91] : memref<4x1x32xf32, #tpu.memory_space<vmem>>, vector<1x1x32xf32>
    %143 = vector.shape_cast %142 : vector<1x1x32xf32> to vector<1x32xf32>
    %144 = vector.broadcast %143 : vector<1x32xf32> to vector<24x32xf32>
    %145 = arith.addf %141, %144 : vector<24x32xf32>
    %146 = arith.truncf %131 : vector<24x32xf32> to vector<24x32xbf16>
    %147 = arith.truncf %138 : vector<24x32xf32> to vector<24x32xbf16>
    %cst_92 = arith.constant dense<0.000000e+00> : vector<24x24xf32>
    %148 = tpu.matmul %146, %147, %cst_92 {dimension_numbers = #tpu.dot_dimension_numbers<[1], [1], [0], [0], [0, 0, 1, 0], [], []>} : vector<24x32xbf16>, vector<24x32xbf16>, vector<24x24xf32> -> vector<24x24xf32>
    %cst_93 = arith.constant 0.176776692 : f32
    %149 = vector.broadcast %cst_93 : f32 to vector<24x24xf32>
    %150 = arith.mulf %148, %149 : vector<24x24xf32>
    %151 = arith.addf %150, %33 : vector<24x24xf32>
    %cst_94 = arith.constant dense<0xFF800000> : vector<24xf32>
    %152 = vector.multi_reduction <maximumf>, %151, %cst_94 [1] : vector<24x24xf32> to vector<24xf32>
    %153 = vector.shape_cast %152 : vector<24xf32> to vector<24x1xf32>
    %154 = vector.broadcast %153 : vector<24x1xf32> to vector<24x24xf32>
    %155 = arith.subf %151, %154 : vector<24x24xf32>
    %156 = math.exp %155 : vector<24x24xf32>
    %cst_95 = arith.constant dense<0.000000e+00> : vector<24xf32>
    %157 = vector.multi_reduction <add>, %156, %cst_95 [1] : vector<24x24xf32> to vector<24xf32>
    %158 = vector.shape_cast %157 : vector<24xf32> to vector<24x1xf32>
    %159 = tpu.reciprocal %158 {approx = true} : vector<24x1xf32> -> vector<24x1xf32>
    %160 = vector.broadcast %159 : vector<24x1xf32> to vector<24x24xf32>
    %161 = arith.mulf %156, %160 : vector<24x24xf32>
    %162 = arith.truncf %161 : vector<24x24xf32> to vector<24x24xbf16>
    %163 = arith.truncf %145 : vector<24x32xf32> to vector<24x32xbf16>
    %cst_96 = arith.constant dense<0.000000e+00> : vector<24x32xf32>
    %164 = tpu.matmul %162, %163, %cst_96 {dimension_numbers = #tpu.dot_dimension_numbers<[1], [0], [0], [1], [0, 0, 1, 1], [], []>} : vector<24x24xbf16>, vector<24x32xbf16>, vector<24x32xf32> -> vector<24x32xf32>
    %165 = arith.truncf %164 : vector<24x32xf32> to vector<24x32xbf16>
    %c2_97 = arith.constant 2 : index
    %c0_98 = arith.constant 0 : index
    %c0_99 = arith.constant 0 : index
    %166 = vector.load %arg8[%c2_97, %c0_98, %c0_99] : memref<4x32x128xbf16, #tpu.memory_space<vmem>>, vector<1x32x128xbf16>
    %167 = vector.shape_cast %166 : vector<1x32x128xbf16> to vector<32x128xbf16>
    %cst_100 = arith.constant dense<0.000000e+00> : vector<24x128xf32>
    %168 = tpu.matmul %165, %167, %cst_100 {dimension_numbers = #tpu.dot_dimension_numbers<[1], [0], [0], [1], [0, 0, 1, 1], [], []>} : vector<24x32xbf16>, vector<32x128xbf16>, vector<24x128xf32> -> vector<24x128xf32>
    %169 = arith.addf %124, %168 : vector<24x128xf32>
    %c3 = arith.constant 3 : index
    %c0_101 = arith.constant 0 : index
    %c0_102 = arith.constant 0 : index
    %170 = vector.load %arg2[%c3, %c0_101, %c0_102] : memref<4x128x32xbf16, #tpu.memory_space<vmem>>, vector<1x128x32xbf16>
    %171 = vector.shape_cast %170 : vector<1x128x32xbf16> to vector<128x32xbf16>
    %cst_103 = arith.constant dense<0.000000e+00> : vector<24x32xf32>
    %172 = tpu.matmul %27, %171, %cst_103 {dimension_numbers = #tpu.dot_dimension_numbers<[1], [0], [0], [1], [0, 0, 1, 1], [], []>} : vector<24x128xbf16>, vector<128x32xbf16>, vector<24x32xf32> -> vector<24x32xf32>
    %c3_104 = arith.constant 3 : index
    %c0_105 = arith.constant 0 : index
    %c0_106 = arith.constant 0 : index
    %173 = vector.load %arg5[%c3_104, %c0_105, %c0_106] : memref<4x1x32xf32, #tpu.memory_space<vmem>>, vector<1x1x32xf32>
    %174 = vector.shape_cast %173 : vector<1x1x32xf32> to vector<1x32xf32>
    %175 = vector.broadcast %174 : vector<1x32xf32> to vector<24x32xf32>
    %176 = arith.addf %172, %175 : vector<24x32xf32>
    %c3_107 = arith.constant 3 : index
    %c0_108 = arith.constant 0 : index
    %c0_109 = arith.constant 0 : index
    %177 = vector.load %arg3[%c3_107, %c0_108, %c0_109] : memref<4x128x32xbf16, #tpu.memory_space<vmem>>, vector<1x128x32xbf16>
    %178 = vector.shape_cast %177 : vector<1x128x32xbf16> to vector<128x32xbf16>
    %cst_110 = arith.constant dense<0.000000e+00> : vector<24x32xf32>
    %179 = tpu.matmul %27, %178, %cst_110 {dimension_numbers = #tpu.dot_dimension_numbers<[1], [0], [0], [1], [0, 0, 1, 1], [], []>} : vector<24x128xbf16>, vector<128x32xbf16>, vector<24x32xf32> -> vector<24x32xf32>
    %c3_111 = arith.constant 3 : index
    %c0_112 = arith.constant 0 : index
    %c0_113 = arith.constant 0 : index
    %180 = vector.load %arg6[%c3_111, %c0_112, %c0_113] : memref<4x1x32xf32, #tpu.memory_space<vmem>>, vector<1x1x32xf32>
    %181 = vector.shape_cast %180 : vector<1x1x32xf32> to vector<1x32xf32>
    %182 = vector.broadcast %181 : vector<1x32xf32> to vector<24x32xf32>
    %183 = arith.addf %179, %182 : vector<24x32xf32>
    %c3_114 = arith.constant 3 : index
    %c0_115 = arith.constant 0 : index
    %c0_116 = arith.constant 0 : index
    %184 = vector.load %arg4[%c3_114, %c0_115, %c0_116] : memref<4x128x32xbf16, #tpu.memory_space<vmem>>, vector<1x128x32xbf16>
    %185 = vector.shape_cast %184 : vector<1x128x32xbf16> to vector<128x32xbf16>
    %cst_117 = arith.constant dense<0.000000e+00> : vector<24x32xf32>
    %186 = tpu.matmul %27, %185, %cst_117 {dimension_numbers = #tpu.dot_dimension_numbers<[1], [0], [0], [1], [0, 0, 1, 1], [], []>} : vector<24x128xbf16>, vector<128x32xbf16>, vector<24x32xf32> -> vector<24x32xf32>
    %c3_118 = arith.constant 3 : index
    %c0_119 = arith.constant 0 : index
    %c0_120 = arith.constant 0 : index
    %187 = vector.load %arg7[%c3_118, %c0_119, %c0_120] : memref<4x1x32xf32, #tpu.memory_space<vmem>>, vector<1x1x32xf32>
    %188 = vector.shape_cast %187 : vector<1x1x32xf32> to vector<1x32xf32>
    %189 = vector.broadcast %188 : vector<1x32xf32> to vector<24x32xf32>
    %190 = arith.addf %186, %189 : vector<24x32xf32>
    %191 = arith.truncf %176 : vector<24x32xf32> to vector<24x32xbf16>
    %192 = arith.truncf %183 : vector<24x32xf32> to vector<24x32xbf16>
    %cst_121 = arith.constant dense<0.000000e+00> : vector<24x24xf32>
    %193 = tpu.matmul %191, %192, %cst_121 {dimension_numbers = #tpu.dot_dimension_numbers<[1], [1], [0], [0], [0, 0, 1, 0], [], []>} : vector<24x32xbf16>, vector<24x32xbf16>, vector<24x24xf32> -> vector<24x24xf32>
    %cst_122 = arith.constant 0.176776692 : f32
    %194 = vector.broadcast %cst_122 : f32 to vector<24x24xf32>
    %195 = arith.mulf %193, %194 : vector<24x24xf32>
    %196 = arith.addf %195, %33 : vector<24x24xf32>
    %cst_123 = arith.constant dense<0xFF800000> : vector<24xf32>
    %197 = vector.multi_reduction <maximumf>, %196, %cst_123 [1] : vector<24x24xf32> to vector<24xf32>
    %198 = vector.shape_cast %197 : vector<24xf32> to vector<24x1xf32>
    %199 = vector.broadcast %198 : vector<24x1xf32> to vector<24x24xf32>
    %200 = arith.subf %196, %199 : vector<24x24xf32>
    %201 = math.exp %200 : vector<24x24xf32>
    %cst_124 = arith.constant dense<0.000000e+00> : vector<24xf32>
    %202 = vector.multi_reduction <add>, %201, %cst_124 [1] : vector<24x24xf32> to vector<24xf32>
    %203 = vector.shape_cast %202 : vector<24xf32> to vector<24x1xf32>
    %204 = tpu.reciprocal %203 {approx = true} : vector<24x1xf32> -> vector<24x1xf32>
    %205 = vector.broadcast %204 : vector<24x1xf32> to vector<24x24xf32>
    %206 = arith.mulf %201, %205 : vector<24x24xf32>
    %207 = arith.truncf %206 : vector<24x24xf32> to vector<24x24xbf16>
    %208 = arith.truncf %190 : vector<24x32xf32> to vector<24x32xbf16>
    %cst_125 = arith.constant dense<0.000000e+00> : vector<24x32xf32>
    %209 = tpu.matmul %207, %208, %cst_125 {dimension_numbers = #tpu.dot_dimension_numbers<[1], [0], [0], [1], [0, 0, 1, 1], [], []>} : vector<24x24xbf16>, vector<24x32xbf16>, vector<24x32xf32> -> vector<24x32xf32>
    %210 = arith.truncf %209 : vector<24x32xf32> to vector<24x32xbf16>
    %c3_126 = arith.constant 3 : index
    %c0_127 = arith.constant 0 : index
    %c0_128 = arith.constant 0 : index
    %211 = vector.load %arg8[%c3_126, %c0_127, %c0_128] : memref<4x32x128xbf16, #tpu.memory_space<vmem>>, vector<1x32x128xbf16>
    %212 = vector.shape_cast %211 : vector<1x32x128xbf16> to vector<32x128xbf16>
    %cst_129 = arith.constant dense<0.000000e+00> : vector<24x128xf32>
    %213 = tpu.matmul %210, %212, %cst_129 {dimension_numbers = #tpu.dot_dimension_numbers<[1], [0], [0], [1], [0, 0, 1, 1], [], []>} : vector<24x32xbf16>, vector<32x128xbf16>, vector<24x128xf32> -> vector<24x128xf32>
    %214 = arith.addf %169, %213 : vector<24x128xf32>
    %c0_130 = arith.constant 0 : index
    %c0_131 = arith.constant 0 : index
    %215 = vector.load %arg9[%c0_130, %c0_131] : memref<1x128xf32, #tpu.memory_space<vmem>>, vector<1x128xf32>
    %216 = vector.broadcast %215 : vector<1x128xf32> to vector<24x128xf32>
    %217 = arith.addf %214, %216 : vector<24x128xf32>
    %218 = arith.addf %217, %2 : vector<24x128xf32>
    %219 = arith.truncf %218 : vector<24x128xf32> to vector<24x128xbf16>
    %c0_132 = arith.constant 0 : index
    %c0_133 = arith.constant 0 : index
    %c0_134 = arith.constant 0 : index
    %220 = vector.load %arg12[%c0_132, %c0_133, %c0_134] : memref<1x24x128xbf16, #tpu.memory_space<vmem>>, vector<1x24x128xbf16>
    %221 = vector.shape_cast %220 : vector<1x24x128xbf16> to vector<24x128xbf16>
    %222 = vector.shape_cast %219 : vector<24x128xbf16> to vector<1x24x128xbf16>
    tpu.vector_store %arg12[%c0_132, %c0_133, %c0_134], %222 {strides = array<i32>} : memref<1x24x128xbf16, #tpu.memory_space<vmem>>, vector<1x24x128xbf16>,
    return
  }
  func.func @transform_0(%arg0: i32) -> (i32, i32, i32) {
    %c0_i32 = arith.constant 0 : i32
    %c0_i32_0 = arith.constant 0 : i32
    %c0_i32_1 = arith.constant 0 : i32
    return %arg0, %c0_i32, %c0_i32_0 : i32, i32, i32
  }
  func.func @transform_1(%arg0: i32) -> (i32, i32, i32) {
    %c0_i32 = arith.constant 0 : i32
    %c0_i32_0 = arith.constant 0 : i32
    %c0_i32_1 = arith.constant 0 : i32
    %c0_i32_2 = arith.constant 0 : i32
    return %c0_i32, %c0_i32_0, %c0_i32_1 : i32, i32, i32
  }
  func.func @transform_2(%arg0: i32) -> (i32, i32, i32) {
    %c0_i32 = arith.constant 0 : i32
    %c0_i32_0 = arith.constant 0 : i32
    %c0_i32_1 = arith.constant 0 : i32
    %c0_i32_2 = arith.constant 0 : i32
    return %c0_i32, %c0_i32_0, %c0_i32_1 : i32, i32, i32
  }
  func.func @transform_3(%arg0: i32) -> (i32, i32, i32) {
    %c0_i32 = arith.constant 0 : i32
    %c0_i32_0 = arith.constant 0 : i32
    %c0_i32_1 = arith.constant 0 : i32
    %c0_i32_2 = arith.constant 0 : i32
    return %c0_i32, %c0_i32_0, %c0_i32_1 : i32, i32, i32
  }
  func.func @transform_4(%arg0: i32) -> (i32, i32, i32) {
    %c0_i32 = arith.constant 0 : i32
    %c0_i32_0 = arith.constant 0 : i32
    %c0_i32_1 = arith.constant 0 : i32
    %c0_i32_2 = arith.constant 0 : i32
    return %c0_i32, %c0_i32_0, %c0_i32_1 : i32, i32, i32
  }
  func.func @transform_5(%arg0: i32) -> (i32, i32, i32) {
    %c0_i32 = arith.constant 0 : i32
    %c0_i32_0 = arith.constant 0 : i32
    %c0_i32_1 = arith.constant 0 : i32
    %c0_i32_2 = arith.constant 0 : i32
    return %c0_i32, %c0_i32_0, %c0_i32_1 : i32, i32, i32
  }
  func.func @transform_6(%arg0: i32) -> (i32, i32, i32) {
    %c0_i32 = arith.constant 0 : i32
    %c0_i32_0 = arith.constant 0 : i32
    %c0_i32_1 = arith.constant 0 : i32
    %c0_i32_2 = arith.constant 0 : i32
    return %c0_i32, %c0_i32_0, %c0_i32_1 : i32, i32, i32
  }
  func.func @transform_7(%arg0: i32) -> (i32, i32, i32) {
    %c0_i32 = arith.constant 0 : i32
    %c0_i32_0 = arith.constant 0 : i32
    %c0_i32_1 = arith.constant 0 : i32
    %c0_i32_2 = arith.constant 0 : i32
    return %c0_i32, %c0_i32_0, %c0_i32_1 : i32, i32, i32
  }
  func.func @transform_8(%arg0: i32) -> (i32, i32) {
    %c0_i32 = arith.constant 0 : i32
    %c0_i32_0 = arith.constant 0 : i32
    %c0_i32_1 = arith.constant 0 : i32
    return %c0_i32, %c0_i32_0 : i32, i32
  }
  func.func @transform_9(%arg0: i32) -> (i32, i32) {
    %c0_i32 = arith.constant 0 : i32
    %c0_i32_0 = arith.constant 0 : i32
    %c0_i32_1 = arith.constant 0 : i32
    return %c0_i32, %c0_i32_0 : i32, i32
  }
  func.func @transform_10(%arg0: i32) -> (i32, i32) {
    %c0_i32 = arith.constant 0 : i32
    %c0_i32_0 = arith.constant 0 : i32
    %c0_i32_1 = arith.constant 0 : i32
    return %c0_i32, %c0_i32_0 : i32, i32
  }
  func.func @transform_11(%arg0: i32) -> (i32, i32, i32) {
    %c0_i32 = arith.constant 0 : i32
    %c0_i32_0 = arith.constant 0 : i32
    %c0_i32_1 = arith.constant 0 : i32
    return %arg0, %c0_i32, %c0_i32_0 : i32, i32, i32
  }
}

module attributes {stable_mosaic.version = 11 : i64} {
  func.func @_vis_pool_kernel(%arg0: i32, %arg1: memref<1x24x128xbf16, #tpu.memory_space<vmem>>, %arg2: memref<1x128xf32, #tpu.memory_space<vmem>>, %arg3: memref<1x128xf32, #tpu.memory_space<vmem>>, %arg4: memref<128x128xbf16, #tpu.memory_space<vmem>>, %arg5: memref<1x128xf32, #tpu.memory_space<vmem>>, %arg6: memref<1x1x128xf32, #tpu.memory_space<vmem>>) attributes {dimension_semantics = [#tpu.dimension_semantics<parallel>], iteration_bounds = array<i64: 2>, scalar_prefetch = 0 : i64, scratch_operands = 0 : i64, tpu.core_type = #tpu.core_type<tc>, window_params = [{transform_indices = @transform_0, window_bounds = array<i64: 1, 24, 128>}, {pipeline_mode = #tpu.pipeline_mode<synchronous>, transform_indices = @transform_1, window_bounds = array<i64: 1, 128>}, {pipeline_mode = #tpu.pipeline_mode<synchronous>, transform_indices = @transform_2, window_bounds = array<i64: 1, 128>}, {pipeline_mode = #tpu.pipeline_mode<synchronous>, transform_indices = @transform_3, window_bounds = array<i64: 128, 128>}, {pipeline_mode = #tpu.pipeline_mode<synchronous>, transform_indices = @transform_4, window_bounds = array<i64: 1, 128>}, {transform_indices = @transform_5, window_bounds = array<i64: 1, 1, 128>}]} {
    %c0 = arith.constant 0 : index
    %c0_0 = arith.constant 0 : index
    %c0_1 = arith.constant 0 : index
    %0 = vector.load %arg1[%c0, %c0_0, %c0_1] : memref<1x24x128xbf16, #tpu.memory_space<vmem>>, vector<1x24x128xbf16>
    %1 = vector.shape_cast %0 : vector<1x24x128xbf16> to vector<24x128xbf16>
    %2 = arith.extf %1 : vector<24x128xbf16> to vector<24x128xf32>
    %c0_2 = arith.constant 0 : index
    %c0_3 = arith.constant 0 : index
    %3 = vector.load %arg2[%c0_2, %c0_3] : memref<1x128xf32, #tpu.memory_space<vmem>>, vector<1x128xf32>
    %c0_4 = arith.constant 0 : index
    %c0_5 = arith.constant 0 : index
    %4 = vector.load %arg3[%c0_4, %c0_5] : memref<1x128xf32, #tpu.memory_space<vmem>>, vector<1x128xf32>
    %cst = arith.constant dense<0.000000e+00> : vector<24xf32>
    %5 = vector.multi_reduction <add>, %2, %cst [1] : vector<24x128xf32> to vector<24xf32>
    %6 = vector.shape_cast %5 : vector<24xf32> to vector<24x1xf32>
    %cst_6 = arith.constant 1.280000e+02 : f32
    %7 = vector.broadcast %cst_6 : f32 to vector<24x1xf32>
    %8 = arith.divf %6, %7 : vector<24x1xf32>
    %9 = vector.broadcast %8 : vector<24x1xf32> to vector<24x128xf32>
    %10 = arith.subf %2, %9 : vector<24x128xf32>
    %11 = arith.mulf %10, %10 : vector<24x128xf32>
    %cst_7 = arith.constant dense<0.000000e+00> : vector<24xf32>
    %12 = vector.multi_reduction <add>, %11, %cst_7 [1] : vector<24x128xf32> to vector<24xf32>
    %13 = vector.shape_cast %12 : vector<24xf32> to vector<24x1xf32>
    %cst_8 = arith.constant 1.280000e+02 : f32
    %14 = vector.broadcast %cst_8 : f32 to vector<24x1xf32>
    %15 = arith.divf %13, %14 : vector<24x1xf32>
    %16 = vector.broadcast %8 : vector<24x1xf32> to vector<24x128xf32>
    %17 = arith.subf %2, %16 : vector<24x128xf32>
    %cst_9 = arith.constant 9.99999974E-6 : f32
    %18 = vector.broadcast %cst_9 : f32 to vector<24x1xf32>
    %19 = arith.addf %15, %18 : vector<24x1xf32>
    %20 = math.rsqrt %19 : vector<24x1xf32>
    %21 = vector.broadcast %20 : vector<24x1xf32> to vector<24x128xf32>
    %22 = arith.mulf %17, %21 : vector<24x128xf32>
    %23 = vector.broadcast %3 : vector<1x128xf32> to vector<24x128xf32>
    %24 = arith.mulf %22, %23 : vector<24x128xf32>
    %25 = vector.broadcast %4 : vector<1x128xf32> to vector<24x128xf32>
    %26 = arith.addf %24, %25 : vector<24x128xf32>
    %27 = tpu.iota {dimensions = array<i32: 0>} : vector<24x128xi32>
    %c17_i32 = arith.constant 17 : i32
    %28 = vector.broadcast %c17_i32 : i32 to vector<24x128xi32>
    %29 = arith.cmpi slt, %27, %28 : vector<24x128xi32>
    %cst_10 = arith.constant 0.000000e+00 : f32
    %30 = vector.broadcast %cst_10 : f32 to vector<24x128xf32>
    %31 = arith.select %29, %26, %30 : vector<24x128xi1>, vector<24x128xf32>
    %cst_11 = arith.constant dense<0.000000e+00> : vector<128xf32>
    %32 = vector.multi_reduction <add>, %31, %cst_11 [0] : vector<24x128xf32> to vector<128xf32>
    %33 = vector.shape_cast %32 : vector<128xf32> to vector<1x128xf32>
    %cst_12 = arith.constant 0.0588235296 : f32
    %34 = vector.broadcast %cst_12 : f32 to vector<1x128xf32>
    %35 = arith.mulf %33, %34 : vector<1x128xf32>
    %36 = arith.truncf %35 : vector<1x128xf32> to vector<1x128xbf16>
    %c0_13 = arith.constant 0 : index
    %c0_14 = arith.constant 0 : index
    %37 = vector.load %arg4[%c0_13, %c0_14] : memref<128x128xbf16, #tpu.memory_space<vmem>>, vector<128x128xbf16>
    %cst_15 = arith.constant dense<0.000000e+00> : vector<1x128xf32>
    %38 = tpu.matmul %36, %37, %cst_15 {dimension_numbers = #tpu.dot_dimension_numbers<[1], [0], [0], [1], [0, 0, 1, 1], [], []>} : vector<1x128xbf16>, vector<128x128xbf16>, vector<1x128xf32> -> vector<1x128xf32>
    %c0_16 = arith.constant 0 : index
    %c0_17 = arith.constant 0 : index
    %39 = vector.load %arg5[%c0_16, %c0_17] : memref<1x128xf32, #tpu.memory_space<vmem>>, vector<1x128xf32>
    %40 = arith.addf %38, %39 : vector<1x128xf32>
    %c0_18 = arith.constant 0 : index
    %c0_19 = arith.constant 0 : index
    %c0_20 = arith.constant 0 : index
    %41 = vector.load %arg6[%c0_18, %c0_19, %c0_20] : memref<1x1x128xf32, #tpu.memory_space<vmem>>, vector<1x1x128xf32>
    %42 = vector.shape_cast %41 : vector<1x1x128xf32> to vector<1x128xf32>
    %43 = vector.shape_cast %40 : vector<1x128xf32> to vector<1x1x128xf32>
    tpu.vector_store %arg6[%c0_18, %c0_19, %c0_20], %43 {strides = array<i32>} : memref<1x1x128xf32, #tpu.memory_space<vmem>>, vector<1x1x128xf32>,
    return
  }
  func.func @transform_0(%arg0: i32) -> (i32, i32, i32) {
    %c0_i32 = arith.constant 0 : i32
    %c0_i32_0 = arith.constant 0 : i32
    %c0_i32_1 = arith.constant 0 : i32
    return %arg0, %c0_i32, %c0_i32_0 : i32, i32, i32
  }
  func.func @transform_1(%arg0: i32) -> (i32, i32) {
    %c0_i32 = arith.constant 0 : i32
    %c0_i32_0 = arith.constant 0 : i32
    %c0_i32_1 = arith.constant 0 : i32
    return %c0_i32, %c0_i32_0 : i32, i32
  }
  func.func @transform_2(%arg0: i32) -> (i32, i32) {
    %c0_i32 = arith.constant 0 : i32
    %c0_i32_0 = arith.constant 0 : i32
    %c0_i32_1 = arith.constant 0 : i32
    return %c0_i32, %c0_i32_0 : i32, i32
  }
  func.func @transform_3(%arg0: i32) -> (i32, i32) {
    %c0_i32 = arith.constant 0 : i32
    %c0_i32_0 = arith.constant 0 : i32
    %c0_i32_1 = arith.constant 0 : i32
    return %c0_i32, %c0_i32_0 : i32, i32
  }
  func.func @transform_4(%arg0: i32) -> (i32, i32) {
    %c0_i32 = arith.constant 0 : i32
    %c0_i32_0 = arith.constant 0 : i32
    %c0_i32_1 = arith.constant 0 : i32
    return %c0_i32, %c0_i32_0 : i32, i32
  }
  func.func @transform_5(%arg0: i32) -> (i32, i32, i32) {
    %c0_i32 = arith.constant 0 : i32
    %c0_i32_0 = arith.constant 0 : i32
    %c0_i32_1 = arith.constant 0 : i32
    return %arg0, %c0_i32, %c0_i32_0 : i32, i32, i32
  }
}

module attributes {stable_mosaic.version = 11 : i64} {
  func.func @_linear_kernel(%arg0: i32, %arg1: i32, %arg2: memref<32x128xbf16, #tpu.memory_space<vmem>>, %arg3: memref<128x128xbf16, #tpu.memory_space<vmem>>, %arg4: memref<1x128xf32, #tpu.memory_space<vmem>>, %arg5: memref<32x128xbf16, #tpu.memory_space<vmem>>) attributes {dimension_semantics = [#tpu.dimension_semantics<parallel>, #tpu.dimension_semantics<arbitrary>], iteration_bounds = array<i64: 1, 1>, scalar_prefetch = 0 : i64, scratch_operands = 0 : i64, tpu.core_type = #tpu.core_type<tc>, window_params = [{transform_indices = @transform_0, window_bounds = array<i64: 32, 128>}, {transform_indices = @transform_1, window_bounds = array<i64: 128, 128>}, {transform_indices = @transform_2, window_bounds = array<i64: 1, 128>}, {transform_indices = @transform_3, window_bounds = array<i64: 32, 128>}]} {
    %c0 = arith.constant 0 : index
    %c0_0 = arith.constant 0 : index
    %0 = vector.load %arg2[%c0, %c0_0] : memref<32x128xbf16, #tpu.memory_space<vmem>>, vector<32x128xbf16>
    %1 = arith.extf %0 : vector<32x128xbf16> to vector<32x128xf32>
    %2 = arith.truncf %1 : vector<32x128xf32> to vector<32x128xbf16>
    %c0_1 = arith.constant 0 : index
    %c0_2 = arith.constant 0 : index
    %3 = vector.load %arg3[%c0_1, %c0_2] : memref<128x128xbf16, #tpu.memory_space<vmem>>, vector<128x128xbf16>
    %cst = arith.constant dense<0.000000e+00> : vector<32x128xf32>
    %4 = tpu.matmul %2, %3, %cst {dimension_numbers = #tpu.dot_dimension_numbers<[1], [0], [0], [1], [0, 0, 1, 1], [], []>} : vector<32x128xbf16>, vector<128x128xbf16>, vector<32x128xf32> -> vector<32x128xf32>
    %c0_3 = arith.constant 0 : index
    %c0_4 = arith.constant 0 : index
    %5 = vector.load %arg4[%c0_3, %c0_4] : memref<1x128xf32, #tpu.memory_space<vmem>>, vector<1x128xf32>
    %6 = vector.broadcast %5 : vector<1x128xf32> to vector<32x128xf32>
    %7 = arith.addf %4, %6 : vector<32x128xf32>
    %8 = arith.truncf %7 : vector<32x128xf32> to vector<32x128xbf16>
    %c0_5 = arith.constant 0 : index
    %c0_6 = arith.constant 0 : index
    %9 = vector.load %arg5[%c0_5, %c0_6] : memref<32x128xbf16, #tpu.memory_space<vmem>>, vector<32x128xbf16>
    tpu.vector_store %arg5[%c0_5, %c0_6], %8 {strides = array<i32>} : memref<32x128xbf16, #tpu.memory_space<vmem>>, vector<32x128xbf16>,
    return
  }
  func.func @transform_0(%arg0: i32, %arg1: i32) -> (i32, i32) {
    %c0_i32 = arith.constant 0 : i32
    %c0_i32_0 = arith.constant 0 : i32
    return %arg1, %c0_i32 : i32, i32
  }
  func.func @transform_1(%arg0: i32, %arg1: i32) -> (i32, i32) {
    %c0_i32 = arith.constant 0 : i32
    %c0_i32_0 = arith.constant 0 : i32
    return %c0_i32, %arg0 : i32, i32
  }
  func.func @transform_2(%arg0: i32, %arg1: i32) -> (i32, i32) {
    %c0_i32 = arith.constant 0 : i32
    %c0_i32_0 = arith.constant 0 : i32
    return %c0_i32, %arg0 : i32, i32
  }
  func.func @transform_3(%arg0: i32, %arg1: i32) -> (i32, i32) {
    %c0_i32 = arith.constant 0 : i32
    return %arg1, %arg0 : i32, i32
  }
}

module attributes {stable_mosaic.version = 11 : i64} {
  func.func @_mlp_block_kernel(%arg0: i32, %arg1: memref<80x128xbf16, #tpu.memory_space<vmem>>, %arg2: memref<128x512xbf16, #tpu.memory_space<vmem>>, %arg3: memref<1x512xf32, #tpu.memory_space<vmem>>, %arg4: memref<512x128xbf16, #tpu.memory_space<vmem>>, %arg5: memref<1x128xf32, #tpu.memory_space<vmem>>, %arg6: memref<1x128xf32, #tpu.memory_space<vmem>>, %arg7: memref<1x128xf32, #tpu.memory_space<vmem>>, %arg8: memref<80x128xbf16, #tpu.memory_space<vmem>>) attributes {dimension_semantics = [#tpu.dimension_semantics<arbitrary>], iteration_bounds = array<i64: 1>, scalar_prefetch = 0 : i64, scratch_operands = 0 : i64, tpu.core_type = #tpu.core_type<tc>, window_params = [{transform_indices = @transform_0, window_bounds = array<i64: 80, 128>}, {pipeline_mode = #tpu.pipeline_mode<synchronous>, transform_indices = @transform_1, window_bounds = array<i64: 128, 512>}, {pipeline_mode = #tpu.pipeline_mode<synchronous>, transform_indices = @transform_2, window_bounds = array<i64: 1, 512>}, {pipeline_mode = #tpu.pipeline_mode<synchronous>, transform_indices = @transform_3, window_bounds = array<i64: 512, 128>}, {pipeline_mode = #tpu.pipeline_mode<synchronous>, transform_indices = @transform_4, window_bounds = array<i64: 1, 128>}, {pipeline_mode = #tpu.pipeline_mode<synchronous>, transform_indices = @transform_5, window_bounds = array<i64: 1, 128>}, {pipeline_mode = #tpu.pipeline_mode<synchronous>, transform_indices = @transform_6, window_bounds = array<i64: 1, 128>}, {transform_indices = @transform_7, window_bounds = array<i64: 80, 128>}]} {
    %c0 = arith.constant 0 : index
    %c0_0 = arith.constant 0 : index
    %0 = vector.load %arg1[%c0, %c0_0] : memref<80x128xbf16, #tpu.memory_space<vmem>>, vector<80x128xbf16>
    %1 = arith.extf %0 : vector<80x128xbf16> to vector<80x128xf32>
    %c0_1 = arith.constant 0 : index
    %c0_2 = arith.constant 0 : index
    %2 = vector.load %arg6[%c0_1, %c0_2] : memref<1x128xf32, #tpu.memory_space<vmem>>, vector<1x128xf32>
    %c0_3 = arith.constant 0 : index
    %c0_4 = arith.constant 0 : index
    %3 = vector.load %arg7[%c0_3, %c0_4] : memref<1x128xf32, #tpu.memory_space<vmem>>, vector<1x128xf32>
    %cst = arith.constant dense<0.000000e+00> : vector<80xf32>
    %4 = vector.multi_reduction <add>, %1, %cst [1] : vector<80x128xf32> to vector<80xf32>
    %5 = vector.shape_cast %4 : vector<80xf32> to vector<80x1xf32>
    %cst_5 = arith.constant 1.280000e+02 : f32
    %6 = vector.broadcast %cst_5 : f32 to vector<80x1xf32>
    %7 = arith.divf %5, %6 : vector<80x1xf32>
    %8 = vector.broadcast %7 : vector<80x1xf32> to vector<80x128xf32>
    %9 = arith.subf %1, %8 : vector<80x128xf32>
    %10 = arith.mulf %9, %9 : vector<80x128xf32>
    %cst_6 = arith.constant dense<0.000000e+00> : vector<80xf32>
    %11 = vector.multi_reduction <add>, %10, %cst_6 [1] : vector<80x128xf32> to vector<80xf32>
    %12 = vector.shape_cast %11 : vector<80xf32> to vector<80x1xf32>
    %cst_7 = arith.constant 1.280000e+02 : f32
    %13 = vector.broadcast %cst_7 : f32 to vector<80x1xf32>
    %14 = arith.divf %12, %13 : vector<80x1xf32>
    %15 = vector.broadcast %7 : vector<80x1xf32> to vector<80x128xf32>
    %16 = arith.subf %1, %15 : vector<80x128xf32>
    %cst_8 = arith.constant 9.99999974E-6 : f32
    %17 = vector.broadcast %cst_8 : f32 to vector<80x1xf32>
    %18 = arith.addf %14, %17 : vector<80x1xf32>
    %19 = math.rsqrt %18 : vector<80x1xf32>
    %20 = vector.broadcast %19 : vector<80x1xf32> to vector<80x128xf32>
    %21 = arith.mulf %16, %20 : vector<80x128xf32>
    %22 = vector.broadcast %2 : vector<1x128xf32> to vector<80x128xf32>
    %23 = arith.mulf %21, %22 : vector<80x128xf32>
    %24 = vector.broadcast %3 : vector<1x128xf32> to vector<80x128xf32>
    %25 = arith.addf %23, %24 : vector<80x128xf32>
    %26 = arith.truncf %25 : vector<80x128xf32> to vector<80x128xbf16>
    %c0_9 = arith.constant 0 : index
    %c0_10 = arith.constant 0 : index
    %27 = vector.load %arg2[%c0_9, %c0_10] : memref<128x512xbf16, #tpu.memory_space<vmem>>, vector<128x512xbf16>
    %cst_11 = arith.constant dense<0.000000e+00> : vector<80x512xf32>
    %28 = tpu.matmul %26, %27, %cst_11 {dimension_numbers = #tpu.dot_dimension_numbers<[1], [0], [0], [1], [0, 0, 1, 1], [], []>} : vector<80x128xbf16>, vector<128x512xbf16>, vector<80x512xf32> -> vector<80x512xf32>
    %c0_12 = arith.constant 0 : index
    %c0_13 = arith.constant 0 : index
    %29 = vector.load %arg3[%c0_12, %c0_13] : memref<1x512xf32, #tpu.memory_space<vmem>>, vector<1x512xf32>
    %30 = vector.broadcast %29 : vector<1x512xf32> to vector<80x512xf32>
    %31 = arith.addf %28, %30 : vector<80x512xf32>
    %cst_14 = arith.constant 5.000000e-01 : f32
    %32 = vector.broadcast %cst_14 : f32 to vector<80x512xf32>
    %33 = arith.mulf %32, %31 : vector<80x512xf32>
    %cst_15 = arith.constant 8.510000e-01 : f32
    %34 = vector.broadcast %cst_15 : f32 to vector<80x512xf32>
    %35 = arith.mulf %34, %31 : vector<80x512xf32>
    %36 = math.tanh %35 : vector<80x512xf32>
    %cst_16 = arith.constant 1.000000e+00 : f32
    %37 = vector.broadcast %cst_16 : f32 to vector<80x512xf32>
    %38 = arith.addf %37, %36 : vector<80x512xf32>
    %39 = arith.mulf %33, %38 : vector<80x512xf32>
    %40 = arith.truncf %39 : vector<80x512xf32> to vector<80x512xbf16>
    %c0_17 = arith.constant 0 : index
    %c0_18 = arith.constant 0 : index
    %41 = vector.load %arg4[%c0_17, %c0_18] : memref<512x128xbf16, #tpu.memory_space<vmem>>, vector<512x128xbf16>
    %cst_19 = arith.constant dense<0.000000e+00> : vector<80x128xf32>
    %42 = tpu.matmul %40, %41, %cst_19 {dimension_numbers = #tpu.dot_dimension_numbers<[1], [0], [0], [1], [0, 0, 1, 1], [], []>} : vector<80x512xbf16>, vector<512x128xbf16>, vector<80x128xf32> -> vector<80x128xf32>
    %c0_20 = arith.constant 0 : index
    %c0_21 = arith.constant 0 : index
    %43 = vector.load %arg5[%c0_20, %c0_21] : memref<1x128xf32, #tpu.memory_space<vmem>>, vector<1x128xf32>
    %44 = vector.broadcast %43 : vector<1x128xf32> to vector<80x128xf32>
    %45 = arith.addf %42, %44 : vector<80x128xf32>
    %46 = arith.addf %45, %1 : vector<80x128xf32>
    %47 = arith.truncf %46 : vector<80x128xf32> to vector<80x128xbf16>
    %c0_22 = arith.constant 0 : index
    %c0_23 = arith.constant 0 : index
    %48 = vector.load %arg8[%c0_22, %c0_23] : memref<80x128xbf16, #tpu.memory_space<vmem>>, vector<80x128xbf16>
    tpu.vector_store %arg8[%c0_22, %c0_23], %47 {strides = array<i32>} : memref<80x128xbf16, #tpu.memory_space<vmem>>, vector<80x128xbf16>,
    return
  }
  func.func @transform_0(%arg0: i32) -> (i32, i32) {
    %c0_i32 = arith.constant 0 : i32
    %c0_i32_0 = arith.constant 0 : i32
    return %arg0, %c0_i32 : i32, i32
  }
  func.func @transform_1(%arg0: i32) -> (i32, i32) {
    %c0_i32 = arith.constant 0 : i32
    %c0_i32_0 = arith.constant 0 : i32
    %c0_i32_1 = arith.constant 0 : i32
    return %c0_i32, %c0_i32_0 : i32, i32
  }
  func.func @transform_2(%arg0: i32) -> (i32, i32) {
    %c0_i32 = arith.constant 0 : i32
    %c0_i32_0 = arith.constant 0 : i32
    %c0_i32_1 = arith.constant 0 : i32
    return %c0_i32, %c0_i32_0 : i32, i32
  }
  func.func @transform_3(%arg0: i32) -> (i32, i32) {
    %c0_i32 = arith.constant 0 : i32
    %c0_i32_0 = arith.constant 0 : i32
    %c0_i32_1 = arith.constant 0 : i32
    return %c0_i32, %c0_i32_0 : i32, i32
  }
  func.func @transform_4(%arg0: i32) -> (i32, i32) {
    %c0_i32 = arith.constant 0 : i32
    %c0_i32_0 = arith.constant 0 : i32
    %c0_i32_1 = arith.constant 0 : i32
    return %c0_i32, %c0_i32_0 : i32, i32
  }
  func.func @transform_5(%arg0: i32) -> (i32, i32) {
    %c0_i32 = arith.constant 0 : i32
    %c0_i32_0 = arith.constant 0 : i32
    %c0_i32_1 = arith.constant 0 : i32
    return %c0_i32, %c0_i32_0 : i32, i32
  }
  func.func @transform_6(%arg0: i32) -> (i32, i32) {
    %c0_i32 = arith.constant 0 : i32
    %c0_i32_0 = arith.constant 0 : i32
    %c0_i32_1 = arith.constant 0 : i32
    return %c0_i32, %c0_i32_0 : i32, i32
  }
  func.func @transform_7(%arg0: i32) -> (i32, i32) {
    %c0_i32 = arith.constant 0 : i32
    %c0_i32_0 = arith.constant 0 : i32
    return %arg0, %c0_i32 : i32, i32
  }
}

module attributes {stable_mosaic.version = 11 : i64} {
  func.func @_attn_block_kernel(%arg0: i32, %arg1: memref<1x8x128xbf16, #tpu.memory_space<vmem>>, %arg2: memref<4x128x32xbf16, #tpu.memory_space<vmem>>, %arg3: memref<4x128x32xbf16, #tpu.memory_space<vmem>>, %arg4: memref<4x128x32xbf16, #tpu.memory_space<vmem>>, %arg5: memref<4x1x32xf32, #tpu.memory_space<vmem>>, %arg6: memref<4x1x32xf32, #tpu.memory_space<vmem>>, %arg7: memref<4x1x32xf32, #tpu.memory_space<vmem>>, %arg8: memref<4x32x128xbf16, #tpu.memory_space<vmem>>, %arg9: memref<1x128xf32, #tpu.memory_space<vmem>>, %arg10: memref<1x128xf32, #tpu.memory_space<vmem>>, %arg11: memref<1x128xf32, #tpu.memory_space<vmem>>, %arg12: memref<1x8x128xbf16, #tpu.memory_space<vmem>>) attributes {dimension_semantics = [#tpu.dimension_semantics<parallel>], iteration_bounds = array<i64: 10>, scalar_prefetch = 0 : i64, scratch_operands = 0 : i64, tpu.core_type = #tpu.core_type<tc>, window_params = [{transform_indices = @transform_0, window_bounds = array<i64: 1, 8, 128>}, {pipeline_mode = #tpu.pipeline_mode<synchronous>, transform_indices = @transform_1, window_bounds = array<i64: 4, 128, 32>}, {pipeline_mode = #tpu.pipeline_mode<synchronous>, transform_indices = @transform_2, window_bounds = array<i64: 4, 128, 32>}, {pipeline_mode = #tpu.pipeline_mode<synchronous>, transform_indices = @transform_3, window_bounds = array<i64: 4, 128, 32>}, {pipeline_mode = #tpu.pipeline_mode<synchronous>, transform_indices = @transform_4, window_bounds = array<i64: 4, 1, 32>}, {pipeline_mode = #tpu.pipeline_mode<synchronous>, transform_indices = @transform_5, window_bounds = array<i64: 4, 1, 32>}, {pipeline_mode = #tpu.pipeline_mode<synchronous>, transform_indices = @transform_6, window_bounds = array<i64: 4, 1, 32>}, {pipeline_mode = #tpu.pipeline_mode<synchronous>, transform_indices = @transform_7, window_bounds = array<i64: 4, 32, 128>}, {pipeline_mode = #tpu.pipeline_mode<synchronous>, transform_indices = @transform_8, window_bounds = array<i64: 1, 128>}, {pipeline_mode = #tpu.pipeline_mode<synchronous>, transform_indices = @transform_9, window_bounds = array<i64: 1, 128>}, {pipeline_mode = #tpu.pipeline_mode<synchronous>, transform_indices = @transform_10, window_bounds = array<i64: 1, 128>}, {transform_indices = @transform_11, window_bounds = array<i64: 1, 8, 128>}]} {
    %c0 = arith.constant 0 : index
    %c0_0 = arith.constant 0 : index
    %c0_1 = arith.constant 0 : index
    %0 = vector.load %arg1[%c0, %c0_0, %c0_1] : memref<1x8x128xbf16, #tpu.memory_space<vmem>>, vector<1x8x128xbf16>
    %1 = vector.shape_cast %0 : vector<1x8x128xbf16> to vector<8x128xbf16>
    %2 = arith.extf %1 : vector<8x128xbf16> to vector<8x128xf32>
    %c0_2 = arith.constant 0 : index
    %c0_3 = arith.constant 0 : index
    %3 = vector.load %arg10[%c0_2, %c0_3] : memref<1x128xf32, #tpu.memory_space<vmem>>, vector<1x128xf32>
    %c0_4 = arith.constant 0 : index
    %c0_5 = arith.constant 0 : index
    %4 = vector.load %arg11[%c0_4, %c0_5] : memref<1x128xf32, #tpu.memory_space<vmem>>, vector<1x128xf32>
    %cst = arith.constant dense<0.000000e+00> : vector<8xf32>
    %5 = vector.multi_reduction <add>, %2, %cst [1] : vector<8x128xf32> to vector<8xf32>
    %6 = vector.shape_cast %5 : vector<8xf32> to vector<8x1xf32>
    %cst_6 = arith.constant 1.280000e+02 : f32
    %7 = vector.broadcast %cst_6 : f32 to vector<8x1xf32>
    %8 = arith.divf %6, %7 : vector<8x1xf32>
    %9 = vector.broadcast %8 : vector<8x1xf32> to vector<8x128xf32>
    %10 = arith.subf %2, %9 : vector<8x128xf32>
    %11 = arith.mulf %10, %10 : vector<8x128xf32>
    %cst_7 = arith.constant dense<0.000000e+00> : vector<8xf32>
    %12 = vector.multi_reduction <add>, %11, %cst_7 [1] : vector<8x128xf32> to vector<8xf32>
    %13 = vector.shape_cast %12 : vector<8xf32> to vector<8x1xf32>
    %cst_8 = arith.constant 1.280000e+02 : f32
    %14 = vector.broadcast %cst_8 : f32 to vector<8x1xf32>
    %15 = arith.divf %13, %14 : vector<8x1xf32>
    %16 = vector.broadcast %8 : vector<8x1xf32> to vector<8x128xf32>
    %17 = arith.subf %2, %16 : vector<8x128xf32>
    %cst_9 = arith.constant 9.99999974E-6 : f32
    %18 = vector.broadcast %cst_9 : f32 to vector<8x1xf32>
    %19 = arith.addf %15, %18 : vector<8x1xf32>
    %20 = math.rsqrt %19 : vector<8x1xf32>
    %21 = vector.broadcast %20 : vector<8x1xf32> to vector<8x128xf32>
    %22 = arith.mulf %17, %21 : vector<8x128xf32>
    %23 = vector.broadcast %3 : vector<1x128xf32> to vector<8x128xf32>
    %24 = arith.mulf %22, %23 : vector<8x128xf32>
    %25 = vector.broadcast %4 : vector<1x128xf32> to vector<8x128xf32>
    %26 = arith.addf %24, %25 : vector<8x128xf32>
    %27 = arith.truncf %26 : vector<8x128xf32> to vector<8x128xbf16>
    %28 = tpu.iota {dimensions = array<i32: 1>} : vector<8x8xi32>
    %c8_i32 = arith.constant 8 : i32
    %29 = vector.broadcast %c8_i32 : i32 to vector<8x8xi32>
    %30 = arith.cmpi slt, %28, %29 : vector<8x8xi32>
    %31 = tpu.iota {dimensions = array<i32: 0>} : vector<8x8xi32>
    %32 = arith.cmpi sle, %28, %31 : vector<8x8xi32>
    %33 = arith.andi %30, %32 : vector<8x8xi1>
    %cst_10 = arith.constant 0.000000e+00 : f32
    %cst_11 = arith.constant -1.000000e+30 : f32
    %34 = vector.broadcast %cst_10 : f32 to vector<8x8xf32>
    %35 = vector.broadcast %cst_11 : f32 to vector<8x8xf32>
    %36 = arith.select %33, %34, %35 : vector<8x8xi1>, vector<8x8xf32>
    %cst_12 = arith.constant 0.000000e+00 : f32
    %37 = vector.broadcast %cst_12 : f32 to vector<8x128xf32>
    %c0_13 = arith.constant 0 : index
    %c0_14 = arith.constant 0 : index
    %c0_15 = arith.constant 0 : index
    %38 = vector.load %arg2[%c0_13, %c0_14, %c0_15] : memref<4x128x32xbf16, #tpu.memory_space<vmem>>, vector<1x128x32xbf16>
    %39 = vector.shape_cast %38 : vector<1x128x32xbf16> to vector<128x32xbf16>
    %cst_16 = arith.constant dense<0.000000e+00> : vector<8x32xf32>
    %40 = tpu.matmul %27, %39, %cst_16 {dimension_numbers = #tpu.dot_dimension_numbers<[1], [0], [0], [1], [0, 0, 1, 1], [], []>} : vector<8x128xbf16>, vector<128x32xbf16>, vector<8x32xf32> -> vector<8x32xf32>
    %c0_17 = arith.constant 0 : index
    %c0_18 = arith.constant 0 : index
    %c0_19 = arith.constant 0 : index
    %41 = vector.load %arg5[%c0_17, %c0_18, %c0_19] : memref<4x1x32xf32, #tpu.memory_space<vmem>>, vector<1x1x32xf32>
    %42 = vector.shape_cast %41 : vector<1x1x32xf32> to vector<1x32xf32>
    %43 = vector.broadcast %42 : vector<1x32xf32> to vector<8x32xf32>
    %44 = arith.addf %40, %43 : vector<8x32xf32>
    %c0_20 = arith.constant 0 : index
    %c0_21 = arith.constant 0 : index
    %c0_22 = arith.constant 0 : index
    %45 = vector.load %arg3[%c0_20, %c0_21, %c0_22] : memref<4x128x32xbf16, #tpu.memory_space<vmem>>, vector<1x128x32xbf16>
    %46 = vector.shape_cast %45 : vector<1x128x32xbf16> to vector<128x32xbf16>
    %cst_23 = arith.constant dense<0.000000e+00> : vector<8x32xf32>
    %47 = tpu.matmul %27, %46, %cst_23 {dimension_numbers = #tpu.dot_dimension_numbers<[1], [0], [0], [1], [0, 0, 1, 1], [], []>} : vector<8x128xbf16>, vector<128x32xbf16>, vector<8x32xf32> -> vector<8x32xf32>
    %c0_24 = arith.constant 0 : index
    %c0_25 = arith.constant 0 : index
    %c0_26 = arith.constant 0 : index
    %48 = vector.load %arg6[%c0_24, %c0_25, %c0_26] : memref<4x1x32xf32, #tpu.memory_space<vmem>>, vector<1x1x32xf32>
    %49 = vector.shape_cast %48 : vector<1x1x32xf32> to vector<1x32xf32>
    %50 = vector.broadcast %49 : vector<1x32xf32> to vector<8x32xf32>
    %51 = arith.addf %47, %50 : vector<8x32xf32>
    %c0_27 = arith.constant 0 : index
    %c0_28 = arith.constant 0 : index
    %c0_29 = arith.constant 0 : index
    %52 = vector.load %arg4[%c0_27, %c0_28, %c0_29] : memref<4x128x32xbf16, #tpu.memory_space<vmem>>, vector<1x128x32xbf16>
    %53 = vector.shape_cast %52 : vector<1x128x32xbf16> to vector<128x32xbf16>
    %cst_30 = arith.constant dense<0.000000e+00> : vector<8x32xf32>
    %54 = tpu.matmul %27, %53, %cst_30 {dimension_numbers = #tpu.dot_dimension_numbers<[1], [0], [0], [1], [0, 0, 1, 1], [], []>} : vector<8x128xbf16>, vector<128x32xbf16>, vector<8x32xf32> -> vector<8x32xf32>
    %c0_31 = arith.constant 0 : index
    %c0_32 = arith.constant 0 : index
    %c0_33 = arith.constant 0 : index
    %55 = vector.load %arg7[%c0_31, %c0_32, %c0_33] : memref<4x1x32xf32, #tpu.memory_space<vmem>>, vector<1x1x32xf32>
    %56 = vector.shape_cast %55 : vector<1x1x32xf32> to vector<1x32xf32>
    %57 = vector.broadcast %56 : vector<1x32xf32> to vector<8x32xf32>
    %58 = arith.addf %54, %57 : vector<8x32xf32>
    %59 = arith.truncf %44 : vector<8x32xf32> to vector<8x32xbf16>
    %60 = arith.truncf %51 : vector<8x32xf32> to vector<8x32xbf16>
    %cst_34 = arith.constant dense<0.000000e+00> : vector<8x8xf32>
    %61 = tpu.matmul %59, %60, %cst_34 {dimension_numbers = #tpu.dot_dimension_numbers<[1], [1], [0], [0], [0, 0, 1, 0], [], []>} : vector<8x32xbf16>, vector<8x32xbf16>, vector<8x8xf32> -> vector<8x8xf32>
    %cst_35 = arith.constant 0.176776692 : f32
    %62 = vector.broadcast %cst_35 : f32 to vector<8x8xf32>
    %63 = arith.mulf %61, %62 : vector<8x8xf32>
    %64 = arith.addf %63, %36 : vector<8x8xf32>
    %cst_36 = arith.constant dense<0xFF800000> : vector<8xf32>
    %65 = vector.multi_reduction <maximumf>, %64, %cst_36 [1] : vector<8x8xf32> to vector<8xf32>
    %66 = vector.shape_cast %65 : vector<8xf32> to vector<8x1xf32>
    %67 = vector.broadcast %66 : vector<8x1xf32> to vector<8x8xf32>
    %68 = arith.subf %64, %67 : vector<8x8xf32>
    %69 = math.exp %68 : vector<8x8xf32>
    %cst_37 = arith.constant dense<0.000000e+00> : vector<8xf32>
    %70 = vector.multi_reduction <add>, %69, %cst_37 [1] : vector<8x8xf32> to vector<8xf32>
    %71 = vector.shape_cast %70 : vector<8xf32> to vector<8x1xf32>
    %72 = tpu.reciprocal %71 {approx = true} : vector<8x1xf32> -> vector<8x1xf32>
    %73 = vector.broadcast %72 : vector<8x1xf32> to vector<8x8xf32>
    %74 = arith.mulf %69, %73 : vector<8x8xf32>
    %75 = arith.truncf %74 : vector<8x8xf32> to vector<8x8xbf16>
    %76 = arith.truncf %58 : vector<8x32xf32> to vector<8x32xbf16>
    %cst_38 = arith.constant dense<0.000000e+00> : vector<8x32xf32>
    %77 = tpu.matmul %75, %76, %cst_38 {dimension_numbers = #tpu.dot_dimension_numbers<[1], [0], [0], [1], [0, 0, 1, 1], [], []>} : vector<8x8xbf16>, vector<8x32xbf16>, vector<8x32xf32> -> vector<8x32xf32>
    %78 = arith.truncf %77 : vector<8x32xf32> to vector<8x32xbf16>
    %c0_39 = arith.constant 0 : index
    %c0_40 = arith.constant 0 : index
    %c0_41 = arith.constant 0 : index
    %79 = vector.load %arg8[%c0_39, %c0_40, %c0_41] : memref<4x32x128xbf16, #tpu.memory_space<vmem>>, vector<1x32x128xbf16>
    %80 = vector.shape_cast %79 : vector<1x32x128xbf16> to vector<32x128xbf16>
    %cst_42 = arith.constant dense<0.000000e+00> : vector<8x128xf32>
    %81 = tpu.matmul %78, %80, %cst_42 {dimension_numbers = #tpu.dot_dimension_numbers<[1], [0], [0], [1], [0, 0, 1, 1], [], []>} : vector<8x32xbf16>, vector<32x128xbf16>, vector<8x128xf32> -> vector<8x128xf32>
    %82 = arith.addf %37, %81 : vector<8x128xf32>
    %c1 = arith.constant 1 : index
    %c0_43 = arith.constant 0 : index
    %c0_44 = arith.constant 0 : index
    %83 = vector.load %arg2[%c1, %c0_43, %c0_44] : memref<4x128x32xbf16, #tpu.memory_space<vmem>>, vector<1x128x32xbf16>
    %84 = vector.shape_cast %83 : vector<1x128x32xbf16> to vector<128x32xbf16>
    %cst_45 = arith.constant dense<0.000000e+00> : vector<8x32xf32>
    %85 = tpu.matmul %27, %84, %cst_45 {dimension_numbers = #tpu.dot_dimension_numbers<[1], [0], [0], [1], [0, 0, 1, 1], [], []>} : vector<8x128xbf16>, vector<128x32xbf16>, vector<8x32xf32> -> vector<8x32xf32>
    %c1_46 = arith.constant 1 : index
    %c0_47 = arith.constant 0 : index
    %c0_48 = arith.constant 0 : index
    %86 = vector.load %arg5[%c1_46, %c0_47, %c0_48] : memref<4x1x32xf32, #tpu.memory_space<vmem>>, vector<1x1x32xf32>
    %87 = vector.shape_cast %86 : vector<1x1x32xf32> to vector<1x32xf32>
    %88 = vector.broadcast %87 : vector<1x32xf32> to vector<8x32xf32>
    %89 = arith.addf %85, %88 : vector<8x32xf32>
    %c1_49 = arith.constant 1 : index
    %c0_50 = arith.constant 0 : index
    %c0_51 = arith.constant 0 : index
    %90 = vector.load %arg3[%c1_49, %c0_50, %c0_51] : memref<4x128x32xbf16, #tpu.memory_space<vmem>>, vector<1x128x32xbf16>
    %91 = vector.shape_cast %90 : vector<1x128x32xbf16> to vector<128x32xbf16>
    %cst_52 = arith.constant dense<0.000000e+00> : vector<8x32xf32>
    %92 = tpu.matmul %27, %91, %cst_52 {dimension_numbers = #tpu.dot_dimension_numbers<[1], [0], [0], [1], [0, 0, 1, 1], [], []>} : vector<8x128xbf16>, vector<128x32xbf16>, vector<8x32xf32> -> vector<8x32xf32>
    %c1_53 = arith.constant 1 : index
    %c0_54 = arith.constant 0 : index
    %c0_55 = arith.constant 0 : index
    %93 = vector.load %arg6[%c1_53, %c0_54, %c0_55] : memref<4x1x32xf32, #tpu.memory_space<vmem>>, vector<1x1x32xf32>
    %94 = vector.shape_cast %93 : vector<1x1x32xf32> to vector<1x32xf32>
    %95 = vector.broadcast %94 : vector<1x32xf32> to vector<8x32xf32>
    %96 = arith.addf %92, %95 : vector<8x32xf32>
    %c1_56 = arith.constant 1 : index
    %c0_57 = arith.constant 0 : index
    %c0_58 = arith.constant 0 : index
    %97 = vector.load %arg4[%c1_56, %c0_57, %c0_58] : memref<4x128x32xbf16, #tpu.memory_space<vmem>>, vector<1x128x32xbf16>
    %98 = vector.shape_cast %97 : vector<1x128x32xbf16> to vector<128x32xbf16>
    %cst_59 = arith.constant dense<0.000000e+00> : vector<8x32xf32>
    %99 = tpu.matmul %27, %98, %cst_59 {dimension_numbers = #tpu.dot_dimension_numbers<[1], [0], [0], [1], [0, 0, 1, 1], [], []>} : vector<8x128xbf16>, vector<128x32xbf16>, vector<8x32xf32> -> vector<8x32xf32>
    %c1_60 = arith.constant 1 : index
    %c0_61 = arith.constant 0 : index
    %c0_62 = arith.constant 0 : index
    %100 = vector.load %arg7[%c1_60, %c0_61, %c0_62] : memref<4x1x32xf32, #tpu.memory_space<vmem>>, vector<1x1x32xf32>
    %101 = vector.shape_cast %100 : vector<1x1x32xf32> to vector<1x32xf32>
    %102 = vector.broadcast %101 : vector<1x32xf32> to vector<8x32xf32>
    %103 = arith.addf %99, %102 : vector<8x32xf32>
    %104 = arith.truncf %89 : vector<8x32xf32> to vector<8x32xbf16>
    %105 = arith.truncf %96 : vector<8x32xf32> to vector<8x32xbf16>
    %cst_63 = arith.constant dense<0.000000e+00> : vector<8x8xf32>
    %106 = tpu.matmul %104, %105, %cst_63 {dimension_numbers = #tpu.dot_dimension_numbers<[1], [1], [0], [0], [0, 0, 1, 0], [], []>} : vector<8x32xbf16>, vector<8x32xbf16>, vector<8x8xf32> -> vector<8x8xf32>
    %cst_64 = arith.constant 0.176776692 : f32
    %107 = vector.broadcast %cst_64 : f32 to vector<8x8xf32>
    %108 = arith.mulf %106, %107 : vector<8x8xf32>
    %109 = arith.addf %108, %36 : vector<8x8xf32>
    %cst_65 = arith.constant dense<0xFF800000> : vector<8xf32>
    %110 = vector.multi_reduction <maximumf>, %109, %cst_65 [1] : vector<8x8xf32> to vector<8xf32>
    %111 = vector.shape_cast %110 : vector<8xf32> to vector<8x1xf32>
    %112 = vector.broadcast %111 : vector<8x1xf32> to vector<8x8xf32>
    %113 = arith.subf %109, %112 : vector<8x8xf32>
    %114 = math.exp %113 : vector<8x8xf32>
    %cst_66 = arith.constant dense<0.000000e+00> : vector<8xf32>
    %115 = vector.multi_reduction <add>, %114, %cst_66 [1] : vector<8x8xf32> to vector<8xf32>
    %116 = vector.shape_cast %115 : vector<8xf32> to vector<8x1xf32>
    %117 = tpu.reciprocal %116 {approx = true} : vector<8x1xf32> -> vector<8x1xf32>
    %118 = vector.broadcast %117 : vector<8x1xf32> to vector<8x8xf32>
    %119 = arith.mulf %114, %118 : vector<8x8xf32>
    %120 = arith.truncf %119 : vector<8x8xf32> to vector<8x8xbf16>
    %121 = arith.truncf %103 : vector<8x32xf32> to vector<8x32xbf16>
    %cst_67 = arith.constant dense<0.000000e+00> : vector<8x32xf32>
    %122 = tpu.matmul %120, %121, %cst_67 {dimension_numbers = #tpu.dot_dimension_numbers<[1], [0], [0], [1], [0, 0, 1, 1], [], []>} : vector<8x8xbf16>, vector<8x32xbf16>, vector<8x32xf32> -> vector<8x32xf32>
    %123 = arith.truncf %122 : vector<8x32xf32> to vector<8x32xbf16>
    %c1_68 = arith.constant 1 : index
    %c0_69 = arith.constant 0 : index
    %c0_70 = arith.constant 0 : index
    %124 = vector.load %arg8[%c1_68, %c0_69, %c0_70] : memref<4x32x128xbf16, #tpu.memory_space<vmem>>, vector<1x32x128xbf16>
    %125 = vector.shape_cast %124 : vector<1x32x128xbf16> to vector<32x128xbf16>
    %cst_71 = arith.constant dense<0.000000e+00> : vector<8x128xf32>
    %126 = tpu.matmul %123, %125, %cst_71 {dimension_numbers = #tpu.dot_dimension_numbers<[1], [0], [0], [1], [0, 0, 1, 1], [], []>} : vector<8x32xbf16>, vector<32x128xbf16>, vector<8x128xf32> -> vector<8x128xf32>
    %127 = arith.addf %82, %126 : vector<8x128xf32>
    %c2 = arith.constant 2 : index
    %c0_72 = arith.constant 0 : index
    %c0_73 = arith.constant 0 : index
    %128 = vector.load %arg2[%c2, %c0_72, %c0_73] : memref<4x128x32xbf16, #tpu.memory_space<vmem>>, vector<1x128x32xbf16>
    %129 = vector.shape_cast %128 : vector<1x128x32xbf16> to vector<128x32xbf16>
    %cst_74 = arith.constant dense<0.000000e+00> : vector<8x32xf32>
    %130 = tpu.matmul %27, %129, %cst_74 {dimension_numbers = #tpu.dot_dimension_numbers<[1], [0], [0], [1], [0, 0, 1, 1], [], []>} : vector<8x128xbf16>, vector<128x32xbf16>, vector<8x32xf32> -> vector<8x32xf32>
    %c2_75 = arith.constant 2 : index
    %c0_76 = arith.constant 0 : index
    %c0_77 = arith.constant 0 : index
    %131 = vector.load %arg5[%c2_75, %c0_76, %c0_77] : memref<4x1x32xf32, #tpu.memory_space<vmem>>, vector<1x1x32xf32>
    %132 = vector.shape_cast %131 : vector<1x1x32xf32> to vector<1x32xf32>
    %133 = vector.broadcast %132 : vector<1x32xf32> to vector<8x32xf32>
    %134 = arith.addf %130, %133 : vector<8x32xf32>
    %c2_78 = arith.constant 2 : index
    %c0_79 = arith.constant 0 : index
    %c0_80 = arith.constant 0 : index
    %135 = vector.load %arg3[%c2_78, %c0_79, %c0_80] : memref<4x128x32xbf16, #tpu.memory_space<vmem>>, vector<1x128x32xbf16>
    %136 = vector.shape_cast %135 : vector<1x128x32xbf16> to vector<128x32xbf16>
    %cst_81 = arith.constant dense<0.000000e+00> : vector<8x32xf32>
    %137 = tpu.matmul %27, %136, %cst_81 {dimension_numbers = #tpu.dot_dimension_numbers<[1], [0], [0], [1], [0, 0, 1, 1], [], []>} : vector<8x128xbf16>, vector<128x32xbf16>, vector<8x32xf32> -> vector<8x32xf32>
    %c2_82 = arith.constant 2 : index
    %c0_83 = arith.constant 0 : index
    %c0_84 = arith.constant 0 : index
    %138 = vector.load %arg6[%c2_82, %c0_83, %c0_84] : memref<4x1x32xf32, #tpu.memory_space<vmem>>, vector<1x1x32xf32>
    %139 = vector.shape_cast %138 : vector<1x1x32xf32> to vector<1x32xf32>
    %140 = vector.broadcast %139 : vector<1x32xf32> to vector<8x32xf32>
    %141 = arith.addf %137, %140 : vector<8x32xf32>
    %c2_85 = arith.constant 2 : index
    %c0_86 = arith.constant 0 : index
    %c0_87 = arith.constant 0 : index
    %142 = vector.load %arg4[%c2_85, %c0_86, %c0_87] : memref<4x128x32xbf16, #tpu.memory_space<vmem>>, vector<1x128x32xbf16>
    %143 = vector.shape_cast %142 : vector<1x128x32xbf16> to vector<128x32xbf16>
    %cst_88 = arith.constant dense<0.000000e+00> : vector<8x32xf32>
    %144 = tpu.matmul %27, %143, %cst_88 {dimension_numbers = #tpu.dot_dimension_numbers<[1], [0], [0], [1], [0, 0, 1, 1], [], []>} : vector<8x128xbf16>, vector<128x32xbf16>, vector<8x32xf32> -> vector<8x32xf32>
    %c2_89 = arith.constant 2 : index
    %c0_90 = arith.constant 0 : index
    %c0_91 = arith.constant 0 : index
    %145 = vector.load %arg7[%c2_89, %c0_90, %c0_91] : memref<4x1x32xf32, #tpu.memory_space<vmem>>, vector<1x1x32xf32>
    %146 = vector.shape_cast %145 : vector<1x1x32xf32> to vector<1x32xf32>
    %147 = vector.broadcast %146 : vector<1x32xf32> to vector<8x32xf32>
    %148 = arith.addf %144, %147 : vector<8x32xf32>
    %149 = arith.truncf %134 : vector<8x32xf32> to vector<8x32xbf16>
    %150 = arith.truncf %141 : vector<8x32xf32> to vector<8x32xbf16>
    %cst_92 = arith.constant dense<0.000000e+00> : vector<8x8xf32>
    %151 = tpu.matmul %149, %150, %cst_92 {dimension_numbers = #tpu.dot_dimension_numbers<[1], [1], [0], [0], [0, 0, 1, 0], [], []>} : vector<8x32xbf16>, vector<8x32xbf16>, vector<8x8xf32> -> vector<8x8xf32>
    %cst_93 = arith.constant 0.176776692 : f32
    %152 = vector.broadcast %cst_93 : f32 to vector<8x8xf32>
    %153 = arith.mulf %151, %152 : vector<8x8xf32>
    %154 = arith.addf %153, %36 : vector<8x8xf32>
    %cst_94 = arith.constant dense<0xFF800000> : vector<8xf32>
    %155 = vector.multi_reduction <maximumf>, %154, %cst_94 [1] : vector<8x8xf32> to vector<8xf32>
    %156 = vector.shape_cast %155 : vector<8xf32> to vector<8x1xf32>
    %157 = vector.broadcast %156 : vector<8x1xf32> to vector<8x8xf32>
    %158 = arith.subf %154, %157 : vector<8x8xf32>
    %159 = math.exp %158 : vector<8x8xf32>
    %cst_95 = arith.constant dense<0.000000e+00> : vector<8xf32>
    %160 = vector.multi_reduction <add>, %159, %cst_95 [1] : vector<8x8xf32> to vector<8xf32>
    %161 = vector.shape_cast %160 : vector<8xf32> to vector<8x1xf32>
    %162 = tpu.reciprocal %161 {approx = true} : vector<8x1xf32> -> vector<8x1xf32>
    %163 = vector.broadcast %162 : vector<8x1xf32> to vector<8x8xf32>
    %164 = arith.mulf %159, %163 : vector<8x8xf32>
    %165 = arith.truncf %164 : vector<8x8xf32> to vector<8x8xbf16>
    %166 = arith.truncf %148 : vector<8x32xf32> to vector<8x32xbf16>
    %cst_96 = arith.constant dense<0.000000e+00> : vector<8x32xf32>
    %167 = tpu.matmul %165, %166, %cst_96 {dimension_numbers = #tpu.dot_dimension_numbers<[1], [0], [0], [1], [0, 0, 1, 1], [], []>} : vector<8x8xbf16>, vector<8x32xbf16>, vector<8x32xf32> -> vector<8x32xf32>
    %168 = arith.truncf %167 : vector<8x32xf32> to vector<8x32xbf16>
    %c2_97 = arith.constant 2 : index
    %c0_98 = arith.constant 0 : index
    %c0_99 = arith.constant 0 : index
    %169 = vector.load %arg8[%c2_97, %c0_98, %c0_99] : memref<4x32x128xbf16, #tpu.memory_space<vmem>>, vector<1x32x128xbf16>
    %170 = vector.shape_cast %169 : vector<1x32x128xbf16> to vector<32x128xbf16>
    %cst_100 = arith.constant dense<0.000000e+00> : vector<8x128xf32>
    %171 = tpu.matmul %168, %170, %cst_100 {dimension_numbers = #tpu.dot_dimension_numbers<[1], [0], [0], [1], [0, 0, 1, 1], [], []>} : vector<8x32xbf16>, vector<32x128xbf16>, vector<8x128xf32> -> vector<8x128xf32>
    %172 = arith.addf %127, %171 : vector<8x128xf32>
    %c3 = arith.constant 3 : index
    %c0_101 = arith.constant 0 : index
    %c0_102 = arith.constant 0 : index
    %173 = vector.load %arg2[%c3, %c0_101, %c0_102] : memref<4x128x32xbf16, #tpu.memory_space<vmem>>, vector<1x128x32xbf16>
    %174 = vector.shape_cast %173 : vector<1x128x32xbf16> to vector<128x32xbf16>
    %cst_103 = arith.constant dense<0.000000e+00> : vector<8x32xf32>
    %175 = tpu.matmul %27, %174, %cst_103 {dimension_numbers = #tpu.dot_dimension_numbers<[1], [0], [0], [1], [0, 0, 1, 1], [], []>} : vector<8x128xbf16>, vector<128x32xbf16>, vector<8x32xf32> -> vector<8x32xf32>
    %c3_104 = arith.constant 3 : index
    %c0_105 = arith.constant 0 : index
    %c0_106 = arith.constant 0 : index
    %176 = vector.load %arg5[%c3_104, %c0_105, %c0_106] : memref<4x1x32xf32, #tpu.memory_space<vmem>>, vector<1x1x32xf32>
    %177 = vector.shape_cast %176 : vector<1x1x32xf32> to vector<1x32xf32>
    %178 = vector.broadcast %177 : vector<1x32xf32> to vector<8x32xf32>
    %179 = arith.addf %175, %178 : vector<8x32xf32>
    %c3_107 = arith.constant 3 : index
    %c0_108 = arith.constant 0 : index
    %c0_109 = arith.constant 0 : index
    %180 = vector.load %arg3[%c3_107, %c0_108, %c0_109] : memref<4x128x32xbf16, #tpu.memory_space<vmem>>, vector<1x128x32xbf16>
    %181 = vector.shape_cast %180 : vector<1x128x32xbf16> to vector<128x32xbf16>
    %cst_110 = arith.constant dense<0.000000e+00> : vector<8x32xf32>
    %182 = tpu.matmul %27, %181, %cst_110 {dimension_numbers = #tpu.dot_dimension_numbers<[1], [0], [0], [1], [0, 0, 1, 1], [], []>} : vector<8x128xbf16>, vector<128x32xbf16>, vector<8x32xf32> -> vector<8x32xf32>
    %c3_111 = arith.constant 3 : index
    %c0_112 = arith.constant 0 : index
    %c0_113 = arith.constant 0 : index
    %183 = vector.load %arg6[%c3_111, %c0_112, %c0_113] : memref<4x1x32xf32, #tpu.memory_space<vmem>>, vector<1x1x32xf32>
    %184 = vector.shape_cast %183 : vector<1x1x32xf32> to vector<1x32xf32>
    %185 = vector.broadcast %184 : vector<1x32xf32> to vector<8x32xf32>
    %186 = arith.addf %182, %185 : vector<8x32xf32>
    %c3_114 = arith.constant 3 : index
    %c0_115 = arith.constant 0 : index
    %c0_116 = arith.constant 0 : index
    %187 = vector.load %arg4[%c3_114, %c0_115, %c0_116] : memref<4x128x32xbf16, #tpu.memory_space<vmem>>, vector<1x128x32xbf16>
    %188 = vector.shape_cast %187 : vector<1x128x32xbf16> to vector<128x32xbf16>
    %cst_117 = arith.constant dense<0.000000e+00> : vector<8x32xf32>
    %189 = tpu.matmul %27, %188, %cst_117 {dimension_numbers = #tpu.dot_dimension_numbers<[1], [0], [0], [1], [0, 0, 1, 1], [], []>} : vector<8x128xbf16>, vector<128x32xbf16>, vector<8x32xf32> -> vector<8x32xf32>
    %c3_118 = arith.constant 3 : index
    %c0_119 = arith.constant 0 : index
    %c0_120 = arith.constant 0 : index
    %190 = vector.load %arg7[%c3_118, %c0_119, %c0_120] : memref<4x1x32xf32, #tpu.memory_space<vmem>>, vector<1x1x32xf32>
    %191 = vector.shape_cast %190 : vector<1x1x32xf32> to vector<1x32xf32>
    %192 = vector.broadcast %191 : vector<1x32xf32> to vector<8x32xf32>
    %193 = arith.addf %189, %192 : vector<8x32xf32>
    %194 = arith.truncf %179 : vector<8x32xf32> to vector<8x32xbf16>
    %195 = arith.truncf %186 : vector<8x32xf32> to vector<8x32xbf16>
    %cst_121 = arith.constant dense<0.000000e+00> : vector<8x8xf32>
    %196 = tpu.matmul %194, %195, %cst_121 {dimension_numbers = #tpu.dot_dimension_numbers<[1], [1], [0], [0], [0, 0, 1, 0], [], []>} : vector<8x32xbf16>, vector<8x32xbf16>, vector<8x8xf32> -> vector<8x8xf32>
    %cst_122 = arith.constant 0.176776692 : f32
    %197 = vector.broadcast %cst_122 : f32 to vector<8x8xf32>
    %198 = arith.mulf %196, %197 : vector<8x8xf32>
    %199 = arith.addf %198, %36 : vector<8x8xf32>
    %cst_123 = arith.constant dense<0xFF800000> : vector<8xf32>
    %200 = vector.multi_reduction <maximumf>, %199, %cst_123 [1] : vector<8x8xf32> to vector<8xf32>
    %201 = vector.shape_cast %200 : vector<8xf32> to vector<8x1xf32>
    %202 = vector.broadcast %201 : vector<8x1xf32> to vector<8x8xf32>
    %203 = arith.subf %199, %202 : vector<8x8xf32>
    %204 = math.exp %203 : vector<8x8xf32>
    %cst_124 = arith.constant dense<0.000000e+00> : vector<8xf32>
    %205 = vector.multi_reduction <add>, %204, %cst_124 [1] : vector<8x8xf32> to vector<8xf32>
    %206 = vector.shape_cast %205 : vector<8xf32> to vector<8x1xf32>
    %207 = tpu.reciprocal %206 {approx = true} : vector<8x1xf32> -> vector<8x1xf32>
    %208 = vector.broadcast %207 : vector<8x1xf32> to vector<8x8xf32>
    %209 = arith.mulf %204, %208 : vector<8x8xf32>
    %210 = arith.truncf %209 : vector<8x8xf32> to vector<8x8xbf16>
    %211 = arith.truncf %193 : vector<8x32xf32> to vector<8x32xbf16>
    %cst_125 = arith.constant dense<0.000000e+00> : vector<8x32xf32>
    %212 = tpu.matmul %210, %211, %cst_125 {dimension_numbers = #tpu.dot_dimension_numbers<[1], [0], [0], [1], [0, 0, 1, 1], [], []>} : vector<8x8xbf16>, vector<8x32xbf16>, vector<8x32xf32> -> vector<8x32xf32>
    %213 = arith.truncf %212 : vector<8x32xf32> to vector<8x32xbf16>
    %c3_126 = arith.constant 3 : index
    %c0_127 = arith.constant 0 : index
    %c0_128 = arith.constant 0 : index
    %214 = vector.load %arg8[%c3_126, %c0_127, %c0_128] : memref<4x32x128xbf16, #tpu.memory_space<vmem>>, vector<1x32x128xbf16>
    %215 = vector.shape_cast %214 : vector<1x32x128xbf16> to vector<32x128xbf16>
    %cst_129 = arith.constant dense<0.000000e+00> : vector<8x128xf32>
    %216 = tpu.matmul %213, %215, %cst_129 {dimension_numbers = #tpu.dot_dimension_numbers<[1], [0], [0], [1], [0, 0, 1, 1], [], []>} : vector<8x32xbf16>, vector<32x128xbf16>, vector<8x128xf32> -> vector<8x128xf32>
    %217 = arith.addf %172, %216 : vector<8x128xf32>
    %c0_130 = arith.constant 0 : index
    %c0_131 = arith.constant 0 : index
    %218 = vector.load %arg9[%c0_130, %c0_131] : memref<1x128xf32, #tpu.memory_space<vmem>>, vector<1x128xf32>
    %219 = vector.broadcast %218 : vector<1x128xf32> to vector<8x128xf32>
    %220 = arith.addf %217, %219 : vector<8x128xf32>
    %221 = arith.addf %220, %2 : vector<8x128xf32>
    %222 = arith.truncf %221 : vector<8x128xf32> to vector<8x128xbf16>
    %c0_132 = arith.constant 0 : index
    %c0_133 = arith.constant 0 : index
    %c0_134 = arith.constant 0 : index
    %223 = vector.load %arg12[%c0_132, %c0_133, %c0_134] : memref<1x8x128xbf16, #tpu.memory_space<vmem>>, vector<1x8x128xbf16>
    %224 = vector.shape_cast %223 : vector<1x8x128xbf16> to vector<8x128xbf16>
    %225 = vector.shape_cast %222 : vector<8x128xbf16> to vector<1x8x128xbf16>
    tpu.vector_store %arg12[%c0_132, %c0_133, %c0_134], %225 {strides = array<i32>} : memref<1x8x128xbf16, #tpu.memory_space<vmem>>, vector<1x8x128xbf16>,
    return
  }
  func.func @transform_0(%arg0: i32) -> (i32, i32, i32) {
    %c0_i32 = arith.constant 0 : i32
    %c0_i32_0 = arith.constant 0 : i32
    %c0_i32_1 = arith.constant 0 : i32
    return %arg0, %c0_i32, %c0_i32_0 : i32, i32, i32
  }
  func.func @transform_1(%arg0: i32) -> (i32, i32, i32) {
    %c0_i32 = arith.constant 0 : i32
    %c0_i32_0 = arith.constant 0 : i32
    %c0_i32_1 = arith.constant 0 : i32
    %c0_i32_2 = arith.constant 0 : i32
    return %c0_i32, %c0_i32_0, %c0_i32_1 : i32, i32, i32
  }
  func.func @transform_2(%arg0: i32) -> (i32, i32, i32) {
    %c0_i32 = arith.constant 0 : i32
    %c0_i32_0 = arith.constant 0 : i32
    %c0_i32_1 = arith.constant 0 : i32
    %c0_i32_2 = arith.constant 0 : i32
    return %c0_i32, %c0_i32_0, %c0_i32_1 : i32, i32, i32
  }
  func.func @transform_3(%arg0: i32) -> (i32, i32, i32) {
    %c0_i32 = arith.constant 0 : i32
    %c0_i32_0 = arith.constant 0 : i32
    %c0_i32_1 = arith.constant 0 : i32
    %c0_i32_2 = arith.constant 0 : i32
    return %c0_i32, %c0_i32_0, %c0_i32_1 : i32, i32, i32
  }
  func.func @transform_4(%arg0: i32) -> (i32, i32, i32) {
    %c0_i32 = arith.constant 0 : i32
    %c0_i32_0 = arith.constant 0 : i32
    %c0_i32_1 = arith.constant 0 : i32
    %c0_i32_2 = arith.constant 0 : i32
    return %c0_i32, %c0_i32_0, %c0_i32_1 : i32, i32, i32
  }
  func.func @transform_5(%arg0: i32) -> (i32, i32, i32) {
    %c0_i32 = arith.constant 0 : i32
    %c0_i32_0 = arith.constant 0 : i32
    %c0_i32_1 = arith.constant 0 : i32
    %c0_i32_2 = arith.constant 0 : i32
    return %c0_i32, %c0_i32_0, %c0_i32_1 : i32, i32, i32
  }
  func.func @transform_6(%arg0: i32) -> (i32, i32, i32) {
    %c0_i32 = arith.constant 0 : i32
    %c0_i32_0 = arith.constant 0 : i32
    %c0_i32_1 = arith.constant 0 : i32
    %c0_i32_2 = arith.constant 0 : i32
    return %c0_i32, %c0_i32_0, %c0_i32_1 : i32, i32, i32
  }
  func.func @transform_7(%arg0: i32) -> (i32, i32, i32) {
    %c0_i32 = arith.constant 0 : i32
    %c0_i32_0 = arith.constant 0 : i32
    %c0_i32_1 = arith.constant 0 : i32
    %c0_i32_2 = arith.constant 0 : i32
    return %c0_i32, %c0_i32_0, %c0_i32_1 : i32, i32, i32
  }
  func.func @transform_8(%arg0: i32) -> (i32, i32) {
    %c0_i32 = arith.constant 0 : i32
    %c0_i32_0 = arith.constant 0 : i32
    %c0_i32_1 = arith.constant 0 : i32
    return %c0_i32, %c0_i32_0 : i32, i32
  }
  func.func @transform_9(%arg0: i32) -> (i32, i32) {
    %c0_i32 = arith.constant 0 : i32
    %c0_i32_0 = arith.constant 0 : i32
    %c0_i32_1 = arith.constant 0 : i32
    return %c0_i32, %c0_i32_0 : i32, i32
  }
  func.func @transform_10(%arg0: i32) -> (i32, i32) {
    %c0_i32 = arith.constant 0 : i32
    %c0_i32_0 = arith.constant 0 : i32
    %c0_i32_1 = arith.constant 0 : i32
    return %c0_i32, %c0_i32_0 : i32, i32
  }
  func.func @transform_11(%arg0: i32) -> (i32, i32, i32) {
    %c0_i32 = arith.constant 0 : i32
    %c0_i32_0 = arith.constant 0 : i32
    %c0_i32_1 = arith.constant 0 : i32
    return %arg0, %c0_i32, %c0_i32_0 : i32, i32, i32
  }
}

module attributes {stable_mosaic.version = 11 : i64} {
  func.func @_linear_kernel(%arg0: i32, %arg1: i32, %arg2: memref<16x128xbf16, #tpu.memory_space<vmem>>, %arg3: memref<128x128xbf16, #tpu.memory_space<vmem>>, %arg4: memref<1x128xf32, #tpu.memory_space<vmem>>, %arg5: memref<1x128xf32, #tpu.memory_space<vmem>>, %arg6: memref<1x128xf32, #tpu.memory_space<vmem>>, %arg7: memref<16x128xbf16, #tpu.memory_space<vmem>>) attributes {dimension_semantics = [#tpu.dimension_semantics<parallel>, #tpu.dimension_semantics<arbitrary>], iteration_bounds = array<i64: 1, 1>, scalar_prefetch = 0 : i64, scratch_operands = 0 : i64, tpu.core_type = #tpu.core_type<tc>, window_params = [{transform_indices = @transform_0, window_bounds = array<i64: 16, 128>}, {transform_indices = @transform_1, window_bounds = array<i64: 128, 128>}, {transform_indices = @transform_2, window_bounds = array<i64: 1, 128>}, {pipeline_mode = #tpu.pipeline_mode<synchronous>, transform_indices = @transform_3, window_bounds = array<i64: 1, 128>}, {pipeline_mode = #tpu.pipeline_mode<synchronous>, transform_indices = @transform_4, window_bounds = array<i64: 1, 128>}, {transform_indices = @transform_5, window_bounds = array<i64: 16, 128>}]} {
    %c0 = arith.constant 0 : index
    %c0_0 = arith.constant 0 : index
    %0 = vector.load %arg2[%c0, %c0_0] : memref<16x128xbf16, #tpu.memory_space<vmem>>, vector<16x128xbf16>
    %1 = arith.extf %0 : vector<16x128xbf16> to vector<16x128xf32>
    %c0_1 = arith.constant 0 : index
    %c0_2 = arith.constant 0 : index
    %2 = vector.load %arg5[%c0_1, %c0_2] : memref<1x128xf32, #tpu.memory_space<vmem>>, vector<1x128xf32>
    %c0_3 = arith.constant 0 : index
    %c0_4 = arith.constant 0 : index
    %3 = vector.load %arg6[%c0_3, %c0_4] : memref<1x128xf32, #tpu.memory_space<vmem>>, vector<1x128xf32>
    %cst = arith.constant dense<0.000000e+00> : vector<16xf32>
    %4 = vector.multi_reduction <add>, %1, %cst [1] : vector<16x128xf32> to vector<16xf32>
    %5 = vector.shape_cast %4 : vector<16xf32> to vector<16x1xf32>
    %cst_5 = arith.constant 1.280000e+02 : f32
    %6 = vector.broadcast %cst_5 : f32 to vector<16x1xf32>
    %7 = arith.divf %5, %6 : vector<16x1xf32>
    %8 = vector.broadcast %7 : vector<16x1xf32> to vector<16x128xf32>
    %9 = arith.subf %1, %8 : vector<16x128xf32>
    %10 = arith.mulf %9, %9 : vector<16x128xf32>
    %cst_6 = arith.constant dense<0.000000e+00> : vector<16xf32>
    %11 = vector.multi_reduction <add>, %10, %cst_6 [1] : vector<16x128xf32> to vector<16xf32>
    %12 = vector.shape_cast %11 : vector<16xf32> to vector<16x1xf32>
    %cst_7 = arith.constant 1.280000e+02 : f32
    %13 = vector.broadcast %cst_7 : f32 to vector<16x1xf32>
    %14 = arith.divf %12, %13 : vector<16x1xf32>
    %15 = vector.broadcast %7 : vector<16x1xf32> to vector<16x128xf32>
    %16 = arith.subf %1, %15 : vector<16x128xf32>
    %cst_8 = arith.constant 9.99999974E-6 : f32
    %17 = vector.broadcast %cst_8 : f32 to vector<16x1xf32>
    %18 = arith.addf %14, %17 : vector<16x1xf32>
    %19 = math.rsqrt %18 : vector<16x1xf32>
    %20 = vector.broadcast %19 : vector<16x1xf32> to vector<16x128xf32>
    %21 = arith.mulf %16, %20 : vector<16x128xf32>
    %22 = vector.broadcast %2 : vector<1x128xf32> to vector<16x128xf32>
    %23 = arith.mulf %21, %22 : vector<16x128xf32>
    %24 = vector.broadcast %3 : vector<1x128xf32> to vector<16x128xf32>
    %25 = arith.addf %23, %24 : vector<16x128xf32>
    %26 = arith.truncf %25 : vector<16x128xf32> to vector<16x128xbf16>
    %c0_9 = arith.constant 0 : index
    %c0_10 = arith.constant 0 : index
    %27 = vector.load %arg3[%c0_9, %c0_10] : memref<128x128xbf16, #tpu.memory_space<vmem>>, vector<128x128xbf16>
    %cst_11 = arith.constant dense<0.000000e+00> : vector<16x128xf32>
    %28 = tpu.matmul %26, %27, %cst_11 {dimension_numbers = #tpu.dot_dimension_numbers<[1], [0], [0], [1], [0, 0, 1, 1], [], []>} : vector<16x128xbf16>, vector<128x128xbf16>, vector<16x128xf32> -> vector<16x128xf32>
    %c0_12 = arith.constant 0 : index
    %c0_13 = arith.constant 0 : index
    %29 = vector.load %arg4[%c0_12, %c0_13] : memref<1x128xf32, #tpu.memory_space<vmem>>, vector<1x128xf32>
    %30 = vector.broadcast %29 : vector<1x128xf32> to vector<16x128xf32>
    %31 = arith.addf %28, %30 : vector<16x128xf32>
    %32 = arith.truncf %31 : vector<16x128xf32> to vector<16x128xbf16>
    %c0_14 = arith.constant 0 : index
    %c0_15 = arith.constant 0 : index
    %33 = vector.load %arg7[%c0_14, %c0_15] : memref<16x128xbf16, #tpu.memory_space<vmem>>, vector<16x128xbf16>
    tpu.vector_store %arg7[%c0_14, %c0_15], %32 {strides = array<i32>} : memref<16x128xbf16, #tpu.memory_space<vmem>>, vector<16x128xbf16>,
    return
  }
  func.func @transform_0(%arg0: i32, %arg1: i32) -> (i32, i32) {
    %c0_i32 = arith.constant 0 : i32
    %c0_i32_0 = arith.constant 0 : i32
    return %arg1, %c0_i32 : i32, i32
  }
  func.func @transform_1(%arg0: i32, %arg1: i32) -> (i32, i32) {
    %c0_i32 = arith.constant 0 : i32
    %c0_i32_0 = arith.constant 0 : i32
    return %c0_i32, %arg0 : i32, i32
  }
  func.func @transform_2(%arg0: i32, %arg1: i32) -> (i32, i32) {
    %c0_i32 = arith.constant 0 : i32
    %c0_i32_0 = arith.constant 0 : i32
    return %c0_i32, %arg0 : i32, i32
  }
  func.func @transform_3(%arg0: i32, %arg1: i32) -> (i32, i32) {
    %c0_i32 = arith.constant 0 : i32
    %c0_i32_0 = arith.constant 0 : i32
    %c0_i32_1 = arith.constant 0 : i32
    return %c0_i32, %c0_i32_0 : i32, i32
  }
  func.func @transform_4(%arg0: i32, %arg1: i32) -> (i32, i32) {
    %c0_i32 = arith.constant 0 : i32
    %c0_i32_0 = arith.constant 0 : i32
    %c0_i32_1 = arith.constant 0 : i32
    return %c0_i32, %c0_i32_0 : i32, i32
  }
  func.func @transform_5(%arg0: i32, %arg1: i32) -> (i32, i32) {
    %c0_i32 = arith.constant 0 : i32
    return %arg1, %arg0 : i32, i32
  }
}

module attributes {stable_mosaic.version = 11 : i64} {
  func.func @_logits_kernel(%arg0: i32, %arg1: memref<1x1x128xf32, #tpu.memory_space<vmem>>, %arg2: memref<1x128x128xbf16, #tpu.memory_space<vmem>>, %arg3: memref<1x1xf32, #tpu.memory_space<vmem>>, %arg4: memref<1x1x128xf32, #tpu.memory_space<vmem>>) attributes {dimension_semantics = [#tpu.dimension_semantics<parallel>], iteration_bounds = array<i64: 2>, scalar_prefetch = 0 : i64, scratch_operands = 0 : i64, tpu.core_type = #tpu.core_type<tc>, window_params = [{transform_indices = @transform_0, window_bounds = array<i64: 1, 1, 128>}, {transform_indices = @transform_1, window_bounds = array<i64: 1, 128, 128>}, {pipeline_mode = #tpu.pipeline_mode<synchronous>, transform_indices = @transform_2, window_bounds = array<i64: 1, 1>}, {transform_indices = @transform_3, window_bounds = array<i64: 1, 1, 128>}]} {
    %c0 = arith.constant 0 : index
    %c0_0 = arith.constant 0 : index
    %c0_1 = arith.constant 0 : index
    %0 = vector.load %arg1[%c0, %c0_0, %c0_1] : memref<1x1x128xf32, #tpu.memory_space<vmem>>, vector<1x1x128xf32>
    %1 = vector.shape_cast %0 : vector<1x1x128xf32> to vector<1x128xf32>
    %c0_2 = arith.constant 0 : index
    %c0_3 = arith.constant 0 : index
    %c0_4 = arith.constant 0 : index
    %2 = vector.load %arg2[%c0_2, %c0_3, %c0_4] : memref<1x128x128xbf16, #tpu.memory_space<vmem>>, vector<1x128x128xbf16>
    %3 = vector.shape_cast %2 : vector<1x128x128xbf16> to vector<128x128xbf16>
    %4 = arith.extf %3 : vector<128x128xbf16> to vector<128x128xf32>
    %5 = arith.mulf %1, %1 : vector<1x128xf32>
    %cst = arith.constant dense<0.000000e+00> : vector<1xf32>
    %6 = vector.multi_reduction <add>, %5, %cst [1] : vector<1x128xf32> to vector<1xf32>
    %7 = vector.shape_cast %6 : vector<1xf32> to vector<1x1xf32>
    %cst_5 = arith.constant 9.99999996E-13 : f32
    %8 = vector.broadcast %cst_5 : f32 to vector<1x1xf32>
    %9 = arith.addf %7, %8 : vector<1x1xf32>
    %10 = math.rsqrt %9 : vector<1x1xf32>
    %11 = vector.broadcast %10 : vector<1x1xf32> to vector<1x128xf32>
    %12 = arith.mulf %1, %11 : vector<1x128xf32>
    %13 = arith.mulf %4, %4 : vector<128x128xf32>
    %cst_6 = arith.constant dense<0.000000e+00> : vector<128xf32>
    %14 = vector.multi_reduction <add>, %13, %cst_6 [1] : vector<128x128xf32> to vector<128xf32>
    %15 = vector.shape_cast %14 : vector<128xf32> to vector<128x1xf32>
    %cst_7 = arith.constant 9.99999996E-13 : f32
    %16 = vector.broadcast %cst_7 : f32 to vector<128x1xf32>
    %17 = arith.addf %15, %16 : vector<128x1xf32>
    %18 = math.rsqrt %17 : vector<128x1xf32>
    %19 = vector.broadcast %18 : vector<128x1xf32> to vector<128x128xf32>
    %20 = arith.mulf %4, %19 : vector<128x128xf32>
    %cst_8 = arith.constant dense<0.000000e+00> : vector<1x128xf32>
    %21 = tpu.matmul %12, %20, %cst_8 {dimension_numbers = #tpu.dot_dimension_numbers<[1], [1], [0], [0], [0, 0, 1, 0], [], []>} : vector<1x128xf32>, vector<128x128xf32>, vector<1x128xf32> -> vector<1x128xf32>
    %c0_9 = arith.constant 0 : index
    %c0_10 = arith.constant 0 : index
    %22 = vector.load %arg3[%c0_9, %c0_10] : memref<1x1xf32, #tpu.memory_space<vmem>>, vector<1x1xf32>
    %23 = vector.extract %22[0, 0] : f32 from vector<1x1xf32>
    %24 = vector.broadcast %23 : f32 to vector<1x128xf32>
    %25 = arith.mulf %24, %21 : vector<1x128xf32>
    %c0_11 = arith.constant 0 : index
    %c0_12 = arith.constant 0 : index
    %c0_13 = arith.constant 0 : index
    %26 = vector.load %arg4[%c0_11, %c0_12, %c0_13] : memref<1x1x128xf32, #tpu.memory_space<vmem>>, vector<1x1x128xf32>
    %27 = vector.shape_cast %26 : vector<1x1x128xf32> to vector<1x128xf32>
    %28 = vector.shape_cast %25 : vector<1x128xf32> to vector<1x1x128xf32>
    tpu.vector_store %arg4[%c0_11, %c0_12, %c0_13], %28 {strides = array<i32>} : memref<1x1x128xf32, #tpu.memory_space<vmem>>, vector<1x1x128xf32>,
    return
  }
  func.func @transform_0(%arg0: i32) -> (i32, i32, i32) {
    %c0_i32 = arith.constant 0 : i32
    %c0_i32_0 = arith.constant 0 : i32
    %c0_i32_1 = arith.constant 0 : i32
    return %arg0, %c0_i32, %c0_i32_0 : i32, i32, i32
  }
  func.func @transform_1(%arg0: i32) -> (i32, i32, i32) {
    %c0_i32 = arith.constant 0 : i32
    %c0_i32_0 = arith.constant 0 : i32
    %c0_i32_1 = arith.constant 0 : i32
    return %arg0, %c0_i32, %c0_i32_0 : i32, i32, i32
  }
  func.func @transform_2(%arg0: i32) -> (i32, i32) {
    %c0_i32 = arith.constant 0 : i32
    %c0_i32_0 = arith.constant 0 : i32
    %c0_i32_1 = arith.constant 0 : i32
    return %c0_i32, %c0_i32_0 : i32, i32
  }
  func.func @transform_3(%arg0: i32) -> (i32, i32, i32) {
    %c0_i32 = arith.constant 0 : i32
    %c0_i32_0 = arith.constant 0 : i32
    %c0_i32_1 = arith.constant 0 : i32
    return %arg0, %c0_i32, %c0_i32_0 : i32, i32, i32
  }
}

</mosaic_0001>

<llo_original>
// kernel: tcclip_forward.15
$region0: #{tcclip_forward.15}
  #allocation0 [shape = 'u32[]', space=smem, size = 0x4, offset = 0x4, fixed_abs, tag = 'smem constant byte address 0x4 - core index']
  #allocation1 [shape = 'u32[72,128]{1,0:T(1,128)}', space=vmem, size = 0x9000, scoped, tag = 'internal scratch']
  %s0 = inlined_call_operand.vmem [shape: bf16[32,192], index: 0, kind: input, shape index: {}]
  %s1 = inlined_call_operand.vmem [shape: bf16[192,128], index: 1, kind: input, shape index: {}]
  %s2 = inlined_call_operand.vmem [shape: f32[1,128], index: 2, kind: input, shape index: {}]
  %s3 = inlined_call_operand.vmem [shape: bf16[32,128], index: 3, kind: output, shape index: {}]
  %s4 = sld [smem:[#allocation0]]
  $region22: #{tcclip_forward.15} parent=0
    _
  %s6 = ssub.s32 1, %s4
  %s7 = scalar_select 0, %s6, %s4
  // Predicated region
  $region2: #{tcclip_forward.15} parent=0 // pred_check
    _
  $region3: #{tcclip_forward.15} parent=0 // pred_check_branch
    %9 = sbr.rel (0) target = $region5
  $region4: #{tcclip_forward.15} parent=0 // pred_region
    _
  $region5: #{tcclip_forward.15} parent=0 // pred_fallthru
    _
  // Predicated region
  $region6: #{tcclip_forward.15} parent=0 // pred_check
    _
  $region7: #{tcclip_forward.15} parent=0 // pred_check_branch
    %11 = sbr.rel (0) target = $region9
  $region8: #{tcclip_forward.15} parent=0 // pred_region
    _
  $region9: #{tcclip_forward.15} parent=0 // pred_fallthru
    _
  // Predicated region
  $region10: #{tcclip_forward.15} parent=0 // pred_check
    _
  $region11: #{tcclip_forward.15} parent=0 // pred_check_branch
    %13 = sbr.rel (0) target = $region13
  $region12: #{tcclip_forward.15} parent=0 // pred_region
    _
  $region13: #{tcclip_forward.15} parent=0 // pred_fallthru
    _
  %v15 = vld [vmem:[%s0] sm:$0xff]
  %v16 = vld [vmem:[%s0 + $0x8] sm:$0xff]
  %v17 = vld [vmem:[%s0 + $0x10] sm:$0xff]
  %v18 = vld [vmem:[%s0 + $0x18] sm:$0xff]
  %v19 = vld [vmem:[%s1] sm:$0xf]
  %v20 = vld [vmem:[%s1 + $0x4] sm:$0xf]
  %v21 = vld [vmem:[%s1 + $0x8] sm:$0xf]
  %v22 = vld [vmem:[%s1 + $0xc] sm:$0xf]
  %v23 = vld [vmem:[%s1 + $0x10] sm:$0xf]
  %v24 = vld [vmem:[%s1 + $0x14] sm:$0xf]
  %v25 = vld [vmem:[%s1 + $0x18] sm:$0xf]
  %v26 = vld [vmem:[%s1 + $0x1c] sm:$0xf]
  %v27 = vld [vmem:[%s1 + $0x20] sm:$0xf]
  %v28 = vld [vmem:[%s1 + $0x24] sm:$0xf]
  %v29 = vld [vmem:[%s1 + $0x28] sm:$0xf]
  %v30 = vld [vmem:[%s1 + $0x2c] sm:$0xf]
  %v31 = vld [vmem:[%s1 + $0x30] sm:$0xf]
  %v32 = vld [vmem:[%s1 + $0x34] sm:$0xf]
  %v33 = vld [vmem:[%s1 + $0x38] sm:$0xf]
  %v34 = vld [vmem:[%s1 + $0x3c] sm:$0xf]
  %v35 = vld [vmem:[%s1 + $0x40] sm:$0xf]
  %v36 = vld [vmem:[%s1 + $0x44] sm:$0xf]
  %v37 = vld [vmem:[%s1 + $0x48] sm:$0xf]
  %v38 = vld [vmem:[%s1 + $0x4c] sm:$0xf]
  %v39 = vld [vmem:[%s1 + $0x50] sm:$0xf]
  %v40 = vld [vmem:[%s1 + $0x54] sm:$0xf]
  %v41 = vld [vmem:[%s1 + $0x58] sm:$0xf]
  %v42 = vld [vmem:[%s1 + $0x5c] sm:$0xf]
  %v43 = vld [vmem:[%s2] sm:$0x1]
  %v45 = vperm.slane %v43, 0
  %v51 = vunpack.c.l.b16 %v15
  %v52 = vunpack.c.h.b16 %v15
  %v53 = vunpack.c.l.b16 %v16
  %v54 = vunpack.c.h.b16 %v16
  %v55 = vunpack.c.l.b16 %v17
  %v56 = vunpack.c.h.b16 %v17
  %v57 = vunpack.c.l.b16 %v18
  %v58 = vunpack.c.h.b16 %v18
  %v59 = vpack.c.b16 %v53, %v51
  %v60 = vpack.c.b16 %v54, %v52
  %v61 = vpack.c.b16 %v57, %v55
  %v62 = vpack.c.b16 %v58, %v56
  %v89 = vunpack.c.l.b16 %v19
  %v90 = vunpack.c.l.b16 %v20
  %v91 = vunpack.c.l.b16 %v21
  %v92 = vunpack.c.l.b16 %v22
  %v93 = vunpack.c.l.b16 %v23
  %v94 = vunpack.c.l.b16 %v24
  %v95 = vunpack.c.l.b16 %v25
  %v96 = vunpack.c.l.b16 %v26
  %v97 = vunpack.c.l.b16 %v27
  %v98 = vunpack.c.l.b16 %v28
  %v99 = vunpack.c.l.b16 %v29
  %v100 = vunpack.c.l.b16 %v30
  %v101 = vunpack.c.l.b16 %v31
  %v102 = vunpack.c.l.b16 %v32
  %v103 = vunpack.c.l.b16 %v33
  %v104 = vunpack.c.l.b16 %v34
  %v105 = vunpack.c.l.b16 %v35
  %v106 = vunpack.c.l.b16 %v36
  %v107 = vunpack.c.l.b16 %v37
  %v108 = vunpack.c.l.b16 %v38
  %v109 = vunpack.c.l.b16 %v39
  %v110 = vunpack.c.l.b16 %v40
  %v111 = vunpack.c.l.b16 %v41
  %v112 = vunpack.c.l.b16 %v42
  %v113 = vpack.c.b16 %v90, %v89
  %v114 = vpack.c.b16 %v92, %v91
  %v115 = vpack.c.b16 %v94, %v93
  %v116 = vpack.c.b16 %v96, %v95
  %v117 = vpack.c.b16 %v98, %v97
  %v118 = vpack.c.b16 %v100, %v99
  %v119 = vpack.c.b16 %v102, %v101
  %v120 = vpack.c.b16 %v104, %v103
  %v121 = vpack.c.b16 %v106, %v105
  %v122 = vpack.c.b16 %v108, %v107
  %v123 = vpack.c.b16 %v110, %v109
  %v124 = vpack.c.b16 %v112, %v111
  %vm137 = vcmask 523264
  %v139 = vsel %vm137, %v60, 0
  %v142 = vsel %vm137, %v62, 0
  %144 = vmatpush.bf16.msra.mxu0 %v120
  %145 = vmatpush.bf16.msra.mxu0 %v119
  %146 = vmatpush.bf16.msra.mxu0 %v118
  %147 = vmatpush.bf16.msra.mxu0 %v117
  %148 = vmatpush.bf16.msra.mxu0 %v116
  %149 = vmatpush.bf16.msra.mxu0 %v115
  %150 = vmatpush.bf16.msra.mxu0 %v114
  %151 = vmatpush.bf16.msra.mxu0 %v113
  %152 = vmatmul.bf16.gmra.mxu0 %v59
  %v153 = vpop.f32.mrf.mxu0
  %v154 = vadd.f32 %v45, %v153
  %v155 = vpop.f32.mrf.mxu0
  %v156 = vadd.f32 %v45, %v155
  %157 = vmatmul.bf16.gmra.mxu0 %v61
  %v158 = vpop.f32.mrf.mxu0
  %v159 = vadd.f32 %v45, %v158
  %v160 = vpop.f32.mrf.mxu0
  %v161 = vadd.f32 %v45, %v160
  %162 = vdwg.mxu0
  %163 = vmatpush.bf16.msra.mxu0 0
  %164 = vmatpush.bf16.msra.mxu0 0
  %165 = vmatpush.bf16.msra.mxu0 0
  %166 = vmatpush.bf16.msra.mxu0 0
  %167 = vmatpush.bf16.msra.mxu0 %v124
  %168 = vmatpush.bf16.msra.mxu0 %v123
  %169 = vmatpush.bf16.msra.mxu0 %v122
  %170 = vmatpush.bf16.msra.mxu0 %v121
  %171 = vmatmul.bf16.gmra.mxu0 %v139
  %v172 = vpop.f32.mrf.mxu0
  %v173 = vadd.f32 %v154, %v172
  %v174 = vpop.f32.mrf.mxu0
  %v175 = vadd.f32 %v156, %v174
  %176 = vmatmul.bf16.gmra.mxu0 %v142
  %v177 = vpop.f32.mrf.mxu0
  %v178 = vadd.f32 %v159, %v177
  %v179 = vpop.f32.mrf.mxu0
  %v180 = vadd.f32 %v161, %v179
  %181 = vdwg.mxu0
  %v182 = vpack.c.bf16 %v173, %v173
  %v183 = vpack.c.bf16 %v175, %v175
  %v184 = vpack.c.bf16 %v178, %v178
  %v185 = vpack.c.bf16 %v180, %v180
  %186 = vst [vmem:[%s3] sm:$0xf] %v182
  %187 = vst [vmem:[%s3 + $0x4] sm:$0xf] %v183
  %188 = vst [vmem:[%s3 + $0x8] sm:$0xf] %v184
  %189 = vst [vmem:[%s3 + $0xc] sm:$0xf] %v185
  // Predicated region
  $region14: #{tcclip_forward.15} parent=0 // pred_check
    _
  $region15: #{tcclip_forward.15} parent=0 // pred_check_branch
    %191 = sbr.rel (0) target = $region17
  $region16: #{tcclip_forward.15} parent=0 // pred_region
    _
  $region17: #{tcclip_forward.15} parent=0 // pred_fallthru
    _
  // Predicated region
  $region18: #{tcclip_forward.15} parent=0 // pred_check
    _
  $region19: #{tcclip_forward.15} parent=0 // pred_check_branch
    %193 = sbr.rel (0) target = $region21
  $region20: #{tcclip_forward.15} parent=0 // pred_region
    _
  $region21: #{tcclip_forward.15} parent=0 // pred_fallthru
    _

// kernel: tcclip_forward.22
$region0: #{tcclip_forward.22}
  #allocation0 [shape = 'u32[]', space=smem, size = 0x4, offset = 0x4, fixed_abs, tag = 'smem constant byte address 0x4 - core index']
  #allocation1 [shape = 'u32[72,128]{1,0:T(1,128)}', space=vmem, size = 0x9000, scoped, tag = 'internal scratch']
  %s0 = inlined_call_operand.vmem [shape: bf16[2,24,128], index: 0, kind: input, shape index: {}]
  %s1 = inlined_call_operand.vmem [shape: f32[1,128], index: 1, kind: input, shape index: {}]
  %s2 = inlined_call_operand.vmem [shape: f32[1,128], index: 2, kind: input, shape index: {}]
  %s3 = inlined_call_operand.vmem [shape: bf16[128,128], index: 3, kind: input, shape index: {}]
  %s4 = inlined_call_operand.vmem [shape: f32[1,128], index: 4, kind: input, shape index: {}]
  %s5 = inlined_call_operand.vmem [shape: f32[2,1,128], index: 5, kind: output, shape index: {}]
  %s6 = sld [smem:[#allocation0]]
  $region53: #{tcclip_forward.22} parent=0
    _
  %s8 = ssub.s32 1, %s6
  %s9 = scalar_select 0, %s8, %s6
  loop: start=0, step=1, limit=4
  $region2: #{tcclip_forward.22} parent=0 // loop_pre_header
    _
  $region3: #{tcclip_forward.22} parent=0 // loop_header
    %s11 = sphi 0, %s15
    %p12 = scmp.ge.s32.totalorder %s11, 4
    %s21 = sphi 0, %s23
    %s24 = sphi 0, %s21
    %s25 = sphi 0, %s24
    %s41 = sphi 0, %s25
    %s45 = sphi 0, %s45
    %s47 = sphi 0, %s45
    %s48 = sphi 0, %s47
    %s62 = sphi 0, %s48
    %s66 = sphi 0, %s66
    %s68 = sphi 0, %s66
    %s69 = sphi 0, %s68
    %s83 = sphi 0, %s69
    %s87 = sphi 0, %s87
    %s89 = sphi 0, %s87
    %s90 = sphi 0, %s89
    %s104 = sphi 0, %s90
    %s108 = sphi 0, %s108
    %s110 = sphi 0, %s108
    %s111 = sphi 0, %s110
    %s125 = sphi 0, %s111
    %s131 = sphi 0, %s133
    %s134 = sphi 0, %s131
    %s135 = sphi 0, %s134
    %s151 = sphi 0, %s135
  $region4: #{tcclip_forward.22} parent=0 // loop_header_branch
    %14 = sbr.rel (%p12) target = $region8
  $region5: #{tcclip_forward.22} parent=0 // loop_body
    %s16 = ssub.s32 %s11, 1
    %s17 = ssub.s32 %s11, 2
    %s18 = sadd.s32 %s11, 1
    %s19 = ssub.s32 %s11, %s18
    %p20 = scmp.eq.s32.totalorder %s19, 0
    %s22 = sadd.s32 %s21, 1
    %s23 = scalar_select %p20, %s21, %s22
    %p26 = pneg %p20
    %p27 = scmp.eq.s32.totalorder %s11, 1
    %p28 = por %p26, %p27
    %p29 = scmp.ne.s32.totalorder %s21, %s24
    %p30 = scmp.eq.s32.totalorder %s11, 0
    %p31 = por %p29, %p30
    %p32 = scmp.ne.s32.totalorder %s21, %s24
    %p33 = scmp.eq.s32.totalorder %s16, 1
    %p34 = por %p32, %p33
    %p35 = scmp.ne.s32.totalorder %s24, %s25
    %p36 = scmp.eq.s32.totalorder %s16, 0
    %p37 = por %p35, %p36
    %p38 = scmp.ne.s32.totalorder %s24, %s25
    %p39 = scmp.eq.s32.totalorder %s17, 1
    %p40 = por %p38, %p39
    %p42 = scmp.ne.s32.totalorder %s25, %s41
    %p43 = scmp.eq.s32.totalorder %s17, 0
    %p44 = por %p42, %p43
    %s46 = sadd.s32 %s45, 1
    %p49 = scmp.eq.s32.totalorder %s11, 1
    %p50 = scmp.ne.s32.totalorder %s45, %s47
    %p51 = scmp.eq.s32.totalorder %s11, 0
    %p52 = por %p50, %p51
    %p53 = scmp.ne.s32.totalorder %s45, %s47
    %p54 = scmp.eq.s32.totalorder %s16, 1
    %p55 = por %p53, %p54
    %p56 = scmp.ne.s32.totalorder %s47, %s48
    %p57 = scmp.eq.s32.totalorder %s16, 0
    %p58 = por %p56, %p57
    %p59 = scmp.ne.s32.totalorder %s47, %s48
    %p60 = scmp.eq.s32.totalorder %s17, 1
    %p61 = por %p59, %p60
    %p63 = scmp.ne.s32.totalorder %s48, %s62
    %p64 = scmp.eq.s32.totalorder %s17, 0
    %p65 = por %p63, %p64
    %s67 = sadd.s32 %s66, 1
    %p70 = scmp.eq.s32.totalorder %s11, 1
    %p71 = scmp.ne.s32.totalorder %s66, %s68
    %p72 = scmp.eq.s32.totalorder %s11, 0
    %p73 = por %p71, %p72
    %p74 = scmp.ne.s32.totalorder %s66, %s68
    %p75 = scmp.eq.s32.totalorder %s16, 1
    %p76 = por %p74, %p75
    %p77 = scmp.ne.s32.totalorder %s68, %s69
    %p78 = scmp.eq.s32.totalorder %s16, 0
    %p79 = por %p77, %p78
    %p80 = scmp.ne.s32.totalorder %s68, %s69
    %p81 = scmp.eq.s32.totalorder %s17, 1
    %p82 = por %p80, %p81
    %p84 = scmp.ne.s32.totalorder %s69, %s83
    %p85 = scmp.eq.s32.totalorder %s17, 0
    %p86 = por %p84, %p85
    %s88 = sadd.s32 %s87, 1
    %p91 = scmp.eq.s32.totalorder %s11, 1
    %p92 = scmp.ne.s32.totalorder %s87, %s89
    %p93 = scmp.eq.s32.totalorder %s11, 0
    %p94 = por %p92, %p93
    %p95 = scmp.ne.s32.totalorder %s87, %s89
    %p96 = scmp.eq.s32.totalorder %s16, 1
    %p97 = por %p95, %p96
    %p98 = scmp.ne.s32.totalorder %s89, %s90
    %p99 = scmp.eq.s32.totalorder %s16, 0
    %p100 = por %p98, %p99
    %p101 = scmp.ne.s32.totalorder %s89, %s90
    %p102 = scmp.eq.s32.totalorder %s17, 1
    %p103 = por %p101, %p102
    %p105 = scmp.ne.s32.totalorder %s90, %s104
    %p106 = scmp.eq.s32.totalorder %s17, 0
    %p107 = por %p105, %p106
    %s109 = sadd.s32 %s108, 1
    %p112 = scmp.eq.s32.totalorder %s11, 1
    %p113 = scmp.ne.s32.totalorder %s108, %s110
    %p114 = scmp.eq.s32.totalorder %s11, 0
    %p115 = por %p113, %p114
    %p116 = scmp.ne.s32.totalorder %s108, %s110
    %p117 = scmp.eq.s32.totalorder %s16, 1
    %p118 = por %p116, %p117
    %p119 = scmp.ne.s32.totalorder %s110, %s111
    %p120 = scmp.eq.s32.totalorder %s16, 0
    %p121 = por %p119, %p120
    %p122 = scmp.ne.s32.totalorder %s110, %s111
    %p123 = scmp.eq.s32.totalorder %s17, 1
    %p124 = por %p122, %p123
    %p126 = scmp.ne.s32.totalorder %s111, %s125
    %p127 = scmp.eq.s32.totalorder %s17, 0
    %p128 = por %p126, %p127
    %s129 = ssub.s32 %s11, %s18
    %p130 = scmp.eq.s32.totalorder %s129, 0
    %s132 = sadd.s32 %s131, 1
    %s133 = scalar_select %p130, %s131, %s132
    %p136 = pneg %p130
    %p137 = scmp.eq.s32.totalorder %s11, 1
    %p138 = por %p136, %p137
    %p139 = scmp.ne.s32.totalorder %s131, %s134
    %p140 = scmp.eq.s32.totalorder %s11, 0
    %p141 = por %p139, %p140
    %p142 = scmp.ne.s32.totalorder %s131, %s134
    %p143 = scmp.eq.s32.totalorder %s16, 1
    %p144 = por %p142, %p143
    %p145 = scmp.ne.s32.totalorder %s134, %s135
    %p146 = scmp.eq.s32.totalorder %s16, 0
    %p147 = por %p145, %p146
    %p148 = scmp.ne.s32.totalorder %s134, %s135
    %p149 = scmp.eq.s32.totalorder %s17, 1
    %p150 = por %p148, %p149
    %p152 = scmp.ne.s32.totalorder %s135, %s151
    %p153 = scmp.eq.s32.totalorder %s17, 0
    %p154 = por %p152, %p153
    %p155 = scmp.le.s32.totalorder 1, %s11
    %p156 = scmp.lt.s32.totalorder %s11, 3
    %p157 = pnand %p155, %p156
    %p158 = pneg %p157
    // Predicated region
    $region9: #{tcclip_forward.22} parent=5 // pred_check
      _
    $region10: #{tcclip_forward.22} parent=5 // pred_check_branch
      %160 = sbr.rel (%p157) target = $region12
    $region11: #{tcclip_forward.22} parent=5 // pred_region
      %s161 = ssub.s32 %s11, 1
      // Predicated region
      $region13: #{tcclip_forward.22} parent=11 // pred_check
        %p162 = pneg %p58
      $region14: #{tcclip_forward.22} parent=11 // pred_check_branch
        %164 = sbr.rel (%p162) target = $region16
      $region15: #{tcclip_forward.22} parent=11 // pred_region
        _
      $region16: #{tcclip_forward.22} parent=11 // pred_fallthru
        _
      // Predicated region
      $region17: #{tcclip_forward.22} parent=11 // pred_check
        %p165 = pneg %p79
      $region18: #{tcclip_forward.22} parent=11 // pred_check_branch
        %167 = sbr.rel (%p165) target = $region20
      $region19: #{tcclip_forward.22} parent=11 // pred_region
        _
      $region20: #{tcclip_forward.22} parent=11 // pred_fallthru
        _
      // Predicated region
      $region21: #{tcclip_forward.22} parent=11 // pred_check
        %p168 = pneg %p100
      $region22: #{tcclip_forward.22} parent=11 // pred_check_branch
        %170 = sbr.rel (%p168) target = $region24
      $region23: #{tcclip_forward.22} parent=11 // pred_region
        _
      $region24: #{tcclip_forward.22} parent=11 // pred_fallthru
        _
      // Predicated region
      $region25: #{tcclip_forward.22} parent=11 // pred_check
        %p171 = pneg %p121
      $region26: #{tcclip_forward.22} parent=11 // pred_check_branch
        %173 = sbr.rel (%p171) target = $region28
      $region27: #{tcclip_forward.22} parent=11 // pred_region
        _
      $region28: #{tcclip_forward.22} parent=11 // pred_fallthru
        _
    $region12: #{tcclip_forward.22} parent=5 // pred_fallthru
      _
    %p174 = scmp.lt.s32.totalorder %s11, 2
    // Predicated region
    $region29: #{tcclip_forward.22} parent=5 // pred_check
      %p175 = pneg %p174
    $region30: #{tcclip_forward.22} parent=5 // pred_check_branch
      %177 = sbr.rel (%p175) target = $region32
    $region31: #{tcclip_forward.22} parent=5 // pred_region
      // Predicated region
      $region33: #{tcclip_forward.22} parent=31 // pred_check
        %p178 = pneg %p31
      $region34: #{tcclip_forward.22} parent=31 // pred_check_branch
        %180 = sbr.rel (%p178) target = $region36
      $region35: #{tcclip_forward.22} parent=31 // pred_region
        %p181 = scmp.lt.s32.totalorder %s11, 1
        %s182 = scalar_select %p181, %s11, 1
        %s183 = smul.addr %s182, 3
        %s184 = smul.addr %s183, 4
        %s185 = scalar_lea.vmem %s0, %s184
      $region36: #{tcclip_forward.22} parent=31 // pred_fallthru
        _
    $region32: #{tcclip_forward.22} parent=5 // pred_fallthru
      _
    %p186 = scmp.le.s32.totalorder 1, %s11
    %p187 = scmp.lt.s32.totalorder %s11, 3
    %p188 = pnand %p186, %p187
    %p189 = pneg %p188
    // Predicated region
    $region37: #{tcclip_forward.22} parent=5 // pred_check
      _
    $region38: #{tcclip_forward.22} parent=5 // pred_check_branch
      %191 = sbr.rel (%p188) target = $region40
    $region39: #{tcclip_forward.22} parent=5 // pred_region
      %s192 = ssub.s32 %s11, 1
      %p193 = scmp.lt.s32.totalorder %s16, 1
      %s194 = scalar_select %p193, %s16, 1
      %s195 = smul.addr %s194, 3
      %s196 = smul.addr %s195, 4
      %s197 = scalar_lea.vmem %s0, %s196
      %p198 = pneg %p37
      %p199 = pneg %p34
      %p200 = pneg %p58
      %p201 = pneg %p55
      %p202 = pneg %p79
      %p203 = pneg %p76
      %p204 = pneg %p100
      %p205 = pneg %p97
      %p206 = pneg %p121
      %p207 = pneg %p118
      %p208 = pneg %p147
      %p209 = pneg %p144
      %p210 = scmp.lt.s32.totalorder %s16, 1
      %s211 = scalar_select %p210, %s16, 1
      %s212 = scalar_lea.vmem %s5, %s211
      %p213 = scmp.lt.s32.totalorder %s16, 1
      %s214 = scalar_select %p213, %s16, 1
      %s215 = smul.addr %s214, 3
      %s216 = smul.addr %s215, 4
      %s217 = scalar_lea.vmem %s0, %s216
      %p218 = scmp.lt.s32.totalorder %s16, 1
      %s219 = scalar_select %p218, %s16, 1
      %s220 = scalar_lea.vmem %s5, %s219
      %v221 = vld [vmem:[%s217] sm:$0xf]
      %v222 = vld [vmem:[%s217 + $0x4] sm:$0xf]
      %v223 = vld [vmem:[%s217 + $0x8] sm:$0xf]
      %v224 = vunpack.c.l.bf16 %v221
      %v225 = vunpack.c.l.bf16 %v222
      %v226 = vunpack.c.l.bf16 %v223
      %v227 = vld [vmem:[%s1] sm:$0x1]
      %v228 = vld [vmem:[%s2] sm:$0x1]
      %229 = vadd.xlane.f32.xlu0 %v224
      %v230 = vpop.xlane.xlu0 %229
      %231 = vadd.xlane.f32.xlu0 %v225
      %v232 = vpop.xlane.xlu0 %231
      %233 = vadd.xlane.f32.xlu0 %v226
      %v234 = vpop.xlane.xlu0 %233
      %v235 = vrcp.pop 128.0
      %v236 = vmul.f32 128.0, %v235
      %v237 = vsub.f32 1.0, %v236
      %v238 = vmul.f32 %v235, %v237
      %v239 = vadd.f32 %v235, %v238
      %vm240 = vweird.f32 %v235
      %v241 = vsel %vm240, %v235, %v239
      %v242 = vmul.f32 %v230, %v241
      %v243 = vmul.f32 %v232, %v241
      %v244 = vmul.f32 %v234, %v241
      %v245 = vsub.f32 %v224, %v242
      %v246 = vsub.f32 %v225, %v243
      %v247 = vsub.f32 %v226, %v244
      %v248 = vmul.f32 %v245, %v245
      %v249 = vmul.f32 %v246, %v246
      %v250 = vmul.f32 %v247, %v247
      %251 = vadd.xlane.f32.xlu0 %v248
      %v252 = vpop.xlane.xlu0 %251
      %253 = vadd.xlane.f32.xlu0 %v249
      %v254 = vpop.xlane.xlu0 %253
      %255 = vadd.xlane.f32.xlu0 %v250
      %v256 = vpop.xlane.xlu0 %255
      %v257 = vmul.f32 %v252, %v241
      %v258 = vmul.f32 %v254, %v241
      %v259 = vmul.f32 %v256, %v241
      %v260 = vadd.f32 %v257, 1e-05
      %v261 = vadd.f32 %v258, 1e-05
      %v262 = vadd.f32 %v259, 1e-05
      %v263 = vrsqrt.pop %v260
      %v264 = vmul.f32 %v263, %v260
      %v265 = vmul.f32 %v264, %v263
      %v266 = vmul.f32 0.5, %v265
      %v267 = vsub.f32 1.5, %v266
      %v268 = vmul.f32 %v263, %v267
      %vm269 = vweird.f32 %v260
      %vm270 = vweird.f32 %v263
      %vm271 = vmor %vm269, %vm270
      %v272 = vsel %vm271, %v263, %v268
      %v273 = vrsqrt.pop %v261
      %v274 = vmul.f32 %v273, %v261
      %v275 = vmul.f32 %v274, %v273
      %v276 = vmul.f32 0.5, %v275
      %v277 = vsub.f32 1.5, %v276
      %v278 = vmul.f32 %v273, %v277
      %vm279 = vweird.f32 %v261
      %vm280 = vweird.f32 %v273
      %vm281 = vmor %vm279, %vm280
      %v282 = vsel %vm281, %v273, %v278
      %v283 = vrsqrt.pop %v262
      %v284 = vmul.f32 %v283, %v262
      %v285 = vmul.f32 %v284, %v283
      %v286 = vmul.f32 0.5, %v285
      %v287 = vsub.f32 1.5, %v286
      %v288 = vmul.f32 %v283, %v287
      %vm289 = vweird.f32 %v262
      %vm290 = vweird.f32 %v283
      %vm291 = vmor %vm289, %vm290
      %v292 = vsel %vm291, %v283, %v288
      %v293 = vmul.f32 %v245, %v272
      %v294 = vmul.f32 %v246, %v282
      %v295 = vmul.f32 %v247, %v292
      %v297 = vperm.slane %v227, 0
      %v299 = vmul.f32 %v293, %v297
      %v300 = vmul.f32 %v294, %v297
      %v301 = vmul.f32 %v295, %v297
      %v303 = vperm.slane %v228, 0
      %v305 = vadd.f32 %v299, %v303
      %v306 = vadd.f32 %v300, %v303
      %v307 = vadd.f32 %v301, %v303
      %v308 = vlaneseq
      %v309 = vshrl.u32 %v308, 7
      %v310 = vadd.s32 %v309, 8
      %v311 = vadd.s32 %v309, 16
      %vm312 = vcmp.lt.s32.totalorder %v309, 17
      %vm313 = vcmp.lt.s32.totalorder %v310, 17
      %vm314 = vcmp.lt.s32.totalorder %v311, 17
      %v315 = vsel %vm312, %v305, 0.0
      %v316 = vsel %vm313, %v306, 0.0
      %v317 = vsel %vm314, %v307, 0.0
      %v318 = vadd.f32 %v315, %v316
      %v319 = vadd.f32 %v318, %v317
      %v320 = vrot.slane %v319, 4
      %v321 = vadd.f32 %v319, %v320
      %v322 = vrot.slane %v321, 2
      %v323 = vadd.f32 %v321, %v322
      %v324 = vrot.slane %v323, 1
      %v325 = vadd.f32 %v323, %v324
      %v326 = vmul.f32 %v325, 0.05882353
      %v327 = vpack.c.bf16 %v326, %v326
      %v328 = vld [vmem:[%s3] sm:$0xf]
      %v329 = vld [vmem:[%s3 + $0x4] sm:$0xf]
      %v330 = vld [vmem:[%s3 + $0x8] sm:$0xf]
      %v331 = vld [vmem:[%s3 + $0xc] sm:$0xf]
      %v332 = vld [vmem:[%s3 + $0x10] sm:$0xf]
      %v333 = vld [vmem:[%s3 + $0x14] sm:$0xf]
      %v334 = vld [vmem:[%s3 + $0x18] sm:$0xf]
      %v335 = vld [vmem:[%s3 + $0x1c] sm:$0xf]
      %v336 = vld [vmem:[%s3 + $0x20] sm:$0xf]
      %v337 = vld [vmem:[%s3 + $0x24] sm:$0xf]
      %v338 = vld [vmem:[%s3 + $0x28] sm:$0xf]
      %v339 = vld [vmem:[%s3 + $0x2c] sm:$0xf]
      %v340 = vld [vmem:[%s3 + $0x30] sm:$0xf]
      %v341 = vld [vmem:[%s3 + $0x34] sm:$0xf]
      %v342 = vld [vmem:[%s3 + $0x38] sm:$0xf]
      %v343 = vld [vmem:[%s3 + $0x3c] sm:$0xf]
      %v344 = vld [vmem:[%s4] sm:$0x1]
      %v361 = vunpack.c.l.b16 %v328
      %v362 = vunpack.c.l.b16 %v329
      %v363 = vunpack.c.l.b16 %v330
      %v364 = vunpack.c.l.b16 %v331
      %v365 = vunpack.c.l.b16 %v332
      %v366 = vunpack.c.l.b16 %v333
      %v367 = vunpack.c.l.b16 %v334
      %v368 = vunpack.c.l.b16 %v335
      %v369 = vunpack.c.l.b16 %v336
      %v370 = vunpack.c.l.b16 %v337
      %v371 = vunpack.c.l.b16 %v338
      %v372 = vunpack.c.l.b16 %v339
      %v373 = vunpack.c.l.b16 %v340
      %v374 = vunpack.c.l.b16 %v341
      %v375 = vunpack.c.l.b16 %v342
      %v376 = vunpack.c.l.b16 %v343
      %v377 = vpack.c.b16 %v362, %v361
      %v378 = vpack.c.b16 %v364, %v363
      %v379 = vpack.c.b16 %v366, %v365
      %v380 = vpack.c.b16 %v368, %v367
      %v381 = vpack.c.b16 %v370, %v369
      %v382 = vpack.c.b16 %v372, %v371
      %v383 = vpack.c.b16 %v374, %v373
      %v384 = vpack.c.b16 %v376, %v375
      %393 = vmatpush.bf16.msra.mxu0 %v384
      %394 = vmatpush.bf16.msra.mxu0 %v383
      %395 = vmatpush.bf16.msra.mxu0 %v382
      %396 = vmatpush.bf16.msra.mxu0 %v381
      %397 = vmatpush.bf16.msra.mxu0 %v380
      %398 = vmatpush.bf16.msra.mxu0 %v379
      %399 = vmatpush.bf16.msra.mxu0 %v378
      %400 = vmatpush.bf16.msra.mxu0 %v377
      %401 = vmatmul.bf16.gmra.mxu0 %v327
      %v402 = vpop.f32.mrf.mxu0
      %v403 = vadd.f32 %v344, %v402
      %v404 = vpop.f32.mrf.mxu0
      %405 = vdwg.mxu0
      %406 = vst [vmem:[%s220] sm:$0x1] %v403
      %p407 = scmp.lt.s32.totalorder %s16, 1
      %s408 = scalar_select %p407, %s16, 1
      %s409 = scalar_lea.vmem %s5, %s408
      // Predicated region
      $region41: #{tcclip_forward.22} parent=39 // pred_check
        %p410 = pneg %p144
      $region42: #{tcclip_forward.22} parent=39 // pred_check_branch
        %412 = sbr.rel (%p410) target = $region44
      $region43: #{tcclip_forward.22} parent=39 // pred_region
        _
      $region44: #{tcclip_forward.22} parent=39 // pred_fallthru
        _
    $region40: #{tcclip_forward.22} parent=5 // pred_fallthru
      _
    %p413 = scmp.le.s32.totalorder 2, %s11
    // Predicated region
    $region45: #{tcclip_forward.22} parent=5 // pred_check
      %p414 = pneg %p413
    $region46: #{tcclip_forward.22} parent=5 // pred_check_branch
      %416 = sbr.rel (%p414) target = $region48
    $region47: #{tcclip_forward.22} parent=5 // pred_region
      %s417 = ssub.s32 %s11, 2
      // Predicated region
      $region49: #{tcclip_forward.22} parent=47 // pred_check
        %p418 = pneg %p150
      $region50: #{tcclip_forward.22} parent=47 // pred_check_branch
        %420 = sbr.rel (%p418) target = $region52
      $region51: #{tcclip_forward.22} parent=47 // pred_region
        %p421 = scmp.lt.s32.totalorder %s17, 1
        %s422 = scalar_select %p421, %s17, 1
        %s423 = scalar_lea.vmem %s5, %s422
      $region52: #{tcclip_forward.22} parent=47 // pred_fallthru
        _
    $region48: #{tcclip_forward.22} parent=5 // pred_fallthru
      _
  $region6: #{tcclip_forward.22} parent=0 // loop_footer
    %s15 = sadd.s32 1, %s11
  $region7: #{tcclip_forward.22} parent=0 // loop_footer_branch
    %10 = sbr.rel target = $region3
  $region8: #{tcclip_forward.22} parent=0 // loop_exit
    _

// kernel: tcclip_forward.17
$region0: #{tcclip_forward.17}
  #allocation0 [shape = 'u32[]', space=smem, size = 0x4, offset = 0x4, fixed_abs, tag = 'smem constant byte address 0x4 - core index']
  #allocation1 [shape = 'u32[72,128]{1,0:T(1,128)}', space=vmem, size = 0x9000, scoped, tag = 'internal scratch']
  %s0 = inlined_call_operand.vmem [shape: bf16[48,128], index: 0, kind: input, shape index: {}]
  %s1 = inlined_call_operand.vmem [shape: bf16[128,512], index: 1, kind: input, shape index: {}]
  %s2 = inlined_call_operand.vmem [shape: f32[1,512], index: 2, kind: input, shape index: {}]
  %s3 = inlined_call_operand.vmem [shape: bf16[512,128], index: 3, kind: input, shape index: {}]
  %s4 = inlined_call_operand.vmem [shape: f32[1,128], index: 4, kind: input, shape index: {}]
  %s5 = inlined_call_operand.vmem [shape: f32[1,128], index: 5, kind: input, shape index: {}]
  %s6 = inlined_call_operand.vmem [shape: f32[1,128], index: 6, kind: input, shape index: {}]
  %s7 = inlined_call_operand.vmem [shape: bf16[48,128], index: 7, kind: output, shape index: {}]
  %s8 = sld [smem:[#allocation0]]
  $region38: #{tcclip_forward.17} parent=0
    _
  %s10 = ssub.s32 1, %s8
  %s11 = scalar_select 0, %s10, %s8
  // Predicated region
  $region2: #{tcclip_forward.17} parent=0 // pred_check
    _
  $region3: #{tcclip_forward.17} parent=0 // pred_check_branch
    %13 = sbr.rel (0) target = $region5
  $region4: #{tcclip_forward.17} parent=0 // pred_region
    _
  $region5: #{tcclip_forward.17} parent=0 // pred_fallthru
    _
  // Predicated region
  $region6: #{tcclip_forward.17} parent=0 // pred_check
    _
  $region7: #{tcclip_forward.17} parent=0 // pred_check_branch
    %15 = sbr.rel (0) target = $region9
  $region8: #{tcclip_forward.17} parent=0 // pred_region
    _
  $region9: #{tcclip_forward.17} parent=0 // pred_fallthru
    _
  // Predicated region
  $region10: #{tcclip_forward.17} parent=0 // pred_check
    _
  $region11: #{tcclip_forward.17} parent=0 // pred_check_branch
    %17 = sbr.rel (0) target = $region13
  $region12: #{tcclip_forward.17} parent=0 // pred_region
    _
  $region13: #{tcclip_forward.17} parent=0 // pred_fallthru
    _
  // Predicated region
  $region14: #{tcclip_forward.17} parent=0 // pred_check
    _
  $region15: #{tcclip_forward.17} parent=0 // pred_check_branch
    %19 = sbr.rel (0) target = $region17
  $region16: #{tcclip_forward.17} parent=0 // pred_region
    _
  $region17: #{tcclip_forward.17} parent=0 // pred_fallthru
    _
  // Predicated region
  $region18: #{tcclip_forward.17} parent=0 // pred_check
    _
  $region19: #{tcclip_forward.17} parent=0 // pred_check_branch
    %21 = sbr.rel (0) target = $region21
  $region20: #{tcclip_forward.17} parent=0 // pred_region
    _
  $region21: #{tcclip_forward.17} parent=0 // pred_fallthru
    _
  // Predicated region
  $region22: #{tcclip_forward.17} parent=0 // pred_check
    _
  $region23: #{tcclip_forward.17} parent=0 // pred_check_branch
    %23 = sbr.rel (0) target = $region25
  $region24: #{tcclip_forward.17} parent=0 // pred_region
    _
  $region25: #{tcclip_forward.17} parent=0 // pred_fallthru
    _
  // Predicated region
  $region26: #{tcclip_forward.17} parent=0 // pred_check
    _
  $region27: #{tcclip_forward.17} parent=0 // pred_check_branch
    %25 = sbr.rel (0) target = $region29
  $region28: #{tcclip_forward.17} parent=0 // pred_region
    _
  $region29: #{tcclip_forward.17} parent=0 // pred_fallthru
    _
  %v26 = vld [vmem:[%s0] sm:$0xf]
  %v27 = vld [vmem:[%s0 + $0x4] sm:$0xf]
  %v28 = vld [vmem:[%s0 + $0x8] sm:$0xf]
  %v29 = vld [vmem:[%s0 + $0xc] sm:$0xf]
  %v30 = vld [vmem:[%s0 + $0x10] sm:$0xf]
  %v31 = vld [vmem:[%s0 + $0x14] sm:$0xf]
  %v32 = vunpack.c.l.bf16 %v26
  %v33 = vunpack.c.l.bf16 %v27
  %v34 = vunpack.c.l.bf16 %v28
  %v35 = vunpack.c.l.bf16 %v29
  %v36 = vunpack.c.l.bf16 %v30
  %v37 = vunpack.c.l.bf16 %v31
  %v38 = vld [vmem:[%s5] sm:$0x1]
  %v39 = vld [vmem:[%s6] sm:$0x1]
  %40 = vadd.xlane.f32.xlu0 %v32
  %v41 = vpop.xlane.xlu0 %40
  %42 = vadd.xlane.f32.xlu0 %v33
  %v43 = vpop.xlane.xlu0 %42
  %44 = vadd.xlane.f32.xlu0 %v34
  %v45 = vpop.xlane.xlu0 %44
  %46 = vadd.xlane.f32.xlu0 %v35
  %v47 = vpop.xlane.xlu0 %46
  %48 = vadd.xlane.f32.xlu0 %v36
  %v49 = vpop.xlane.xlu0 %48
  %50 = vadd.xlane.f32.xlu0 %v37
  %v51 = vpop.xlane.xlu0 %50
  %v52 = vrcp.pop 128.0
  %v53 = vmul.f32 128.0, %v52
  %v54 = vsub.f32 1.0, %v53
  %v55 = vmul.f32 %v52, %v54
  %v56 = vadd.f32 %v52, %v55
  %vm57 = vweird.f32 %v52
  %v58 = vsel %vm57, %v52, %v56
  %v59 = vmul.f32 %v41, %v58
  %v60 = vmul.f32 %v43, %v58
  %v61 = vmul.f32 %v45, %v58
  %v62 = vmul.f32 %v47, %v58
  %v63 = vmul.f32 %v49, %v58
  %v64 = vmul.f32 %v51, %v58
  %v65 = vsub.f32 %v32, %v59
  %v66 = vsub.f32 %v33, %v60
  %v67 = vsub.f32 %v34, %v61
  %v68 = vsub.f32 %v35, %v62
  %v69 = vsub.f32 %v36, %v63
  %v70 = vsub.f32 %v37, %v64
  %v71 = vmul.f32 %v65, %v65
  %v72 = vmul.f32 %v66, %v66
  %v73 = vmul.f32 %v67, %v67
  %v74 = vmul.f32 %v68, %v68
  %v75 = vmul.f32 %v69, %v69
  %v76 = vmul.f32 %v70, %v70
  %77 = vadd.xlane.f32.xlu0 %v71
  %v78 = vpop.xlane.xlu0 %77
  %79 = vadd.xlane.f32.xlu0 %v72
  %v80 = vpop.xlane.xlu0 %79
  %81 = vadd.xlane.f32.xlu0 %v73
  %v82 = vpop.xlane.xlu0 %81
  %83 = vadd.xlane.f32.xlu0 %v74
  %v84 = vpop.xlane.xlu0 %83
  %85 = vadd.xlane.f32.xlu0 %v75
  %v86 = vpop.xlane.xlu0 %85
  %87 = vadd.xlane.f32.xlu0 %v76
  %v88 = vpop.xlane.xlu0 %87
  %v89 = vmul.f32 %v78, %v58
  %v90 = vmul.f32 %v80, %v58
  %v91 = vmul.f32 %v82, %v58
  %v92 = vmul.f32 %v84, %v58
  %v93 = vmul.f32 %v86, %v58
  %v94 = vmul.f32 %v88, %v58
  %v95 = vadd.f32 %v89, 1e-05
  %v96 = vadd.f32 %v90, 1e-05
  %v97 = vadd.f32 %v91, 1e-05
  %v98 = vadd.f32 %v92, 1e-05
  %v99 = vadd.f32 %v93, 1e-05
  %v100 = vadd.f32 %v94, 1e-05
  %v101 = vrsqrt.pop %v95
  %v102 = vmul.f32 %v101, %v95
  %v103 = vmul.f32 %v102, %v101
  %v104 = vmul.f32 0.5, %v103
  %v105 = vsub.f32 1.5, %v104
  %v106 = vmul.f32 %v101, %v105
  %vm107 = vweird.f32 %v95
  %vm108 = vweird.f32 %v101
  %vm109 = vmor %vm107, %vm108
  %v110 = vsel %vm109, %v101, %v106
  %v111 = vrsqrt.pop %v96
  %v112 = vmul.f32 %v111, %v96
  %v113 = vmul.f32 %v112, %v111
  %v114 = vmul.f32 0.5, %v113
  %v115 = vsub.f32 1.5, %v114
  %v116 = vmul.f32 %v111, %v115
  %vm117 = vweird.f32 %v96
  %vm118 = vweird.f32 %v111
  %vm119 = vmor %vm117, %vm118
  %v120 = vsel %vm119, %v111, %v116
  %v121 = vrsqrt.pop %v97
  %v122 = vmul.f32 %v121, %v97
  %v123 = vmul.f32 %v122, %v121
  %v124 = vmul.f32 0.5, %v123
  %v125 = vsub.f32 1.5, %v124
  %v126 = vmul.f32 %v121, %v125
  %vm127 = vweird.f32 %v97
  %vm128 = vweird.f32 %v121
  %vm129 = vmor %vm127, %vm128
  %v130 = vsel %vm129, %v121, %v126
  %v131 = vrsqrt.pop %v98
  %v132 = vmul.f32 %v131, %v98
  %v133 = vmul.f32 %v132, %v131
  %v134 = vmul.f32 0.5, %v133
  %v135 = vsub.f32 1.5, %v134
  %v136 = vmul.f32 %v131, %v135
  %vm137 = vweird.f32 %v98
  %vm138 = vweird.f32 %v131
  %vm139 = vmor %vm137, %vm138
  %v140 = vsel %vm139, %v131, %v136
  %v141 = vrsqrt.pop %v99
  %v142 = vmul.f32 %v141, %v99
  %v143 = vmul.f32 %v142, %v141
  %v144 = vmul.f32 0.5, %v143
  %v145 = vsub.f32 1.5, %v144
  %v146 = vmul.f32 %v141, %v145
  %vm147 = vweird.f32 %v99
  %vm148 = vweird.f32 %v141
  %vm149 = vmor %vm147, %vm148
  %v150 = vsel %vm149, %v141, %v146
  %v151 = vrsqrt.pop %v100
  %v152 = vmul.f32 %v151, %v100
  %v153 = vmul.f32 %v152, %v151
  %v154 = vmul.f32 0.5, %v153
  %v155 = vsub.f32 1.5, %v154
  %v156 = vmul.f32 %v151, %v155
  %vm157 = vweird.f32 %v100
  %vm158 = vweird.f32 %v151
  %vm159 = vmor %vm157, %vm158
  %v160 = vsel %vm159, %v151, %v156
  %v161 = vmul.f32 %v65, %v110
  %v162 = vmul.f32 %v66, %v120
  %v163 = vmul.f32 %v67, %v130
  %v164 = vmul.f32 %v68, %v140
  %v165 = vmul.f32 %v69, %v150
  %v166 = vmul.f32 %v70, %v160
  %v168 = vperm.slane %v38, 0
  %v170 = vmul.f32 %v161, %v168
  %v171 = vmul.f32 %v162, %v168
  %v172 = vmul.f32 %v163, %v168
  %v173 = vmul.f32 %v164, %v168
  %v174 = vmul.f32 %v165, %v168
  %v175 = vmul.f32 %v166, %v168
  %v177 = vperm.slane %v39, 0
  %v179 = vadd.f32 %v170, %v177
  %v180 = vadd.f32 %v171, %v177
  %v181 = vadd.f32 %v172, %v177
  %v182 = vadd.f32 %v173, %v177
  %v183 = vadd.f32 %v174, %v177
  %v184 = vadd.f32 %v175, %v177
  %v185 = vpack.c.bf16 %v180, %v179
  %v186 = vpack.c.bf16 %v182, %v181
  %v187 = vpack.c.bf16 %v184, %v183
  %v188 = vld [vmem:[%s1] sm:$0xff]
  %v189 = vld [vmem:[%s1 + $0x8] sm:$0xff]
  %v190 = vld [vmem:[%s1 + $0x10] sm:$0xff]
  %v191 = vld [vmem:[%s1 + $0x18] sm:$0xff]
  %v192 = vld [vmem:[%s1 + $0x20] sm:$0xff]
  %v193 = vld [vmem:[%s1 + $0x28] sm:$0xff]
  %v194 = vld [vmem:[%s1 + $0x30] sm:$0xff]
  %v195 = vld [vmem:[%s1 + $0x38] sm:$0xff]
  %v196 = vld [vmem:[%s1 + $0x40] sm:$0xff]
  %v197 = vld [vmem:[%s1 + $0x48] sm:$0xff]
  %v198 = vld [vmem:[%s1 + $0x50] sm:$0xff]
  %v199 = vld [vmem:[%s1 + $0x58] sm:$0xff]
  %v200 = vld [vmem:[%s1 + $0x60] sm:$0xff]
  %v201 = vld [vmem:[%s1 + $0x68] sm:$0xff]
  %v202 = vld [vmem:[%s1 + $0x70] sm:$0xff]
  %v203 = vld [vmem:[%s1 + $0x78] sm:$0xff]
  %v204 = vld [vmem:[%s1 + $0x80] sm:$0xff]
  %v205 = vld [vmem:[%s1 + $0x88] sm:$0xff]
  %v206 = vld [vmem:[%s1 + $0x90] sm:$0xff]
  %v207 = vld [vmem:[%s1 + $0x98] sm:$0xff]
  %v208 = vld [vmem:[%s1 + $0xa0] sm:$0xff]
  %v209 = vld [vmem:[%s1 + $0xa8] sm:$0xff]
  %v210 = vld [vmem:[%s1 + $0xb0] sm:$0xff]
  %v211 = vld [vmem:[%s1 + $0xb8] sm:$0xff]
  %v212 = vld [vmem:[%s1 + $0xc0] sm:$0xff]
  %v213 = vld [vmem:[%s1 + $0xc8] sm:$0xff]
  %v214 = vld [vmem:[%s1 + $0xd0] sm:$0xff]
  %v215 = vld [vmem:[%s1 + $0xd8] sm:$0xff]
  %v216 = vld [vmem:[%s1 + $0xe0] sm:$0xff]
  %v217 = vld [vmem:[%s1 + $0xe8] sm:$0xff]
  %v218 = vld [vmem:[%s1 + $0xf0] sm:$0xff]
  %v219 = vld [vmem:[%s1 + $0xf8] sm:$0xff]
  %v220 = vld [vmem:[%s2] sm:$0xf]
  %v222 = vperm.slane %v220, 0
  %v223 = vperm.slane %v220, 1
  %v224 = vperm.slane %v220, 2
  %v225 = vperm.slane %v220, 3
  %v262 = vunpack.c.l.b16 %v188
  %v263 = vunpack.c.h.b16 %v188
  %v264 = vunpack.c.l.b16 %v189
  %v265 = vunpack.c.h.b16 %v189
  %v266 = vunpack.c.l.b16 %v190
  %v267 = vunpack.c.h.b16 %v190
  %v268 = vunpack.c.l.b16 %v191
  %v269 = vunpack.c.h.b16 %v191
  %v270 = vunpack.c.l.b16 %v192
  %v271 = vunpack.c.h.b16 %v192
  %v272 = vunpack.c.l.b16 %v193
  %v273 = vunpack.c.h.b16 %v193
  %v274 = vunpack.c.l.b16 %v194
  %v275 = vunpack.c.h.b16 %v194
  %v276 = vunpack.c.l.b16 %v195
  %v277 = vunpack.c.h.b16 %v195
  %v278 = vunpack.c.l.b16 %v196
  %v279 = vunpack.c.h.b16 %v196
  %v280 = vunpack.c.l.b16 %v197
  %v281 = vunpack.c.h.b16 %v197
  %v282 = vunpack.c.l.b16 %v198
  %v283 = vunpack.c.h.b16 %v198
  %v284 = vunpack.c.l.b16 %v199
  %v285 = vunpack.c.h.b16 %v199
  %v286 = vunpack.c.l.b16 %v200
  %v287 = vunpack.c.h.b16 %v200
  %v288 = vunpack.c.l.b16 %v201
  %v289 = vunpack.c.h.b16 %v201
  %v290 = vunpack.c.l.b16 %v202
  %v291 = vunpack.c.h.b16 %v202
  %v292 = vunpack.c.l.b16 %v203
  %v293 = vunpack.c.h.b16 %v203
  %v294 = vunpack.c.l.b16 %v204
  %v295 = vunpack.c.h.b16 %v204
  %v296 = vunpack.c.l.b16 %v205
  %v297 = vunpack.c.h.b16 %v205
  %v298 = vunpack.c.l.b16 %v206
  %v299 = vunpack.c.h.b16 %v206
  %v300 = vunpack.c.l.b16 %v207
  %v301 = vunpack.c.h.b16 %v207
  %v302 = vunpack.c.l.b16 %v208
  %v303 = vunpack.c.h.b16 %v208
  %v304 = vunpack.c.l.b16 %v209
  %v305 = vunpack.c.h.b16 %v209
  %v306 = vunpack.c.l.b16 %v210
  %v307 = vunpack.c.h.b16 %v210
  %v308 = vunpack.c.l.b16 %v211
  %v309 = vunpack.c.h.b16 %v211
  %v310 = vunpack.c.l.b16 %v212
  %v311 = vunpack.c.h.b16 %v212
  %v312 = vunpack.c.l.b16 %v213
  %v313 = vunpack.c.h.b16 %v213
  %v314 = vunpack.c.l.b16 %v214
  %v315 = vunpack.c.h.b16 %v214
  %v316 = vunpack.c.l.b16 %v215
  %v317 = vunpack.c.h.b16 %v215
  %v318 = vunpack.c.l.b16 %v216
  %v319 = vunpack.c.h.b16 %v216
  %v320 = vunpack.c.l.b16 %v217
  %v321 = vunpack.c.h.b16 %v217
  %v322 = vunpack.c.l.b16 %v218
  %v323 = vunpack.c.h.b16 %v218
  %v324 = vunpack.c.l.b16 %v219
  %v325 = vunpack.c.h.b16 %v219
  %v326 = vpack.c.b16 %v266, %v262
  %v327 = vpack.c.b16 %v267, %v263
  %v328 = vpack.c.b16 %v268, %v264
  %v329 = vpack.c.b16 %v269, %v265
  %v330 = vpack.c.b16 %v274, %v270
  %v331 = vpack.c.b16 %v275, %v271
  %v332 = vpack.c.b16 %v276, %v272
  %v333 = vpack.c.b16 %v277, %v273
  %v334 = vpack.c.b16 %v282, %v278
  %v335 = vpack.c.b16 %v283, %v279
  %v336 = vpack.c.b16 %v284, %v280
  %v337 = vpack.c.b16 %v285, %v281
  %v338 = vpack.c.b16 %v290, %v286
  %v339 = vpack.c.b16 %v291, %v287
  %v340 = vpack.c.b16 %v292, %v288
  %v341 = vpack.c.b16 %v293, %v289
  %v342 = vpack.c.b16 %v298, %v294
  %v343 = vpack.c.b16 %v299, %v295
  %v344 = vpack.c.b16 %v300, %v296
  %v345 = vpack.c.b16 %v301, %v297
  %v346 = vpack.c.b16 %v306, %v302
  %v347 = vpack.c.b16 %v307, %v303
  %v348 = vpack.c.b16 %v308, %v304
  %v349 = vpack.c.b16 %v309, %v305
  %v350 = vpack.c.b16 %v314, %v310
  %v351 = vpack.c.b16 %v315, %v311
  %v352 = vpack.c.b16 %v316, %v312
  %v353 = vpack.c.b16 %v317, %v313
  %v354 = vpack.c.b16 %v322, %v318
  %v355 = vpack.c.b16 %v323, %v319
  %v356 = vpack.c.b16 %v324, %v320
  %v357 = vpack.c.b16 %v325, %v321
  %390 = vmatpush.bf16.msra.mxu0 %v354
  %391 = vmatpush.bf16.msra.mxu0 %v350
  %392 = vmatpush.bf16.msra.mxu0 %v346
  %393 = vmatpush.bf16.msra.mxu0 %v342
  %394 = vmatpush.bf16.msra.mxu0 %v338
  %395 = vmatpush.bf16.msra.mxu0 %v334
  %396 = vmatpush.bf16.msra.mxu0 %v330
  %397 = vmatpush.bf16.msra.mxu0 %v326
  %398 = vmatmul.bf16.gmra.mxu0 %v185
  %v399 = vpop.f32.mrf.mxu0
  %v400 = vadd.f32 %v222, %v399
  %v401 = vpop.f32.mrf.mxu0
  %v402 = vadd.f32 %v222, %v401
  %403 = vmatmul.bf16.gmra.mxu0 %v186
  %v404 = vpop.f32.mrf.mxu0
  %v405 = vadd.f32 %v222, %v404
  %v406 = vpop.f32.mrf.mxu0
  %v407 = vadd.f32 %v222, %v406
  %408 = vmatmul.bf16.gmra.mxu0 %v187
  %v409 = vpop.f32.mrf.mxu0
  %v410 = vadd.f32 %v222, %v409
  %v411 = vpop.f32.mrf.mxu0
  %v412 = vadd.f32 %v222, %v411
  %413 = vdwg.mxu0
  %414 = vmatpush.bf16.msra.mxu0 %v355
  %415 = vmatpush.bf16.msra.mxu0 %v351
  %416 = vmatpush.bf16.msra.mxu0 %v347
  %417 = vmatpush.bf16.msra.mxu0 %v343
  %418 = vmatpush.bf16.msra.mxu0 %v339
  %419 = vmatpush.bf16.msra.mxu0 %v335
  %420 = vmatpush.bf16.msra.mxu0 %v331
  %421 = vmatpush.bf16.msra.mxu0 %v327
  %422 = vmatmul.bf16.gmra.mxu0 %v185
  %v423 = vpop.f32.mrf.mxu0
  %v424 = vadd.f32 %v223, %v423
  %v425 = vpop.f32.mrf.mxu0
  %v426 = vadd.f32 %v223, %v425
  %427 = vmatmul.bf16.gmra.mxu0 %v186
  %v428 = vpop.f32.mrf.mxu0
  %v429 = vadd.f32 %v223, %v428
  %v430 = vpop.f32.mrf.mxu0
  %v431 = vadd.f32 %v223, %v430
  %432 = vmatmul.bf16.gmra.mxu0 %v187
  %v433 = vpop.f32.mrf.mxu0
  %v434 = vadd.f32 %v223, %v433
  %v435 = vpop.f32.mrf.mxu0
  %v436 = vadd.f32 %v223, %v435
  %437 = vdwg.mxu0
  %438 = vmatpush.bf16.msra.mxu0 %v356
  %439 = vmatpush.bf16.msra.mxu0 %v352
  %440 = vmatpush.bf16.msra.mxu0 %v348
  %441 = vmatpush.bf16.msra.mxu0 %v344
  %442 = vmatpush.bf16.msra.mxu0 %v340
  %443 = vmatpush.bf16.msra.mxu0 %v336
  %444 = vmatpush.bf16.msra.mxu0 %v332
  %445 = vmatpush.bf16.msra.mxu0 %v328
  %446 = vmatmul.bf16.gmra.mxu0 %v185
  %v447 = vpop.f32.mrf.mxu0
  %v448 = vadd.f32 %v224, %v447
  %v449 = vpop.f32.mrf.mxu0
  %v450 = vadd.f32 %v224, %v449
  %451 = vmatmul.bf16.gmra.mxu0 %v186
  %v452 = vpop.f32.mrf.mxu0
  %v453 = vadd.f32 %v224, %v452
  %v454 = vpop.f32.mrf.mxu0
  %v455 = vadd.f32 %v224, %v454
  %456 = vmatmul.bf16.gmra.mxu0 %v187
  %v457 = vpop.f32.mrf.mxu0
  %v458 = vadd.f32 %v224, %v457
  %v459 = vpop.f32.mrf.mxu0
  %v460 = vadd.f32 %v224, %v459
  %461 = vdwg.mxu0
  %462 = vmatpush.bf16.msra.mxu0 %v357
  %463 = vmatpush.bf16.msra.mxu0 %v353
  %464 = vmatpush.bf16.msra.mxu0 %v349
  %465 = vmatpush.bf16.msra.mxu0 %v345
  %466 = vmatpush.bf16.msra.mxu0 %v341
  %467 = vmatpush.bf16.msra.mxu0 %v337
  %468 = vmatpush.bf16.msra.mxu0 %v333
  %469 = vmatpush.bf16.msra.mxu0 %v329
  %470 = vmatmul.bf16.gmra.mxu0 %v185
  %v471 = vpop.f32.mrf.mxu0
  %v472 = vadd.f32 %v225, %v471
  %v473 = vpop.f32.mrf.mxu0
  %v474 = vadd.f32 %v225, %v473
  %475 = vmatmul.bf16.gmra.mxu0 %v186
  %v476 = vpop.f32.mrf.mxu0
  %v477 = vadd.f32 %v225, %v476
  %v478 = vpop.f32.mrf.mxu0
  %v479 = vadd.f32 %v225, %v478
  %480 = vmatmul.bf16.gmra.mxu0 %v187
  %v481 = vpop.f32.mrf.mxu0
  %v482 = vadd.f32 %v225, %v481
  %v483 = vpop.f32.mrf.mxu0
  %v484 = vadd.f32 %v225, %v483
  %485 = vdwg.mxu0
  %v486 = vmul.f32 %v400, 0.5
  %v487 = vmul.f32 %v424, 0.5
  %v488 = vmul.f32 %v448, 0.5
  %v489 = vmul.f32 %v472, 0.5
  %v490 = vmul.f32 %v402, 0.5
  %v491 = vmul.f32 %v426, 0.5
  %v492 = vmul.f32 %v450, 0.5
  %v493 = vmul.f32 %v474, 0.5
  %v494 = vmul.f32 %v405, 0.5
  %v495 = vmul.f32 %v429, 0.5
  %v496 = vmul.f32 %v453, 0.5
  %v497 = vmul.f32 %v477, 0.5
  %v498 = vmul.f32 %v407, 0.5
  %v499 = vmul.f32 %v431, 0.5
  %v500 = vmul.f32 %v455, 0.5
  %v501 = vmul.f32 %v479, 0.5
  %v502 = vmul.f32 %v410, 0.5
  %v503 = vmul.f32 %v434, 0.5
  %v504 = vmul.f32 %v458, 0.5
  %v505 = vmul.f32 %v482, 0.5
  %v506 = vmul.f32 %v412, 0.5
  %v507 = vmul.f32 %v436, 0.5
  %v508 = vmul.f32 %v460, 0.5
  %v509 = vmul.f32 %v484, 0.5
  %v510 = vmul.f32 %v400, 0.851
  %v511 = vmul.f32 %v424, 0.851
  %v512 = vmul.f32 %v448, 0.851
  %v513 = vmul.f32 %v472, 0.851
  %v514 = vmul.f32 %v402, 0.851
  %v515 = vmul.f32 %v426, 0.851
  %v516 = vmul.f32 %v450, 0.851
  %v517 = vmul.f32 %v474, 0.851
  %v518 = vmul.f32 %v405, 0.851
  %v519 = vmul.f32 %v429, 0.851
  %v520 = vmul.f32 %v453, 0.851
  %v521 = vmul.f32 %v477, 0.851
  %v522 = vmul.f32 %v407, 0.851
  %v523 = vmul.f32 %v431, 0.851
  %v524 = vmul.f32 %v455, 0.851
  %v525 = vmul.f32 %v479, 0.851
  %v526 = vmul.f32 %v410, 0.851
  %v527 = vmul.f32 %v434, 0.851
  %v528 = vmul.f32 %v458, 0.851
  %v529 = vmul.f32 %v482, 0.851
  %v530 = vmul.f32 %v412, 0.851
  %v531 = vmul.f32 %v436, 0.851
  %v532 = vmul.f32 %v460, 0.851
  %v533 = vmul.f32 %v484, 0.851
  %v534 = vtanh.pop %v510
  %v535 = vtanh.pop %v511
  %v536 = vtanh.pop %v512
  %v537 = vtanh.pop %v513
  %v538 = vtanh.pop %v514
  %v539 = vtanh.pop %v515
  %v540 = vtanh.pop %v516
  %v541 = vtanh.pop %v517
  %v542 = vtanh.pop %v518
  %v543 = vtanh.pop %v519
  %v544 = vtanh.pop %v520
  %v545 = vtanh.pop %v521
  %v546 = vtanh.pop %v522
  %v547 = vtanh.pop %v523
  %v548 = vtanh.pop %v524
  %v549 = vtanh.pop %v525
  %v550 = vtanh.pop %v526
  %v551 = vtanh.pop %v527
  %v552 = vtanh.pop %v528
  %v553 = vtanh.pop %v529
  %v554 = vtanh.pop %v530
  %v555 = vtanh.pop %v531
  %v556 = vtanh.pop %v532
  %v557 = vtanh.pop %v533
  %v558 = vadd.f32 %v534, 1.0
  %v559 = vadd.f32 %v535, 1.0
  %v560 = vadd.f32 %v536, 1.0
  %v561 = vadd.f32 %v537, 1.0
  %v562 = vadd.f32 %v538, 1.0
  %v563 = vadd.f32 %v539, 1.0
  %v564 = vadd.f32 %v540, 1.0
  %v565 = vadd.f32 %v541, 1.0
  %v566 = vadd.f32 %v542, 1.0
  %v567 = vadd.f32 %v543, 1.0
  %v568 = vadd.f32 %v544, 1.0
  %v569 = vadd.f32 %v545, 1.0
  %v570 = vadd.f32 %v546, 1.0
  %v571 = vadd.f32 %v547, 1.0
  %v572 = vadd.f32 %v548, 1.0
  %v573 = vadd.f32 %v549, 1.0
  %v574 = vadd.f32 %v550, 1.0
  %v575 = vadd.f32 %v551, 1.0
  %v576 = vadd.f32 %v552, 1.0
  %v577 = vadd.f32 %v553, 1.0
  %v578 = vadd.f32 %v554, 1.0
  %v579 = vadd.f32 %v555, 1.0
  %v580 = vadd.f32 %v556, 1.0
  %v581 = vadd.f32 %v557, 1.0
  %v582 = vmul.f32 %v486, %v558
  %v583 = vmul.f32 %v487, %v559
  %v584 = vmul.f32 %v488, %v560
  %v585 = vmul.f32 %v489, %v561
  %v586 = vmul.f32 %v490, %v562
  %v587 = vmul.f32 %v491, %v563
  %v588 = vmul.f32 %v492, %v564
  %v589 = vmul.f32 %v493, %v565
  %v590 = vmul.f32 %v494, %v566
  %v591 = vmul.f32 %v495, %v567
  %v592 = vmul.f32 %v496, %v568
  %v593 = vmul.f32 %v497, %v569
  %v594 = vmul.f32 %v498, %v570
  %v595 = vmul.f32 %v499, %v571
  %v596 = vmul.f32 %v500, %v572
  %v597 = vmul.f32 %v501, %v573
  %v598 = vmul.f32 %v502, %v574
  %v599 = vmul.f32 %v503, %v575
  %v600 = vmul.f32 %v504, %v576
  %v601 = vmul.f32 %v505, %v577
  %v602 = vmul.f32 %v506, %v578
  %v603 = vmul.f32 %v507, %v579
  %v604 = vmul.f32 %v508, %v580
  %v605 = vmul.f32 %v509, %v581
  %v606 = vpack.c.bf16 %v586, %v582
  %v607 = vpack.c.bf16 %v587, %v583
  %v608 = vpack.c.bf16 %v588, %v584
  %v609 = vpack.c.bf16 %v589, %v585
  %v610 = vpack.c.bf16 %v594, %v590
  %v611 = vpack.c.bf16 %v595, %v591
  %v612 = vpack.c.bf16 %v596, %v592
  %v613 = vpack.c.bf16 %v597, %v593
  %v614 = vpack.c.bf16 %v602, %v598
  %v615 = vpack.c.bf16 %v603, %v599
  %v616 = vpack.c.bf16 %v604, %v600
  %v617 = vpack.c.bf16 %v605, %v601
  %v618 = vld [vmem:[%s3] sm:$0xf]
  %v619 = vld [vmem:[%s3 + $0x4] sm:$0xf]
  %v620 = vld [vmem:[%s3 + $0x8] sm:$0xf]
  %v621 = vld [vmem:[%s3 + $0xc] sm:$0xf]
  %v622 = vld [vmem:[%s3 + $0x10] sm:$0xf]
  %v623 = vld [vmem:[%s3 + $0x14] sm:$0xf]
  %v624 = vld [vmem:[%s3 + $0x18] sm:$0xf]
  %v625 = vld [vmem:[%s3 + $0x1c] sm:$0xf]
  %v626 = vld [vmem:[%s3 + $0x20] sm:$0xf]
  %v627 = vld [vmem:[%s3 + $0x24] sm:$0xf]
  %v628 = vld [vmem:[%s3 + $0x28] sm:$0xf]
  %v629 = vld [vmem:[%s3 + $0x2c] sm:$0xf]
  %v630 = vld [vmem:[%s3 + $0x30] sm:$0xf]
  %v631 = vld [vmem:[%s3 + $0x34] sm:$0xf]
  %v632 = vld [vmem:[%s3 + $0x38] sm:$0xf]
  %v633 = vld [vmem:[%s3 + $0x3c] sm:$0xf]
  %v634 = vld [vmem:[%s3 + $0x40] sm:$0xf]
  %v635 = vld [vmem:[%s3 + $0x44] sm:$0xf]
  %v636 = vld [vmem:[%s3 + $0x48] sm:$0xf]
  %v637 = vld [vmem:[%s3 + $0x4c] sm:$0xf]
  %v638 = vld [vmem:[%s3 + $0x50] sm:$0xf]
  %v639 = vld [vmem:[%s3 + $0x54] sm:$0xf]
  %v640 = vld [vmem:[%s3 + $0x58] sm:$0xf]
  %v641 = vld [vmem:[%s3 + $0x5c] sm:$0xf]
  %v642 = vld [vmem:[%s3 + $0x60] sm:$0xf]
  %v643 = vld [vmem:[%s3 + $0x64] sm:$0xf]
  %v644 = vld [vmem:[%s3 + $0x68] sm:$0xf]
  %v645 = vld [vmem:[%s3 + $0x6c] sm:$0xf]
  %v646 = vld [vmem:[%s3 + $0x70] sm:$0xf]
  %v647 = vld [vmem:[%s3 + $0x74] sm:$0xf]
  %v648 = vld [vmem:[%s3 + $0x78] sm:$0xf]
  %v649 = vld [vmem:[%s3 + $0x7c] sm:$0xf]
  %v650 = vld [vmem:[%s3 + $0x80] sm:$0xf]
  %v651 = vld [vmem:[%s3 + $0x84] sm:$0xf]
  %v652 = vld [vmem:[%s3 + $0x88] sm:$0xf]
  %v653 = vld [vmem:[%s3 + $0x8c] sm:$0xf]
  %v654 = vld [vmem:[%s3 + $0x90] sm:$0xf]
  %v655 = vld [vmem:[%s3 + $0x94] sm:$0xf]
  %v656 = vld [vmem:[%s3 + $0x98] sm:$0xf]
  %v657 = vld [vmem:[%s3 + $0x9c] sm:$0xf]
  %v658 = vld [vmem:[%s3 + $0xa0] sm:$0xf]
  %v659 = vld [vmem:[%s3 + $0xa4] sm:$0xf]
  %v660 = vld [vmem:[%s3 + $0xa8] sm:$0xf]
  %v661 = vld [vmem:[%s3 + $0xac] sm:$0xf]
  %v662 = vld [vmem:[%s3 + $0xb0] sm:$0xf]
  %v663 = vld [vmem:[%s3 + $0xb4] sm:$0xf]
  %v664 = vld [vmem:[%s3 + $0xb8] sm:$0xf]
  %v665 = vld [vmem:[%s3 + $0xbc] sm:$0xf]
  %v666 = vld [vmem:[%s3 + $0xc0] sm:$0xf]
  %v667 = vld [vmem:[%s3 + $0xc4] sm:$0xf]
  %v668 = vld [vmem:[%s3 + $0xc8] sm:$0xf]
  %v669 = vld [vmem:[%s3 + $0xcc] sm:$0xf]
  %v670 = vld [vmem:[%s3 + $0xd0] sm:$0xf]
  %v671 = vld [vmem:[%s3 + $0xd4] sm:$0xf]
  %v672 = vld [vmem:[%s3 + $0xd8] sm:$0xf]
  %v673 = vld [vmem:[%s3 + $0xdc] sm:$0xf]
  %v674 = vld [vmem:[%s3 + $0xe0] sm:$0xf]
  %v675 = vld [vmem:[%s3 + $0xe4] sm:$0xf]
  %v676 = vld [vmem:[%s3 + $0xe8] sm:$0xf]
  %v677 = vld [vmem:[%s3 + $0xec] sm:$0xf]
  %v678 = vld [vmem:[%s3 + $0xf0] sm:$0xf]
  %v679 = vld [vmem:[%s3 + $0xf4] sm:$0xf]
  %v680 = vld [vmem:[%s3 + $0xf8] sm:$0xf]
  %v681 = vld [vmem:[%s3 + $0xfc] sm:$0xf]
  %v682 = vld [vmem:[%s4] sm:$0x1]
  %v684 = vperm.slane %v682, 0
  %v750 = vunpack.c.l.b16 %v618
  %v751 = vunpack.c.l.b16 %v619
  %v752 = vunpack.c.l.b16 %v620
  %v753 = vunpack.c.l.b16 %v621
  %v754 = vunpack.c.l.b16 %v622
  %v755 = vunpack.c.l.b16 %v623
  %v756 = vunpack.c.l.b16 %v624
  %v757 = vunpack.c.l.b16 %v625
  %v758 = vunpack.c.l.b16 %v626
  %v759 = vunpack.c.l.b16 %v627
  %v760 = vunpack.c.l.b16 %v628
  %v761 = vunpack.c.l.b16 %v629
  %v762 = vunpack.c.l.b16 %v630
  %v763 = vunpack.c.l.b16 %v631
  %v764 = vunpack.c.l.b16 %v632
  %v765 = vunpack.c.l.b16 %v633
  %v766 = vunpack.c.l.b16 %v634
  %v767 = vunpack.c.l.b16 %v635
  %v768 = vunpack.c.l.b16 %v636
  %v769 = vunpack.c.l.b16 %v637
  %v770 = vunpack.c.l.b16 %v638
  %v771 = vunpack.c.l.b16 %v639
  %v772 = vunpack.c.l.b16 %v640
  %v773 = vunpack.c.l.b16 %v641
  %v774 = vunpack.c.l.b16 %v642
  %v775 = vunpack.c.l.b16 %v643
  %v776 = vunpack.c.l.b16 %v644
  %v777 = vunpack.c.l.b16 %v645
  %v778 = vunpack.c.l.b16 %v646
  %v779 = vunpack.c.l.b16 %v647
  %v780 = vunpack.c.l.b16 %v648
  %v781 = vunpack.c.l.b16 %v649
  %v782 = vunpack.c.l.b16 %v650
  %v783 = vunpack.c.l.b16 %v651
  %v784 = vunpack.c.l.b16 %v652
  %v785 = vunpack.c.l.b16 %v653
  %v786 = vunpack.c.l.b16 %v654
  %v787 = vunpack.c.l.b16 %v655
  %v788 = vunpack.c.l.b16 %v656
  %v789 = vunpack.c.l.b16 %v657
  %v790 = vunpack.c.l.b16 %v658
  %v791 = vunpack.c.l.b16 %v659
  %v792 = vunpack.c.l.b16 %v660
  %v793 = vunpack.c.l.b16 %v661
  %v794 = vunpack.c.l.b16 %v662
  %v795 = vunpack.c.l.b16 %v663
  %v796 = vunpack.c.l.b16 %v664
  %v797 = vunpack.c.l.b16 %v665
  %v798 = vunpack.c.l.b16 %v666
  %v799 = vunpack.c.l.b16 %v667
  %v800 = vunpack.c.l.b16 %v668
  %v801 = vunpack.c.l.b16 %v669
  %v802 = vunpack.c.l.b16 %v670
  %v803 = vunpack.c.l.b16 %v671
  %v804 = vunpack.c.l.b16 %v672
  %v805 = vunpack.c.l.b16 %v673
  %v806 = vunpack.c.l.b16 %v674
  %v807 = vunpack.c.l.b16 %v675
  %v808 = vunpack.c.l.b16 %v676
  %v809 = vunpack.c.l.b16 %v677
  %v810 = vunpack.c.l.b16 %v678
  %v811 = vunpack.c.l.b16 %v679
  %v812 = vunpack.c.l.b16 %v680
  %v813 = vunpack.c.l.b16 %v681
  %v814 = vpack.c.b16 %v751, %v750
  %v815 = vpack.c.b16 %v753, %v752
  %v816 = vpack.c.b16 %v755, %v754
  %v817 = vpack.c.b16 %v757, %v756
  %v818 = vpack.c.b16 %v759, %v758
  %v819 = vpack.c.b16 %v761, %v760
  %v820 = vpack.c.b16 %v763, %v762
  %v821 = vpack.c.b16 %v765, %v764
  %v822 = vpack.c.b16 %v767, %v766
  %v823 = vpack.c.b16 %v769, %v768
  %v824 = vpack.c.b16 %v771, %v770
  %v825 = vpack.c.b16 %v773, %v772
  %v826 = vpack.c.b16 %v775, %v774
  %v827 = vpack.c.b16 %v777, %v776
  %v828 = vpack.c.b16 %v779, %v778
  %v829 = vpack.c.b16 %v781, %v780
  %v830 = vpack.c.b16 %v783, %v782
  %v831 = vpack.c.b16 %v785, %v784
  %v832 = vpack.c.b16 %v787, %v786
  %v833 = vpack.c.b16 %v789, %v788
  %v834 = vpack.c.b16 %v791, %v790
  %v835 = vpack.c.b16 %v793, %v792
  %v836 = vpack.c.b16 %v795, %v794
  %v837 = vpack.c.b16 %v797, %v796
  %v838 = vpack.c.b16 %v799, %v798
  %v839 = vpack.c.b16 %v801, %v800
  %v840 = vpack.c.b16 %v803, %v802
  %v841 = vpack.c.b16 %v805, %v804
  %v842 = vpack.c.b16 %v807, %v806
  %v843 = vpack.c.b16 %v809, %v808
  %v844 = vpack.c.b16 %v811, %v810
  %v845 = vpack.c.b16 %v813, %v812
  %878 = vmatpush.bf16.msra.mxu0 %v821
  %879 = vmatpush.bf16.msra.mxu0 %v820
  %880 = vmatpush.bf16.msra.mxu0 %v819
  %881 = vmatpush.bf16.msra.mxu0 %v818
  %882 = vmatpush.bf16.msra.mxu0 %v817
  %883 = vmatpush.bf16.msra.mxu0 %v816
  %884 = vmatpush.bf16.msra.mxu0 %v815
  %885 = vmatpush.bf16.msra.mxu0 %v814
  %886 = vmatmul.bf16.gmra.mxu0 %v606
  %v887 = vpop.f32.mrf.mxu0
  %v888 = vadd.f32 %v684, %v887
  %v889 = vpop.f32.mrf.mxu0
  %v890 = vadd.f32 %v684, %v889
  %891 = vmatmul.bf16.gmra.mxu0 %v610
  %v892 = vpop.f32.mrf.mxu0
  %v893 = vadd.f32 %v684, %v892
  %v894 = vpop.f32.mrf.mxu0
  %v895 = vadd.f32 %v684, %v894
  %896 = vmatmul.bf16.gmra.mxu0 %v614
  %v897 = vpop.f32.mrf.mxu0
  %v898 = vadd.f32 %v684, %v897
  %v899 = vpop.f32.mrf.mxu0
  %v900 = vadd.f32 %v684, %v899
  %901 = vdwg.mxu0
  %902 = vmatpush.bf16.msra.mxu0 %v829
  %903 = vmatpush.bf16.msra.mxu0 %v828
  %904 = vmatpush.bf16.msra.mxu0 %v827
  %905 = vmatpush.bf16.msra.mxu0 %v826
  %906 = vmatpush.bf16.msra.mxu0 %v825
  %907 = vmatpush.bf16.msra.mxu0 %v824
  %908 = vmatpush.bf16.msra.mxu0 %v823
  %909 = vmatpush.bf16.msra.mxu0 %v822
  %910 = vmatmul.bf16.gmra.mxu0 %v607
  %v911 = vpop.f32.mrf.mxu0
  %v912 = vadd.f32 %v888, %v911
  %v913 = vpop.f32.mrf.mxu0
  %v914 = vadd.f32 %v890, %v913
  %915 = vmatmul.bf16.gmra.mxu0 %v611
  %v916 = vpop.f32.mrf.mxu0
  %v917 = vadd.f32 %v893, %v916
  %v918 = vpop.f32.mrf.mxu0
  %v919 = vadd.f32 %v895, %v918
  %920 = vmatmul.bf16.gmra.mxu0 %v615
  %v921 = vpop.f32.mrf.mxu0
  %v922 = vadd.f32 %v898, %v921
  %v923 = vpop.f32.mrf.mxu0
  %v924 = vadd.f32 %v900, %v923
  %925 = vdwg.mxu0
  %926 = vmatpush.bf16.msra.mxu0 %v837
  %927 = vmatpush.bf16.msra.mxu0 %v836
  %928 = vmatpush.bf16.msra.mxu0 %v835
  %929 = vmatpush.bf16.msra.mxu0 %v834
  %930 = vmatpush.bf16.msra.mxu0 %v833
  %931 = vmatpush.bf16.msra.mxu0 %v832
  %932 = vmatpush.bf16.msra.mxu0 %v831
  %933 = vmatpush.bf16.msra.mxu0 %v830
  %934 = vmatmul.bf16.gmra.mxu0 %v608
  %v935 = vpop.f32.mrf.mxu0
  %v936 = vadd.f32 %v912, %v935
  %v937 = vpop.f32.mrf.mxu0
  %v938 = vadd.f32 %v914, %v937
  %939 = vmatmul.bf16.gmra.mxu0 %v612
  %v940 = vpop.f32.mrf.mxu0
  %v941 = vadd.f32 %v917, %v940
  %v942 = vpop.f32.mrf.mxu0
  %v943 = vadd.f32 %v919, %v942
  %944 = vmatmul.bf16.gmra.mxu0 %v616
  %v945 = vpop.f32.mrf.mxu0
  %v946 = vadd.f32 %v922, %v945
  %v947 = vpop.f32.mrf.mxu0
  %v948 = vadd.f32 %v924, %v947
  %949 = vdwg.mxu0
  %950 = vmatpush.bf16.msra.mxu0 %v845
  %951 = vmatpush.bf16.msra.mxu0 %v844
  %952 = vmatpush.bf16.msra.mxu0 %v843
  %953 = vmatpush.bf16.msra.mxu0 %v842
  %954 = vmatpush.bf16.msra.mxu0 %v841
  %955 = vmatpush.bf16.msra.mxu0 %v840
  %956 = vmatpush.bf16.msra.mxu0 %v839
  %957 = vmatpush.bf16.msra.mxu0 %v838
  %958 = vmatmul.bf16.gmra.mxu0 %v609
  %v959 = vpop.f32.mrf.mxu0
  %v960 = vadd.f32 %v936, %v959
  %v961 = vpop.f32.mrf.mxu0
  %v962 = vadd.f32 %v938, %v961
  %963 = vmatmul.bf16.gmra.mxu0 %v613
  %v964 = vpop.f32.mrf.mxu0
  %v965 = vadd.f32 %v941, %v964
  %v966 = vpop.f32.mrf.mxu0
  %v967 = vadd.f32 %v943, %v966
  %968 = vmatmul.bf16.gmra.mxu0 %v617
  %v969 = vpop.f32.mrf.mxu0
  %v970 = vadd.f32 %v946, %v969
  %v971 = vpop.f32.mrf.mxu0
  %v972 = vadd.f32 %v948, %v971
  %973 = vdwg.mxu0
  %v974 = vadd.f32 %v960, %v32
  %v975 = vadd.f32 %v962, %v33
  %v976 = vadd.f32 %v965, %v34
  %v977 = vadd.f32 %v967, %v35
  %v978 = vadd.f32 %v970, %v36
  %v979 = vadd.f32 %v972, %v37
  %v980 = vpack.c.bf16 %v974, %v974
  %v981 = vpack.c.bf16 %v975, %v975
  %v982 = vpack.c.bf16 %v976, %v976
  %v983 = vpack.c.bf16 %v977, %v977
  %v984 = vpack.c.bf16 %v978, %v978
  %v985 = vpack.c.bf16 %v979, %v979
  %986 = vst [vmem:[%s7] sm:$0xf] %v980
  %987 = vst [vmem:[%s7 + $0x4] sm:$0xf] %v981
  %988 = vst [vmem:[%s7 + $0x8] sm:$0xf] %v982
  %989 = vst [vmem:[%s7 + $0xc] sm:$0xf] %v983
  %990 = vst [vmem:[%s7 + $0x10] sm:$0xf] %v984
  %991 = vst [vmem:[%s7 + $0x14] sm:$0xf] %v985
  // Predicated region
  $region30: #{tcclip_forward.17} parent=0 // pred_check
    _
  $region31: #{tcclip_forward.17} parent=0 // pred_check_branch
    %993 = sbr.rel (0) target = $region33
  $region32: #{tcclip_forward.17} parent=0 // pred_region
    _
  $region33: #{tcclip_forward.17} parent=0 // pred_fallthru
    _
  // Predicated region
  $region34: #{tcclip_forward.17} parent=0 // pred_check
    _
  $region35: #{tcclip_forward.17} parent=0 // pred_check_branch
    %995 = sbr.rel (0) target = $region37
  $region36: #{tcclip_forward.17} parent=0 // pred_region
    _
  $region37: #{tcclip_forward.17} parent=0 // pred_fallthru
    _

// kernel: tcclip_forward.23
$region0: #{tcclip_forward.23}
  #allocation0 [shape = 'u32[]', space=smem, size = 0x4, offset = 0x4, fixed_abs, tag = 'smem constant byte address 0x4 - core index']
  #allocation1 [shape = 'u32[72,128]{1,0:T(1,128)}', space=vmem, size = 0x9000, scoped, tag = 'internal scratch']
  %s0 = inlined_call_operand.vmem [shape: bf16[32,128], index: 0, kind: input, shape index: {}]
  %s1 = inlined_call_operand.vmem [shape: bf16[128,128], index: 1, kind: input, shape index: {}]
  %s2 = inlined_call_operand.vmem [shape: f32[1,128], index: 2, kind: input, shape index: {}]
  %s3 = inlined_call_operand.vmem [shape: bf16[32,128], index: 3, kind: output, shape index: {}]
  %s4 = sld [smem:[#allocation0]]
  $region22: #{tcclip_forward.23} parent=0
    _
  %s6 = ssub.s32 1, %s4
  %s7 = scalar_select 0, %s6, %s4
  // Predicated region
  $region2: #{tcclip_forward.23} parent=0 // pred_check
    _
  $region3: #{tcclip_forward.23} parent=0 // pred_check_branch
    %9 = sbr.rel (0) target = $region5
  $region4: #{tcclip_forward.23} parent=0 // pred_region
    _
  $region5: #{tcclip_forward.23} parent=0 // pred_fallthru
    _
  // Predicated region
  $region6: #{tcclip_forward.23} parent=0 // pred_check
    _
  $region7: #{tcclip_forward.23} parent=0 // pred_check_branch
    %11 = sbr.rel (0) target = $region9
  $region8: #{tcclip_forward.23} parent=0 // pred_region
    _
  $region9: #{tcclip_forward.23} parent=0 // pred_fallthru
    _
  // Predicated region
  $region10: #{tcclip_forward.23} parent=0 // pred_check
    _
  $region11: #{tcclip_forward.23} parent=0 // pred_check_branch
    %13 = sbr.rel (0) target = $region13
  $region12: #{tcclip_forward.23} parent=0 // pred_region
    _
  $region13: #{tcclip_forward.23} parent=0 // pred_fallthru
    _
  %v14 = vld [vmem:[%s0] sm:$0xf]
  %v15 = vld [vmem:[%s0 + $0x4] sm:$0xf]
  %v16 = vld [vmem:[%s0 + $0x8] sm:$0xf]
  %v17 = vld [vmem:[%s0 + $0xc] sm:$0xf]
  %v18 = vld [vmem:[%s1] sm:$0xf]
  %v19 = vld [vmem:[%s1 + $0x4] sm:$0xf]
  %v20 = vld [vmem:[%s1 + $0x8] sm:$0xf]
  %v21 = vld [vmem:[%s1 + $0xc] sm:$0xf]
  %v22 = vld [vmem:[%s1 + $0x10] sm:$0xf]
  %v23 = vld [vmem:[%s1 + $0x14] sm:$0xf]
  %v24 = vld [vmem:[%s1 + $0x18] sm:$0xf]
  %v25 = vld [vmem:[%s1 + $0x1c] sm:$0xf]
  %v26 = vld [vmem:[%s1 + $0x20] sm:$0xf]
  %v27 = vld [vmem:[%s1 + $0x24] sm:$0xf]
  %v28 = vld [vmem:[%s1 + $0x28] sm:$0xf]
  %v29 = vld [vmem:[%s1 + $0x2c] sm:$0xf]
  %v30 = vld [vmem:[%s1 + $0x30] sm:$0xf]
  %v31 = vld [vmem:[%s1 + $0x34] sm:$0xf]
  %v32 = vld [vmem:[%s1 + $0x38] sm:$0xf]
  %v33 = vld [vmem:[%s1 + $0x3c] sm:$0xf]
  %v34 = vld [vmem:[%s2] sm:$0x1]
  %v36 = vperm.slane %v34, 0
  %v42 = vunpack.c.l.b16 %v14
  %v43 = vunpack.c.l.b16 %v15
  %v44 = vunpack.c.l.b16 %v16
  %v45 = vunpack.c.l.b16 %v17
  %v46 = vpack.c.b16 %v43, %v42
  %v47 = vpack.c.b16 %v45, %v44
  %v66 = vunpack.c.l.b16 %v18
  %v67 = vunpack.c.l.b16 %v19
  %v68 = vunpack.c.l.b16 %v20
  %v69 = vunpack.c.l.b16 %v21
  %v70 = vunpack.c.l.b16 %v22
  %v71 = vunpack.c.l.b16 %v23
  %v72 = vunpack.c.l.b16 %v24
  %v73 = vunpack.c.l.b16 %v25
  %v74 = vunpack.c.l.b16 %v26
  %v75 = vunpack.c.l.b16 %v27
  %v76 = vunpack.c.l.b16 %v28
  %v77 = vunpack.c.l.b16 %v29
  %v78 = vunpack.c.l.b16 %v30
  %v79 = vunpack.c.l.b16 %v31
  %v80 = vunpack.c.l.b16 %v32
  %v81 = vunpack.c.l.b16 %v33
  %v82 = vpack.c.b16 %v67, %v66
  %v83 = vpack.c.b16 %v69, %v68
  %v84 = vpack.c.b16 %v71, %v70
  %v85 = vpack.c.b16 %v73, %v72
  %v86 = vpack.c.b16 %v75, %v74
  %v87 = vpack.c.b16 %v77, %v76
  %v88 = vpack.c.b16 %v79, %v78
  %v89 = vpack.c.b16 %v81, %v80
  %98 = vmatpush.bf16.msra.mxu0 %v89
  %99 = vmatpush.bf16.msra.mxu0 %v88
  %100 = vmatpush.bf16.msra.mxu0 %v87
  %101 = vmatpush.bf16.msra.mxu0 %v86
  %102 = vmatpush.bf16.msra.mxu0 %v85
  %103 = vmatpush.bf16.msra.mxu0 %v84
  %104 = vmatpush.bf16.msra.mxu0 %v83
  %105 = vmatpush.bf16.msra.mxu0 %v82
  %106 = vmatmul.bf16.gmra.mxu0 %v46
  %v107 = vpop.f32.mrf.mxu0
  %v108 = vadd.f32 %v36, %v107
  %v109 = vpop.f32.mrf.mxu0
  %v110 = vadd.f32 %v36, %v109
  %111 = vmatmul.bf16.gmra.mxu0 %v47
  %v112 = vpop.f32.mrf.mxu0
  %v113 = vadd.f32 %v36, %v112
  %v114 = vpop.f32.mrf.mxu0
  %v115 = vadd.f32 %v36, %v114
  %116 = vdwg.mxu0
  %v117 = vpack.c.bf16 %v108, %v108
  %v118 = vpack.c.bf16 %v110, %v110
  %v119 = vpack.c.bf16 %v113, %v113
  %v120 = vpack.c.bf16 %v115, %v115
  %121 = vst [vmem:[%s3] sm:$0xf] %v117
  %122 = vst [vmem:[%s3 + $0x4] sm:$0xf] %v118
  %123 = vst [vmem:[%s3 + $0x8] sm:$0xf] %v119
  %124 = vst [vmem:[%s3 + $0xc] sm:$0xf] %v120
  // Predicated region
  $region14: #{tcclip_forward.23} parent=0 // pred_check
    _
  $region15: #{tcclip_forward.23} parent=0 // pred_check_branch
    %126 = sbr.rel (0) target = $region17
  $region16: #{tcclip_forward.23} parent=0 // pred_region
    _
  $region17: #{tcclip_forward.23} parent=0 // pred_fallthru
    _
  // Predicated region
  $region18: #{tcclip_forward.23} parent=0 // pred_check
    _
  $region19: #{tcclip_forward.23} parent=0 // pred_check_branch
    %128 = sbr.rel (0) target = $region21
  $region20: #{tcclip_forward.23} parent=0 // pred_region
    _
  $region21: #{tcclip_forward.23} parent=0 // pred_fallthru
    _

// kernel: tile.8
$region0: #{tile.8}
  #allocation0 [shape = 's32[1]{0}', space=sflag, size = 0x4, scoped, tag = 'scoped memory for tile.8']
  %s0 = inlined_call_operand.vmem [shape: s32[5], index: 0, kind: input, shape index: {}]
  %s1 = inlined_call_operand.vmem [shape: s32[2,5], index: 1, kind: output, shape index: {}]
  // Predicated region
  $region2: #{tile.8} parent=0 // pred_check
    _
  $region3: #{tile.8} parent=0 // pred_check_branch
    %3 = sbr.rel (0) target = $region5
  $region4: #{tile.8} parent=0 // pred_region
    _
  $region5: #{tile.8} parent=0 // pred_fallthru
    _
  %v4 = vld [vmem:[%s0] ss:$0 sm:$0xff]
  %5 = vst [vmem:[%s1] sm:$0x3] %v4

// kernel: tcclip_forward.16
$region0: #{tcclip_forward.16}
  #allocation0 [shape = 'u32[]', space=smem, size = 0x4, offset = 0x4, fixed_abs, tag = 'smem constant byte address 0x4 - core index']
  #allocation1 [shape = 'u32[72,128]{1,0:T(1,128)}', space=vmem, size = 0x9000, scoped, tag = 'internal scratch']
  %s0 = inlined_call_operand.vmem [shape: bf16[2,24,128], index: 0, kind: input, shape index: {}]
  %s1 = inlined_call_operand.vmem [shape: bf16[4,128,32], index: 1, kind: input, shape index: {}]
  %s2 = inlined_call_operand.vmem [shape: bf16[4,128,32], index: 2, kind: input, shape index: {}]
  %s3 = inlined_call_operand.vmem [shape: bf16[4,128,32], index: 3, kind: input, shape index: {}]
  %s4 = inlined_call_operand.vmem [shape: f32[4,1,32], index: 4, kind: input, shape index: {}]
  %s5 = inlined_call_operand.vmem [shape: f32[4,1,32], index: 5, kind: input, shape index: {}]
  %s6 = inlined_call_operand.vmem [shape: f32[4,1,32], index: 6, kind: input, shape index: {}]
  %s7 = inlined_call_operand.vmem [shape: bf16[4,32,128], index: 7, kind: input, shape index: {}]
  %s8 = inlined_call_operand.vmem [shape: f32[1,128], index: 8, kind: input, shape index: {}]
  %s9 = inlined_call_operand.vmem [shape: f32[1,128], index: 9, kind: input, shape index: {}]
  %s10 = inlined_call_operand.vmem [shape: f32[1,128], index: 10, kind: input, shape index: {}]
  %s11 = inlined_call_operand.vmem [shape: bf16[2,24,128], index: 11, kind: output, shape index: {}]
  %s12 = sld [smem:[#allocation0]]
  $region77: #{tcclip_forward.16} parent=0
    _
  %s14 = ssub.s32 1, %s12
  %s15 = scalar_select 0, %s14, %s12
  loop: start=0, step=1, limit=4
  $region2: #{tcclip_forward.16} parent=0 // loop_pre_header
    _
  $region3: #{tcclip_forward.16} parent=0 // loop_header
    %s17 = sphi 0, %s21
    %p18 = scmp.ge.s32.totalorder %s17, 4
    %s27 = sphi 0, %s29
    %s30 = sphi 0, %s27
    %s31 = sphi 0, %s30
    %s47 = sphi 0, %s31
    %s51 = sphi 0, %s51
    %s53 = sphi 0, %s51
    %s54 = sphi 0, %s53
    %s68 = sphi 0, %s54
    %s72 = sphi 0, %s72
    %s74 = sphi 0, %s72
    %s75 = sphi 0, %s74
    %s89 = sphi 0, %s75
    %s93 = sphi 0, %s93
    %s95 = sphi 0, %s93
    %s96 = sphi 0, %s95
    %s110 = sphi 0, %s96
    %s114 = sphi 0, %s114
    %s116 = sphi 0, %s114
    %s117 = sphi 0, %s116
    %s131 = sphi 0, %s117
    %s135 = sphi 0, %s135
    %s137 = sphi 0, %s135
    %s138 = sphi 0, %s137
    %s152 = sphi 0, %s138
    %s156 = sphi 0, %s156
    %s158 = sphi 0, %s156
    %s159 = sphi 0, %s158
    %s173 = sphi 0, %s159
    %s177 = sphi 0, %s177
    %s179 = sphi 0, %s177
    %s180 = sphi 0, %s179
    %s194 = sphi 0, %s180
    %s198 = sphi 0, %s198
    %s200 = sphi 0, %s198
    %s201 = sphi 0, %s200
    %s215 = sphi 0, %s201
    %s219 = sphi 0, %s219
    %s221 = sphi 0, %s219
    %s222 = sphi 0, %s221
    %s236 = sphi 0, %s222
    %s240 = sphi 0, %s240
    %s242 = sphi 0, %s240
    %s243 = sphi 0, %s242
    %s257 = sphi 0, %s243
    %s263 = sphi 0, %s265
    %s266 = sphi 0, %s263
    %s267 = sphi 0, %s266
    %s283 = sphi 0, %s267
  $region4: #{tcclip_forward.16} parent=0 // loop_header_branch
    %20 = sbr.rel (%p18) target = $region8
  $region5: #{tcclip_forward.16} parent=0 // loop_body
    %s22 = ssub.s32 %s17, 1
    %s23 = ssub.s32 %s17, 2
    %s24 = sadd.s32 %s17, 1
    %s25 = ssub.s32 %s17, %s24
    %p26 = scmp.eq.s32.totalorder %s25, 0
    %s28 = sadd.s32 %s27, 1
    %s29 = scalar_select %p26, %s27, %s28
    %p32 = pneg %p26
    %p33 = scmp.eq.s32.totalorder %s17, 1
    %p34 = por %p32, %p33
    %p35 = scmp.ne.s32.totalorder %s27, %s30
    %p36 = scmp.eq.s32.totalorder %s17, 0
    %p37 = por %p35, %p36
    %p38 = scmp.ne.s32.totalorder %s27, %s30
    %p39 = scmp.eq.s32.totalorder %s22, 1
    %p40 = por %p38, %p39
    %p41 = scmp.ne.s32.totalorder %s30, %s31
    %p42 = scmp.eq.s32.totalorder %s22, 0
    %p43 = por %p41, %p42
    %p44 = scmp.ne.s32.totalorder %s30, %s31
    %p45 = scmp.eq.s32.totalorder %s23, 1
    %p46 = por %p44, %p45
    %p48 = scmp.ne.s32.totalorder %s31, %s47
    %p49 = scmp.eq.s32.totalorder %s23, 0
    %p50 = por %p48, %p49
    %s52 = sadd.s32 %s51, 1
    %p55 = scmp.eq.s32.totalorder %s17, 1
    %p56 = scmp.ne.s32.totalorder %s51, %s53
    %p57 = scmp.eq.s32.totalorder %s17, 0
    %p58 = por %p56, %p57
    %p59 = scmp.ne.s32.totalorder %s51, %s53
    %p60 = scmp.eq.s32.totalorder %s22, 1
    %p61 = por %p59, %p60
    %p62 = scmp.ne.s32.totalorder %s53, %s54
    %p63 = scmp.eq.s32.totalorder %s22, 0
    %p64 = por %p62, %p63
    %p65 = scmp.ne.s32.totalorder %s53, %s54
    %p66 = scmp.eq.s32.totalorder %s23, 1
    %p67 = por %p65, %p66
    %p69 = scmp.ne.s32.totalorder %s54, %s68
    %p70 = scmp.eq.s32.totalorder %s23, 0
    %p71 = por %p69, %p70
    %s73 = sadd.s32 %s72, 1
    %p76 = scmp.eq.s32.totalorder %s17, 1
    %p77 = scmp.ne.s32.totalorder %s72, %s74
    %p78 = scmp.eq.s32.totalorder %s17, 0
    %p79 = por %p77, %p78
    %p80 = scmp.ne.s32.totalorder %s72, %s74
    %p81 = scmp.eq.s32.totalorder %s22, 1
    %p82 = por %p80, %p81
    %p83 = scmp.ne.s32.totalorder %s74, %s75
    %p84 = scmp.eq.s32.totalorder %s22, 0
    %p85 = por %p83, %p84
    %p86 = scmp.ne.s32.totalorder %s74, %s75
    %p87 = scmp.eq.s32.totalorder %s23, 1
    %p88 = por %p86, %p87
    %p90 = scmp.ne.s32.totalorder %s75, %s89
    %p91 = scmp.eq.s32.totalorder %s23, 0
    %p92 = por %p90, %p91
    %s94 = sadd.s32 %s93, 1
    %p97 = scmp.eq.s32.totalorder %s17, 1
    %p98 = scmp.ne.s32.totalorder %s93, %s95
    %p99 = scmp.eq.s32.totalorder %s17, 0
    %p100 = por %p98, %p99
    %p101 = scmp.ne.s32.totalorder %s93, %s95
    %p102 = scmp.eq.s32.totalorder %s22, 1
    %p103 = por %p101, %p102
    %p104 = scmp.ne.s32.totalorder %s95, %s96
    %p105 = scmp.eq.s32.totalorder %s22, 0
    %p106 = por %p104, %p105
    %p107 = scmp.ne.s32.totalorder %s95, %s96
    %p108 = scmp.eq.s32.totalorder %s23, 1
    %p109 = por %p107, %p108
    %p111 = scmp.ne.s32.totalorder %s96, %s110
    %p112 = scmp.eq.s32.totalorder %s23, 0
    %p113 = por %p111, %p112
    %s115 = sadd.s32 %s114, 1
    %p118 = scmp.eq.s32.totalorder %s17, 1
    %p119 = scmp.ne.s32.totalorder %s114, %s116
    %p120 = scmp.eq.s32.totalorder %s17, 0
    %p121 = por %p119, %p120
    %p122 = scmp.ne.s32.totalorder %s114, %s116
    %p123 = scmp.eq.s32.totalorder %s22, 1
    %p124 = por %p122, %p123
    %p125 = scmp.ne.s32.totalorder %s116, %s117
    %p126 = scmp.eq.s32.totalorder %s22, 0
    %p127 = por %p125, %p126
    %p128 = scmp.ne.s32.totalorder %s116, %s117
    %p129 = scmp.eq.s32.totalorder %s23, 1
    %p130 = por %p128, %p129
    %p132 = scmp.ne.s32.totalorder %s117, %s131
    %p133 = scmp.eq.s32.totalorder %s23, 0
    %p134 = por %p132, %p133
    %s136 = sadd.s32 %s135, 1
    %p139 = scmp.eq.s32.totalorder %s17, 1
    %p140 = scmp.ne.s32.totalorder %s135, %s137
    %p141 = scmp.eq.s32.totalorder %s17, 0
    %p142 = por %p140, %p141
    %p143 = scmp.ne.s32.totalorder %s135, %s137
    %p144 = scmp.eq.s32.totalorder %s22, 1
    %p145 = por %p143, %p144
    %p146 = scmp.ne.s32.totalorder %s137, %s138
    %p147 = scmp.eq.s32.totalorder %s22, 0
    %p148 = por %p146, %p147
    %p149 = scmp.ne.s32.totalorder %s137, %s138
    %p150 = scmp.eq.s32.totalorder %s23, 1
    %p151 = por %p149, %p150
    %p153 = scmp.ne.s32.totalorder %s138, %s152
    %p154 = scmp.eq.s32.totalorder %s23, 0
    %p155 = por %p153, %p154
    %s157 = sadd.s32 %s156, 1
    %p160 = scmp.eq.s32.totalorder %s17, 1
    %p161 = scmp.ne.s32.totalorder %s156, %s158
    %p162 = scmp.eq.s32.totalorder %s17, 0
    %p163 = por %p161, %p162
    %p164 = scmp.ne.s32.totalorder %s156, %s158
    %p165 = scmp.eq.s32.totalorder %s22, 1
    %p166 = por %p164, %p165
    %p167 = scmp.ne.s32.totalorder %s158, %s159
    %p168 = scmp.eq.s32.totalorder %s22, 0
    %p169 = por %p167, %p168
    %p170 = scmp.ne.s32.totalorder %s158, %s159
    %p171 = scmp.eq.s32.totalorder %s23, 1
    %p172 = por %p170, %p171
    %p174 = scmp.ne.s32.totalorder %s159, %s173
    %p175 = scmp.eq.s32.totalorder %s23, 0
    %p176 = por %p174, %p175
    %s178 = sadd.s32 %s177, 1
    %p181 = scmp.eq.s32.totalorder %s17, 1
    %p182 = scmp.ne.s32.totalorder %s177, %s179
    %p183 = scmp.eq.s32.totalorder %s17, 0
    %p184 = por %p182, %p183
    %p185 = scmp.ne.s32.totalorder %s177, %s179
    %p186 = scmp.eq.s32.totalorder %s22, 1
    %p187 = por %p185, %p186
    %p188 = scmp.ne.s32.totalorder %s179, %s180
    %p189 = scmp.eq.s32.totalorder %s22, 0
    %p190 = por %p188, %p189
    %p191 = scmp.ne.s32.totalorder %s179, %s180
    %p192 = scmp.eq.s32.totalorder %s23, 1
    %p193 = por %p191, %p192
    %p195 = scmp.ne.s32.totalorder %s180, %s194
    %p196 = scmp.eq.s32.totalorder %s23, 0
    %p197 = por %p195, %p196
    %s199 = sadd.s32 %s198, 1
    %p202 = scmp.eq.s32.totalorder %s17, 1
    %p203 = scmp.ne.s32.totalorder %s198, %s200
    %p204 = scmp.eq.s32.totalorder %s17, 0
    %p205 = por %p203, %p204
    %p206 = scmp.ne.s32.totalorder %s198, %s200
    %p207 = scmp.eq.s32.totalorder %s22, 1
    %p208 = por %p206, %p207
    %p209 = scmp.ne.s32.totalorder %s200, %s201
    %p210 = scmp.eq.s32.totalorder %s22, 0
    %p211 = por %p209, %p210
    %p212 = scmp.ne.s32.totalorder %s200, %s201
    %p213 = scmp.eq.s32.totalorder %s23, 1
    %p214 = por %p212, %p213
    %p216 = scmp.ne.s32.totalorder %s201, %s215
    %p217 = scmp.eq.s32.totalorder %s23, 0
    %p218 = por %p216, %p217
    %s220 = sadd.s32 %s219, 1
    %p223 = scmp.eq.s32.totalorder %s17, 1
    %p224 = scmp.ne.s32.totalorder %s219, %s221
    %p225 = scmp.eq.s32.totalorder %s17, 0
    %p226 = por %p224, %p225
    %p227 = scmp.ne.s32.totalorder %s219, %s221
    %p228 = scmp.eq.s32.totalorder %s22, 1
    %p229 = por %p227, %p228
    %p230 = scmp.ne.s32.totalorder %s221, %s222
    %p231 = scmp.eq.s32.totalorder %s22, 0
    %p232 = por %p230, %p231
    %p233 = scmp.ne.s32.totalorder %s221, %s222
    %p234 = scmp.eq.s32.totalorder %s23, 1
    %p235 = por %p233, %p234
    %p237 = scmp.ne.s32.totalorder %s222, %s236
    %p238 = scmp.eq.s32.totalorder %s23, 0
    %p239 = por %p237, %p238
    %s241 = sadd.s32 %s240, 1
    %p244 = scmp.eq.s32.totalorder %s17, 1
    %p245 = scmp.ne.s32.totalorder %s240, %s242
    %p246 = scmp.eq.s32.totalorder %s17, 0
    %p247 = por %p245, %p246
    %p248 = scmp.ne.s32.totalorder %s240, %s242
    %p249 = scmp.eq.s32.totalorder %s22, 1
    %p250 = por %p248, %p249
    %p251 = scmp.ne.s32.totalorder %s242, %s243
    %p252 = scmp.eq.s32.totalorder %s22, 0
    %p253 = por %p251, %p252
    %p254 = scmp.ne.s32.totalorder %s242, %s243
    %p255 = scmp.eq.s32.totalorder %s23, 1
    %p256 = por %p254, %p255
    %p258 = scmp.ne.s32.totalorder %s243, %s257
    %p259 = scmp.eq.s32.totalorder %s23, 0
    %p260 = por %p258, %p259
    %s261 = ssub.s32 %s17, %s24
    %p262 = scmp.eq.s32.totalorder %s261, 0
    %s264 = sadd.s32 %s263, 1
    %s265 = scalar_select %p262, %s263, %s264
    %p268 = pneg %p262
    %p269 = scmp.eq.s32.totalorder %s17, 1
    %p270 = por %p268, %p269
    %p271 = scmp.ne.s32.totalorder %s263, %s266
    %p272 = scmp.eq.s32.totalorder %s17, 0
    %p273 = por %p271, %p272
    %p274 = scmp.ne.s32.totalorder %s263, %s266
    %p275 = scmp.eq.s32.totalorder %s22, 1
    %p276 = por %p274, %p275
    %p277 = scmp.ne.s32.totalorder %s266, %s267
    %p278 = scmp.eq.s32.totalorder %s22, 0
    %p279 = por %p277, %p278
    %p280 = scmp.ne.s32.totalorder %s266, %s267
    %p281 = scmp.eq.s32.totalorder %s23, 1
    %p282 = por %p280, %p281
    %p284 = scmp.ne.s32.totalorder %s267, %s283
    %p285 = scmp.eq.s32.totalorder %s23, 0
    %p286 = por %p284, %p285
    %p287 = scmp.le.s32.totalorder 1, %s17
    %p288 = scmp.lt.s32.totalorder %s17, 3
    %p289 = pnand %p287, %p288
    %p290 = pneg %p289
    // Predicated region
    $region9: #{tcclip_forward.16} parent=5 // pred_check
      _
    $region10: #{tcclip_forward.16} parent=5 // pred_check_branch
      %292 = sbr.rel (%p289) target = $region12
    $region11: #{tcclip_forward.16} parent=5 // pred_region
      %s293 = ssub.s32 %s17, 1
      // Predicated region
      $region13: #{tcclip_forward.16} parent=11 // pred_check
        %p294 = pneg %p64
      $region14: #{tcclip_forward.16} parent=11 // pred_check_branch
        %296 = sbr.rel (%p294) target = $region16
      $region15: #{tcclip_forward.16} parent=11 // pred_region
        _
      $region16: #{tcclip_forward.16} parent=11 // pred_fallthru
        _
      // Predicated region
      $region17: #{tcclip_forward.16} parent=11 // pred_check
        %p297 = pneg %p85
      $region18: #{tcclip_forward.16} parent=11 // pred_check_branch
        %299 = sbr.rel (%p297) target = $region20
      $region19: #{tcclip_forward.16} parent=11 // pred_region
        _
      $region20: #{tcclip_forward.16} parent=11 // pred_fallthru
        _
      // Predicated region
      $region21: #{tcclip_forward.16} parent=11 // pred_check
        %p300 = pneg %p106
      $region22: #{tcclip_forward.16} parent=11 // pred_check_branch
        %302 = sbr.rel (%p300) target = $region24
      $region23: #{tcclip_forward.16} parent=11 // pred_region
        _
      $region24: #{tcclip_forward.16} parent=11 // pred_fallthru
        _
      // Predicated region
      $region25: #{tcclip_forward.16} parent=11 // pred_check
        %p303 = pneg %p127
      $region26: #{tcclip_forward.16} parent=11 // pred_check_branch
        %305 = sbr.rel (%p303) target = $region28
      $region27: #{tcclip_forward.16} parent=11 // pred_region
        _
      $region28: #{tcclip_forward.16} parent=11 // pred_fallthru
        _
      // Predicated region
      $region29: #{tcclip_forward.16} parent=11 // pred_check
        %p306 = pneg %p148
      $region30: #{tcclip_forward.16} parent=11 // pred_check_branch
        %308 = sbr.rel (%p306) target = $region32
      $region31: #{tcclip_forward.16} parent=11 // pred_region
        _
      $region32: #{tcclip_forward.16} parent=11 // pred_fallthru
        _
      // Predicated region
      $region33: #{tcclip_forward.16} parent=11 // pred_check
        %p309 = pneg %p169
      $region34: #{tcclip_forward.16} parent=11 // pred_check_branch
        %311 = sbr.rel (%p309) target = $region36
      $region35: #{tcclip_forward.16} parent=11 // pred_region
        _
      $region36: #{tcclip_forward.16} parent=11 // pred_fallthru
        _
      // Predicated region
      $region37: #{tcclip_forward.16} parent=11 // pred_check
        %p312 = pneg %p190
      $region38: #{tcclip_forward.16} parent=11 // pred_check_branch
        %314 = sbr.rel (%p312) target = $region40
      $region39: #{tcclip_forward.16} parent=11 // pred_region
        _
      $region40: #{tcclip_forward.16} parent=11 // pred_fallthru
        _
      // Predicated region
      $region41: #{tcclip_forward.16} parent=11 // pred_check
        %p315 = pneg %p211
      $region42: #{tcclip_forward.16} parent=11 // pred_check_branch
        %317 = sbr.rel (%p315) target = $region44
      $region43: #{tcclip_forward.16} parent=11 // pred_region
        _
      $region44: #{tcclip_forward.16} parent=11 // pred_fallthru
        _
      // Predicated region
      $region45: #{tcclip_forward.16} parent=11 // pred_check
        %p318 = pneg %p232
      $region46: #{tcclip_forward.16} parent=11 // pred_check_branch
        %320 = sbr.rel (%p318) target = $region48
      $region47: #{tcclip_forward.16} parent=11 // pred_region
        _
      $region48: #{tcclip_forward.16} parent=11 // pred_fallthru
        _
      // Predicated region
      $region49: #{tcclip_forward.16} parent=11 // pred_check
        %p321 = pneg %p253
      $region50: #{tcclip_forward.16} parent=11 // pred_check_branch
        %323 = sbr.rel (%p321) target = $region52
      $region51: #{tcclip_forward.16} parent=11 // pred_region
        _
      $region52: #{tcclip_forward.16} parent=11 // pred_fallthru
        _
    $region12: #{tcclip_forward.16} parent=5 // pred_fallthru
      _
    %p324 = scmp.lt.s32.totalorder %s17, 2
    // Predicated region
    $region53: #{tcclip_forward.16} parent=5 // pred_check
      %p325 = pneg %p324
    $region54: #{tcclip_forward.16} parent=5 // pred_check_branch
      %327 = sbr.rel (%p325) target = $region56
    $region55: #{tcclip_forward.16} parent=5 // pred_region
      // Predicated region
      $region57: #{tcclip_forward.16} parent=55 // pred_check
        %p328 = pneg %p37
      $region58: #{tcclip_forward.16} parent=55 // pred_check_branch
        %330 = sbr.rel (%p328) target = $region60
      $region59: #{tcclip_forward.16} parent=55 // pred_region
        %p331 = scmp.lt.s32.totalorder %s17, 1
        %s332 = scalar_select %p331, %s17, 1
        %s333 = smul.addr %s332, 3
        %s334 = smul.addr %s333, 4
        %s335 = scalar_lea.vmem %s0, %s334
      $region60: #{tcclip_forward.16} parent=55 // pred_fallthru
        _
    $region56: #{tcclip_forward.16} parent=5 // pred_fallthru
      _
    %p336 = scmp.le.s32.totalorder 1, %s17
    %p337 = scmp.lt.s32.totalorder %s17, 3
    %p338 = pnand %p336, %p337
    %p339 = pneg %p338
    // Predicated region
    $region61: #{tcclip_forward.16} parent=5 // pred_check
      _
    $region62: #{tcclip_forward.16} parent=5 // pred_check_branch
      %341 = sbr.rel (%p338) target = $region64
    $region63: #{tcclip_forward.16} parent=5 // pred_region
      %s342 = ssub.s32 %s17, 1
      %p343 = scmp.lt.s32.totalorder %s22, 1
      %s344 = scalar_select %p343, %s22, 1
      %s345 = smul.addr %s344, 3
      %s346 = smul.addr %s345, 4
      %s347 = scalar_lea.vmem %s0, %s346
      %p348 = pneg %p43
      %p349 = pneg %p40
      %p350 = pneg %p64
      %p351 = pneg %p61
      %p352 = pneg %p85
      %p353 = pneg %p82
      %p354 = pneg %p106
      %p355 = pneg %p103
      %p356 = pneg %p127
      %p357 = pneg %p124
      %p358 = pneg %p148
      %p359 = pneg %p145
      %p360 = pneg %p169
      %p361 = pneg %p166
      %p362 = pneg %p190
      %p363 = pneg %p187
      %p364 = pneg %p211
      %p365 = pneg %p208
      %p366 = pneg %p232
      %p367 = pneg %p229
      %p368 = pneg %p253
      %p369 = pneg %p250
      %p370 = pneg %p279
      %p371 = pneg %p276
      %p372 = scmp.lt.s32.totalorder %s22, 1
      %s373 = scalar_select %p372, %s22, 1
      %s374 = smul.addr %s373, 3
      %s375 = smul.addr %s374, 4
      %s376 = scalar_lea.vmem %s11, %s375
      %p377 = scmp.lt.s32.totalorder %s22, 1
      %s378 = scalar_select %p377, %s22, 1
      %s379 = smul.addr %s378, 3
      %s380 = smul.addr %s379, 4
      %s381 = scalar_lea.vmem %s0, %s380
      %p382 = scmp.lt.s32.totalorder %s22, 1
      %s383 = scalar_select %p382, %s22, 1
      %s384 = smul.addr %s383, 3
      %s385 = smul.addr %s384, 4
      %s386 = scalar_lea.vmem %s11, %s385
      %v388 = vld [vmem:[%s381] sm:$0xf]
      %v389 = vld [vmem:[%s381 + $0x4] sm:$0xf]
      %v390 = vld [vmem:[%s381 + $0x8] sm:$0xf]
      %v391 = vunpack.c.l.bf16 %v388
      %v392 = vunpack.c.l.bf16 %v389
      %v393 = vunpack.c.l.bf16 %v390
      %v394 = vld [vmem:[%s9] sm:$0x1]
      %v395 = vld [vmem:[%s10] sm:$0x1]
      %396 = vadd.xlane.f32.xlu0 %v391
      %v397 = vpop.xlane.xlu0 %396
      %398 = vadd.xlane.f32.xlu0 %v392
      %v399 = vpop.xlane.xlu0 %398
      %400 = vadd.xlane.f32.xlu0 %v393
      %v401 = vpop.xlane.xlu0 %400
      %v402 = vrcp.pop 128.0
      %v403 = vmul.f32 128.0, %v402
      %v404 = vsub.f32 1.0, %v403
      %v405 = vmul.f32 %v402, %v404
      %v406 = vadd.f32 %v402, %v405
      %vm407 = vweird.f32 %v402
      %v408 = vsel %vm407, %v402, %v406
      %v409 = vmul.f32 %v397, %v408
      %v410 = vmul.f32 %v399, %v408
      %v411 = vmul.f32 %v401, %v408
      %v412 = vsub.f32 %v391, %v409
      %v413 = vsub.f32 %v392, %v410
      %v414 = vsub.f32 %v393, %v411
      %v415 = vmul.f32 %v412, %v412
      %v416 = vmul.f32 %v413, %v413
      %v417 = vmul.f32 %v414, %v414
      %418 = vadd.xlane.f32.xlu0 %v415
      %v419 = vpop.xlane.xlu0 %418
      %420 = vadd.xlane.f32.xlu0 %v416
      %v421 = vpop.xlane.xlu0 %420
      %422 = vadd.xlane.f32.xlu0 %v417
      %v423 = vpop.xlane.xlu0 %422
      %v424 = vmul.f32 %v419, %v408
      %v425 = vmul.f32 %v421, %v408
      %v426 = vmul.f32 %v423, %v408
      %v427 = vadd.f32 %v424, 1e-05
      %v428 = vadd.f32 %v425, 1e-05
      %v429 = vadd.f32 %v426, 1e-05
      %v430 = vrsqrt.pop %v427
      %v431 = vmul.f32 %v430, %v427
      %v432 = vmul.f32 %v431, %v430
      %v433 = vmul.f32 0.5, %v432
      %v434 = vsub.f32 1.5, %v433
      %v435 = vmul.f32 %v430, %v434
      %vm436 = vweird.f32 %v427
      %vm437 = vweird.f32 %v430
      %vm438 = vmor %vm436, %vm437
      %v439 = vsel %vm438, %v430, %v435
      %v440 = vrsqrt.pop %v428
      %v441 = vmul.f32 %v440, %v428
      %v442 = vmul.f32 %v441, %v440
      %v443 = vmul.f32 0.5, %v442
      %v444 = vsub.f32 1.5, %v443
      %v445 = vmul.f32 %v440, %v444
      %vm446 = vweird.f32 %v428
      %vm447 = vweird.f32 %v440
      %vm448 = vmor %vm446, %vm447
      %v449 = vsel %vm448, %v440, %v445
      %v450 = vrsqrt.pop %v429
      %v451 = vmul.f32 %v450, %v429
      %v452 = vmul.f32 %v451, %v450
      %v453 = vmul.f32 0.5, %v452
      %v454 = vsub.f32 1.5, %v453
      %v455 = vmul.f32 %v450, %v454
      %vm456 = vweird.f32 %v429
      %vm457 = vweird.f32 %v450
      %vm458 = vmor %vm456, %vm457
      %v459 = vsel %vm458, %v450, %v455
      %v460 = vmul.f32 %v412, %v439
      %v461 = vmul.f32 %v413, %v449
      %v462 = vmul.f32 %v414, %v459
      %v464 = vperm.slane %v394, 0
      %v466 = vmul.f32 %v460, %v464
      %v467 = vmul.f32 %v461, %v464
      %v468 = vmul.f32 %v462, %v464
      %v470 = vperm.slane %v395, 0
      %v472 = vadd.f32 %v466, %v470
      %v473 = vadd.f32 %v467, %v470
      %v474 = vadd.f32 %v468, %v470
      %v475 = vpack.c.bf16 %v473, %v472
      %v476 = vpack.c.bf16 %v474, %v474
      %v477 = vlaneseq
      %v478 = vand.u32 %v477, 127
      %vm479 = vcmp.lt.s32.totalorder %v478, 17
      %v480 = vsel %vm479, 0.0, -1e+30
      %v481 = vld [vmem:[%s1] sm:$0xf]
      %v482 = vld [vmem:[%s1 + $0x4] sm:$0xf]
      %v483 = vld [vmem:[%s1 + $0x8] sm:$0xf]
      %v484 = vld [vmem:[%s1 + $0xc] sm:$0xf]
      %v485 = vld [vmem:[%s1 + $0x10] sm:$0xf]
      %v486 = vld [vmem:[%s1 + $0x14] sm:$0xf]
      %v487 = vld [vmem:[%s1 + $0x18] sm:$0xf]
      %v488 = vld [vmem:[%s1 + $0x1c] sm:$0xf]
      %v489 = vld [vmem:[%s1 + $0x20] sm:$0xf]
      %v490 = vld [vmem:[%s1 + $0x24] sm:$0xf]
      %v491 = vld [vmem:[%s1 + $0x28] sm:$0xf]
      %v492 = vld [vmem:[%s1 + $0x2c] sm:$0xf]
      %v493 = vld [vmem:[%s1 + $0x30] sm:$0xf]
      %v494 = vld [vmem:[%s1 + $0x34] sm:$0xf]
      %v495 = vld [vmem:[%s1 + $0x38] sm:$0xf]
      %v496 = vld [vmem:[%s1 + $0x3c] sm:$0xf]
      %v497 = vld [vmem:[%s4] sm:$0x1]
      %v499 = vperm.slane %v497, 0
      %v517 = vunpack.c.l.b16 %v481
      %v518 = vunpack.c.l.b16 %v482
      %v519 = vunpack.c.l.b16 %v483
      %v520 = vunpack.c.l.b16 %v484
      %v521 = vunpack.c.l.b16 %v485
      %v522 = vunpack.c.l.b16 %v486
      %v523 = vunpack.c.l.b16 %v487
      %v524 = vunpack.c.l.b16 %v488
      %v525 = vunpack.c.l.b16 %v489
      %v526 = vunpack.c.l.b16 %v490
      %v527 = vunpack.c.l.b16 %v491
      %v528 = vunpack.c.l.b16 %v492
      %v529 = vunpack.c.l.b16 %v493
      %v530 = vunpack.c.l.b16 %v494
      %v531 = vunpack.c.l.b16 %v495
      %v532 = vunpack.c.l.b16 %v496
      %v533 = vpack.c.b16 %v518, %v517
      %v534 = vpack.c.b16 %v520, %v519
      %v535 = vpack.c.b16 %v522, %v521
      %v536 = vpack.c.b16 %v524, %v523
      %v537 = vpack.c.b16 %v526, %v525
      %v538 = vpack.c.b16 %v528, %v527
      %v539 = vpack.c.b16 %v530, %v529
      %v540 = vpack.c.b16 %v532, %v531
      %549 = vmatpush.bf16.msra.mxu0 %v540
      %550 = vmatpush.bf16.msra.mxu0 %v539
      %551 = vmatpush.bf16.msra.mxu0 %v538
      %552 = vmatpush.bf16.msra.mxu0 %v537
      %553 = vmatpush.bf16.msra.mxu0 %v536
      %554 = vmatpush.bf16.msra.mxu0 %v535
      %555 = vmatpush.bf16.msra.mxu0 %v534
      %556 = vmatpush.bf16.msra.mxu0 %v533
      %557 = vmatmul.bf16.gmra.mxu0 %v475
      %v558 = vpop.f32.mrf.mxu0
      %v559 = vadd.f32 %v499, %v558
      %v560 = vpop.f32.mrf.mxu0
      %v561 = vadd.f32 %v499, %v560
      %562 = vmatmul.bf16.gmra.mxu0 %v476
      %v563 = vpop.f32.mrf.mxu0
      %v564 = vadd.f32 %v499, %v563
      %v565 = vpop.f32.mrf.mxu0
      %566 = vdwg.mxu0
      %v567 = vld [vmem:[%s2] sm:$0xf]
      %v568 = vld [vmem:[%s2 + $0x4] sm:$0xf]
      %v569 = vld [vmem:[%s2 + $0x8] sm:$0xf]
      %v570 = vld [vmem:[%s2 + $0xc] sm:$0xf]
      %v571 = vld [vmem:[%s2 + $0x10] sm:$0xf]
      %v572 = vld [vmem:[%s2 + $0x14] sm:$0xf]
      %v573 = vld [vmem:[%s2 + $0x18] sm:$0xf]
      %v574 = vld [vmem:[%s2 + $0x1c] sm:$0xf]
      %v575 = vld [vmem:[%s2 + $0x20] sm:$0xf]
      %v576 = vld [vmem:[%s2 + $0x24] sm:$0xf]
      %v577 = vld [vmem:[%s2 + $0x28] sm:$0xf]
      %v578 = vld [vmem:[%s2 + $0x2c] sm:$0xf]
      %v579 = vld [vmem:[%s2 + $0x30] sm:$0xf]
      %v580 = vld [vmem:[%s2 + $0x34] sm:$0xf]
      %v581 = vld [vmem:[%s2 + $0x38] sm:$0xf]
      %v582 = vld [vmem:[%s2 + $0x3c] sm:$0xf]
      %v583 = vld [vmem:[%s5] sm:$0x1]
      %v585 = vperm.slane %v583, 0
      %v603 = vunpack.c.l.b16 %v567
      %v604 = vunpack.c.l.b16 %v568
      %v605 = vunpack.c.l.b16 %v569
      %v606 = vunpack.c.l.b16 %v570
      %v607 = vunpack.c.l.b16 %v571
      %v608 = vunpack.c.l.b16 %v572
      %v609 = vunpack.c.l.b16 %v573
      %v610 = vunpack.c.l.b16 %v574
      %v611 = vunpack.c.l.b16 %v575
      %v612 = vunpack.c.l.b16 %v576
      %v613 = vunpack.c.l.b16 %v577
      %v614 = vunpack.c.l.b16 %v578
      %v615 = vunpack.c.l.b16 %v579
      %v616 = vunpack.c.l.b16 %v580
      %v617 = vunpack.c.l.b16 %v581
      %v618 = vunpack.c.l.b16 %v582
      %v619 = vpack.c.b16 %v604, %v603
      %v620 = vpack.c.b16 %v606, %v605
      %v621 = vpack.c.b16 %v608, %v607
      %v622 = vpack.c.b16 %v610, %v609
      %v623 = vpack.c.b16 %v612, %v611
      %v624 = vpack.c.b16 %v614, %v613
      %v625 = vpack.c.b16 %v616, %v615
      %v626 = vpack.c.b16 %v618, %v617
      %635 = vmatpush.bf16.msra.mxu0 %v626
      %636 = vmatpush.bf16.msra.mxu0 %v625
      %637 = vmatpush.bf16.msra.mxu0 %v624
      %638 = vmatpush.bf16.msra.mxu0 %v623
      %639 = vmatpush.bf16.msra.mxu0 %v622
      %640 = vmatpush.bf16.msra.mxu0 %v621
      %641 = vmatpush.bf16.msra.mxu0 %v620
      %642 = vmatpush.bf16.msra.mxu0 %v619
      %643 = vmatmul.bf16.gmra.mxu0 %v475
      %v644 = vpop.f32.mrf.mxu0
      %v645 = vadd.f32 %v585, %v644
      %v646 = vpop.f32.mrf.mxu0
      %v647 = vadd.f32 %v585, %v646
      %648 = vmatmul.bf16.gmra.mxu0 %v476
      %v649 = vpop.f32.mrf.mxu0
      %v650 = vadd.f32 %v585, %v649
      %v651 = vpop.f32.mrf.mxu0
      %652 = vdwg.mxu0
      %v653 = vld [vmem:[%s3] sm:$0xf]
      %v654 = vld [vmem:[%s3 + $0x4] sm:$0xf]
      %v655 = vld [vmem:[%s3 + $0x8] sm:$0xf]
      %v656 = vld [vmem:[%s3 + $0xc] sm:$0xf]
      %v657 = vld [vmem:[%s3 + $0x10] sm:$0xf]
      %v658 = vld [vmem:[%s3 + $0x14] sm:$0xf]
      %v659 = vld [vmem:[%s3 + $0x18] sm:$0xf]
      %v660 = vld [vmem:[%s3 + $0x1c] sm:$0xf]
      %v661 = vld [vmem:[%s3 + $0x20] sm:$0xf]
      %v662 = vld [vmem:[%s3 + $0x24] sm:$0xf]
      %v663 = vld [vmem:[%s3 + $0x28] sm:$0xf]
      %v664 = vld [vmem:[%s3 + $0x2c] sm:$0xf]
      %v665 = vld [vmem:[%s3 + $0x30] sm:$0xf]
      %v666 = vld [vmem:[%s3 + $0x34] sm:$0xf]
      %v667 = vld [vmem:[%s3 + $0x38] sm:$0xf]
      %v668 = vld [vmem:[%s3 + $0x3c] sm:$0xf]
      %v669 = vld [vmem:[%s6] sm:$0x1]
      %v671 = vperm.slane %v669, 0
      %v689 = vunpack.c.l.b16 %v653
      %v690 = vunpack.c.l.b16 %v654
      %v691 = vunpack.c.l.b16 %v655
      %v692 = vunpack.c.l.b16 %v656
      %v693 = vunpack.c.l.b16 %v657
      %v694 = vunpack.c.l.b16 %v658
      %v695 = vunpack.c.l.b16 %v659
      %v696 = vunpack.c.l.b16 %v660
      %v697 = vunpack.c.l.b16 %v661
      %v698 = vunpack.c.l.b16 %v662
      %v699 = vunpack.c.l.b16 %v663
      %v700 = vunpack.c.l.b16 %v664
      %v701 = vunpack.c.l.b16 %v665
      %v702 = vunpack.c.l.b16 %v666
      %v703 = vunpack.c.l.b16 %v667
      %v704 = vunpack.c.l.b16 %v668
      %v705 = vpack.c.b16 %v690, %v689
      %v706 = vpack.c.b16 %v692, %v691
      %v707 = vpack.c.b16 %v694, %v693
      %v708 = vpack.c.b16 %v696, %v695
      %v709 = vpack.c.b16 %v698, %v697
      %v710 = vpack.c.b16 %v700, %v699
      %v711 = vpack.c.b16 %v702, %v701
      %v712 = vpack.c.b16 %v704, %v703
      %721 = vmatpush.bf16.msra.mxu0 %v712
      %722 = vmatpush.bf16.msra.mxu0 %v711
      %723 = vmatpush.bf16.msra.mxu0 %v710
      %724 = vmatpush.bf16.msra.mxu0 %v709
      %725 = vmatpush.bf16.msra.mxu0 %v708
      %726 = vmatpush.bf16.msra.mxu0 %v707
      %727 = vmatpush.bf16.msra.mxu0 %v706
      %728 = vmatpush.bf16.msra.mxu0 %v705
      %729 = vmatmul.bf16.gmra.mxu0 %v475
      %v730 = vpop.f32.mrf.mxu0
      %v731 = vadd.f32 %v671, %v730
      %v732 = vpop.f32.mrf.mxu0
      %v733 = vadd.f32 %v671, %v732
      %734 = vmatmul.bf16.gmra.mxu0 %v476
      %v735 = vpop.f32.mrf.mxu0
      %v736 = vadd.f32 %v671, %v735
      %v737 = vpop.f32.mrf.mxu0
      %738 = vdwg.mxu0
      %v739 = vpack.c.bf16 %v561, %v559
      %v740 = vpack.c.bf16 %v564, %v564
      %v741 = vpack.c.bf16 %v647, %v645
      %v742 = vpack.c.bf16 %v650, %v650
      %vm743 = vcmask 261120
      %v745 = vsel %vm743, %v739, 0
      %v748 = vsel %vm743, %v740, 0
      %v751 = vsel %vm743, %v741, 0
      %v754 = vsel %vm743, %v742, 0
      %756 = vmatpush.bf16.xpose.msra.mxu0 0
      %757 = vmatpush.bf16.xpose.msra.mxu0 0
      %758 = vmatpush.bf16.xpose.msra.mxu0 0
      %759 = vmatpush.bf16.xpose.msra.mxu0 0
      %760 = vmatpush.bf16.xpose.msra.mxu0 0
      %761 = vmatpush.bf16.xpose.msra.mxu0 0
      %762 = vmatpush.bf16.xpose.msra.mxu0 %v754
      %763 = vmatpush.bf16.xpose.msra.mxu0 %v751
      %764 = vmatmul.bf16.gmra.mxu0 %v745
      %v765 = vpop.f32.mrf.mxu0
      %v766 = vadd.f32 0.0, %v765
      %v767 = vpop.f32.mrf.mxu0
      %v768 = vadd.f32 0.0, %v767
      %769 = vmatmul.bf16.gmra.mxu0 %v748
      %v770 = vpop.f32.mrf.mxu0
      %v771 = vadd.f32 0.0, %v770
      %v772 = vpop.f32.mrf.mxu0
      %773 = vdwg.mxu0
      %v774 = vmul.f32 %v766, 0.17677669
      %v775 = vmul.f32 %v768, 0.17677669
      %v776 = vmul.f32 %v771, 0.17677669
      %v777 = vadd.f32 %v774, %v480
      %v778 = vadd.f32 %v775, %v480
      %v779 = vadd.f32 %v776, %v480
      %vm780 = vcmask 195584
      %v781 = vsel %vm780, %v777, -inf
      %782 = vmax.xlane.f32.xlu0 %v781
      %v783 = vpop.xlane.xlu0 %782
      %v784 = vsel %vm780, %v778, -inf
      %785 = vmax.xlane.f32.xlu0 %v784
      %v786 = vpop.xlane.xlu0 %785
      %v787 = vsel %vm780, %v779, -inf
      %788 = vmax.xlane.f32.xlu0 %v787
      %v789 = vpop.xlane.xlu0 %788
      %v790 = vsub.f32 %v777, %v783
      %v791 = vsub.f32 %v778, %v786
      %v792 = vsub.f32 %v779, %v789
      %v793 = vmul.f32 %v790, 1.442695
      %v794 = vpow.pop %v793
      %v795 = vmul.f32 %v791, 1.442695
      %v796 = vpow.pop %v795
      %v797 = vmul.f32 %v792, 1.442695
      %v798 = vpow.pop %v797
      %v799 = vsel %vm780, %v794, 0.0
      %800 = vadd.xlane.f32.xlu0 %v799
      %v801 = vpop.xlane.xlu0 %800
      %v802 = vsel %vm780, %v796, 0.0
      %803 = vadd.xlane.f32.xlu0 %v802
      %v804 = vpop.xlane.xlu0 %803
      %v805 = vsel %vm780, %v798, 0.0
      %806 = vadd.xlane.f32.xlu0 %v805
      %v807 = vpop.xlane.xlu0 %806
      %v808 = vrcp.pop %v801
      %v809 = vrcp.pop %v804
      %v810 = vrcp.pop %v807
      %v811 = vmul.f32 %v794, %v808
      %v812 = vmul.f32 %v796, %v809
      %v813 = vmul.f32 %v798, %v810
      %v814 = vpack.c.bf16 %v812, %v811
      %v815 = vpack.c.bf16 %v813, %v813
      %v816 = vpack.c.bf16 %v733, %v731
      %v817 = vpack.c.bf16 %v736, %v736
      %v819 = vsel %vm780, %v814, 0
      %v822 = vsel %vm780, %v815, 0
      %vm824 = vcmask 1043456
      %v826 = vsel %vm824, %v817, 0
      %828 = vmatpush.bf16.msra.mxu0 0
      %829 = vmatpush.bf16.msra.mxu0 0
      %830 = vmatpush.bf16.msra.mxu0 0
      %831 = vmatpush.bf16.msra.mxu0 0
      %832 = vmatpush.bf16.msra.mxu0 0
      %833 = vmatpush.bf16.msra.mxu0 0
      %834 = vmatpush.bf16.msra.mxu0 %v826
      %835 = vmatpush.bf16.msra.mxu0 %v816
      %836 = vmatmul.bf16.gmra.mxu0 %v819
      %v837 = vpop.f32.mrf.mxu0
      %v838 = vadd.f32 0.0, %v837
      %v839 = vpop.f32.mrf.mxu0
      %v840 = vadd.f32 0.0, %v839
      %841 = vmatmul.bf16.gmra.mxu0 %v822
      %v842 = vpop.f32.mrf.mxu0
      %v843 = vadd.f32 0.0, %v842
      %v844 = vpop.f32.mrf.mxu0
      %845 = vdwg.mxu0
      %v846 = vpack.c.bf16 %v840, %v838
      %v847 = vpack.c.bf16 %v843, %v843
      %v848 = vld [vmem:[%s7] sm:$0xf]
      %v849 = vld [vmem:[%s7 + $0x4] sm:$0xf]
      %v850 = vld [vmem:[%s7 + $0x8] sm:$0xf]
      %v851 = vld [vmem:[%s7 + $0xc] sm:$0xf]
      %s852 = scalar_lea.vmem %s1, 64
      %v853 = vld [vmem:[%s852] sm:$0xf]
      %v854 = vld [vmem:[%s852 + $0x4] sm:$0xf]
      %v855 = vld [vmem:[%s852 + $0x8] sm:$0xf]
      %v856 = vld [vmem:[%s852 + $0xc] sm:$0xf]
      %v857 = vld [vmem:[%s852 + $0x10] sm:$0xf]
      %v858 = vld [vmem:[%s852 + $0x14] sm:$0xf]
      %v859 = vld [vmem:[%s852 + $0x18] sm:$0xf]
      %v860 = vld [vmem:[%s852 + $0x1c] sm:$0xf]
      %v861 = vld [vmem:[%s852 + $0x20] sm:$0xf]
      %v862 = vld [vmem:[%s852 + $0x24] sm:$0xf]
      %v863 = vld [vmem:[%s852 + $0x28] sm:$0xf]
      %v864 = vld [vmem:[%s852 + $0x2c] sm:$0xf]
      %v865 = vld [vmem:[%s852 + $0x30] sm:$0xf]
      %v866 = vld [vmem:[%s852 + $0x34] sm:$0xf]
      %v867 = vld [vmem:[%s852 + $0x38] sm:$0xf]
      %v868 = vld [vmem:[%s852 + $0x3c] sm:$0xf]
      %s869 = scalar_lea.vmem %s4, 1
      %v870 = vld [vmem:[%s869] sm:$0x1]
      %v872 = vperm.slane %v870, 0
      %v890 = vunpack.c.l.b16 %v853
      %v891 = vunpack.c.l.b16 %v854
      %v892 = vunpack.c.l.b16 %v855
      %v893 = vunpack.c.l.b16 %v856
      %v894 = vunpack.c.l.b16 %v857
      %v895 = vunpack.c.l.b16 %v858
      %v896 = vunpack.c.l.b16 %v859
      %v897 = vunpack.c.l.b16 %v860
      %v898 = vunpack.c.l.b16 %v861
      %v899 = vunpack.c.l.b16 %v862
      %v900 = vunpack.c.l.b16 %v863
      %v901 = vunpack.c.l.b16 %v864
      %v902 = vunpack.c.l.b16 %v865
      %v903 = vunpack.c.l.b16 %v866
      %v904 = vunpack.c.l.b16 %v867
      %v905 = vunpack.c.l.b16 %v868
      %v906 = vpack.c.b16 %v891, %v890
      %v907 = vpack.c.b16 %v893, %v892
      %v908 = vpack.c.b16 %v895, %v894
      %v909 = vpack.c.b16 %v897, %v896
      %v910 = vpack.c.b16 %v899, %v898
      %v911 = vpack.c.b16 %v901, %v900
      %v912 = vpack.c.b16 %v903, %v902
      %v913 = vpack.c.b16 %v905, %v904
      %922 = vmatpush.bf16.msra.mxu0 %v913
      %923 = vmatpush.bf16.msra.mxu0 %v912
      %924 = vmatpush.bf16.msra.mxu0 %v911
      %925 = vmatpush.bf16.msra.mxu0 %v910
      %926 = vmatpush.bf16.msra.mxu0 %v909
      %927 = vmatpush.bf16.msra.mxu0 %v908
      %928 = vmatpush.bf16.msra.mxu0 %v907
      %929 = vmatpush.bf16.msra.mxu0 %v906
      %930 = vmatmul.bf16.gmra.mxu0 %v475
      %v931 = vpop.f32.mrf.mxu0
      %v932 = vadd.f32 %v872, %v931
      %v933 = vpop.f32.mrf.mxu0
      %v934 = vadd.f32 %v872, %v933
      %935 = vmatmul.bf16.gmra.mxu0 %v476
      %v936 = vpop.f32.mrf.mxu0
      %v937 = vadd.f32 %v872, %v936
      %v938 = vpop.f32.mrf.mxu0
      %939 = vdwg.mxu0
      %s940 = scalar_lea.vmem %s2, 64
      %v941 = vld [vmem:[%s940] sm:$0xf]
      %v942 = vld [vmem:[%s940 + $0x4] sm:$0xf]
      %v943 = vld [vmem:[%s940 + $0x8] sm:$0xf]
      %v944 = vld [vmem:[%s940 + $0xc] sm:$0xf]
      %v945 = vld [vmem:[%s940 + $0x10] sm:$0xf]
      %v946 = vld [vmem:[%s940 + $0x14] sm:$0xf]
      %v947 = vld [vmem:[%s940 + $0x18] sm:$0xf]
      %v948 = vld [vmem:[%s940 + $0x1c] sm:$0xf]
      %v949 = vld [vmem:[%s940 + $0x20] sm:$0xf]
      %v950 = vld [vmem:[%s940 + $0x24] sm:$0xf]
      %v951 = vld [vmem:[%s940 + $0x28] sm:$0xf]
      %v952 = vld [vmem:[%s940 + $0x2c] sm:$0xf]
      %v953 = vld [vmem:[%s940 + $0x30] sm:$0xf]
      %v954 = vld [vmem:[%s940 + $0x34] sm:$0xf]
      %v955 = vld [vmem:[%s940 + $0x38] sm:$0xf]
      %v956 = vld [vmem:[%s940 + $0x3c] sm:$0xf]
      %s957 = scalar_lea.vmem %s5, 1
      %v958 = vld [vmem:[%s957] sm:$0x1]
      %v960 = vperm.slane %v958, 0
      %v978 = vunpack.c.l.b16 %v941
      %v979 = vunpack.c.l.b16 %v942
      %v980 = vunpack.c.l.b16 %v943
      %v981 = vunpack.c.l.b16 %v944
      %v982 = vunpack.c.l.b16 %v945
      %v983 = vunpack.c.l.b16 %v946
      %v984 = vunpack.c.l.b16 %v947
      %v985 = vunpack.c.l.b16 %v948
      %v986 = vunpack.c.l.b16 %v949
      %v987 = vunpack.c.l.b16 %v950
      %v988 = vunpack.c.l.b16 %v951
      %v989 = vunpack.c.l.b16 %v952
      %v990 = vunpack.c.l.b16 %v953
      %v991 = vunpack.c.l.b16 %v954
      %v992 = vunpack.c.l.b16 %v955
      %v993 = vunpack.c.l.b16 %v956
      %v994 = vpack.c.b16 %v979, %v978
      %v995 = vpack.c.b16 %v981, %v980
      %v996 = vpack.c.b16 %v983, %v982
      %v997 = vpack.c.b16 %v985, %v984
      %v998 = vpack.c.b16 %v987, %v986
      %v999 = vpack.c.b16 %v989, %v988
      %v1000 = vpack.c.b16 %v991, %v990
      %v1001 = vpack.c.b16 %v993, %v992
      %1010 = vmatpush.bf16.msra.mxu0 %v1001
      %1011 = vmatpush.bf16.msra.mxu0 %v1000
      %1012 = vmatpush.bf16.msra.mxu0 %v999
      %1013 = vmatpush.bf16.msra.mxu0 %v998
      %1014 = vmatpush.bf16.msra.mxu0 %v997
      %1015 = vmatpush.bf16.msra.mxu0 %v996
      %1016 = vmatpush.bf16.msra.mxu0 %v995
      %1017 = vmatpush.bf16.msra.mxu0 %v994
      %1018 = vmatmul.bf16.gmra.mxu0 %v475
      %v1019 = vpop.f32.mrf.mxu0
      %v1020 = vadd.f32 %v960, %v1019
      %v1021 = vpop.f32.mrf.mxu0
      %v1022 = vadd.f32 %v960, %v1021
      %1023 = vmatmul.bf16.gmra.mxu0 %v476
      %v1024 = vpop.f32.mrf.mxu0
      %v1025 = vadd.f32 %v960, %v1024
      %v1026 = vpop.f32.mrf.mxu0
      %1027 = vdwg.mxu0
      %s1028 = scalar_lea.vmem %s3, 64
      %v1029 = vld [vmem:[%s1028] sm:$0xf]
      %v1030 = vld [vmem:[%s1028 + $0x4] sm:$0xf]
      %v1031 = vld [vmem:[%s1028 + $0x8] sm:$0xf]
      %v1032 = vld [vmem:[%s1028 + $0xc] sm:$0xf]
      %v1033 = vld [vmem:[%s1028 + $0x10] sm:$0xf]
      %v1034 = vld [vmem:[%s1028 + $0x14] sm:$0xf]
      %v1035 = vld [vmem:[%s1028 + $0x18] sm:$0xf]
      %v1036 = vld [vmem:[%s1028 + $0x1c] sm:$0xf]
      %v1037 = vld [vmem:[%s1028 + $0x20] sm:$0xf]
      %v1038 = vld [vmem:[%s1028 + $0x24] sm:$0xf]
      %v1039 = vld [vmem:[%s1028 + $0x28] sm:$0xf]
      %v1040 = vld [vmem:[%s1028 + $0x2c] sm:$0xf]
      %v1041 = vld [vmem:[%s1028 + $0x30] sm:$0xf]
      %v1042 = vld [vmem:[%s1028 + $0x34] sm:$0xf]
      %v1043 = vld [vmem:[%s1028 + $0x38] sm:$0xf]
      %v1044 = vld [vmem:[%s1028 + $0x3c] sm:$0xf]
      %s1045 = scalar_lea.vmem %s6, 1
      %v1046 = vld [vmem:[%s1045] sm:$0x1]
      %v1048 = vperm.slane %v1046, 0
      %v1066 = vunpack.c.l.b16 %v1029
      %v1067 = vunpack.c.l.b16 %v1030
      %v1068 = vunpack.c.l.b16 %v1031
      %v1069 = vunpack.c.l.b16 %v1032
      %v1070 = vunpack.c.l.b16 %v1033
      %v1071 = vunpack.c.l.b16 %v1034
      %v1072 = vunpack.c.l.b16 %v1035
      %v1073 = vunpack.c.l.b16 %v1036
      %v1074 = vunpack.c.l.b16 %v1037
      %v1075 = vunpack.c.l.b16 %v1038
      %v1076 = vunpack.c.l.b16 %v1039
      %v1077 = vunpack.c.l.b16 %v1040
      %v1078 = vunpack.c.l.b16 %v1041
      %v1079 = vunpack.c.l.b16 %v1042
      %v1080 = vunpack.c.l.b16 %v1043
      %v1081 = vunpack.c.l.b16 %v1044
      %v1082 = vpack.c.b16 %v1067, %v1066
      %v1083 = vpack.c.b16 %v1069, %v1068
      %v1084 = vpack.c.b16 %v1071, %v1070
      %v1085 = vpack.c.b16 %v1073, %v1072
      %v1086 = vpack.c.b16 %v1075, %v1074
      %v1087 = vpack.c.b16 %v1077, %v1076
      %v1088 = vpack.c.b16 %v1079, %v1078
      %v1089 = vpack.c.b16 %v1081, %v1080
      %1098 = vmatpush.bf16.msra.mxu0 %v1089
      %1099 = vmatpush.bf16.msra.mxu0 %v1088
      %1100 = vmatpush.bf16.msra.mxu0 %v1087
      %1101 = vmatpush.bf16.msra.mxu0 %v1086
      %1102 = vmatpush.bf16.msra.mxu0 %v1085
      %1103 = vmatpush.bf16.msra.mxu0 %v1084
      %1104 = vmatpush.bf16.msra.mxu0 %v1083
      %1105 = vmatpush.bf16.msra.mxu0 %v1082
      %1106 = vmatmul.bf16.gmra.mxu0 %v475
      %v1107 = vpop.f32.mrf.mxu0
      %v1108 = vadd.f32 %v1048, %v1107
      %v1109 = vpop.f32.mrf.mxu0
      %v1110 = vadd.f32 %v1048, %v1109
      %1111 = vmatmul.bf16.gmra.mxu0 %v476
      %v1112 = vpop.f32.mrf.mxu0
      %v1113 = vadd.f32 %v1048, %v1112
      %v1114 = vpop.f32.mrf.mxu0
      %1115 = vdwg.mxu0
      %v1116 = vpack.c.bf16 %v934, %v932
      %v1117 = vpack.c.bf16 %v937, %v937
      %v1118 = vpack.c.bf16 %v1022, %v1020
      %v1119 = vpack.c.bf16 %v1025, %v1025
      %v1121 = vsel %vm743, %v1116, 0
      %v1124 = vsel %vm743, %v1117, 0
      %v1127 = vsel %vm743, %v1118, 0
      %v1130 = vsel %vm743, %v1119, 0
      %1132 = vmatpush.bf16.xpose.msra.mxu0 0
      %1133 = vmatpush.bf16.xpose.msra.mxu0 0
      %1134 = vmatpush.bf16.xpose.msra.mxu0 0
      %1135 = vmatpush.bf16.xpose.msra.mxu0 0
      %1136 = vmatpush.bf16.xpose.msra.mxu0 0
      %1137 = vmatpush.bf16.xpose.msra.mxu0 0
      %1138 = vmatpush.bf16.xpose.msra.mxu0 %v1130
      %1139 = vmatpush.bf16.xpose.msra.mxu0 %v1127
      %1140 = vmatmul.bf16.gmra.mxu0 %v1121
      %v1141 = vpop.f32.mrf.mxu0
      %v1142 = vadd.f32 0.0, %v1141
      %v1143 = vpop.f32.mrf.mxu0
      %v1144 = vadd.f32 0.0, %v1143
      %1145 = vmatmul.bf16.gmra.mxu0 %v1124
      %v1146 = vpop.f32.mrf.mxu0
      %v1147 = vadd.f32 0.0, %v1146
      %v1148 = vpop.f32.mrf.mxu0
      %1149 = vdwg.mxu0
      %v1150 = vmul.f32 %v1142, 0.17677669
      %v1151 = vmul.f32 %v1144, 0.17677669
      %v1152 = vmul.f32 %v1147, 0.17677669
      %v1153 = vadd.f32 %v1150, %v480
      %v1154 = vadd.f32 %v1151, %v480
      %v1155 = vadd.f32 %v1152, %v480
      %v1156 = vsel %vm780, %v1153, -inf
      %1157 = vmax.xlane.f32.xlu0 %v1156
      %v1158 = vpop.xlane.xlu0 %1157
      %v1159 = vsel %vm780, %v1154, -inf
      %1160 = vmax.xlane.f32.xlu0 %v1159
      %v1161 = vpop.xlane.xlu0 %1160
      %v1162 = vsel %vm780, %v1155, -inf
      %1163 = vmax.xlane.f32.xlu0 %v1162
      %v1164 = vpop.xlane.xlu0 %1163
      %v1165 = vsub.f32 %v1153, %v1158
      %v1166 = vsub.f32 %v1154, %v1161
      %v1167 = vsub.f32 %v1155, %v1164
      %v1168 = vmul.f32 %v1165, 1.442695
      %v1169 = vpow.pop %v1168
      %v1170 = vmul.f32 %v1166, 1.442695
      %v1171 = vpow.pop %v1170
      %v1172 = vmul.f32 %v1167, 1.442695
      %v1173 = vpow.pop %v1172
      %v1174 = vsel %vm780, %v1169, 0.0
      %1175 = vadd.xlane.f32.xlu0 %v1174
      %v1176 = vpop.xlane.xlu0 %1175
      %v1177 = vsel %vm780, %v1171, 0.0
      %1178 = vadd.xlane.f32.xlu0 %v1177
      %v1179 = vpop.xlane.xlu0 %1178
      %v1180 = vsel %vm780, %v1173, 0.0
      %1181 = vadd.xlane.f32.xlu0 %v1180
      %v1182 = vpop.xlane.xlu0 %1181
      %v1183 = vrcp.pop %v1176
      %v1184 = vrcp.pop %v1179
      %v1185 = vrcp.pop %v1182
      %v1186 = vmul.f32 %v1169, %v1183
      %v1187 = vmul.f32 %v1171, %v1184
      %v1188 = vmul.f32 %v1173, %v1185
      %v1189 = vpack.c.bf16 %v1187, %v1186
      %v1190 = vpack.c.bf16 %v1188, %v1188
      %v1191 = vpack.c.bf16 %v1110, %v1108
      %v1192 = vpack.c.bf16 %v1113, %v1113
      %v1194 = vsel %vm780, %v1189, 0
      %v1197 = vsel %vm780, %v1190, 0
      %v1200 = vsel %vm824, %v1192, 0
      %1202 = vmatpush.bf16.msra.mxu0 0
      %1203 = vmatpush.bf16.msra.mxu0 0
      %1204 = vmatpush.bf16.msra.mxu0 0
      %1205 = vmatpush.bf16.msra.mxu0 0
      %1206 = vmatpush.bf16.msra.mxu0 0
      %1207 = vmatpush.bf16.msra.mxu0 0
      %1208 = vmatpush.bf16.msra.mxu0 %v1200
      %1209 = vmatpush.bf16.msra.mxu0 %v1191
      %1210 = vmatmul.bf16.gmra.mxu0 %v1194
      %v1211 = vpop.f32.mrf.mxu0
      %v1212 = vadd.f32 0.0, %v1211
      %v1213 = vpop.f32.mrf.mxu0
      %v1214 = vadd.f32 0.0, %v1213
      %1215 = vmatmul.bf16.gmra.mxu0 %v1197
      %v1216 = vpop.f32.mrf.mxu0
      %v1217 = vadd.f32 0.0, %v1216
      %v1218 = vpop.f32.mrf.mxu0
      %1219 = vdwg.mxu0
      %v1220 = vpack.c.bf16 %v1214, %v1212
      %v1221 = vpack.c.bf16 %v1217, %v1217
      %s1222 = scalar_lea.vmem %s7, 16
      %v1223 = vld [vmem:[%s1222] sm:$0xf]
      %v1224 = vld [vmem:[%s1222 + $0x4] sm:$0xf]
      %v1225 = vld [vmem:[%s1222 + $0x8] sm:$0xf]
      %v1226 = vld [vmem:[%s1222 + $0xc] sm:$0xf]
      %v1231 = vunpack.c.l.b16 %v1223
      %v1232 = vunpack.c.l.b16 %v1224
      %v1233 = vunpack.c.l.b16 %v1225
      %v1234 = vunpack.c.l.b16 %v1226
      %v1235 = vpack.c.b16 %v1232, %v1231
      %v1236 = vpack.c.b16 %v1234, %v1233
      %v1240 = vsel %vm743, %v1220, 0
      %v1243 = vsel %vm743, %v1221, 0
      %1245 = vmatpush.bf16.msra.mxu0 0
      %1246 = vmatpush.bf16.msra.mxu0 0
      %1247 = vmatpush.bf16.msra.mxu0 0
      %1248 = vmatpush.bf16.msra.mxu0 0
      %1249 = vmatpush.bf16.msra.mxu0 0
      %1250 = vmatpush.bf16.msra.mxu0 0
      %1251 = vmatpush.bf16.msra.mxu0 %v1236
      %1252 = vmatpush.bf16.msra.mxu0 %v1235
      %1253 = vmatmul.bf16.gmra.mxu0 %v1240
      %v1254 = vpop.f32.mrf.mxu0
      %v1255 = vadd.f32 0.0, %v1254
      %v1256 = vpop.f32.mrf.mxu0
      %v1257 = vadd.f32 0.0, %v1256
      %1258 = vmatmul.bf16.gmra.mxu0 %v1243
      %v1259 = vpop.f32.mrf.mxu0
      %v1260 = vadd.f32 0.0, %v1259
      %v1261 = vpop.f32.mrf.mxu0
      %1262 = vdwg.mxu0
      %v1267 = vunpack.c.l.b16 %v848
      %v1268 = vunpack.c.l.b16 %v849
      %v1269 = vunpack.c.l.b16 %v850
      %v1270 = vunpack.c.l.b16 %v851
      %v1271 = vpack.c.b16 %v1268, %v1267
      %v1272 = vpack.c.b16 %v1270, %v1269
      %v1276 = vsel %vm743, %v846, 0
      %v1279 = vsel %vm743, %v847, 0
      %1281 = vmatpush.bf16.msra.mxu0 0
      %1282 = vmatpush.bf16.msra.mxu0 0
      %1283 = vmatpush.bf16.msra.mxu0 0
      %1284 = vmatpush.bf16.msra.mxu0 0
      %1285 = vmatpush.bf16.msra.mxu0 0
      %1286 = vmatpush.bf16.msra.mxu0 0
      %1287 = vmatpush.bf16.msra.mxu0 %v1272
      %1288 = vmatpush.bf16.msra.mxu0 %v1271
      %1289 = vmatmul.bf16.gmra.mxu0 %v1276
      %v1290 = vpop.f32.mrf.mxu0
      %v1291 = vadd.f32 %v1255, %v1290
      %v1292 = vpop.f32.mrf.mxu0
      %v1293 = vadd.f32 %v1257, %v1292
      %1294 = vmatmul.bf16.gmra.mxu0 %v1279
      %v1295 = vpop.f32.mrf.mxu0
      %v1296 = vadd.f32 %v1260, %v1295
      %v1297 = vpop.f32.mrf.mxu0
      %1298 = vdwg.mxu0
      %s1299 = scalar_lea.vmem %s1, 128
      %v1300 = vld [vmem:[%s1299] sm:$0xf]
      %v1301 = vld [vmem:[%s1299 + $0x4] sm:$0xf]
      %v1302 = vld [vmem:[%s1299 + $0x8] sm:$0xf]
      %v1303 = vld [vmem:[%s1299 + $0xc] sm:$0xf]
      %v1304 = vld [vmem:[%s1299 + $0x10] sm:$0xf]
      %v1305 = vld [vmem:[%s1299 + $0x14] sm:$0xf]
      %v1306 = vld [vmem:[%s1299 + $0x18] sm:$0xf]
      %v1307 = vld [vmem:[%s1299 + $0x1c] sm:$0xf]
      %v1308 = vld [vmem:[%s1299 + $0x20] sm:$0xf]
      %v1309 = vld [vmem:[%s1299 + $0x24] sm:$0xf]
      %v1310 = vld [vmem:[%s1299 + $0x28] sm:$0xf]
      %v1311 = vld [vmem:[%s1299 + $0x2c] sm:$0xf]
      %v1312 = vld [vmem:[%s1299 + $0x30] sm:$0xf]
      %v1313 = vld [vmem:[%s1299 + $0x34] sm:$0xf]
      %v1314 = vld [vmem:[%s1299 + $0x38] sm:$0xf]
      %v1315 = vld [vmem:[%s1299 + $0x3c] sm:$0xf]
      %s1316 = scalar_lea.vmem %s4, 2
      %v1317 = vld [vmem:[%s1316] sm:$0x1]
      %v1319 = vperm.slane %v1317, 0
      %v1337 = vunpack.c.l.b16 %v1300
      %v1338 = vunpack.c.l.b16 %v1301
      %v1339 = vunpack.c.l.b16 %v1302
      %v1340 = vunpack.c.l.b16 %v1303
      %v1341 = vunpack.c.l.b16 %v1304
      %v1342 = vunpack.c.l.b16 %v1305
      %v1343 = vunpack.c.l.b16 %v1306
      %v1344 = vunpack.c.l.b16 %v1307
      %v1345 = vunpack.c.l.b16 %v1308
      %v1346 = vunpack.c.l.b16 %v1309
      %v1347 = vunpack.c.l.b16 %v1310
      %v1348 = vunpack.c.l.b16 %v1311
      %v1349 = vunpack.c.l.b16 %v1312
      %v1350 = vunpack.c.l.b16 %v1313
      %v1351 = vunpack.c.l.b16 %v1314
      %v1352 = vunpack.c.l.b16 %v1315
      %v1353 = vpack.c.b16 %v1338, %v1337
      %v1354 = vpack.c.b16 %v1340, %v1339
      %v1355 = vpack.c.b16 %v1342, %v1341
      %v1356 = vpack.c.b16 %v1344, %v1343
      %v1357 = vpack.c.b16 %v1346, %v1345
      %v1358 = vpack.c.b16 %v1348, %v1347
      %v1359 = vpack.c.b16 %v1350, %v1349
      %v1360 = vpack.c.b16 %v1352, %v1351
      %1369 = vmatpush.bf16.msra.mxu0 %v1360
      %1370 = vmatpush.bf16.msra.mxu0 %v1359
      %1371 = vmatpush.bf16.msra.mxu0 %v1358
      %1372 = vmatpush.bf16.msra.mxu0 %v1357
      %1373 = vmatpush.bf16.msra.mxu0 %v1356
      %1374 = vmatpush.bf16.msra.mxu0 %v1355
      %1375 = vmatpush.bf16.msra.mxu0 %v1354
      %1376 = vmatpush.bf16.msra.mxu0 %v1353
      %1377 = vmatmul.bf16.gmra.mxu0 %v475
      %v1378 = vpop.f32.mrf.mxu0
      %v1379 = vadd.f32 %v1319, %v1378
      %v1380 = vpop.f32.mrf.mxu0
      %v1381 = vadd.f32 %v1319, %v1380
      %1382 = vmatmul.bf16.gmra.mxu0 %v476
      %v1383 = vpop.f32.mrf.mxu0
      %v1384 = vadd.f32 %v1319, %v1383
      %v1385 = vpop.f32.mrf.mxu0
      %1386 = vdwg.mxu0
      %s1387 = scalar_lea.vmem %s2, 128
      %v1388 = vld [vmem:[%s1387] sm:$0xf]
      %v1389 = vld [vmem:[%s1387 + $0x4] sm:$0xf]
      %v1390 = vld [vmem:[%s1387 + $0x8] sm:$0xf]
      %v1391 = vld [vmem:[%s1387 + $0xc] sm:$0xf]
      %v1392 = vld [vmem:[%s1387 + $0x10] sm:$0xf]
      %v1393 = vld [vmem:[%s1387 + $0x14] sm:$0xf]
      %v1394 = vld [vmem:[%s1387 + $0x18] sm:$0xf]
      %v1395 = vld [vmem:[%s1387 + $0x1c] sm:$0xf]
      %v1396 = vld [vmem:[%s1387 + $0x20] sm:$0xf]
      %v1397 = vld [vmem:[%s1387 + $0x24] sm:$0xf]
      %v1398 = vld [vmem:[%s1387 + $0x28] sm:$0xf]
      %v1399 = vld [vmem:[%s1387 + $0x2c] sm:$0xf]
      %v1400 = vld [vmem:[%s1387 + $0x30] sm:$0xf]
      %v1401 = vld [vmem:[%s1387 + $0x34] sm:$0xf]
      %v1402 = vld [vmem:[%s1387 + $0x38] sm:$0xf]
      %v1403 = vld [vmem:[%s1387 + $0x3c] sm:$0xf]
      %s1404 = scalar_lea.vmem %s5, 2
      %v1405 = vld [vmem:[%s1404] sm:$0x1]
      %v1407 = vperm.slane %v1405, 0
      %v1425 = vunpack.c.l.b16 %v1388
      %v1426 = vunpack.c.l.b16 %v1389
      %v1427 = vunpack.c.l.b16 %v1390
      %v1428 = vunpack.c.l.b16 %v1391
      %v1429 = vunpack.c.l.b16 %v1392
      %v1430 = vunpack.c.l.b16 %v1393
      %v1431 = vunpack.c.l.b16 %v1394
      %v1432 = vunpack.c.l.b16 %v1395
      %v1433 = vunpack.c.l.b16 %v1396
      %v1434 = vunpack.c.l.b16 %v1397
      %v1435 = vunpack.c.l.b16 %v1398
      %v1436 = vunpack.c.l.b16 %v1399
      %v1437 = vunpack.c.l.b16 %v1400
      %v1438 = vunpack.c.l.b16 %v1401
      %v1439 = vunpack.c.l.b16 %v1402
      %v1440 = vunpack.c.l.b16 %v1403
      %v1441 = vpack.c.b16 %v1426, %v1425
      %v1442 = vpack.c.b16 %v1428, %v1427
      %v1443 = vpack.c.b16 %v1430, %v1429
      %v1444 = vpack.c.b16 %v1432, %v1431
      %v1445 = vpack.c.b16 %v1434, %v1433
      %v1446 = vpack.c.b16 %v1436, %v1435
      %v1447 = vpack.c.b16 %v1438, %v1437
      %v1448 = vpack.c.b16 %v1440, %v1439
      %1457 = vmatpush.bf16.msra.mxu0 %v1448
      %1458 = vmatpush.bf16.msra.mxu0 %v1447
      %1459 = vmatpush.bf16.msra.mxu0 %v1446
      %1460 = vmatpush.bf16.msra.mxu0 %v1445
      %1461 = vmatpush.bf16.msra.mxu0 %v1444
      %1462 = vmatpush.bf16.msra.mxu0 %v1443
      %1463 = vmatpush.bf16.msra.mxu0 %v1442
      %1464 = vmatpush.bf16.msra.mxu0 %v1441
      %1465 = vmatmul.bf16.gmra.mxu0 %v475
      %v1466 = vpop.f32.mrf.mxu0
      %v1467 = vadd.f32 %v1407, %v1466
      %v1468 = vpop.f32.mrf.mxu0
      %v1469 = vadd.f32 %v1407, %v1468
      %1470 = vmatmul.bf16.gmra.mxu0 %v476
      %v1471 = vpop.f32.mrf.mxu0
      %v1472 = vadd.f32 %v1407, %v1471
      %v1473 = vpop.f32.mrf.mxu0
      %1474 = vdwg.mxu0
      %s1475 = scalar_lea.vmem %s3, 128
      %v1476 = vld [vmem:[%s1475] sm:$0xf]
      %v1477 = vld [vmem:[%s1475 + $0x4] sm:$0xf]
      %v1478 = vld [vmem:[%s1475 + $0x8] sm:$0xf]
      %v1479 = vld [vmem:[%s1475 + $0xc] sm:$0xf]
      %v1480 = vld [vmem:[%s1475 + $0x10] sm:$0xf]
      %v1481 = vld [vmem:[%s1475 + $0x14] sm:$0xf]
      %v1482 = vld [vmem:[%s1475 + $0x18] sm:$0xf]
      %v1483 = vld [vmem:[%s1475 + $0x1c] sm:$0xf]
      %v1484 = vld [vmem:[%s1475 + $0x20] sm:$0xf]
      %v1485 = vld [vmem:[%s1475 + $0x24] sm:$0xf]
      %v1486 = vld [vmem:[%s1475 + $0x28] sm:$0xf]
      %v1487 = vld [vmem:[%s1475 + $0x2c] sm:$0xf]
      %v1488 = vld [vmem:[%s1475 + $0x30] sm:$0xf]
      %v1489 = vld [vmem:[%s1475 + $0x34] sm:$0xf]
      %v1490 = vld [vmem:[%s1475 + $0x38] sm:$0xf]
      %v1491 = vld [vmem:[%s1475 + $0x3c] sm:$0xf]
      %s1492 = scalar_lea.vmem %s6, 2
      %v1493 = vld [vmem:[%s1492] sm:$0x1]
      %v1495 = vperm.slane %v1493, 0
      %v1513 = vunpack.c.l.b16 %v1476
      %v1514 = vunpack.c.l.b16 %v1477
      %v1515 = vunpack.c.l.b16 %v1478
      %v1516 = vunpack.c.l.b16 %v1479
      %v1517 = vunpack.c.l.b16 %v1480
      %v1518 = vunpack.c.l.b16 %v1481
      %v1519 = vunpack.c.l.b16 %v1482
      %v1520 = vunpack.c.l.b16 %v1483
      %v1521 = vunpack.c.l.b16 %v1484
      %v1522 = vunpack.c.l.b16 %v1485
      %v1523 = vunpack.c.l.b16 %v1486
      %v1524 = vunpack.c.l.b16 %v1487
      %v1525 = vunpack.c.l.b16 %v1488
      %v1526 = vunpack.c.l.b16 %v1489
      %v1527 = vunpack.c.l.b16 %v1490
      %v1528 = vunpack.c.l.b16 %v1491
      %v1529 = vpack.c.b16 %v1514, %v1513
      %v1530 = vpack.c.b16 %v1516, %v1515
      %v1531 = vpack.c.b16 %v1518, %v1517
      %v1532 = vpack.c.b16 %v1520, %v1519
      %v1533 = vpack.c.b16 %v1522, %v1521
      %v1534 = vpack.c.b16 %v1524, %v1523
      %v1535 = vpack.c.b16 %v1526, %v1525
      %v1536 = vpack.c.b16 %v1528, %v1527
      %1545 = vmatpush.bf16.msra.mxu0 %v1536
      %1546 = vmatpush.bf16.msra.mxu0 %v1535
      %1547 = vmatpush.bf16.msra.mxu0 %v1534
      %1548 = vmatpush.bf16.msra.mxu0 %v1533
      %1549 = vmatpush.bf16.msra.mxu0 %v1532
      %1550 = vmatpush.bf16.msra.mxu0 %v1531
      %1551 = vmatpush.bf16.msra.mxu0 %v1530
      %1552 = vmatpush.bf16.msra.mxu0 %v1529
      %1553 = vmatmul.bf16.gmra.mxu0 %v475
      %v1554 = vpop.f32.mrf.mxu0
      %v1555 = vadd.f32 %v1495, %v1554
      %v1556 = vpop.f32.mrf.mxu0
      %v1557 = vadd.f32 %v1495, %v1556
      %1558 = vmatmul.bf16.gmra.mxu0 %v476
      %v1559 = vpop.f32.mrf.mxu0
      %v1560 = vadd.f32 %v1495, %v1559
      %v1561 = vpop.f32.mrf.mxu0
      %1562 = vdwg.mxu0
      %v1563 = vpack.c.bf16 %v1381, %v1379
      %v1564 = vpack.c.bf16 %v1384, %v1384
      %v1565 = vpack.c.bf16 %v1469, %v1467
      %v1566 = vpack.c.bf16 %v1472, %v1472
      %v1568 = vsel %vm743, %v1563, 0
      %v1571 = vsel %vm743, %v1564, 0
      %v1574 = vsel %vm743, %v1565, 0
      %v1577 = vsel %vm743, %v1566, 0
      %1579 = vmatpush.bf16.xpose.msra.mxu0 0
      %1580 = vmatpush.bf16.xpose.msra.mxu0 0
      %1581 = vmatpush.bf16.xpose.msra.mxu0 0
      %1582 = vmatpush.bf16.xpose.msra.mxu0 0
      %1583 = vmatpush.bf16.xpose.msra.mxu0 0
      %1584 = vmatpush.bf16.xpose.msra.mxu0 0
      %1585 = vmatpush.bf16.xpose.msra.mxu0 %v1577
      %1586 = vmatpush.bf16.xpose.msra.mxu0 %v1574
      %1587 = vmatmul.bf16.gmra.mxu0 %v1568
      %v1588 = vpop.f32.mrf.mxu0
      %v1589 = vadd.f32 0.0, %v1588
      %v1590 = vpop.f32.mrf.mxu0
      %v1591 = vadd.f32 0.0, %v1590
      %1592 = vmatmul.bf16.gmra.mxu0 %v1571
      %v1593 = vpop.f32.mrf.mxu0
      %v1594 = vadd.f32 0.0, %v1593
      %v1595 = vpop.f32.mrf.mxu0
      %1596 = vdwg.mxu0
      %v1597 = vmul.f32 %v1589, 0.17677669
      %v1598 = vmul.f32 %v1591, 0.17677669
      %v1599 = vmul.f32 %v1594, 0.17677669
      %v1600 = vadd.f32 %v1597, %v480
      %v1601 = vadd.f32 %v1598, %v480
      %v1602 = vadd.f32 %v1599, %v480
      %v1603 = vsel %vm780, %v1600, -inf
      %1604 = vmax.xlane.f32.xlu0 %v1603
      %v1605 = vpop.xlane.xlu0 %1604
      %v1606 = vsel %vm780, %v1601, -inf
      %1607 = vmax.xlane.f32.xlu0 %v1606
      %v1608 = vpop.xlane.xlu0 %1607
      %v1609 = vsel %vm780, %v1602, -inf
      %1610 = vmax.xlane.f32.xlu0 %v1609
      %v1611 = vpop.xlane.xlu0 %1610
      %v1612 = vsub.f32 %v1600, %v1605
      %v1613 = vsub.f32 %v1601, %v1608
      %v1614 = vsub.f32 %v1602, %v1611
      %v1615 = vmul.f32 %v1612, 1.442695
      %v1616 = vpow.pop %v1615
      %v1617 = vmul.f32 %v1613, 1.442695
      %v1618 = vpow.pop %v1617
      %v1619 = vmul.f32 %v1614, 1.442695
      %v1620 = vpow.pop %v1619
      %v1621 = vsel %vm780, %v1616, 0.0
      %1622 = vadd.xlane.f32.xlu0 %v1621
      %v1623 = vpop.xlane.xlu0 %1622
      %v1624 = vsel %vm780, %v1618, 0.0
      %1625 = vadd.xlane.f32.xlu0 %v1624
      %v1626 = vpop.xlane.xlu0 %1625
      %v1627 = vsel %vm780, %v1620, 0.0
      %1628 = vadd.xlane.f32.xlu0 %v1627
      %v1629 = vpop.xlane.xlu0 %1628
      %v1630 = vrcp.pop %v1623
      %v1631 = vrcp.pop %v1626
      %v1632 = vrcp.pop %v1629
      %v1633 = vmul.f32 %v1616, %v1630
      %v1634 = vmul.f32 %v1618, %v1631
      %v1635 = vmul.f32 %v1620, %v1632
      %v1636 = vpack.c.bf16 %v1634, %v1633
      %v1637 = vpack.c.bf16 %v1635, %v1635
      %v1638 = vpack.c.bf16 %v1557, %v1555
      %v1639 = vpack.c.bf16 %v1560, %v1560
      %v1641 = vsel %vm780, %v1636, 0
      %v1644 = vsel %vm780, %v1637, 0
      %v1647 = vsel %vm824, %v1639, 0
      %1649 = vmatpush.bf16.msra.mxu0 0
      %1650 = vmatpush.bf16.msra.mxu0 0
      %1651 = vmatpush.bf16.msra.mxu0 0
      %1652 = vmatpush.bf16.msra.mxu0 0
      %1653 = vmatpush.bf16.msra.mxu0 0
      %1654 = vmatpush.bf16.msra.mxu0 0
      %1655 = vmatpush.bf16.msra.mxu0 %v1647
      %1656 = vmatpush.bf16.msra.mxu0 %v1638
      %1657 = vmatmul.bf16.gmra.mxu0 %v1641
      %v1658 = vpop.f32.mrf.mxu0
      %v1659 = vadd.f32 0.0, %v1658
      %v1660 = vpop.f32.mrf.mxu0
      %v1661 = vadd.f32 0.0, %v1660
      %1662 = vmatmul.bf16.gmra.mxu0 %v1644
      %v1663 = vpop.f32.mrf.mxu0
      %v1664 = vadd.f32 0.0, %v1663
      %v1665 = vpop.f32.mrf.mxu0
      %1666 = vdwg.mxu0
      %v1667 = vpack.c.bf16 %v1661, %v1659
      %v1668 = vpack.c.bf16 %v1664, %v1664
      %s1669 = scalar_lea.vmem %s7, 32
      %v1670 = vld [vmem:[%s1669] sm:$0xf]
      %v1671 = vld [vmem:[%s1669 + $0x4] sm:$0xf]
      %v1672 = vld [vmem:[%s1669 + $0x8] sm:$0xf]
      %v1673 = vld [vmem:[%s1669 + $0xc] sm:$0xf]
      %v1678 = vunpack.c.l.b16 %v1670
      %v1679 = vunpack.c.l.b16 %v1671
      %v1680 = vunpack.c.l.b16 %v1672
      %v1681 = vunpack.c.l.b16 %v1673
      %v1682 = vpack.c.b16 %v1679, %v1678
      %v1683 = vpack.c.b16 %v1681, %v1680
      %v1687 = vsel %vm743, %v1667, 0
      %v1690 = vsel %vm743, %v1668, 0
      %1692 = vmatpush.bf16.msra.mxu0 0
      %1693 = vmatpush.bf16.msra.mxu0 0
      %1694 = vmatpush.bf16.msra.mxu0 0
      %1695 = vmatpush.bf16.msra.mxu0 0
      %1696 = vmatpush.bf16.msra.mxu0 0
      %1697 = vmatpush.bf16.msra.mxu0 0
      %1698 = vmatpush.bf16.msra.mxu0 %v1683
      %1699 = vmatpush.bf16.msra.mxu0 %v1682
      %1700 = vmatmul.bf16.gmra.mxu0 %v1687
      %v1701 = vpop.f32.mrf.mxu0
      %v1702 = vadd.f32 0.0, %v1701
      %v1703 = vpop.f32.mrf.mxu0
      %v1704 = vadd.f32 0.0, %v1703
      %1705 = vmatmul.bf16.gmra.mxu0 %v1690
      %v1706 = vpop.f32.mrf.mxu0
      %v1707 = vadd.f32 0.0, %v1706
      %v1708 = vpop.f32.mrf.mxu0
      %1709 = vdwg.mxu0
      %v1710 = vadd.f32 %v1291, %v1702
      %v1711 = vadd.f32 %v1293, %v1704
      %v1712 = vadd.f32 %v1296, %v1707
      %s1713 = scalar_lea.vmem %s1, 192
      %v1714 = vld [vmem:[%s1713] sm:$0xf]
      %v1715 = vld [vmem:[%s1713 + $0x4] sm:$0xf]
      %v1716 = vld [vmem:[%s1713 + $0x8] sm:$0xf]
      %v1717 = vld [vmem:[%s1713 + $0xc] sm:$0xf]
      %v1718 = vld [vmem:[%s1713 + $0x10] sm:$0xf]
      %v1719 = vld [vmem:[%s1713 + $0x14] sm:$0xf]
      %v1720 = vld [vmem:[%s1713 + $0x18] sm:$0xf]
      %v1721 = vld [vmem:[%s1713 + $0x1c] sm:$0xf]
      %v1722 = vld [vmem:[%s1713 + $0x20] sm:$0xf]
      %v1723 = vld [vmem:[%s1713 + $0x24] sm:$0xf]
      %v1724 = vld [vmem:[%s1713 + $0x28] sm:$0xf]
      %v1725 = vld [vmem:[%s1713 + $0x2c] sm:$0xf]
      %v1726 = vld [vmem:[%s1713 + $0x30] sm:$0xf]
      %v1727 = vld [vmem:[%s1713 + $0x34] sm:$0xf]
      %v1728 = vld [vmem:[%s1713 + $0x38] sm:$0xf]
      %v1729 = vld [vmem:[%s1713 + $0x3c] sm:$0xf]
      %s1730 = scalar_lea.vmem %s4, 3
      %v1731 = vld [vmem:[%s1730] sm:$0x1]
      %v1733 = vperm.slane %v1731, 0
      %v1751 = vunpack.c.l.b16 %v1714
      %v1752 = vunpack.c.l.b16 %v1715
      %v1753 = vunpack.c.l.b16 %v1716
      %v1754 = vunpack.c.l.b16 %v1717
      %v1755 = vunpack.c.l.b16 %v1718
      %v1756 = vunpack.c.l.b16 %v1719
      %v1757 = vunpack.c.l.b16 %v1720
      %v1758 = vunpack.c.l.b16 %v1721
      %v1759 = vunpack.c.l.b16 %v1722
      %v1760 = vunpack.c.l.b16 %v1723
      %v1761 = vunpack.c.l.b16 %v1724
      %v1762 = vunpack.c.l.b16 %v1725
      %v1763 = vunpack.c.l.b16 %v1726
      %v1764 = vunpack.c.l.b16 %v1727
      %v1765 = vunpack.c.l.b16 %v1728
      %v1766 = vunpack.c.l.b16 %v1729
      %v1767 = vpack.c.b16 %v1752, %v1751
      %v1768 = vpack.c.b16 %v1754, %v1753
      %v1769 = vpack.c.b16 %v1756, %v1755
      %v1770 = vpack.c.b16 %v1758, %v1757
      %v1771 = vpack.c.b16 %v1760, %v1759
      %v1772 = vpack.c.b16 %v1762, %v1761
      %v1773 = vpack.c.b16 %v1764, %v1763
      %v1774 = vpack.c.b16 %v1766, %v1765
      %1783 = vmatpush.bf16.msra.mxu0 %v1774
      %1784 = vmatpush.bf16.msra.mxu0 %v1773
      %1785 = vmatpush.bf16.msra.mxu0 %v1772
      %1786 = vmatpush.bf16.msra.mxu0 %v1771
      %1787 = vmatpush.bf16.msra.mxu0 %v1770
      %1788 = vmatpush.bf16.msra.mxu0 %v1769
      %1789 = vmatpush.bf16.msra.mxu0 %v1768
      %1790 = vmatpush.bf16.msra.mxu0 %v1767
      %1791 = vmatmul.bf16.gmra.mxu0 %v475
      %v1792 = vpop.f32.mrf.mxu0
      %v1793 = vadd.f32 %v1733, %v1792
      %v1794 = vpop.f32.mrf.mxu0
      %v1795 = vadd.f32 %v1733, %v1794
      %1796 = vmatmul.bf16.gmra.mxu0 %v476
      %v1797 = vpop.f32.mrf.mxu0
      %v1798 = vadd.f32 %v1733, %v1797
      %v1799 = vpop.f32.mrf.mxu0
      %1800 = vdwg.mxu0
      %s1801 = scalar_lea.vmem %s2, 192
      %v1802 = vld [vmem:[%s1801] sm:$0xf]
      %v1803 = vld [vmem:[%s1801 + $0x4] sm:$0xf]
      %v1804 = vld [vmem:[%s1801 + $0x8] sm:$0xf]
      %v1805 = vld [vmem:[%s1801 + $0xc] sm:$0xf]
      %v1806 = vld [vmem:[%s1801 + $0x10] sm:$0xf]
      %v1807 = vld [vmem:[%s1801 + $0x14] sm:$0xf]
      %v1808 = vld [vmem:[%s1801 + $0x18] sm:$0xf]
      %v1809 = vld [vmem:[%s1801 + $0x1c] sm:$0xf]
      %v1810 = vld [vmem:[%s1801 + $0x20] sm:$0xf]
      %v1811 = vld [vmem:[%s1801 + $0x24] sm:$0xf]
      %v1812 = vld [vmem:[%s1801 + $0x28] sm:$0xf]
      %v1813 = vld [vmem:[%s1801 + $0x2c] sm:$0xf]
      %v1814 = vld [vmem:[%s1801 + $0x30] sm:$0xf]
      %v1815 = vld [vmem:[%s1801 + $0x34] sm:$0xf]
      %v1816 = vld [vmem:[%s1801 + $0x38] sm:$0xf]
      %v1817 = vld [vmem:[%s1801 + $0x3c] sm:$0xf]
      %s1818 = scalar_lea.vmem %s5, 3
      %v1819 = vld [vmem:[%s1818] sm:$0x1]
      %v1821 = vperm.slane %v1819, 0
      %v1839 = vunpack.c.l.b16 %v1802
      %v1840 = vunpack.c.l.b16 %v1803
      %v1841 = vunpack.c.l.b16 %v1804
      %v1842 = vunpack.c.l.b16 %v1805
      %v1843 = vunpack.c.l.b16 %v1806
      %v1844 = vunpack.c.l.b16 %v1807
      %v1845 = vunpack.c.l.b16 %v1808
      %v1846 = vunpack.c.l.b16 %v1809
      %v1847 = vunpack.c.l.b16 %v1810
      %v1848 = vunpack.c.l.b16 %v1811
      %v1849 = vunpack.c.l.b16 %v1812
      %v1850 = vunpack.c.l.b16 %v1813
      %v1851 = vunpack.c.l.b16 %v1814
      %v1852 = vunpack.c.l.b16 %v1815
      %v1853 = vunpack.c.l.b16 %v1816
      %v1854 = vunpack.c.l.b16 %v1817
      %v1855 = vpack.c.b16 %v1840, %v1839
      %v1856 = vpack.c.b16 %v1842, %v1841
      %v1857 = vpack.c.b16 %v1844, %v1843
      %v1858 = vpack.c.b16 %v1846, %v1845
      %v1859 = vpack.c.b16 %v1848, %v1847
      %v1860 = vpack.c.b16 %v1850, %v1849
      %v1861 = vpack.c.b16 %v1852, %v1851
      %v1862 = vpack.c.b16 %v1854, %v1853
      %1871 = vmatpush.bf16.msra.mxu0 %v1862
      %1872 = vmatpush.bf16.msra.mxu0 %v1861
      %1873 = vmatpush.bf16.msra.mxu0 %v1860
      %1874 = vmatpush.bf16.msra.mxu0 %v1859
      %1875 = vmatpush.bf16.msra.mxu0 %v1858
      %1876 = vmatpush.bf16.msra.mxu0 %v1857
      %1877 = vmatpush.bf16.msra.mxu0 %v1856
      %1878 = vmatpush.bf16.msra.mxu0 %v1855
      %1879 = vmatmul.bf16.gmra.mxu0 %v475
      %v1880 = vpop.f32.mrf.mxu0
      %v1881 = vadd.f32 %v1821, %v1880
      %v1882 = vpop.f32.mrf.mxu0
      %v1883 = vadd.f32 %v1821, %v1882
      %1884 = vmatmul.bf16.gmra.mxu0 %v476
      %v1885 = vpop.f32.mrf.mxu0
      %v1886 = vadd.f32 %v1821, %v1885
      %v1887 = vpop.f32.mrf.mxu0
      %1888 = vdwg.mxu0
      %s1889 = scalar_lea.vmem %s3, 192
      %v1890 = vld [vmem:[%s1889] sm:$0xf]
      %v1891 = vld [vmem:[%s1889 + $0x4] sm:$0xf]
      %v1892 = vld [vmem:[%s1889 + $0x8] sm:$0xf]
      %v1893 = vld [vmem:[%s1889 + $0xc] sm:$0xf]
      %v1894 = vld [vmem:[%s1889 + $0x10] sm:$0xf]
      %v1895 = vld [vmem:[%s1889 + $0x14] sm:$0xf]
      %v1896 = vld [vmem:[%s1889 + $0x18] sm:$0xf]
      %v1897 = vld [vmem:[%s1889 + $0x1c] sm:$0xf]
      %v1898 = vld [vmem:[%s1889 + $0x20] sm:$0xf]
      %v1899 = vld [vmem:[%s1889 + $0x24] sm:$0xf]
      %v1900 = vld [vmem:[%s1889 + $0x28] sm:$0xf]
      %v1901 = vld [vmem:[%s1889 + $0x2c] sm:$0xf]
      %v1902 = vld [vmem:[%s1889 + $0x30] sm:$0xf]
      %v1903 = vld [vmem:[%s1889 + $0x34] sm:$0xf]
      %v1904 = vld [vmem:[%s1889 + $0x38] sm:$0xf]
      %v1905 = vld [vmem:[%s1889 + $0x3c] sm:$0xf]
      %s1906 = scalar_lea.vmem %s6, 3
      %v1907 = vld [vmem:[%s1906] sm:$0x1]
      %v1909 = vperm.slane %v1907, 0
      %v1927 = vunpack.c.l.b16 %v1890
      %v1928 = vunpack.c.l.b16 %v1891
      %v1929 = vunpack.c.l.b16 %v1892
      %v1930 = vunpack.c.l.b16 %v1893
      %v1931 = vunpack.c.l.b16 %v1894
      %v1932 = vunpack.c.l.b16 %v1895
      %v1933 = vunpack.c.l.b16 %v1896
      %v1934 = vunpack.c.l.b16 %v1897
      %v1935 = vunpack.c.l.b16 %v1898
      %v1936 = vunpack.c.l.b16 %v1899
      %v1937 = vunpack.c.l.b16 %v1900
      %v1938 = vunpack.c.l.b16 %v1901
      %v1939 = vunpack.c.l.b16 %v1902
      %v1940 = vunpack.c.l.b16 %v1903
      %v1941 = vunpack.c.l.b16 %v1904
      %v1942 = vunpack.c.l.b16 %v1905
      %v1943 = vpack.c.b16 %v1928, %v1927
      %v1944 = vpack.c.b16 %v1930, %v1929
      %v1945 = vpack.c.b16 %v1932, %v1931
      %v1946 = vpack.c.b16 %v1934, %v1933
      %v1947 = vpack.c.b16 %v1936, %v1935
      %v1948 = vpack.c.b16 %v1938, %v1937
      %v1949 = vpack.c.b16 %v1940, %v1939
      %v1950 = vpack.c.b16 %v1942, %v1941
      %1959 = vmatpush.bf16.msra.mxu0 %v1950
      %1960 = vmatpush.bf16.msra.mxu0 %v1949
      %1961 = vmatpush.bf16.msra.mxu0 %v1948
      %1962 = vmatpush.bf16.msra.mxu0 %v1947
      %1963 = vmatpush.bf16.msra.mxu0 %v1946
      %1964 = vmatpush.bf16.msra.mxu0 %v1945
      %1965 = vmatpush.bf16.msra.mxu0 %v1944
      %1966 = vmatpush.bf16.msra.mxu0 %v1943
      %1967 = vmatmul.bf16.gmra.mxu0 %v475
      %v1968 = vpop.f32.mrf.mxu0
      %v1969 = vadd.f32 %v1909, %v1968
      %v1970 = vpop.f32.mrf.mxu0
      %v1971 = vadd.f32 %v1909, %v1970
      %1972 = vmatmul.bf16.gmra.mxu0 %v476
      %v1973 = vpop.f32.mrf.mxu0
      %v1974 = vadd.f32 %v1909, %v1973
      %v1975 = vpop.f32.mrf.mxu0
      %1976 = vdwg.mxu0
      %v1977 = vpack.c.bf16 %v1795, %v1793
      %v1978 = vpack.c.bf16 %v1798, %v1798
      %v1979 = vpack.c.bf16 %v1883, %v1881
      %v1980 = vpack.c.bf16 %v1886, %v1886
      %v1982 = vsel %vm743, %v1977, 0
      %v1985 = vsel %vm743, %v1978, 0
      %v1988 = vsel %vm743, %v1979, 0
      %v1991 = vsel %vm743, %v1980, 0
      %1993 = vmatpush.bf16.xpose.msra.mxu0 0
      %1994 = vmatpush.bf16.xpose.msra.mxu0 0
      %1995 = vmatpush.bf16.xpose.msra.mxu0 0
      %1996 = vmatpush.bf16.xpose.msra.mxu0 0
      %1997 = vmatpush.bf16.xpose.msra.mxu0 0
      %1998 = vmatpush.bf16.xpose.msra.mxu0 0
      %1999 = vmatpush.bf16.xpose.msra.mxu0 %v1991
      %2000 = vmatpush.bf16.xpose.msra.mxu0 %v1988
      %2001 = vmatmul.bf16.gmra.mxu0 %v1982
      %v2002 = vpop.f32.mrf.mxu0
      %v2003 = vadd.f32 0.0, %v2002
      %v2004 = vpop.f32.mrf.mxu0
      %v2005 = vadd.f32 0.0, %v2004
      %2006 = vmatmul.bf16.gmra.mxu0 %v1985
      %v2007 = vpop.f32.mrf.mxu0
      %v2008 = vadd.f32 0.0, %v2007
      %v2009 = vpop.f32.mrf.mxu0
      %2010 = vdwg.mxu0
      %v2011 = vmul.f32 %v2003, 0.17677669
      %v2012 = vmul.f32 %v2005, 0.17677669
      %v2013 = vmul.f32 %v2008, 0.17677669
      %v2014 = vadd.f32 %v2011, %v480
      %v2015 = vadd.f32 %v2012, %v480
      %v2016 = vadd.f32 %v2013, %v480
      %v2017 = vsel %vm780, %v2014, -inf
      %2018 = vmax.xlane.f32.xlu0 %v2017
      %v2019 = vpop.xlane.xlu0 %2018
      %v2020 = vsel %vm780, %v2015, -inf
      %2021 = vmax.xlane.f32.xlu0 %v2020
      %v2022 = vpop.xlane.xlu0 %2021
      %v2023 = vsel %vm780, %v2016, -inf
      %2024 = vmax.xlane.f32.xlu0 %v2023
      %v2025 = vpop.xlane.xlu0 %2024
      %v2026 = vsub.f32 %v2014, %v2019
      %v2027 = vsub.f32 %v2015, %v2022
      %v2028 = vsub.f32 %v2016, %v2025
      %v2029 = vmul.f32 %v2026, 1.442695
      %v2030 = vpow.pop %v2029
      %v2031 = vmul.f32 %v2027, 1.442695
      %v2032 = vpow.pop %v2031
      %v2033 = vmul.f32 %v2028, 1.442695
      %v2034 = vpow.pop %v2033
      %v2035 = vsel %vm780, %v2030, 0.0
      %2036 = vadd.xlane.f32.xlu0 %v2035
      %v2037 = vpop.xlane.xlu0 %2036
      %v2038 = vsel %vm780, %v2032, 0.0
      %2039 = vadd.xlane.f32.xlu0 %v2038
      %v2040 = vpop.xlane.xlu0 %2039
      %v2041 = vsel %vm780, %v2034, 0.0
      %2042 = vadd.xlane.f32.xlu0 %v2041
      %v2043 = vpop.xlane.xlu0 %2042
      %v2044 = vrcp.pop %v2037
      %v2045 = vrcp.pop %v2040
      %v2046 = vrcp.pop %v2043
      %v2047 = vmul.f32 %v2030, %v2044
      %v2048 = vmul.f32 %v2032, %v2045
      %v2049 = vmul.f32 %v2034, %v2046
      %v2050 = vpack.c.bf16 %v2048, %v2047
      %v2051 = vpack.c.bf16 %v2049, %v2049
      %v2052 = vpack.c.bf16 %v1971, %v1969
      %v2053 = vpack.c.bf16 %v1974, %v1974
      %v2055 = vsel %vm780, %v2050, 0
      %v2058 = vsel %vm780, %v2051, 0
      %v2061 = vsel %vm824, %v2053, 0
      %2063 = vmatpush.bf16.msra.mxu0 0
      %2064 = vmatpush.bf16.msra.mxu0 0
      %2065 = vmatpush.bf16.msra.mxu0 0
      %2066 = vmatpush.bf16.msra.mxu0 0
      %2067 = vmatpush.bf16.msra.mxu0 0
      %2068 = vmatpush.bf16.msra.mxu0 0
      %2069 = vmatpush.bf16.msra.mxu0 %v2061
      %2070 = vmatpush.bf16.msra.mxu0 %v2052
      %2071 = vmatmul.bf16.gmra.mxu0 %v2055
      %v2072 = vpop.f32.mrf.mxu0
      %v2073 = vadd.f32 0.0, %v2072
      %v2074 = vpop.f32.mrf.mxu0
      %v2075 = vadd.f32 0.0, %v2074
      %2076 = vmatmul.bf16.gmra.mxu0 %v2058
      %v2077 = vpop.f32.mrf.mxu0
      %v2078 = vadd.f32 0.0, %v2077
      %v2079 = vpop.f32.mrf.mxu0
      %2080 = vdwg.mxu0
      %v2081 = vpack.c.bf16 %v2075, %v2073
      %v2082 = vpack.c.bf16 %v2078, %v2078
      %s2083 = scalar_lea.vmem %s7, 48
      %v2084 = vld [vmem:[%s2083] sm:$0xf]
      %v2085 = vld [vmem:[%s2083 + $0x4] sm:$0xf]
      %v2086 = vld [vmem:[%s2083 + $0x8] sm:$0xf]
      %v2087 = vld [vmem:[%s2083 + $0xc] sm:$0xf]
      %v2092 = vunpack.c.l.b16 %v2084
      %v2093 = vunpack.c.l.b16 %v2085
      %v2094 = vunpack.c.l.b16 %v2086
      %v2095 = vunpack.c.l.b16 %v2087
      %v2096 = vpack.c.b16 %v2093, %v2092
      %v2097 = vpack.c.b16 %v2095, %v2094
      %v2101 = vsel %vm743, %v2081, 0
      %v2104 = vsel %vm743, %v2082, 0
      %2106 = vmatpush.bf16.msra.mxu0 0
      %2107 = vmatpush.bf16.msra.mxu0 0
      %2108 = vmatpush.bf16.msra.mxu0 0
      %2109 = vmatpush.bf16.msra.mxu0 0
      %2110 = vmatpush.bf16.msra.mxu0 0
      %2111 = vmatpush.bf16.msra.mxu0 0
      %2112 = vmatpush.bf16.msra.mxu0 %v2097
      %2113 = vmatpush.bf16.msra.mxu0 %v2096
      %2114 = vmatmul.bf16.gmra.mxu0 %v2101
      %v2115 = vpop.f32.mrf.mxu0
      %v2116 = vadd.f32 0.0, %v2115
      %v2117 = vpop.f32.mrf.mxu0
      %v2118 = vadd.f32 0.0, %v2117
      %2119 = vmatmul.bf16.gmra.mxu0 %v2104
      %v2120 = vpop.f32.mrf.mxu0
      %v2121 = vadd.f32 0.0, %v2120
      %v2122 = vpop.f32.mrf.mxu0
      %2123 = vdwg.mxu0
      %v2124 = vadd.f32 %v1710, %v2116
      %v2125 = vadd.f32 %v1711, %v2118
      %v2126 = vadd.f32 %v1712, %v2121
      %v2127 = vld [vmem:[%s8] sm:$0x1]
      %v2129 = vperm.slane %v2127, 0
      %v2131 = vadd.f32 %v2124, %v2129
      %v2132 = vadd.f32 %v2125, %v2129
      %v2133 = vadd.f32 %v2126, %v2129
      %v2134 = vadd.f32 %v2131, %v391
      %v2135 = vadd.f32 %v2132, %v392
      %v2136 = vadd.f32 %v2133, %v393
      %v2137 = vpack.c.bf16 %v2134, %v2134
      %v2138 = vpack.c.bf16 %v2135, %v2135
      %v2139 = vpack.c.bf16 %v2136, %v2136
      %2140 = vst [vmem:[%s386] sm:$0xf] %v2137
      %2141 = vst [vmem:[%s386 + $0x4] sm:$0xf] %v2138
      %2142 = vst [vmem:[%s386 + $0x8] sm:$0xf] %v2139
      %p2143 = scmp.lt.s32.totalorder %s22, 1
      %s2144 = scalar_select %p2143, %s22, 1
      %s2145 = smul.addr %s2144, 3
      %s2146 = smul.addr %s2145, 4
      %s2147 = scalar_lea.vmem %s11, %s2146
      // Predicated region
      $region65: #{tcclip_forward.16} parent=63 // pred_check
        %p2148 = pneg %p276
      $region66: #{tcclip_forward.16} parent=63 // pred_check_branch
        %2150 = sbr.rel (%p2148) target = $region68
      $region67: #{tcclip_forward.16} parent=63 // pred_region
        _
      $region68: #{tcclip_forward.16} parent=63 // pred_fallthru
        _
    $region64: #{tcclip_forward.16} parent=5 // pred_fallthru
      _
    %p2151 = scmp.le.s32.totalorder 2, %s17
    // Predicated region
    $region69: #{tcclip_forward.16} parent=5 // pred_check
      %p2152 = pneg %p2151
    $region70: #{tcclip_forward.16} parent=5 // pred_check_branch
      %2154 = sbr.rel (%p2152) target = $region72
    $region71: #{tcclip_forward.16} parent=5 // pred_region
      %s2155 = ssub.s32 %s17, 2
      // Predicated region
      $region73: #{tcclip_forward.16} parent=71 // pred_check
        %p2156 = pneg %p282
      $region74: #{tcclip_forward.16} parent=71 // pred_check_branch
        %2158 = sbr.rel (%p2156) target = $region76
      $region75: #{tcclip_forward.16} parent=71 // pred_region
        %p2159 = scmp.lt.s32.totalorder %s23, 1
        %s2160 = scalar_select %p2159, %s23, 1
        %s2161 = smul.addr %s2160, 3
        %s2162 = smul.addr %s2161, 4
        %s2163 = scalar_lea.vmem %s11, %s2162
      $region76: #{tcclip_forward.16} parent=71 // pred_fallthru
        _
    $region72: #{tcclip_forward.16} parent=5 // pred_fallthru
      _
  $region6: #{tcclip_forward.16} parent=0 // loop_footer
    %s21 = sadd.s32 1, %s17
  $region7: #{tcclip_forward.16} parent=0 // loop_footer_branch
    %16 = sbr.rel target = $region3
  $region8: #{tcclip_forward.16} parent=0 // loop_exit
    _

// kernel: tcclip_forward.25
$region0: #{tcclip_forward.25}
  #allocation0 [shape = 'u32[]', space=smem, size = 0x4, offset = 0x4, fixed_abs, tag = 'smem constant byte address 0x4 - core index']
  #allocation1 [shape = 'u32[72,128]{1,0:T(1,128)}', space=vmem, size = 0x9000, scoped, tag = 'internal scratch']
  %s0 = inlined_call_operand.vmem [shape: bf16[80,128], index: 0, kind: input, shape index: {}]
  %s1 = inlined_call_operand.vmem [shape: bf16[128,512], index: 1, kind: input, shape index: {}]
  %s2 = inlined_call_operand.vmem [shape: f32[1,512], index: 2, kind: input, shape index: {}]
  %s3 = inlined_call_operand.vmem [shape: bf16[512,128], index: 3, kind: input, shape index: {}]
  %s4 = inlined_call_operand.vmem [shape: f32[1,128], index: 4, kind: input, shape index: {}]
  %s5 = inlined_call_operand.vmem [shape: f32[1,128], index: 5, kind: input, shape index: {}]
  %s6 = inlined_call_operand.vmem [shape: f32[1,128], index: 6, kind: input, shape index: {}]
  %s7 = inlined_call_operand.vmem [shape: bf16[80,128], index: 7, kind: output, shape index: {}]
  %s8 = sld [smem:[#allocation0]]
  $region38: #{tcclip_forward.25} parent=0
    _
  %s10 = ssub.s32 1, %s8
  %s11 = scalar_select 0, %s10, %s8
  // Predicated region
  $region2: #{tcclip_forward.25} parent=0 // pred_check
    _
  $region3: #{tcclip_forward.25} parent=0 // pred_check_branch
    %13 = sbr.rel (0) target = $region5
  $region4: #{tcclip_forward.25} parent=0 // pred_region
    _
  $region5: #{tcclip_forward.25} parent=0 // pred_fallthru
    _
  // Predicated region
  $region6: #{tcclip_forward.25} parent=0 // pred_check
    _
  $region7: #{tcclip_forward.25} parent=0 // pred_check_branch
    %15 = sbr.rel (0) target = $region9
  $region8: #{tcclip_forward.25} parent=0 // pred_region
    _
  $region9: #{tcclip_forward.25} parent=0 // pred_fallthru
    _
  // Predicated region
  $region10: #{tcclip_forward.25} parent=0 // pred_check
    _
  $region11: #{tcclip_forward.25} parent=0 // pred_check_branch
    %17 = sbr.rel (0) target = $region13
  $region12: #{tcclip_forward.25} parent=0 // pred_region
    _
  $region13: #{tcclip_forward.25} parent=0 // pred_fallthru
    _
  // Predicated region
  $region14: #{tcclip_forward.25} parent=0 // pred_check
    _
  $region15: #{tcclip_forward.25} parent=0 // pred_check_branch
    %19 = sbr.rel (0) target = $region17
  $region16: #{tcclip_forward.25} parent=0 // pred_region
    _
  $region17: #{tcclip_forward.25} parent=0 // pred_fallthru
    _
  // Predicated region
  $region18: #{tcclip_forward.25} parent=0 // pred_check
    _
  $region19: #{tcclip_forward.25} parent=0 // pred_check_branch
    %21 = sbr.rel (0) target = $region21
  $region20: #{tcclip_forward.25} parent=0 // pred_region
    _
  $region21: #{tcclip_forward.25} parent=0 // pred_fallthru
    _
  // Predicated region
  $region22: #{tcclip_forward.25} parent=0 // pred_check
    _
  $region23: #{tcclip_forward.25} parent=0 // pred_check_branch
    %23 = sbr.rel (0) target = $region25
  $region24: #{tcclip_forward.25} parent=0 // pred_region
    _
  $region25: #{tcclip_forward.25} parent=0 // pred_fallthru
    _
  // Predicated region
  $region26: #{tcclip_forward.25} parent=0 // pred_check
    _
  $region27: #{tcclip_forward.25} parent=0 // pred_check_branch
    %25 = sbr.rel (0) target = $region29
  $region28: #{tcclip_forward.25} parent=0 // pred_region
    _
  $region29: #{tcclip_forward.25} parent=0 // pred_fallthru
    _
  %v26 = vld [vmem:[%s0] sm:$0xf]
  %v27 = vld [vmem:[%s0 + $0x4] sm:$0xf]
  %v28 = vld [vmem:[%s0 + $0x8] sm:$0xf]
  %v29 = vld [vmem:[%s0 + $0xc] sm:$0xf]
  %v30 = vld [vmem:[%s0 + $0x10] sm:$0xf]
  %v31 = vld [vmem:[%s0 + $0x14] sm:$0xf]
  %v32 = vld [vmem:[%s0 + $0x18] sm:$0xf]
  %v33 = vld [vmem:[%s0 + $0x1c] sm:$0xf]
  %v34 = vld [vmem:[%s0 + $0x20] sm:$0xf]
  %v35 = vld [vmem:[%s0 + $0x24] sm:$0xf]
  %v36 = vunpack.c.l.bf16 %v26
  %v37 = vunpack.c.l.bf16 %v27
  %v38 = vunpack.c.l.bf16 %v28
  %v39 = vunpack.c.l.bf16 %v29
  %v40 = vunpack.c.l.bf16 %v30
  %v41 = vunpack.c.l.bf16 %v31
  %v42 = vunpack.c.l.bf16 %v32
  %v43 = vunpack.c.l.bf16 %v33
  %v44 = vunpack.c.l.bf16 %v34
  %v45 = vunpack.c.l.bf16 %v35
  %v46 = vld [vmem:[%s5] sm:$0x1]
  %v47 = vld [vmem:[%s6] sm:$0x1]
  %48 = vadd.xlane.f32.xlu0 %v36
  %v49 = vpop.xlane.xlu0 %48
  %50 = vadd.xlane.f32.xlu0 %v37
  %v51 = vpop.xlane.xlu0 %50
  %52 = vadd.xlane.f32.xlu0 %v38
  %v53 = vpop.xlane.xlu0 %52
  %54 = vadd.xlane.f32.xlu0 %v39
  %v55 = vpop.xlane.xlu0 %54
  %56 = vadd.xlane.f32.xlu0 %v40
  %v57 = vpop.xlane.xlu0 %56
  %58 = vadd.xlane.f32.xlu0 %v41
  %v59 = vpop.xlane.xlu0 %58
  %60 = vadd.xlane.f32.xlu0 %v42
  %v61 = vpop.xlane.xlu0 %60
  %62 = vadd.xlane.f32.xlu0 %v43
  %v63 = vpop.xlane.xlu0 %62
  %64 = vadd.xlane.f32.xlu0 %v44
  %v65 = vpop.xlane.xlu0 %64
  %66 = vadd.xlane.f32.xlu0 %v45
  %v67 = vpop.xlane.xlu0 %66
  %v68 = vrcp.pop 128.0
  %v69 = vmul.f32 128.0, %v68
  %v70 = vsub.f32 1.0, %v69
  %v71 = vmul.f32 %v68, %v70
  %v72 = vadd.f32 %v68, %v71
  %vm73 = vweird.f32 %v68
  %v74 = vsel %vm73, %v68, %v72
  %v75 = vmul.f32 %v49, %v74
  %v76 = vmul.f32 %v51, %v74
  %v77 = vmul.f32 %v53, %v74
  %v78 = vmul.f32 %v55, %v74
  %v79 = vmul.f32 %v57, %v74
  %v80 = vmul.f32 %v59, %v74
  %v81 = vmul.f32 %v61, %v74
  %v82 = vmul.f32 %v63, %v74
  %v83 = vmul.f32 %v65, %v74
  %v84 = vmul.f32 %v67, %v74
  %v85 = vsub.f32 %v36, %v75
  %v86 = vsub.f32 %v37, %v76
  %v87 = vsub.f32 %v38, %v77
  %v88 = vsub.f32 %v39, %v78
  %v89 = vsub.f32 %v40, %v79
  %v90 = vsub.f32 %v41, %v80
  %v91 = vsub.f32 %v42, %v81
  %v92 = vsub.f32 %v43, %v82
  %v93 = vsub.f32 %v44, %v83
  %v94 = vsub.f32 %v45, %v84
  %v95 = vmul.f32 %v85, %v85
  %v96 = vmul.f32 %v86, %v86
  %v97 = vmul.f32 %v87, %v87
  %v98 = vmul.f32 %v88, %v88
  %v99 = vmul.f32 %v89, %v89
  %v100 = vmul.f32 %v90, %v90
  %v101 = vmul.f32 %v91, %v91
  %v102 = vmul.f32 %v92, %v92
  %v103 = vmul.f32 %v93, %v93
  %v104 = vmul.f32 %v94, %v94
  %105 = vadd.xlane.f32.xlu0 %v95
  %v106 = vpop.xlane.xlu0 %105
  %107 = vadd.xlane.f32.xlu0 %v96
  %v108 = vpop.xlane.xlu0 %107
  %109 = vadd.xlane.f32.xlu0 %v97
  %v110 = vpop.xlane.xlu0 %109
  %111 = vadd.xlane.f32.xlu0 %v98
  %v112 = vpop.xlane.xlu0 %111
  %113 = vadd.xlane.f32.xlu0 %v99
  %v114 = vpop.xlane.xlu0 %113
  %115 = vadd.xlane.f32.xlu0 %v100
  %v116 = vpop.xlane.xlu0 %115
  %117 = vadd.xlane.f32.xlu0 %v101
  %v118 = vpop.xlane.xlu0 %117
  %119 = vadd.xlane.f32.xlu0 %v102
  %v120 = vpop.xlane.xlu0 %119
  %121 = vadd.xlane.f32.xlu0 %v103
  %v122 = vpop.xlane.xlu0 %121
  %123 = vadd.xlane.f32.xlu0 %v104
  %v124 = vpop.xlane.xlu0 %123
  %v125 = vmul.f32 %v106, %v74
  %v126 = vmul.f32 %v108, %v74
  %v127 = vmul.f32 %v110, %v74
  %v128 = vmul.f32 %v112, %v74
  %v129 = vmul.f32 %v114, %v74
  %v130 = vmul.f32 %v116, %v74
  %v131 = vmul.f32 %v118, %v74
  %v132 = vmul.f32 %v120, %v74
  %v133 = vmul.f32 %v122, %v74
  %v134 = vmul.f32 %v124, %v74
  %v135 = vadd.f32 %v125, 1e-05
  %v136 = vadd.f32 %v126, 1e-05
  %v137 = vadd.f32 %v127, 1e-05
  %v138 = vadd.f32 %v128, 1e-05
  %v139 = vadd.f32 %v129, 1e-05
  %v140 = vadd.f32 %v130, 1e-05
  %v141 = vadd.f32 %v131, 1e-05
  %v142 = vadd.f32 %v132, 1e-05
  %v143 = vadd.f32 %v133, 1e-05
  %v144 = vadd.f32 %v134, 1e-05
  %v145 = vrsqrt.pop %v135
  %v146 = vmul.f32 %v145, %v135
  %v147 = vmul.f32 %v146, %v145
  %v148 = vmul.f32 0.5, %v147
  %v149 = vsub.f32 1.5, %v148
  %v150 = vmul.f32 %v145, %v149
  %vm151 = vweird.f32 %v135
  %vm152 = vweird.f32 %v145
  %vm153 = vmor %vm151, %vm152
  %v154 = vsel %vm153, %v145, %v150
  %v155 = vrsqrt.pop %v136
  %v156 = vmul.f32 %v155, %v136
  %v157 = vmul.f32 %v156, %v155
  %v158 = vmul.f32 0.5, %v157
  %v159 = vsub.f32 1.5, %v158
  %v160 = vmul.f32 %v155, %v159
  %vm161 = vweird.f32 %v136
  %vm162 = vweird.f32 %v155
  %vm163 = vmor %vm161, %vm162
  %v164 = vsel %vm163, %v155, %v160
  %v165 = vrsqrt.pop %v137
  %v166 = vmul.f32 %v165, %v137
  %v167 = vmul.f32 %v166, %v165
  %v168 = vmul.f32 0.5, %v167
  %v169 = vsub.f32 1.5, %v168
  %v170 = vmul.f32 %v165, %v169
  %vm171 = vweird.f32 %v137
  %vm172 = vweird.f32 %v165
  %vm173 = vmor %vm171, %vm172
  %v174 = vsel %vm173, %v165, %v170
  %v175 = vrsqrt.pop %v138
  %v176 = vmul.f32 %v175, %v138
  %v177 = vmul.f32 %v176, %v175
  %v178 = vmul.f32 0.5, %v177
  %v179 = vsub.f32 1.5, %v178
  %v180 = vmul.f32 %v175, %v179
  %vm181 = vweird.f32 %v138
  %vm182 = vweird.f32 %v175
  %vm183 = vmor %vm181, %vm182
  %v184 = vsel %vm183, %v175, %v180
  %v185 = vrsqrt.pop %v139
  %v186 = vmul.f32 %v185, %v139
  %v187 = vmul.f32 %v186, %v185
  %v188 = vmul.f32 0.5, %v187
  %v189 = vsub.f32 1.5, %v188
  %v190 = vmul.f32 %v185, %v189
  %vm191 = vweird.f32 %v139
  %vm192 = vweird.f32 %v185
  %vm193 = vmor %vm191, %vm192
  %v194 = vsel %vm193, %v185, %v190
  %v195 = vrsqrt.pop %v140
  %v196 = vmul.f32 %v195, %v140
  %v197 = vmul.f32 %v196, %v195
  %v198 = vmul.f32 0.5, %v197
  %v199 = vsub.f32 1.5, %v198
  %v200 = vmul.f32 %v195, %v199
  %vm201 = vweird.f32 %v140
  %vm202 = vweird.f32 %v195
  %vm203 = vmor %vm201, %vm202
  %v204 = vsel %vm203, %v195, %v200
  %v205 = vrsqrt.pop %v141
  %v206 = vmul.f32 %v205, %v141
  %v207 = vmul.f32 %v206, %v205
  %v208 = vmul.f32 0.5, %v207
  %v209 = vsub.f32 1.5, %v208
  %v210 = vmul.f32 %v205, %v209
  %vm211 = vweird.f32 %v141
  %vm212 = vweird.f32 %v205
  %vm213 = vmor %vm211, %vm212
  %v214 = vsel %vm213, %v205, %v210
  %v215 = vrsqrt.pop %v142
  %v216 = vmul.f32 %v215, %v142
  %v217 = vmul.f32 %v216, %v215
  %v218 = vmul.f32 0.5, %v217
  %v219 = vsub.f32 1.5, %v218
  %v220 = vmul.f32 %v215, %v219
  %vm221 = vweird.f32 %v142
  %vm222 = vweird.f32 %v215
  %vm223 = vmor %vm221, %vm222
  %v224 = vsel %vm223, %v215, %v220
  %v225 = vrsqrt.pop %v143
  %v226 = vmul.f32 %v225, %v143
  %v227 = vmul.f32 %v226, %v225
  %v228 = vmul.f32 0.5, %v227
  %v229 = vsub.f32 1.5, %v228
  %v230 = vmul.f32 %v225, %v229
  %vm231 = vweird.f32 %v143
  %vm232 = vweird.f32 %v225
  %vm233 = vmor %vm231, %vm232
  %v234 = vsel %vm233, %v225, %v230
  %v235 = vrsqrt.pop %v144
  %v236 = vmul.f32 %v235, %v144
  %v237 = vmul.f32 %v236, %v235
  %v238 = vmul.f32 0.5, %v237
  %v239 = vsub.f32 1.5, %v238
  %v240 = vmul.f32 %v235, %v239
  %vm241 = vweird.f32 %v144
  %vm242 = vweird.f32 %v235
  %vm243 = vmor %vm241, %vm242
  %v244 = vsel %vm243, %v235, %v240
  %v245 = vmul.f32 %v85, %v154
  %v246 = vmul.f32 %v86, %v164
  %v247 = vmul.f32 %v87, %v174
  %v248 = vmul.f32 %v88, %v184
  %v249 = vmul.f32 %v89, %v194
  %v250 = vmul.f32 %v90, %v204
  %v251 = vmul.f32 %v91, %v214
  %v252 = vmul.f32 %v92, %v224
  %v253 = vmul.f32 %v93, %v234
  %v254 = vmul.f32 %v94, %v244
  %v256 = vperm.slane %v46, 0
  %v258 = vmul.f32 %v245, %v256
  %v259 = vmul.f32 %v246, %v256
  %v260 = vmul.f32 %v247, %v256
  %v261 = vmul.f32 %v248, %v256
  %v262 = vmul.f32 %v249, %v256
  %v263 = vmul.f32 %v250, %v256
  %v264 = vmul.f32 %v251, %v256
  %v265 = vmul.f32 %v252, %v256
  %v266 = vmul.f32 %v253, %v256
  %v267 = vmul.f32 %v254, %v256
  %v269 = vperm.slane %v47, 0
  %v271 = vadd.f32 %v258, %v269
  %v272 = vadd.f32 %v259, %v269
  %v273 = vadd.f32 %v260, %v269
  %v274 = vadd.f32 %v261, %v269
  %v275 = vadd.f32 %v262, %v269
  %v276 = vadd.f32 %v263, %v269
  %v277 = vadd.f32 %v264, %v269
  %v278 = vadd.f32 %v265, %v269
  %v279 = vadd.f32 %v266, %v269
  %v280 = vadd.f32 %v267, %v269
  %v281 = vpack.c.bf16 %v272, %v271
  %v282 = vpack.c.bf16 %v274, %v273
  %v283 = vpack.c.bf16 %v276, %v275
  %v284 = vpack.c.bf16 %v278, %v277
  %v285 = vpack.c.bf16 %v280, %v279
  %v286 = vld [vmem:[%s1] sm:$0xff]
  %v287 = vld [vmem:[%s1 + $0x8] sm:$0xff]
  %v288 = vld [vmem:[%s1 + $0x10] sm:$0xff]
  %v289 = vld [vmem:[%s1 + $0x18] sm:$0xff]
  %v290 = vld [vmem:[%s1 + $0x20] sm:$0xff]
  %v291 = vld [vmem:[%s1 + $0x28] sm:$0xff]
  %v292 = vld [vmem:[%s1 + $0x30] sm:$0xff]
  %v293 = vld [vmem:[%s1 + $0x38] sm:$0xff]
  %v294 = vld [vmem:[%s1 + $0x40] sm:$0xff]
  %v295 = vld [vmem:[%s1 + $0x48] sm:$0xff]
  %v296 = vld [vmem:[%s1 + $0x50] sm:$0xff]
  %v297 = vld [vmem:[%s1 + $0x58] sm:$0xff]
  %v298 = vld [vmem:[%s1 + $0x60] sm:$0xff]
  %v299 = vld [vmem:[%s1 + $0x68] sm:$0xff]
  %v300 = vld [vmem:[%s1 + $0x70] sm:$0xff]
  %v301 = vld [vmem:[%s1 + $0x78] sm:$0xff]
  %v302 = vld [vmem:[%s1 + $0x80] sm:$0xff]
  %v303 = vld [vmem:[%s1 + $0x88] sm:$0xff]
  %v304 = vld [vmem:[%s1 + $0x90] sm:$0xff]
  %v305 = vld [vmem:[%s1 + $0x98] sm:$0xff]
  %v306 = vld [vmem:[%s1 + $0xa0] sm:$0xff]
  %v307 = vld [vmem:[%s1 + $0xa8] sm:$0xff]
  %v308 = vld [vmem:[%s1 + $0xb0] sm:$0xff]
  %v309 = vld [vmem:[%s1 + $0xb8] sm:$0xff]
  %v310 = vld [vmem:[%s1 + $0xc0] sm:$0xff]
  %v311 = vld [vmem:[%s1 + $0xc8] sm:$0xff]
  %v312 = vld [vmem:[%s1 + $0xd0] sm:$0xff]
  %v313 = vld [vmem:[%s1 + $0xd8] sm:$0xff]
  %v314 = vld [vmem:[%s1 + $0xe0] sm:$0xff]
  %v315 = vld [vmem:[%s1 + $0xe8] sm:$0xff]
  %v316 = vld [vmem:[%s1 + $0xf0] sm:$0xff]
  %v317 = vld [vmem:[%s1 + $0xf8] sm:$0xff]
  %v318 = vld [vmem:[%s2] sm:$0xf]
  %v320 = vperm.slane %v318, 0
  %v321 = vperm.slane %v318, 1
  %v322 = vperm.slane %v318, 2
  %v323 = vperm.slane %v318, 3
  %v360 = vunpack.c.l.b16 %v286
  %v361 = vunpack.c.h.b16 %v286
  %v362 = vunpack.c.l.b16 %v287
  %v363 = vunpack.c.h.b16 %v287
  %v364 = vunpack.c.l.b16 %v288
  %v365 = vunpack.c.h.b16 %v288
  %v366 = vunpack.c.l.b16 %v289
  %v367 = vunpack.c.h.b16 %v289
  %v368 = vunpack.c.l.b16 %v290
  %v369 = vunpack.c.h.b16 %v290
  %v370 = vunpack.c.l.b16 %v291
  %v371 = vunpack.c.h.b16 %v291
  %v372 = vunpack.c.l.b16 %v292
  %v373 = vunpack.c.h.b16 %v292
  %v374 = vunpack.c.l.b16 %v293
  %v375 = vunpack.c.h.b16 %v293
  %v376 = vunpack.c.l.b16 %v294
  %v377 = vunpack.c.h.b16 %v294
  %v378 = vunpack.c.l.b16 %v295
  %v379 = vunpack.c.h.b16 %v295
  %v380 = vunpack.c.l.b16 %v296
  %v381 = vunpack.c.h.b16 %v296
  %v382 = vunpack.c.l.b16 %v297
  %v383 = vunpack.c.h.b16 %v297
  %v384 = vunpack.c.l.b16 %v298
  %v385 = vunpack.c.h.b16 %v298
  %v386 = vunpack.c.l.b16 %v299
  %v387 = vunpack.c.h.b16 %v299
  %v388 = vunpack.c.l.b16 %v300
  %v389 = vunpack.c.h.b16 %v300
  %v390 = vunpack.c.l.b16 %v301
  %v391 = vunpack.c.h.b16 %v301
  %v392 = vunpack.c.l.b16 %v302
  %v393 = vunpack.c.h.b16 %v302
  %v394 = vunpack.c.l.b16 %v303
  %v395 = vunpack.c.h.b16 %v303
  %v396 = vunpack.c.l.b16 %v304
  %v397 = vunpack.c.h.b16 %v304
  %v398 = vunpack.c.l.b16 %v305
  %v399 = vunpack.c.h.b16 %v305
  %v400 = vunpack.c.l.b16 %v306
  %v401 = vunpack.c.h.b16 %v306
  %v402 = vunpack.c.l.b16 %v307
  %v403 = vunpack.c.h.b16 %v307
  %v404 = vunpack.c.l.b16 %v308
  %v405 = vunpack.c.h.b16 %v308
  %v406 = vunpack.c.l.b16 %v309
  %v407 = vunpack.c.h.b16 %v309
  %v408 = vunpack.c.l.b16 %v310
  %v409 = vunpack.c.h.b16 %v310
  %v410 = vunpack.c.l.b16 %v311
  %v411 = vunpack.c.h.b16 %v311
  %v412 = vunpack.c.l.b16 %v312
  %v413 = vunpack.c.h.b16 %v312
  %v414 = vunpack.c.l.b16 %v313
  %v415 = vunpack.c.h.b16 %v313
  %v416 = vunpack.c.l.b16 %v314
  %v417 = vunpack.c.h.b16 %v314
  %v418 = vunpack.c.l.b16 %v315
  %v419 = vunpack.c.h.b16 %v315
  %v420 = vunpack.c.l.b16 %v316
  %v421 = vunpack.c.h.b16 %v316
  %v422 = vunpack.c.l.b16 %v317
  %v423 = vunpack.c.h.b16 %v317
  %v424 = vpack.c.b16 %v364, %v360
  %v425 = vpack.c.b16 %v365, %v361
  %v426 = vpack.c.b16 %v366, %v362
  %v427 = vpack.c.b16 %v367, %v363
  %v428 = vpack.c.b16 %v372, %v368
  %v429 = vpack.c.b16 %v373, %v369
  %v430 = vpack.c.b16 %v374, %v370
  %v431 = vpack.c.b16 %v375, %v371
  %v432 = vpack.c.b16 %v380, %v376
  %v433 = vpack.c.b16 %v381, %v377
  %v434 = vpack.c.b16 %v382, %v378
  %v435 = vpack.c.b16 %v383, %v379
  %v436 = vpack.c.b16 %v388, %v384
  %v437 = vpack.c.b16 %v389, %v385
  %v438 = vpack.c.b16 %v390, %v386
  %v439 = vpack.c.b16 %v391, %v387
  %v440 = vpack.c.b16 %v396, %v392
  %v441 = vpack.c.b16 %v397, %v393
  %v442 = vpack.c.b16 %v398, %v394
  %v443 = vpack.c.b16 %v399, %v395
  %v444 = vpack.c.b16 %v404, %v400
  %v445 = vpack.c.b16 %v405, %v401
  %v446 = vpack.c.b16 %v406, %v402
  %v447 = vpack.c.b16 %v407, %v403
  %v448 = vpack.c.b16 %v412, %v408
  %v449 = vpack.c.b16 %v413, %v409
  %v450 = vpack.c.b16 %v414, %v410
  %v451 = vpack.c.b16 %v415, %v411
  %v452 = vpack.c.b16 %v420, %v416
  %v453 = vpack.c.b16 %v421, %v417
  %v454 = vpack.c.b16 %v422, %v418
  %v455 = vpack.c.b16 %v423, %v419
  %488 = vmatpush.bf16.msra.mxu0 %v452
  %489 = vmatpush.bf16.msra.mxu0 %v448
  %490 = vmatpush.bf16.msra.mxu0 %v444
  %491 = vmatpush.bf16.msra.mxu0 %v440
  %492 = vmatpush.bf16.msra.mxu0 %v436
  %493 = vmatpush.bf16.msra.mxu0 %v432
  %494 = vmatpush.bf16.msra.mxu0 %v428
  %495 = vmatpush.bf16.msra.mxu0 %v424
  %496 = vmatmul.bf16.gmra.mxu0 %v281
  %v497 = vpop.f32.mrf.mxu0
  %v498 = vadd.f32 %v320, %v497
  %v499 = vpop.f32.mrf.mxu0
  %v500 = vadd.f32 %v320, %v499
  %501 = vmatmul.bf16.gmra.mxu0 %v282
  %v502 = vpop.f32.mrf.mxu0
  %v503 = vadd.f32 %v320, %v502
  %v504 = vpop.f32.mrf.mxu0
  %v505 = vadd.f32 %v320, %v504
  %506 = vmatmul.bf16.gmra.mxu0 %v283
  %v507 = vpop.f32.mrf.mxu0
  %v508 = vadd.f32 %v320, %v507
  %v509 = vpop.f32.mrf.mxu0
  %v510 = vadd.f32 %v320, %v509
  %511 = vmatmul.bf16.gmra.mxu0 %v284
  %v512 = vpop.f32.mrf.mxu0
  %v513 = vadd.f32 %v320, %v512
  %v514 = vpop.f32.mrf.mxu0
  %v515 = vadd.f32 %v320, %v514
  %516 = vmatmul.bf16.gmra.mxu0 %v285
  %v517 = vpop.f32.mrf.mxu0
  %v518 = vadd.f32 %v320, %v517
  %v519 = vpop.f32.mrf.mxu0
  %v520 = vadd.f32 %v320, %v519
  %521 = vdwg.mxu0
  %522 = vmatpush.bf16.msra.mxu0 %v453
  %523 = vmatpush.bf16.msra.mxu0 %v449
  %524 = vmatpush.bf16.msra.mxu0 %v445
  %525 = vmatpush.bf16.msra.mxu0 %v441
  %526 = vmatpush.bf16.msra.mxu0 %v437
  %527 = vmatpush.bf16.msra.mxu0 %v433
  %528 = vmatpush.bf16.msra.mxu0 %v429
  %529 = vmatpush.bf16.msra.mxu0 %v425
  %530 = vmatmul.bf16.gmra.mxu0 %v281
  %v531 = vpop.f32.mrf.mxu0
  %v532 = vadd.f32 %v321, %v531
  %v533 = vpop.f32.mrf.mxu0
  %v534 = vadd.f32 %v321, %v533
  %535 = vmatmul.bf16.gmra.mxu0 %v282
  %v536 = vpop.f32.mrf.mxu0
  %v537 = vadd.f32 %v321, %v536
  %v538 = vpop.f32.mrf.mxu0
  %v539 = vadd.f32 %v321, %v538
  %540 = vmatmul.bf16.gmra.mxu0 %v283
  %v541 = vpop.f32.mrf.mxu0
  %v542 = vadd.f32 %v321, %v541
  %v543 = vpop.f32.mrf.mxu0
  %v544 = vadd.f32 %v321, %v543
  %545 = vmatmul.bf16.gmra.mxu0 %v284
  %v546 = vpop.f32.mrf.mxu0
  %v547 = vadd.f32 %v321, %v546
  %v548 = vpop.f32.mrf.mxu0
  %v549 = vadd.f32 %v321, %v548
  %550 = vmatmul.bf16.gmra.mxu0 %v285
  %v551 = vpop.f32.mrf.mxu0
  %v552 = vadd.f32 %v321, %v551
  %v553 = vpop.f32.mrf.mxu0
  %v554 = vadd.f32 %v321, %v553
  %555 = vdwg.mxu0
  %556 = vmatpush.bf16.msra.mxu0 %v454
  %557 = vmatpush.bf16.msra.mxu0 %v450
  %558 = vmatpush.bf16.msra.mxu0 %v446
  %559 = vmatpush.bf16.msra.mxu0 %v442
  %560 = vmatpush.bf16.msra.mxu0 %v438
  %561 = vmatpush.bf16.msra.mxu0 %v434
  %562 = vmatpush.bf16.msra.mxu0 %v430
  %563 = vmatpush.bf16.msra.mxu0 %v426
  %564 = vmatmul.bf16.gmra.mxu0 %v281
  %v565 = vpop.f32.mrf.mxu0
  %v566 = vadd.f32 %v322, %v565
  %v567 = vpop.f32.mrf.mxu0
  %v568 = vadd.f32 %v322, %v567
  %569 = vmatmul.bf16.gmra.mxu0 %v282
  %v570 = vpop.f32.mrf.mxu0
  %v571 = vadd.f32 %v322, %v570
  %v572 = vpop.f32.mrf.mxu0
  %v573 = vadd.f32 %v322, %v572
  %574 = vmatmul.bf16.gmra.mxu0 %v283
  %v575 = vpop.f32.mrf.mxu0
  %v576 = vadd.f32 %v322, %v575
  %v577 = vpop.f32.mrf.mxu0
  %v578 = vadd.f32 %v322, %v577
  %579 = vmatmul.bf16.gmra.mxu0 %v284
  %v580 = vpop.f32.mrf.mxu0
  %v581 = vadd.f32 %v322, %v580
  %v582 = vpop.f32.mrf.mxu0
  %v583 = vadd.f32 %v322, %v582
  %584 = vmatmul.bf16.gmra.mxu0 %v285
  %v585 = vpop.f32.mrf.mxu0
  %v586 = vadd.f32 %v322, %v585
  %v587 = vpop.f32.mrf.mxu0
  %v588 = vadd.f32 %v322, %v587
  %589 = vdwg.mxu0
  %590 = vmatpush.bf16.msra.mxu0 %v455
  %591 = vmatpush.bf16.msra.mxu0 %v451
  %592 = vmatpush.bf16.msra.mxu0 %v447
  %593 = vmatpush.bf16.msra.mxu0 %v443
  %594 = vmatpush.bf16.msra.mxu0 %v439
  %595 = vmatpush.bf16.msra.mxu0 %v435
  %596 = vmatpush.bf16.msra.mxu0 %v431
  %597 = vmatpush.bf16.msra.mxu0 %v427
  %598 = vmatmul.bf16.gmra.mxu0 %v281
  %v599 = vpop.f32.mrf.mxu0
  %v600 = vadd.f32 %v323, %v599
  %v601 = vpop.f32.mrf.mxu0
  %v602 = vadd.f32 %v323, %v601
  %603 = vmatmul.bf16.gmra.mxu0 %v282
  %v604 = vpop.f32.mrf.mxu0
  %v605 = vadd.f32 %v323, %v604
  %v606 = vpop.f32.mrf.mxu0
  %v607 = vadd.f32 %v323, %v606
  %608 = vmatmul.bf16.gmra.mxu0 %v283
  %v609 = vpop.f32.mrf.mxu0
  %v610 = vadd.f32 %v323, %v609
  %v611 = vpop.f32.mrf.mxu0
  %v612 = vadd.f32 %v323, %v611
  %613 = vmatmul.bf16.gmra.mxu0 %v284
  %v614 = vpop.f32.mrf.mxu0
  %v615 = vadd.f32 %v323, %v614
  %v616 = vpop.f32.mrf.mxu0
  %v617 = vadd.f32 %v323, %v616
  %618 = vmatmul.bf16.gmra.mxu0 %v285
  %v619 = vpop.f32.mrf.mxu0
  %v620 = vadd.f32 %v323, %v619
  %v621 = vpop.f32.mrf.mxu0
  %v622 = vadd.f32 %v323, %v621
  %623 = vdwg.mxu0
  %v624 = vmul.f32 %v498, 0.5
  %v625 = vmul.f32 %v532, 0.5
  %v626 = vmul.f32 %v566, 0.5
  %v627 = vmul.f32 %v600, 0.5
  %v628 = vmul.f32 %v500, 0.5
  %v629 = vmul.f32 %v534, 0.5
  %v630 = vmul.f32 %v568, 0.5
  %v631 = vmul.f32 %v602, 0.5
  %v632 = vmul.f32 %v503, 0.5
  %v633 = vmul.f32 %v537, 0.5
  %v634 = vmul.f32 %v571, 0.5
  %v635 = vmul.f32 %v605, 0.5
  %v636 = vmul.f32 %v505, 0.5
  %v637 = vmul.f32 %v539, 0.5
  %v638 = vmul.f32 %v573, 0.5
  %v639 = vmul.f32 %v607, 0.5
  %v640 = vmul.f32 %v508, 0.5
  %v641 = vmul.f32 %v542, 0.5
  %v642 = vmul.f32 %v576, 0.5
  %v643 = vmul.f32 %v610, 0.5
  %v644 = vmul.f32 %v510, 0.5
  %v645 = vmul.f32 %v544, 0.5
  %v646 = vmul.f32 %v578, 0.5
  %v647 = vmul.f32 %v612, 0.5
  %v648 = vmul.f32 %v513, 0.5
  %v649 = vmul.f32 %v547, 0.5
  %v650 = vmul.f32 %v581, 0.5
  %v651 = vmul.f32 %v615, 0.5
  %v652 = vmul.f32 %v515, 0.5
  %v653 = vmul.f32 %v549, 0.5
  %v654 = vmul.f32 %v583, 0.5
  %v655 = vmul.f32 %v617, 0.5
  %v656 = vmul.f32 %v518, 0.5
  %v657 = vmul.f32 %v552, 0.5
  %v658 = vmul.f32 %v586, 0.5
  %v659 = vmul.f32 %v620, 0.5
  %v660 = vmul.f32 %v520, 0.5
  %v661 = vmul.f32 %v554, 0.5
  %v662 = vmul.f32 %v588, 0.5
  %v663 = vmul.f32 %v622, 0.5
  %v664 = vmul.f32 %v498, 0.851
  %v665 = vmul.f32 %v532, 0.851
  %v666 = vmul.f32 %v566, 0.851
  %v667 = vmul.f32 %v600, 0.851
  %v668 = vmul.f32 %v500, 0.851
  %v669 = vmul.f32 %v534, 0.851
  %v670 = vmul.f32 %v568, 0.851
  %v671 = vmul.f32 %v602, 0.851
  %v672 = vmul.f32 %v503, 0.851
  %v673 = vmul.f32 %v537, 0.851
  %v674 = vmul.f32 %v571, 0.851
  %v675 = vmul.f32 %v605, 0.851
  %v676 = vmul.f32 %v505, 0.851
  %v677 = vmul.f32 %v539, 0.851
  %v678 = vmul.f32 %v573, 0.851
  %v679 = vmul.f32 %v607, 0.851
  %v680 = vmul.f32 %v508, 0.851
  %v681 = vmul.f32 %v542, 0.851
  %v682 = vmul.f32 %v576, 0.851
  %v683 = vmul.f32 %v610, 0.851
  %v684 = vmul.f32 %v510, 0.851
  %v685 = vmul.f32 %v544, 0.851
  %v686 = vmul.f32 %v578, 0.851
  %v687 = vmul.f32 %v612, 0.851
  %v688 = vmul.f32 %v513, 0.851
  %v689 = vmul.f32 %v547, 0.851
  %v690 = vmul.f32 %v581, 0.851
  %v691 = vmul.f32 %v615, 0.851
  %v692 = vmul.f32 %v515, 0.851
  %v693 = vmul.f32 %v549, 0.851
  %v694 = vmul.f32 %v583, 0.851
  %v695 = vmul.f32 %v617, 0.851
  %v696 = vmul.f32 %v518, 0.851
  %v697 = vmul.f32 %v552, 0.851
  %v698 = vmul.f32 %v586, 0.851
  %v699 = vmul.f32 %v620, 0.851
  %v700 = vmul.f32 %v520, 0.851
  %v701 = vmul.f32 %v554, 0.851
  %v702 = vmul.f32 %v588, 0.851
  %v703 = vmul.f32 %v622, 0.851
  %v704 = vtanh.pop %v664
  %v705 = vtanh.pop %v665
  %v706 = vtanh.pop %v666
  %v707 = vtanh.pop %v667
  %v708 = vtanh.pop %v668
  %v709 = vtanh.pop %v669
  %v710 = vtanh.pop %v670
  %v711 = vtanh.pop %v671
  %v712 = vtanh.pop %v672
  %v713 = vtanh.pop %v673
  %v714 = vtanh.pop %v674
  %v715 = vtanh.pop %v675
  %v716 = vtanh.pop %v676
  %v717 = vtanh.pop %v677
  %v718 = vtanh.pop %v678
  %v719 = vtanh.pop %v679
  %v720 = vtanh.pop %v680
  %v721 = vtanh.pop %v681
  %v722 = vtanh.pop %v682
  %v723 = vtanh.pop %v683
  %v724 = vtanh.pop %v684
  %v725 = vtanh.pop %v685
  %v726 = vtanh.pop %v686
  %v727 = vtanh.pop %v687
  %v728 = vtanh.pop %v688
  %v729 = vtanh.pop %v689
  %v730 = vtanh.pop %v690
  %v731 = vtanh.pop %v691
  %v732 = vtanh.pop %v692
  %v733 = vtanh.pop %v693
  %v734 = vtanh.pop %v694
  %v735 = vtanh.pop %v695
  %v736 = vtanh.pop %v696
  %v737 = vtanh.pop %v697
  %v738 = vtanh.pop %v698
  %v739 = vtanh.pop %v699
  %v740 = vtanh.pop %v700
  %v741 = vtanh.pop %v701
  %v742 = vtanh.pop %v702
  %v743 = vtanh.pop %v703
  %v744 = vadd.f32 %v704, 1.0
  %v745 = vadd.f32 %v705, 1.0
  %v746 = vadd.f32 %v706, 1.0
  %v747 = vadd.f32 %v707, 1.0
  %v748 = vadd.f32 %v708, 1.0
  %v749 = vadd.f32 %v709, 1.0
  %v750 = vadd.f32 %v710, 1.0
  %v751 = vadd.f32 %v711, 1.0
  %v752 = vadd.f32 %v712, 1.0
  %v753 = vadd.f32 %v713, 1.0
  %v754 = vadd.f32 %v714, 1.0
  %v755 = vadd.f32 %v715, 1.0
  %v756 = vadd.f32 %v716, 1.0
  %v757 = vadd.f32 %v717, 1.0
  %v758 = vadd.f32 %v718, 1.0
  %v759 = vadd.f32 %v719, 1.0
  %v760 = vadd.f32 %v720, 1.0
  %v761 = vadd.f32 %v721, 1.0
  %v762 = vadd.f32 %v722, 1.0
  %v763 = vadd.f32 %v723, 1.0
  %v764 = vadd.f32 %v724, 1.0
  %v765 = vadd.f32 %v725, 1.0
  %v766 = vadd.f32 %v726, 1.0
  %v767 = vadd.f32 %v727, 1.0
  %v768 = vadd.f32 %v728, 1.0
  %v769 = vadd.f32 %v729, 1.0
  %v770 = vadd.f32 %v730, 1.0
  %v771 = vadd.f32 %v731, 1.0
  %v772 = vadd.f32 %v732, 1.0
  %v773 = vadd.f32 %v733, 1.0
  %v774 = vadd.f32 %v734, 1.0
  %v775 = vadd.f32 %v735, 1.0
  %v776 = vadd.f32 %v736, 1.0
  %v777 = vadd.f32 %v737, 1.0
  %v778 = vadd.f32 %v738, 1.0
  %v779 = vadd.f32 %v739, 1.0
  %v780 = vadd.f32 %v740, 1.0
  %v781 = vadd.f32 %v741, 1.0
  %v782 = vadd.f32 %v742, 1.0
  %v783 = vadd.f32 %v743, 1.0
  %v784 = vmul.f32 %v624, %v744
  %v785 = vmul.f32 %v625, %v745
  %v786 = vmul.f32 %v626, %v746
  %v787 = vmul.f32 %v627, %v747
  %v788 = vmul.f32 %v628, %v748
  %v789 = vmul.f32 %v629, %v749
  %v790 = vmul.f32 %v630, %v750
  %v791 = vmul.f32 %v631, %v751
  %v792 = vmul.f32 %v632, %v752
  %v793 = vmul.f32 %v633, %v753
  %v794 = vmul.f32 %v634, %v754
  %v795 = vmul.f32 %v635, %v755
  %v796 = vmul.f32 %v636, %v756
  %v797 = vmul.f32 %v637, %v757
  %v798 = vmul.f32 %v638, %v758
  %v799 = vmul.f32 %v639, %v759
  %v800 = vmul.f32 %v640, %v760
  %v801 = vmul.f32 %v641, %v761
  %v802 = vmul.f32 %v642, %v762
  %v803 = vmul.f32 %v643, %v763
  %v804 = vmul.f32 %v644, %v764
  %v805 = vmul.f32 %v645, %v765
  %v806 = vmul.f32 %v646, %v766
  %v807 = vmul.f32 %v647, %v767
  %v808 = vmul.f32 %v648, %v768
  %v809 = vmul.f32 %v649, %v769
  %v810 = vmul.f32 %v650, %v770
  %v811 = vmul.f32 %v651, %v771
  %v812 = vmul.f32 %v652, %v772
  %v813 = vmul.f32 %v653, %v773
  %v814 = vmul.f32 %v654, %v774
  %v815 = vmul.f32 %v655, %v775
  %v816 = vmul.f32 %v656, %v776
  %v817 = vmul.f32 %v657, %v777
  %v818 = vmul.f32 %v658, %v778
  %v819 = vmul.f32 %v659, %v779
  %v820 = vmul.f32 %v660, %v780
  %v821 = vmul.f32 %v661, %v781
  %v822 = vmul.f32 %v662, %v782
  %v823 = vmul.f32 %v663, %v783
  %v824 = vpack.c.bf16 %v788, %v784
  %v825 = vpack.c.bf16 %v789, %v785
  %v826 = vpack.c.bf16 %v790, %v786
  %v827 = vpack.c.bf16 %v791, %v787
  %v828 = vpack.c.bf16 %v796, %v792
  %v829 = vpack.c.bf16 %v797, %v793
  %v830 = vpack.c.bf16 %v798, %v794
  %v831 = vpack.c.bf16 %v799, %v795
  %v832 = vpack.c.bf16 %v804, %v800
  %v833 = vpack.c.bf16 %v805, %v801
  %v834 = vpack.c.bf16 %v806, %v802
  %v835 = vpack.c.bf16 %v807, %v803
  %v836 = vpack.c.bf16 %v812, %v808
  %v837 = vpack.c.bf16 %v813, %v809
  %v838 = vpack.c.bf16 %v814, %v810
  %v839 = vpack.c.bf16 %v815, %v811
  %v840 = vpack.c.bf16 %v820, %v816
  %v841 = vpack.c.bf16 %v821, %v817
  %v842 = vpack.c.bf16 %v822, %v818
  %v843 = vpack.c.bf16 %v823, %v819
  %v844 = vld [vmem:[%s3] sm:$0xf]
  %v845 = vld [vmem:[%s3 + $0x4] sm:$0xf]
  %v846 = vld [vmem:[%s3 + $0x8] sm:$0xf]
  %v847 = vld [vmem:[%s3 + $0xc] sm:$0xf]
  %v848 = vld [vmem:[%s3 + $0x10] sm:$0xf]
  %v849 = vld [vmem:[%s3 + $0x14] sm:$0xf]
  %v850 = vld [vmem:[%s3 + $0x18] sm:$0xf]
  %v851 = vld [vmem:[%s3 + $0x1c] sm:$0xf]
  %v852 = vld [vmem:[%s3 + $0x20] sm:$0xf]
  %v853 = vld [vmem:[%s3 + $0x24] sm:$0xf]
  %v854 = vld [vmem:[%s3 + $0x28] sm:$0xf]
  %v855 = vld [vmem:[%s3 + $0x2c] sm:$0xf]
  %v856 = vld [vmem:[%s3 + $0x30] sm:$0xf]
  %v857 = vld [vmem:[%s3 + $0x34] sm:$0xf]
  %v858 = vld [vmem:[%s3 + $0x38] sm:$0xf]
  %v859 = vld [vmem:[%s3 + $0x3c] sm:$0xf]
  %v860 = vld [vmem:[%s3 + $0x40] sm:$0xf]
  %v861 = vld [vmem:[%s3 + $0x44] sm:$0xf]
  %v862 = vld [vmem:[%s3 + $0x48] sm:$0xf]
  %v863 = vld [vmem:[%s3 + $0x4c] sm:$0xf]
  %v864 = vld [vmem:[%s3 + $0x50] sm:$0xf]
  %v865 = vld [vmem:[%s3 + $0x54] sm:$0xf]
  %v866 = vld [vmem:[%s3 + $0x58] sm:$0xf]
  %v867 = vld [vmem:[%s3 + $0x5c] sm:$0xf]
  %v868 = vld [vmem:[%s3 + $0x60] sm:$0xf]
  %v869 = vld [vmem:[%s3 + $0x64] sm:$0xf]
  %v870 = vld [vmem:[%s3 + $0x68] sm:$0xf]
  %v871 = vld [vmem:[%s3 + $0x6c] sm:$0xf]
  %v872 = vld [vmem:[%s3 + $0x70] sm:$0xf]
  %v873 = vld [vmem:[%s3 + $0x74] sm:$0xf]
  %v874 = vld [vmem:[%s3 + $0x78] sm:$0xf]
  %v875 = vld [vmem:[%s3 + $0x7c] sm:$0xf]
  %v876 = vld [vmem:[%s3 + $0x80] sm:$0xf]
  %v877 = vld [vmem:[%s3 + $0x84] sm:$0xf]
  %v878 = vld [vmem:[%s3 + $0x88] sm:$0xf]
  %v879 = vld [vmem:[%s3 + $0x8c] sm:$0xf]
  %v880 = vld [vmem:[%s3 + $0x90] sm:$0xf]
  %v881 = vld [vmem:[%s3 + $0x94] sm:$0xf]
  %v882 = vld [vmem:[%s3 + $0x98] sm:$0xf]
  %v883 = vld [vmem:[%s3 + $0x9c] sm:$0xf]
  %v884 = vld [vmem:[%s3 + $0xa0] sm:$0xf]
  %v885 = vld [vmem:[%s3 + $0xa4] sm:$0xf]
  %v886 = vld [vmem:[%s3 + $0xa8] sm:$0xf]
  %v887 = vld [vmem:[%s3 + $0xac] sm:$0xf]
  %v888 = vld [vmem:[%s3 + $0xb0] sm:$0xf]
  %v889 = vld [vmem:[%s3 + $0xb4] sm:$0xf]
  %v890 = vld [vmem:[%s3 + $0xb8] sm:$0xf]
  %v891 = vld [vmem:[%s3 + $0xbc] sm:$0xf]
  %v892 = vld [vmem:[%s3 + $0xc0] sm:$0xf]
  %v893 = vld [vmem:[%s3 + $0xc4] sm:$0xf]
  %v894 = vld [vmem:[%s3 + $0xc8] sm:$0xf]
  %v895 = vld [vmem:[%s3 + $0xcc] sm:$0xf]
  %v896 = vld [vmem:[%s3 + $0xd0] sm:$0xf]
  %v897 = vld [vmem:[%s3 + $0xd4] sm:$0xf]
  %v898 = vld [vmem:[%s3 + $0xd8] sm:$0xf]
  %v899 = vld [vmem:[%s3 + $0xdc] sm:$0xf]
  %v900 = vld [vmem:[%s3 + $0xe0] sm:$0xf]
  %v901 = vld [vmem:[%s3 + $0xe4] sm:$0xf]
  %v902 = vld [vmem:[%s3 + $0xe8] sm:$0xf]
  %v903 = vld [vmem:[%s3 + $0xec] sm:$0xf]
  %v904 = vld [vmem:[%s3 + $0xf0] sm:$0xf]
  %v905 = vld [vmem:[%s3 + $0xf4] sm:$0xf]
  %v906 = vld [vmem:[%s3 + $0xf8] sm:$0xf]
  %v907 = vld [vmem:[%s3 + $0xfc] sm:$0xf]
  %v908 = vld [vmem:[%s4] sm:$0x1]
  %v910 = vperm.slane %v908, 0
  %v976 = vunpack.c.l.b16 %v844
  %v977 = vunpack.c.l.b16 %v845
  %v978 = vunpack.c.l.b16 %v846
  %v979 = vunpack.c.l.b16 %v847
  %v980 = vunpack.c.l.b16 %v848
  %v981 = vunpack.c.l.b16 %v849
  %v982 = vunpack.c.l.b16 %v850
  %v983 = vunpack.c.l.b16 %v851
  %v984 = vunpack.c.l.b16 %v852
  %v985 = vunpack.c.l.b16 %v853
  %v986 = vunpack.c.l.b16 %v854
  %v987 = vunpack.c.l.b16 %v855
  %v988 = vunpack.c.l.b16 %v856
  %v989 = vunpack.c.l.b16 %v857
  %v990 = vunpack.c.l.b16 %v858
  %v991 = vunpack.c.l.b16 %v859
  %v992 = vunpack.c.l.b16 %v860
  %v993 = vunpack.c.l.b16 %v861
  %v994 = vunpack.c.l.b16 %v862
  %v995 = vunpack.c.l.b16 %v863
  %v996 = vunpack.c.l.b16 %v864
  %v997 = vunpack.c.l.b16 %v865
  %v998 = vunpack.c.l.b16 %v866
  %v999 = vunpack.c.l.b16 %v867
  %v1000 = vunpack.c.l.b16 %v868
  %v1001 = vunpack.c.l.b16 %v869
  %v1002 = vunpack.c.l.b16 %v870
  %v1003 = vunpack.c.l.b16 %v871
  %v1004 = vunpack.c.l.b16 %v872
  %v1005 = vunpack.c.l.b16 %v873
  %v1006 = vunpack.c.l.b16 %v874
  %v1007 = vunpack.c.l.b16 %v875
  %v1008 = vunpack.c.l.b16 %v876
  %v1009 = vunpack.c.l.b16 %v877
  %v1010 = vunpack.c.l.b16 %v878
  %v1011 = vunpack.c.l.b16 %v879
  %v1012 = vunpack.c.l.b16 %v880
  %v1013 = vunpack.c.l.b16 %v881
  %v1014 = vunpack.c.l.b16 %v882
  %v1015 = vunpack.c.l.b16 %v883
  %v1016 = vunpack.c.l.b16 %v884
  %v1017 = vunpack.c.l.b16 %v885
  %v1018 = vunpack.c.l.b16 %v886
  %v1019 = vunpack.c.l.b16 %v887
  %v1020 = vunpack.c.l.b16 %v888
  %v1021 = vunpack.c.l.b16 %v889
  %v1022 = vunpack.c.l.b16 %v890
  %v1023 = vunpack.c.l.b16 %v891
  %v1024 = vunpack.c.l.b16 %v892
  %v1025 = vunpack.c.l.b16 %v893
  %v1026 = vunpack.c.l.b16 %v894
  %v1027 = vunpack.c.l.b16 %v895
  %v1028 = vunpack.c.l.b16 %v896
  %v1029 = vunpack.c.l.b16 %v897
  %v1030 = vunpack.c.l.b16 %v898
  %v1031 = vunpack.c.l.b16 %v899
  %v1032 = vunpack.c.l.b16 %v900
  %v1033 = vunpack.c.l.b16 %v901
  %v1034 = vunpack.c.l.b16 %v902
  %v1035 = vunpack.c.l.b16 %v903
  %v1036 = vunpack.c.l.b16 %v904
  %v1037 = vunpack.c.l.b16 %v905
  %v1038 = vunpack.c.l.b16 %v906
  %v1039 = vunpack.c.l.b16 %v907
  %v1040 = vpack.c.b16 %v977, %v976
  %v1041 = vpack.c.b16 %v979, %v978
  %v1042 = vpack.c.b16 %v981, %v980
  %v1043 = vpack.c.b16 %v983, %v982
  %v1044 = vpack.c.b16 %v985, %v984
  %v1045 = vpack.c.b16 %v987, %v986
  %v1046 = vpack.c.b16 %v989, %v988
  %v1047 = vpack.c.b16 %v991, %v990
  %v1048 = vpack.c.b16 %v993, %v992
  %v1049 = vpack.c.b16 %v995, %v994
  %v1050 = vpack.c.b16 %v997, %v996
  %v1051 = vpack.c.b16 %v999, %v998
  %v1052 = vpack.c.b16 %v1001, %v1000
  %v1053 = vpack.c.b16 %v1003, %v1002
  %v1054 = vpack.c.b16 %v1005, %v1004
  %v1055 = vpack.c.b16 %v1007, %v1006
  %v1056 = vpack.c.b16 %v1009, %v1008
  %v1057 = vpack.c.b16 %v1011, %v1010
  %v1058 = vpack.c.b16 %v1013, %v1012
  %v1059 = vpack.c.b16 %v1015, %v1014
  %v1060 = vpack.c.b16 %v1017, %v1016
  %v1061 = vpack.c.b16 %v1019, %v1018
  %v1062 = vpack.c.b16 %v1021, %v1020
  %v1063 = vpack.c.b16 %v1023, %v1022
  %v1064 = vpack.c.b16 %v1025, %v1024
  %v1065 = vpack.c.b16 %v1027, %v1026
  %v1066 = vpack.c.b16 %v1029, %v1028
  %v1067 = vpack.c.b16 %v1031, %v1030
  %v1068 = vpack.c.b16 %v1033, %v1032
  %v1069 = vpack.c.b16 %v1035, %v1034
  %v1070 = vpack.c.b16 %v1037, %v1036
  %v1071 = vpack.c.b16 %v1039, %v1038
  %1104 = vmatpush.bf16.msra.mxu0 %v1047
  %1105 = vmatpush.bf16.msra.mxu0 %v1046
  %1106 = vmatpush.bf16.msra.mxu0 %v1045
  %1107 = vmatpush.bf16.msra.mxu0 %v1044
  %1108 = vmatpush.bf16.msra.mxu0 %v1043
  %1109 = vmatpush.bf16.msra.mxu0 %v1042
  %1110 = vmatpush.bf16.msra.mxu0 %v1041
  %1111 = vmatpush.bf16.msra.mxu0 %v1040
  %1112 = vmatmul.bf16.gmra.mxu0 %v824
  %v1113 = vpop.f32.mrf.mxu0
  %v1114 = vadd.f32 %v910, %v1113
  %v1115 = vpop.f32.mrf.mxu0
  %v1116 = vadd.f32 %v910, %v1115
  %1117 = vmatmul.bf16.gmra.mxu0 %v828
  %v1118 = vpop.f32.mrf.mxu0
  %v1119 = vadd.f32 %v910, %v1118
  %v1120 = vpop.f32.mrf.mxu0
  %v1121 = vadd.f32 %v910, %v1120
  %1122 = vmatmul.bf16.gmra.mxu0 %v832
  %v1123 = vpop.f32.mrf.mxu0
  %v1124 = vadd.f32 %v910, %v1123
  %v1125 = vpop.f32.mrf.mxu0
  %v1126 = vadd.f32 %v910, %v1125
  %1127 = vmatmul.bf16.gmra.mxu0 %v836
  %v1128 = vpop.f32.mrf.mxu0
  %v1129 = vadd.f32 %v910, %v1128
  %v1130 = vpop.f32.mrf.mxu0
  %v1131 = vadd.f32 %v910, %v1130
  %1132 = vmatmul.bf16.gmra.mxu0 %v840
  %v1133 = vpop.f32.mrf.mxu0
  %v1134 = vadd.f32 %v910, %v1133
  %v1135 = vpop.f32.mrf.mxu0
  %v1136 = vadd.f32 %v910, %v1135
  %1137 = vdwg.mxu0
  %1138 = vmatpush.bf16.msra.mxu0 %v1055
  %1139 = vmatpush.bf16.msra.mxu0 %v1054
  %1140 = vmatpush.bf16.msra.mxu0 %v1053
  %1141 = vmatpush.bf16.msra.mxu0 %v1052
  %1142 = vmatpush.bf16.msra.mxu0 %v1051
  %1143 = vmatpush.bf16.msra.mxu0 %v1050
  %1144 = vmatpush.bf16.msra.mxu0 %v1049
  %1145 = vmatpush.bf16.msra.mxu0 %v1048
  %1146 = vmatmul.bf16.gmra.mxu0 %v825
  %v1147 = vpop.f32.mrf.mxu0
  %v1148 = vadd.f32 %v1114, %v1147
  %v1149 = vpop.f32.mrf.mxu0
  %v1150 = vadd.f32 %v1116, %v1149
  %1151 = vmatmul.bf16.gmra.mxu0 %v829
  %v1152 = vpop.f32.mrf.mxu0
  %v1153 = vadd.f32 %v1119, %v1152
  %v1154 = vpop.f32.mrf.mxu0
  %v1155 = vadd.f32 %v1121, %v1154
  %1156 = vmatmul.bf16.gmra.mxu0 %v833
  %v1157 = vpop.f32.mrf.mxu0
  %v1158 = vadd.f32 %v1124, %v1157
  %v1159 = vpop.f32.mrf.mxu0
  %v1160 = vadd.f32 %v1126, %v1159
  %1161 = vmatmul.bf16.gmra.mxu0 %v837
  %v1162 = vpop.f32.mrf.mxu0
  %v1163 = vadd.f32 %v1129, %v1162
  %v1164 = vpop.f32.mrf.mxu0
  %v1165 = vadd.f32 %v1131, %v1164
  %1166 = vmatmul.bf16.gmra.mxu0 %v841
  %v1167 = vpop.f32.mrf.mxu0
  %v1168 = vadd.f32 %v1134, %v1167
  %v1169 = vpop.f32.mrf.mxu0
  %v1170 = vadd.f32 %v1136, %v1169
  %1171 = vdwg.mxu0
  %1172 = vmatpush.bf16.msra.mxu0 %v1063
  %1173 = vmatpush.bf16.msra.mxu0 %v1062
  %1174 = vmatpush.bf16.msra.mxu0 %v1061
  %1175 = vmatpush.bf16.msra.mxu0 %v1060
  %1176 = vmatpush.bf16.msra.mxu0 %v1059
  %1177 = vmatpush.bf16.msra.mxu0 %v1058
  %1178 = vmatpush.bf16.msra.mxu0 %v1057
  %1179 = vmatpush.bf16.msra.mxu0 %v1056
  %1180 = vmatmul.bf16.gmra.mxu0 %v826
  %v1181 = vpop.f32.mrf.mxu0
  %v1182 = vadd.f32 %v1148, %v1181
  %v1183 = vpop.f32.mrf.mxu0
  %v1184 = vadd.f32 %v1150, %v1183
  %1185 = vmatmul.bf16.gmra.mxu0 %v830
  %v1186 = vpop.f32.mrf.mxu0
  %v1187 = vadd.f32 %v1153, %v1186
  %v1188 = vpop.f32.mrf.mxu0
  %v1189 = vadd.f32 %v1155, %v1188
  %1190 = vmatmul.bf16.gmra.mxu0 %v834
  %v1191 = vpop.f32.mrf.mxu0
  %v1192 = vadd.f32 %v1158, %v1191
  %v1193 = vpop.f32.mrf.mxu0
  %v1194 = vadd.f32 %v1160, %v1193
  %1195 = vmatmul.bf16.gmra.mxu0 %v838
  %v1196 = vpop.f32.mrf.mxu0
  %v1197 = vadd.f32 %v1163, %v1196
  %v1198 = vpop.f32.mrf.mxu0
  %v1199 = vadd.f32 %v1165, %v1198
  %1200 = vmatmul.bf16.gmra.mxu0 %v842
  %v1201 = vpop.f32.mrf.mxu0
  %v1202 = vadd.f32 %v1168, %v1201
  %v1203 = vpop.f32.mrf.mxu0
  %v1204 = vadd.f32 %v1170, %v1203
  %1205 = vdwg.mxu0
  %1206 = vmatpush.bf16.msra.mxu0 %v1071
  %1207 = vmatpush.bf16.msra.mxu0 %v1070
  %1208 = vmatpush.bf16.msra.mxu0 %v1069
  %1209 = vmatpush.bf16.msra.mxu0 %v1068
  %1210 = vmatpush.bf16.msra.mxu0 %v1067
  %1211 = vmatpush.bf16.msra.mxu0 %v1066
  %1212 = vmatpush.bf16.msra.mxu0 %v1065
  %1213 = vmatpush.bf16.msra.mxu0 %v1064
  %1214 = vmatmul.bf16.gmra.mxu0 %v827
  %v1215 = vpop.f32.mrf.mxu0
  %v1216 = vadd.f32 %v1182, %v1215
  %v1217 = vpop.f32.mrf.mxu0
  %v1218 = vadd.f32 %v1184, %v1217
  %1219 = vmatmul.bf16.gmra.mxu0 %v831
  %v1220 = vpop.f32.mrf.mxu0
  %v1221 = vadd.f32 %v1187, %v1220
  %v1222 = vpop.f32.mrf.mxu0
  %v1223 = vadd.f32 %v1189, %v1222
  %1224 = vmatmul.bf16.gmra.mxu0 %v835
  %v1225 = vpop.f32.mrf.mxu0
  %v1226 = vadd.f32 %v1192, %v1225
  %v1227 = vpop.f32.mrf.mxu0
  %v1228 = vadd.f32 %v1194, %v1227
  %1229 = vmatmul.bf16.gmra.mxu0 %v839
  %v1230 = vpop.f32.mrf.mxu0
  %v1231 = vadd.f32 %v1197, %v1230
  %v1232 = vpop.f32.mrf.mxu0
  %v1233 = vadd.f32 %v1199, %v1232
  %1234 = vmatmul.bf16.gmra.mxu0 %v843
  %v1235 = vpop.f32.mrf.mxu0
  %v1236 = vadd.f32 %v1202, %v1235
  %v1237 = vpop.f32.mrf.mxu0
  %v1238 = vadd.f32 %v1204, %v1237
  %1239 = vdwg.mxu0
  %v1240 = vadd.f32 %v1216, %v36
  %v1241 = vadd.f32 %v1218, %v37
  %v1242 = vadd.f32 %v1221, %v38
  %v1243 = vadd.f32 %v1223, %v39
  %v1244 = vadd.f32 %v1226, %v40
  %v1245 = vadd.f32 %v1228, %v41
  %v1246 = vadd.f32 %v1231, %v42
  %v1247 = vadd.f32 %v1233, %v43
  %v1248 = vadd.f32 %v1236, %v44
  %v1249 = vadd.f32 %v1238, %v45
  %v1250 = vpack.c.bf16 %v1240, %v1240
  %v1251 = vpack.c.bf16 %v1241, %v1241
  %v1252 = vpack.c.bf16 %v1242, %v1242
  %v1253 = vpack.c.bf16 %v1243, %v1243
  %v1254 = vpack.c.bf16 %v1244, %v1244
  %v1255 = vpack.c.bf16 %v1245, %v1245
  %v1256 = vpack.c.bf16 %v1246, %v1246
  %v1257 = vpack.c.bf16 %v1247, %v1247
  %v1258 = vpack.c.bf16 %v1248, %v1248
  %v1259 = vpack.c.bf16 %v1249, %v1249
  %1260 = vst [vmem:[%s7] sm:$0xf] %v1250
  %1261 = vst [vmem:[%s7 + $0x4] sm:$0xf] %v1251
  %1262 = vst [vmem:[%s7 + $0x8] sm:$0xf] %v1252
  %1263 = vst [vmem:[%s7 + $0xc] sm:$0xf] %v1253
  %1264 = vst [vmem:[%s7 + $0x10] sm:$0xf] %v1254
  %1265 = vst [vmem:[%s7 + $0x14] sm:$0xf] %v1255
  %1266 = vst [vmem:[%s7 + $0x18] sm:$0xf] %v1256
  %1267 = vst [vmem:[%s7 + $0x1c] sm:$0xf] %v1257
  %1268 = vst [vmem:[%s7 + $0x20] sm:$0xf] %v1258
  %1269 = vst [vmem:[%s7 + $0x24] sm:$0xf] %v1259
  // Predicated region
  $region30: #{tcclip_forward.25} parent=0 // pred_check
    _
  $region31: #{tcclip_forward.25} parent=0 // pred_check_branch
    %1271 = sbr.rel (0) target = $region33
  $region32: #{tcclip_forward.25} parent=0 // pred_region
    _
  $region33: #{tcclip_forward.25} parent=0 // pred_fallthru
    _
  // Predicated region
  $region34: #{tcclip_forward.25} parent=0 // pred_check
    _
  $region35: #{tcclip_forward.25} parent=0 // pred_check_branch
    %1273 = sbr.rel (0) target = $region37
  $region36: #{tcclip_forward.25} parent=0 // pred_region
    _
  $region37: #{tcclip_forward.25} parent=0 // pred_fallthru
    _

// kernel: tcclip_forward.28
$region0: #{tcclip_forward.28}
  #allocation0 [shape = 'u32[]', space=smem, size = 0x4, offset = 0x4, fixed_abs, tag = 'smem constant byte address 0x4 - core index']
  #allocation1 [shape = 'u32[72,128]{1,0:T(1,128)}', space=vmem, size = 0x9000, scoped, tag = 'internal scratch']
  %s0 = inlined_call_operand.vmem [shape: bf16[16,128], index: 0, kind: input, shape index: {}]
  %s1 = inlined_call_operand.vmem [shape: bf16[128,128], index: 1, kind: input, shape index: {}]
  %s2 = inlined_call_operand.vmem [shape: f32[1,128], index: 2, kind: input, shape index: {}]
  %s3 = inlined_call_operand.vmem [shape: f32[1,128], index: 3, kind: input, shape index: {}]
  %s4 = inlined_call_operand.vmem [shape: f32[1,128], index: 4, kind: input, shape index: {}]
  %s5 = inlined_call_operand.vmem [shape: bf16[16,128], index: 5, kind: output, shape index: {}]
  %s6 = sld [smem:[#allocation0]]
  $region30: #{tcclip_forward.28} parent=0
    _
  %s8 = ssub.s32 1, %s6
  %s9 = scalar_select 0, %s8, %s6
  // Predicated region
  $region2: #{tcclip_forward.28} parent=0 // pred_check
    _
  $region3: #{tcclip_forward.28} parent=0 // pred_check_branch
    %11 = sbr.rel (0) target = $region5
  $region4: #{tcclip_forward.28} parent=0 // pred_region
    _
  $region5: #{tcclip_forward.28} parent=0 // pred_fallthru
    _
  // Predicated region
  $region6: #{tcclip_forward.28} parent=0 // pred_check
    _
  $region7: #{tcclip_forward.28} parent=0 // pred_check_branch
    %13 = sbr.rel (0) target = $region9
  $region8: #{tcclip_forward.28} parent=0 // pred_region
    _
  $region9: #{tcclip_forward.28} parent=0 // pred_fallthru
    _
  // Predicated region
  $region10: #{tcclip_forward.28} parent=0 // pred_check
    _
  $region11: #{tcclip_forward.28} parent=0 // pred_check_branch
    %15 = sbr.rel (0) target = $region13
  $region12: #{tcclip_forward.28} parent=0 // pred_region
    _
  $region13: #{tcclip_forward.28} parent=0 // pred_fallthru
    _
  // Predicated region
  $region14: #{tcclip_forward.28} parent=0 // pred_check
    _
  $region15: #{tcclip_forward.28} parent=0 // pred_check_branch
    %17 = sbr.rel (0) target = $region17
  $region16: #{tcclip_forward.28} parent=0 // pred_region
    _
  $region17: #{tcclip_forward.28} parent=0 // pred_fallthru
    _
  // Predicated region
  $region18: #{tcclip_forward.28} parent=0 // pred_check
    _
  $region19: #{tcclip_forward.28} parent=0 // pred_check_branch
    %19 = sbr.rel (0) target = $region21
  $region20: #{tcclip_forward.28} parent=0 // pred_region
    _
  $region21: #{tcclip_forward.28} parent=0 // pred_fallthru
    _
  %v20 = vld [vmem:[%s0] sm:$0xf]
  %v21 = vld [vmem:[%s0 + $0x4] sm:$0xf]
  %v22 = vunpack.c.l.bf16 %v20
  %v23 = vunpack.c.l.bf16 %v21
  %v24 = vld [vmem:[%s3] sm:$0x1]
  %v25 = vld [vmem:[%s4] sm:$0x1]
  %26 = vadd.xlane.f32.xlu0 %v22
  %v27 = vpop.xlane.xlu0 %26
  %28 = vadd.xlane.f32.xlu0 %v23
  %v29 = vpop.xlane.xlu0 %28
  %v30 = vrcp.pop 128.0
  %v31 = vmul.f32 128.0, %v30
  %v32 = vsub.f32 1.0, %v31
  %v33 = vmul.f32 %v30, %v32
  %v34 = vadd.f32 %v30, %v33
  %vm35 = vweird.f32 %v30
  %v36 = vsel %vm35, %v30, %v34
  %v37 = vmul.f32 %v27, %v36
  %v38 = vmul.f32 %v29, %v36
  %v39 = vsub.f32 %v22, %v37
  %v40 = vsub.f32 %v23, %v38
  %v41 = vmul.f32 %v39, %v39
  %v42 = vmul.f32 %v40, %v40
  %43 = vadd.xlane.f32.xlu0 %v41
  %v44 = vpop.xlane.xlu0 %43
  %45 = vadd.xlane.f32.xlu0 %v42
  %v46 = vpop.xlane.xlu0 %45
  %v47 = vmul.f32 %v44, %v36
  %v48 = vmul.f32 %v46, %v36
  %v49 = vadd.f32 %v47, 1e-05
  %v50 = vadd.f32 %v48, 1e-05
  %v51 = vrsqrt.pop %v49
  %v52 = vmul.f32 %v51, %v49
  %v53 = vmul.f32 %v52, %v51
  %v54 = vmul.f32 0.5, %v53
  %v55 = vsub.f32 1.5, %v54
  %v56 = vmul.f32 %v51, %v55
  %vm57 = vweird.f32 %v49
  %vm58 = vweird.f32 %v51
  %vm59 = vmor %vm57, %vm58
  %v60 = vsel %vm59, %v51, %v56
  %v61 = vrsqrt.pop %v50
  %v62 = vmul.f32 %v61, %v50
  %v63 = vmul.f32 %v62, %v61
  %v64 = vmul.f32 0.5, %v63
  %v65 = vsub.f32 1.5, %v64
  %v66 = vmul.f32 %v61, %v65
  %vm67 = vweird.f32 %v50
  %vm68 = vweird.f32 %v61
  %vm69 = vmor %vm67, %vm68
  %v70 = vsel %vm69, %v61, %v66
  %v71 = vmul.f32 %v39, %v60
  %v72 = vmul.f32 %v40, %v70
  %v74 = vperm.slane %v24, 0
  %v76 = vmul.f32 %v71, %v74
  %v77 = vmul.f32 %v72, %v74
  %v79 = vperm.slane %v25, 0
  %v81 = vadd.f32 %v76, %v79
  %v82 = vadd.f32 %v77, %v79
  %v83 = vpack.c.bf16 %v82, %v81
  %v84 = vld [vmem:[%s1] sm:$0xf]
  %v85 = vld [vmem:[%s1 + $0x4] sm:$0xf]
  %v86 = vld [vmem:[%s1 + $0x8] sm:$0xf]
  %v87 = vld [vmem:[%s1 + $0xc] sm:$0xf]
  %v88 = vld [vmem:[%s1 + $0x10] sm:$0xf]
  %v89 = vld [vmem:[%s1 + $0x14] sm:$0xf]
  %v90 = vld [vmem:[%s1 + $0x18] sm:$0xf]
  %v91 = vld [vmem:[%s1 + $0x1c] sm:$0xf]
  %v92 = vld [vmem:[%s1 + $0x20] sm:$0xf]
  %v93 = vld [vmem:[%s1 + $0x24] sm:$0xf]
  %v94 = vld [vmem:[%s1 + $0x28] sm:$0xf]
  %v95 = vld [vmem:[%s1 + $0x2c] sm:$0xf]
  %v96 = vld [vmem:[%s1 + $0x30] sm:$0xf]
  %v97 = vld [vmem:[%s1 + $0x34] sm:$0xf]
  %v98 = vld [vmem:[%s1 + $0x38] sm:$0xf]
  %v99 = vld [vmem:[%s1 + $0x3c] sm:$0xf]
  %v100 = vld [vmem:[%s2] sm:$0x1]
  %v102 = vperm.slane %v100, 0
  %v120 = vunpack.c.l.b16 %v84
  %v121 = vunpack.c.l.b16 %v85
  %v122 = vunpack.c.l.b16 %v86
  %v123 = vunpack.c.l.b16 %v87
  %v124 = vunpack.c.l.b16 %v88
  %v125 = vunpack.c.l.b16 %v89
  %v126 = vunpack.c.l.b16 %v90
  %v127 = vunpack.c.l.b16 %v91
  %v128 = vunpack.c.l.b16 %v92
  %v129 = vunpack.c.l.b16 %v93
  %v130 = vunpack.c.l.b16 %v94
  %v131 = vunpack.c.l.b16 %v95
  %v132 = vunpack.c.l.b16 %v96
  %v133 = vunpack.c.l.b16 %v97
  %v134 = vunpack.c.l.b16 %v98
  %v135 = vunpack.c.l.b16 %v99
  %v136 = vpack.c.b16 %v121, %v120
  %v137 = vpack.c.b16 %v123, %v122
  %v138 = vpack.c.b16 %v125, %v124
  %v139 = vpack.c.b16 %v127, %v126
  %v140 = vpack.c.b16 %v129, %v128
  %v141 = vpack.c.b16 %v131, %v130
  %v142 = vpack.c.b16 %v133, %v132
  %v143 = vpack.c.b16 %v135, %v134
  %152 = vmatpush.bf16.msra.mxu0 %v143
  %153 = vmatpush.bf16.msra.mxu0 %v142
  %154 = vmatpush.bf16.msra.mxu0 %v141
  %155 = vmatpush.bf16.msra.mxu0 %v140
  %156 = vmatpush.bf16.msra.mxu0 %v139
  %157 = vmatpush.bf16.msra.mxu0 %v138
  %158 = vmatpush.bf16.msra.mxu0 %v137
  %159 = vmatpush.bf16.msra.mxu0 %v136
  %160 = vmatmul.bf16.gmra.mxu0 %v83
  %v161 = vpop.f32.mrf.mxu0
  %v162 = vadd.f32 %v102, %v161
  %v163 = vpop.f32.mrf.mxu0
  %v164 = vadd.f32 %v102, %v163
  %165 = vdwg.mxu0
  %v166 = vpack.c.bf16 %v162, %v162
  %v167 = vpack.c.bf16 %v164, %v164
  %168 = vst [vmem:[%s5] sm:$0xf] %v166
  %169 = vst [vmem:[%s5 + $0x4] sm:$0xf] %v167
  // Predicated region
  $region22: #{tcclip_forward.28} parent=0 // pred_check
    _
  $region23: #{tcclip_forward.28} parent=0 // pred_check_branch
    %171 = sbr.rel (0) target = $region25
  $region24: #{tcclip_forward.28} parent=0 // pred_region
    _
  $region25: #{tcclip_forward.28} parent=0 // pred_fallthru
    _
  // Predicated region
  $region26: #{tcclip_forward.28} parent=0 // pred_check
    _
  $region27: #{tcclip_forward.28} parent=0 // pred_check_branch
    %173 = sbr.rel (0) target = $region29
  $region28: #{tcclip_forward.28} parent=0 // pred_region
    _
  $region29: #{tcclip_forward.28} parent=0 // pred_fallthru
    _

// kernel: tcclip_forward.24
$region0: #{tcclip_forward.24}
  #allocation0 [shape = 'u32[]', space=smem, size = 0x4, offset = 0x4, fixed_abs, tag = 'smem constant byte address 0x4 - core index']
  #allocation1 [shape = 'u32[72,128]{1,0:T(1,128)}', space=vmem, size = 0x9000, scoped, tag = 'internal scratch']
  %s0 = inlined_call_operand.vmem [shape: bf16[10,8,128], index: 0, kind: input, shape index: {}]
  %s1 = inlined_call_operand.vmem [shape: bf16[4,128,32], index: 1, kind: input, shape index: {}]
  %s2 = inlined_call_operand.vmem [shape: bf16[4,128,32], index: 2, kind: input, shape index: {}]
  %s3 = inlined_call_operand.vmem [shape: bf16[4,128,32], index: 3, kind: input, shape index: {}]
  %s4 = inlined_call_operand.vmem [shape: f32[4,1,32], index: 4, kind: input, shape index: {}]
  %s5 = inlined_call_operand.vmem [shape: f32[4,1,32], index: 5, kind: input, shape index: {}]
  %s6 = inlined_call_operand.vmem [shape: f32[4,1,32], index: 6, kind: input, shape index: {}]
  %s7 = inlined_call_operand.vmem [shape: bf16[4,32,128], index: 7, kind: input, shape index: {}]
  %s8 = inlined_call_operand.vmem [shape: f32[1,128], index: 8, kind: input, shape index: {}]
  %s9 = inlined_call_operand.vmem [shape: f32[1,128], index: 9, kind: input, shape index: {}]
  %s10 = inlined_call_operand.vmem [shape: f32[1,128], index: 10, kind: input, shape index: {}]
  %s11 = inlined_call_operand.vmem [shape: bf16[10,8,128], index: 11, kind: output, shape index: {}]
  %s12 = sld [smem:[#allocation0]]
  $region77: #{tcclip_forward.24} parent=0
    _
  %s14 = ssub.s32 1, %s12
  %s15 = scalar_select 0, %s14, %s12
  loop: start=0, step=1, limit=12
  $region2: #{tcclip_forward.24} parent=0 // loop_pre_header
    _
  $region3: #{tcclip_forward.24} parent=0 // loop_header
    %s17 = sphi 0, %s21
    %p18 = scmp.ge.s32.totalorder %s17, 12
    %s27 = sphi 0, %s29
    %s30 = sphi 0, %s27
    %s31 = sphi 0, %s30
    %s47 = sphi 0, %s31
    %s51 = sphi 0, %s51
    %s53 = sphi 0, %s51
    %s54 = sphi 0, %s53
    %s68 = sphi 0, %s54
    %s72 = sphi 0, %s72
    %s74 = sphi 0, %s72
    %s75 = sphi 0, %s74
    %s89 = sphi 0, %s75
    %s93 = sphi 0, %s93
    %s95 = sphi 0, %s93
    %s96 = sphi 0, %s95
    %s110 = sphi 0, %s96
    %s114 = sphi 0, %s114
    %s116 = sphi 0, %s114
    %s117 = sphi 0, %s116
    %s131 = sphi 0, %s117
    %s135 = sphi 0, %s135
    %s137 = sphi 0, %s135
    %s138 = sphi 0, %s137
    %s152 = sphi 0, %s138
    %s156 = sphi 0, %s156
    %s158 = sphi 0, %s156
    %s159 = sphi 0, %s158
    %s173 = sphi 0, %s159
    %s177 = sphi 0, %s177
    %s179 = sphi 0, %s177
    %s180 = sphi 0, %s179
    %s194 = sphi 0, %s180
    %s198 = sphi 0, %s198
    %s200 = sphi 0, %s198
    %s201 = sphi 0, %s200
    %s215 = sphi 0, %s201
    %s219 = sphi 0, %s219
    %s221 = sphi 0, %s219
    %s222 = sphi 0, %s221
    %s236 = sphi 0, %s222
    %s240 = sphi 0, %s240
    %s242 = sphi 0, %s240
    %s243 = sphi 0, %s242
    %s257 = sphi 0, %s243
    %s263 = sphi 0, %s265
    %s266 = sphi 0, %s263
    %s267 = sphi 0, %s266
    %s283 = sphi 0, %s267
  $region4: #{tcclip_forward.24} parent=0 // loop_header_branch
    %20 = sbr.rel (%p18) target = $region8
  $region5: #{tcclip_forward.24} parent=0 // loop_body
    %s22 = ssub.s32 %s17, 1
    %s23 = ssub.s32 %s17, 2
    %s24 = sadd.s32 %s17, 1
    %s25 = ssub.s32 %s17, %s24
    %p26 = scmp.eq.s32.totalorder %s25, 0
    %s28 = sadd.s32 %s27, 1
    %s29 = scalar_select %p26, %s27, %s28
    %p32 = pneg %p26
    %p33 = scmp.eq.s32.totalorder %s17, 9
    %p34 = por %p32, %p33
    %p35 = scmp.ne.s32.totalorder %s27, %s30
    %p36 = scmp.eq.s32.totalorder %s17, 0
    %p37 = por %p35, %p36
    %p38 = scmp.ne.s32.totalorder %s27, %s30
    %p39 = scmp.eq.s32.totalorder %s22, 9
    %p40 = por %p38, %p39
    %p41 = scmp.ne.s32.totalorder %s30, %s31
    %p42 = scmp.eq.s32.totalorder %s22, 0
    %p43 = por %p41, %p42
    %p44 = scmp.ne.s32.totalorder %s30, %s31
    %p45 = scmp.eq.s32.totalorder %s23, 9
    %p46 = por %p44, %p45
    %p48 = scmp.ne.s32.totalorder %s31, %s47
    %p49 = scmp.eq.s32.totalorder %s23, 0
    %p50 = por %p48, %p49
    %s52 = sadd.s32 %s51, 1
    %p55 = scmp.eq.s32.totalorder %s17, 9
    %p56 = scmp.ne.s32.totalorder %s51, %s53
    %p57 = scmp.eq.s32.totalorder %s17, 0
    %p58 = por %p56, %p57
    %p59 = scmp.ne.s32.totalorder %s51, %s53
    %p60 = scmp.eq.s32.totalorder %s22, 9
    %p61 = por %p59, %p60
    %p62 = scmp.ne.s32.totalorder %s53, %s54
    %p63 = scmp.eq.s32.totalorder %s22, 0
    %p64 = por %p62, %p63
    %p65 = scmp.ne.s32.totalorder %s53, %s54
    %p66 = scmp.eq.s32.totalorder %s23, 9
    %p67 = por %p65, %p66
    %p69 = scmp.ne.s32.totalorder %s54, %s68
    %p70 = scmp.eq.s32.totalorder %s23, 0
    %p71 = por %p69, %p70
    %s73 = sadd.s32 %s72, 1
    %p76 = scmp.eq.s32.totalorder %s17, 9
    %p77 = scmp.ne.s32.totalorder %s72, %s74
    %p78 = scmp.eq.s32.totalorder %s17, 0
    %p79 = por %p77, %p78
    %p80 = scmp.ne.s32.totalorder %s72, %s74
    %p81 = scmp.eq.s32.totalorder %s22, 9
    %p82 = por %p80, %p81
    %p83 = scmp.ne.s32.totalorder %s74, %s75
    %p84 = scmp.eq.s32.totalorder %s22, 0
    %p85 = por %p83, %p84
    %p86 = scmp.ne.s32.totalorder %s74, %s75
    %p87 = scmp.eq.s32.totalorder %s23, 9
    %p88 = por %p86, %p87
    %p90 = scmp.ne.s32.totalorder %s75, %s89
    %p91 = scmp.eq.s32.totalorder %s23, 0
    %p92 = por %p90, %p91
    %s94 = sadd.s32 %s93, 1
    %p97 = scmp.eq.s32.totalorder %s17, 9
    %p98 = scmp.ne.s32.totalorder %s93, %s95
    %p99 = scmp.eq.s32.totalorder %s17, 0
    %p100 = por %p98, %p99
    %p101 = scmp.ne.s32.totalorder %s93, %s95
    %p102 = scmp.eq.s32.totalorder %s22, 9
    %p103 = por %p101, %p102
    %p104 = scmp.ne.s32.totalorder %s95, %s96
    %p105 = scmp.eq.s32.totalorder %s22, 0
    %p106 = por %p104, %p105
    %p107 = scmp.ne.s32.totalorder %s95, %s96
    %p108 = scmp.eq.s32.totalorder %s23, 9
    %p109 = por %p107, %p108
    %p111 = scmp.ne.s32.totalorder %s96, %s110
    %p112 = scmp.eq.s32.totalorder %s23, 0
    %p113 = por %p111, %p112
    %s115 = sadd.s32 %s114, 1
    %p118 = scmp.eq.s32.totalorder %s17, 9
    %p119 = scmp.ne.s32.totalorder %s114, %s116
    %p120 = scmp.eq.s32.totalorder %s17, 0
    %p121 = por %p119, %p120
    %p122 = scmp.ne.s32.totalorder %s114, %s116
    %p123 = scmp.eq.s32.totalorder %s22, 9
    %p124 = por %p122, %p123
    %p125 = scmp.ne.s32.totalorder %s116, %s117
    %p126 = scmp.eq.s32.totalorder %s22, 0
    %p127 = por %p125, %p126
    %p128 = scmp.ne.s32.totalorder %s116, %s117
    %p129 = scmp.eq.s32.totalorder %s23, 9
    %p130 = por %p128, %p129
    %p132 = scmp.ne.s32.totalorder %s117, %s131
    %p133 = scmp.eq.s32.totalorder %s23, 0
    %p134 = por %p132, %p133
    %s136 = sadd.s32 %s135, 1
    %p139 = scmp.eq.s32.totalorder %s17, 9
    %p140 = scmp.ne.s32.totalorder %s135, %s137
    %p141 = scmp.eq.s32.totalorder %s17, 0
    %p142 = por %p140, %p141
    %p143 = scmp.ne.s32.totalorder %s135, %s137
    %p144 = scmp.eq.s32.totalorder %s22, 9
    %p145 = por %p143, %p144
    %p146 = scmp.ne.s32.totalorder %s137, %s138
    %p147 = scmp.eq.s32.totalorder %s22, 0
    %p148 = por %p146, %p147
    %p149 = scmp.ne.s32.totalorder %s137, %s138
    %p150 = scmp.eq.s32.totalorder %s23, 9
    %p151 = por %p149, %p150
    %p153 = scmp.ne.s32.totalorder %s138, %s152
    %p154 = scmp.eq.s32.totalorder %s23, 0
    %p155 = por %p153, %p154
    %s157 = sadd.s32 %s156, 1
    %p160 = scmp.eq.s32.totalorder %s17, 9
    %p161 = scmp.ne.s32.totalorder %s156, %s158
    %p162 = scmp.eq.s32.totalorder %s17, 0
    %p163 = por %p161, %p162
    %p164 = scmp.ne.s32.totalorder %s156, %s158
    %p165 = scmp.eq.s32.totalorder %s22, 9
    %p166 = por %p164, %p165
    %p167 = scmp.ne.s32.totalorder %s158, %s159
    %p168 = scmp.eq.s32.totalorder %s22, 0
    %p169 = por %p167, %p168
    %p170 = scmp.ne.s32.totalorder %s158, %s159
    %p171 = scmp.eq.s32.totalorder %s23, 9
    %p172 = por %p170, %p171
    %p174 = scmp.ne.s32.totalorder %s159, %s173
    %p175 = scmp.eq.s32.totalorder %s23, 0
    %p176 = por %p174, %p175
    %s178 = sadd.s32 %s177, 1
    %p181 = scmp.eq.s32.totalorder %s17, 9
    %p182 = scmp.ne.s32.totalorder %s177, %s179
    %p183 = scmp.eq.s32.totalorder %s17, 0
    %p184 = por %p182, %p183
    %p185 = scmp.ne.s32.totalorder %s177, %s179
    %p186 = scmp.eq.s32.totalorder %s22, 9
    %p187 = por %p185, %p186
    %p188 = scmp.ne.s32.totalorder %s179, %s180
    %p189 = scmp.eq.s32.totalorder %s22, 0
    %p190 = por %p188, %p189
    %p191 = scmp.ne.s32.totalorder %s179, %s180
    %p192 = scmp.eq.s32.totalorder %s23, 9
    %p193 = por %p191, %p192
    %p195 = scmp.ne.s32.totalorder %s180, %s194
    %p196 = scmp.eq.s32.totalorder %s23, 0
    %p197 = por %p195, %p196
    %s199 = sadd.s32 %s198, 1
    %p202 = scmp.eq.s32.totalorder %s17, 9
    %p203 = scmp.ne.s32.totalorder %s198, %s200
    %p204 = scmp.eq.s32.totalorder %s17, 0
    %p205 = por %p203, %p204
    %p206 = scmp.ne.s32.totalorder %s198, %s200
    %p207 = scmp.eq.s32.totalorder %s22, 9
    %p208 = por %p206, %p207
    %p209 = scmp.ne.s32.totalorder %s200, %s201
    %p210 = scmp.eq.s32.totalorder %s22, 0
    %p211 = por %p209, %p210
    %p212 = scmp.ne.s32.totalorder %s200, %s201
    %p213 = scmp.eq.s32.totalorder %s23, 9
    %p214 = por %p212, %p213
    %p216 = scmp.ne.s32.totalorder %s201, %s215
    %p217 = scmp.eq.s32.totalorder %s23, 0
    %p218 = por %p216, %p217
    %s220 = sadd.s32 %s219, 1
    %p223 = scmp.eq.s32.totalorder %s17, 9
    %p224 = scmp.ne.s32.totalorder %s219, %s221
    %p225 = scmp.eq.s32.totalorder %s17, 0
    %p226 = por %p224, %p225
    %p227 = scmp.ne.s32.totalorder %s219, %s221
    %p228 = scmp.eq.s32.totalorder %s22, 9
    %p229 = por %p227, %p228
    %p230 = scmp.ne.s32.totalorder %s221, %s222
    %p231 = scmp.eq.s32.totalorder %s22, 0
    %p232 = por %p230, %p231
    %p233 = scmp.ne.s32.totalorder %s221, %s222
    %p234 = scmp.eq.s32.totalorder %s23, 9
    %p235 = por %p233, %p234
    %p237 = scmp.ne.s32.totalorder %s222, %s236
    %p238 = scmp.eq.s32.totalorder %s23, 0
    %p239 = por %p237, %p238
    %s241 = sadd.s32 %s240, 1
    %p244 = scmp.eq.s32.totalorder %s17, 9
    %p245 = scmp.ne.s32.totalorder %s240, %s242
    %p246 = scmp.eq.s32.totalorder %s17, 0
    %p247 = por %p245, %p246
    %p248 = scmp.ne.s32.totalorder %s240, %s242
    %p249 = scmp.eq.s32.totalorder %s22, 9
    %p250 = por %p248, %p249
    %p251 = scmp.ne.s32.totalorder %s242, %s243
    %p252 = scmp.eq.s32.totalorder %s22, 0
    %p253 = por %p251, %p252
    %p254 = scmp.ne.s32.totalorder %s242, %s243
    %p255 = scmp.eq.s32.totalorder %s23, 9
    %p256 = por %p254, %p255
    %p258 = scmp.ne.s32.totalorder %s243, %s257
    %p259 = scmp.eq.s32.totalorder %s23, 0
    %p260 = por %p258, %p259
    %s261 = ssub.s32 %s17, %s24
    %p262 = scmp.eq.s32.totalorder %s261, 0
    %s264 = sadd.s32 %s263, 1
    %s265 = scalar_select %p262, %s263, %s264
    %p268 = pneg %p262
    %p269 = scmp.eq.s32.totalorder %s17, 9
    %p270 = por %p268, %p269
    %p271 = scmp.ne.s32.totalorder %s263, %s266
    %p272 = scmp.eq.s32.totalorder %s17, 0
    %p273 = por %p271, %p272
    %p274 = scmp.ne.s32.totalorder %s263, %s266
    %p275 = scmp.eq.s32.totalorder %s22, 9
    %p276 = por %p274, %p275
    %p277 = scmp.ne.s32.totalorder %s266, %s267
    %p278 = scmp.eq.s32.totalorder %s22, 0
    %p279 = por %p277, %p278
    %p280 = scmp.ne.s32.totalorder %s266, %s267
    %p281 = scmp.eq.s32.totalorder %s23, 9
    %p282 = por %p280, %p281
    %p284 = scmp.ne.s32.totalorder %s267, %s283
    %p285 = scmp.eq.s32.totalorder %s23, 0
    %p286 = por %p284, %p285
    %p287 = scmp.le.s32.totalorder 1, %s17
    %p288 = scmp.lt.s32.totalorder %s17, 11
    %p289 = pnand %p287, %p288
    %p290 = pneg %p289
    // Predicated region
    $region9: #{tcclip_forward.24} parent=5 // pred_check
      _
    $region10: #{tcclip_forward.24} parent=5 // pred_check_branch
      %292 = sbr.rel (%p289) target = $region12
    $region11: #{tcclip_forward.24} parent=5 // pred_region
      %s293 = ssub.s32 %s17, 1
      // Predicated region
      $region13: #{tcclip_forward.24} parent=11 // pred_check
        %p294 = pneg %p64
      $region14: #{tcclip_forward.24} parent=11 // pred_check_branch
        %296 = sbr.rel (%p294) target = $region16
      $region15: #{tcclip_forward.24} parent=11 // pred_region
        _
      $region16: #{tcclip_forward.24} parent=11 // pred_fallthru
        _
      // Predicated region
      $region17: #{tcclip_forward.24} parent=11 // pred_check
        %p297 = pneg %p85
      $region18: #{tcclip_forward.24} parent=11 // pred_check_branch
        %299 = sbr.rel (%p297) target = $region20
      $region19: #{tcclip_forward.24} parent=11 // pred_region
        _
      $region20: #{tcclip_forward.24} parent=11 // pred_fallthru
        _
      // Predicated region
      $region21: #{tcclip_forward.24} parent=11 // pred_check
        %p300 = pneg %p106
      $region22: #{tcclip_forward.24} parent=11 // pred_check_branch
        %302 = sbr.rel (%p300) target = $region24
      $region23: #{tcclip_forward.24} parent=11 // pred_region
        _
      $region24: #{tcclip_forward.24} parent=11 // pred_fallthru
        _
      // Predicated region
      $region25: #{tcclip_forward.24} parent=11 // pred_check
        %p303 = pneg %p127
      $region26: #{tcclip_forward.24} parent=11 // pred_check_branch
        %305 = sbr.rel (%p303) target = $region28
      $region27: #{tcclip_forward.24} parent=11 // pred_region
        _
      $region28: #{tcclip_forward.24} parent=11 // pred_fallthru
        _
      // Predicated region
      $region29: #{tcclip_forward.24} parent=11 // pred_check
        %p306 = pneg %p148
      $region30: #{tcclip_forward.24} parent=11 // pred_check_branch
        %308 = sbr.rel (%p306) target = $region32
      $region31: #{tcclip_forward.24} parent=11 // pred_region
        _
      $region32: #{tcclip_forward.24} parent=11 // pred_fallthru
        _
      // Predicated region
      $region33: #{tcclip_forward.24} parent=11 // pred_check
        %p309 = pneg %p169
      $region34: #{tcclip_forward.24} parent=11 // pred_check_branch
        %311 = sbr.rel (%p309) target = $region36
      $region35: #{tcclip_forward.24} parent=11 // pred_region
        _
      $region36: #{tcclip_forward.24} parent=11 // pred_fallthru
        _
      // Predicated region
      $region37: #{tcclip_forward.24} parent=11 // pred_check
        %p312 = pneg %p190
      $region38: #{tcclip_forward.24} parent=11 // pred_check_branch
        %314 = sbr.rel (%p312) target = $region40
      $region39: #{tcclip_forward.24} parent=11 // pred_region
        _
      $region40: #{tcclip_forward.24} parent=11 // pred_fallthru
        _
      // Predicated region
      $region41: #{tcclip_forward.24} parent=11 // pred_check
        %p315 = pneg %p211
      $region42: #{tcclip_forward.24} parent=11 // pred_check_branch
        %317 = sbr.rel (%p315) target = $region44
      $region43: #{tcclip_forward.24} parent=11 // pred_region
        _
      $region44: #{tcclip_forward.24} parent=11 // pred_fallthru
        _
      // Predicated region
      $region45: #{tcclip_forward.24} parent=11 // pred_check
        %p318 = pneg %p232
      $region46: #{tcclip_forward.24} parent=11 // pred_check_branch
        %320 = sbr.rel (%p318) target = $region48
      $region47: #{tcclip_forward.24} parent=11 // pred_region
        _
      $region48: #{tcclip_forward.24} parent=11 // pred_fallthru
        _
      // Predicated region
      $region49: #{tcclip_forward.24} parent=11 // pred_check
        %p321 = pneg %p253
      $region50: #{tcclip_forward.24} parent=11 // pred_check_branch
        %323 = sbr.rel (%p321) target = $region52
      $region51: #{tcclip_forward.24} parent=11 // pred_region
        _
      $region52: #{tcclip_forward.24} parent=11 // pred_fallthru
        _
    $region12: #{tcclip_forward.24} parent=5 // pred_fallthru
      _
    %p324 = scmp.lt.s32.totalorder %s17, 10
    // Predicated region
    $region53: #{tcclip_forward.24} parent=5 // pred_check
      %p325 = pneg %p324
    $region54: #{tcclip_forward.24} parent=5 // pred_check_branch
      %327 = sbr.rel (%p325) target = $region56
    $region55: #{tcclip_forward.24} parent=5 // pred_region
      // Predicated region
      $region57: #{tcclip_forward.24} parent=55 // pred_check
        %p328 = pneg %p37
      $region58: #{tcclip_forward.24} parent=55 // pred_check_branch
        %330 = sbr.rel (%p328) target = $region60
      $region59: #{tcclip_forward.24} parent=55 // pred_region
        %p331 = scmp.lt.s32.totalorder %s17, 9
        %s332 = scalar_select %p331, %s17, 9
        %s333 = smul.addr %s332, 4
        %s334 = scalar_lea.vmem %s0, %s333
      $region60: #{tcclip_forward.24} parent=55 // pred_fallthru
        _
    $region56: #{tcclip_forward.24} parent=5 // pred_fallthru
      _
    %p335 = scmp.le.s32.totalorder 1, %s17
    %p336 = scmp.lt.s32.totalorder %s17, 11
    %p337 = pnand %p335, %p336
    %p338 = pneg %p337
    // Predicated region
    $region61: #{tcclip_forward.24} parent=5 // pred_check
      _
    $region62: #{tcclip_forward.24} parent=5 // pred_check_branch
      %340 = sbr.rel (%p337) target = $region64
    $region63: #{tcclip_forward.24} parent=5 // pred_region
      %s341 = ssub.s32 %s17, 1
      %p342 = scmp.lt.s32.totalorder %s22, 9
      %s343 = scalar_select %p342, %s22, 9
      %s344 = smul.addr %s343, 4
      %s345 = scalar_lea.vmem %s0, %s344
      %p346 = pneg %p43
      %p347 = pneg %p40
      %p348 = pneg %p64
      %p349 = pneg %p61
      %p350 = pneg %p85
      %p351 = pneg %p82
      %p352 = pneg %p106
      %p353 = pneg %p103
      %p354 = pneg %p127
      %p355 = pneg %p124
      %p356 = pneg %p148
      %p357 = pneg %p145
      %p358 = pneg %p169
      %p359 = pneg %p166
      %p360 = pneg %p190
      %p361 = pneg %p187
      %p362 = pneg %p211
      %p363 = pneg %p208
      %p364 = pneg %p232
      %p365 = pneg %p229
      %p366 = pneg %p253
      %p367 = pneg %p250
      %p368 = pneg %p279
      %p369 = pneg %p276
      %p370 = scmp.lt.s32.totalorder %s22, 9
      %s371 = scalar_select %p370, %s22, 9
      %s372 = smul.addr %s371, 4
      %s373 = scalar_lea.vmem %s11, %s372
      %p374 = scmp.lt.s32.totalorder %s22, 9
      %s375 = scalar_select %p374, %s22, 9
      %s376 = smul.addr %s375, 4
      %s377 = scalar_lea.vmem %s0, %s376
      %p378 = scmp.lt.s32.totalorder %s22, 9
      %s379 = scalar_select %p378, %s22, 9
      %s380 = smul.addr %s379, 4
      %s381 = scalar_lea.vmem %s11, %s380
      %v383 = vld [vmem:[%s377] sm:$0xf]
      %v384 = vunpack.c.l.bf16 %v383
      %v385 = vld [vmem:[%s9] sm:$0x1]
      %v386 = vld [vmem:[%s10] sm:$0x1]
      %387 = vadd.xlane.f32.xlu0 %v384
      %v388 = vpop.xlane.xlu0 %387
      %v389 = vrcp.pop 128.0
      %v390 = vmul.f32 128.0, %v389
      %v391 = vsub.f32 1.0, %v390
      %v392 = vmul.f32 %v389, %v391
      %v393 = vadd.f32 %v389, %v392
      %vm394 = vweird.f32 %v389
      %v395 = vsel %vm394, %v389, %v393
      %v396 = vmul.f32 %v388, %v395
      %v397 = vsub.f32 %v384, %v396
      %v398 = vmul.f32 %v397, %v397
      %399 = vadd.xlane.f32.xlu0 %v398
      %v400 = vpop.xlane.xlu0 %399
      %v401 = vmul.f32 %v400, %v395
      %v402 = vadd.f32 %v401, 1e-05
      %v403 = vrsqrt.pop %v402
      %v404 = vmul.f32 %v403, %v402
      %v405 = vmul.f32 %v404, %v403
      %v406 = vmul.f32 0.5, %v405
      %v407 = vsub.f32 1.5, %v406
      %v408 = vmul.f32 %v403, %v407
      %vm409 = vweird.f32 %v402
      %vm410 = vweird.f32 %v403
      %vm411 = vmor %vm409, %vm410
      %v412 = vsel %vm411, %v403, %v408
      %v413 = vmul.f32 %v397, %v412
      %v415 = vperm.slane %v385, 0
      %v417 = vmul.f32 %v413, %v415
      %v419 = vperm.slane %v386, 0
      %v421 = vadd.f32 %v417, %v419
      %v422 = vpack.c.bf16 %v421, %v421
      %v423 = vlaneseq
      %v424 = vand.u32 %v423, 127
      %vm425 = vcmp.lt.s32.totalorder %v424, 8
      %v426 = vlaneseq
      %v427 = vshrl.u32 %v426, 7
      %vm428 = vcmp.le.s32.totalorder %v424, %v427
      %vm429 = vmand %vm425, %vm428
      %v430 = vsel %vm429, 0.0, -1e+30
      %v431 = vld [vmem:[%s1] sm:$0xf]
      %v432 = vld [vmem:[%s1 + $0x4] sm:$0xf]
      %v433 = vld [vmem:[%s1 + $0x8] sm:$0xf]
      %v434 = vld [vmem:[%s1 + $0xc] sm:$0xf]
      %v435 = vld [vmem:[%s1 + $0x10] sm:$0xf]
      %v436 = vld [vmem:[%s1 + $0x14] sm:$0xf]
      %v437 = vld [vmem:[%s1 + $0x18] sm:$0xf]
      %v438 = vld [vmem:[%s1 + $0x1c] sm:$0xf]
      %v439 = vld [vmem:[%s1 + $0x20] sm:$0xf]
      %v440 = vld [vmem:[%s1 + $0x24] sm:$0xf]
      %v441 = vld [vmem:[%s1 + $0x28] sm:$0xf]
      %v442 = vld [vmem:[%s1 + $0x2c] sm:$0xf]
      %v443 = vld [vmem:[%s1 + $0x30] sm:$0xf]
      %v444 = vld [vmem:[%s1 + $0x34] sm:$0xf]
      %v445 = vld [vmem:[%s1 + $0x38] sm:$0xf]
      %v446 = vld [vmem:[%s1 + $0x3c] sm:$0xf]
      %v447 = vld [vmem:[%s4] sm:$0x1]
      %v449 = vperm.slane %v447, 0
      %v467 = vunpack.c.l.b16 %v431
      %v468 = vunpack.c.l.b16 %v432
      %v469 = vunpack.c.l.b16 %v433
      %v470 = vunpack.c.l.b16 %v434
      %v471 = vunpack.c.l.b16 %v435
      %v472 = vunpack.c.l.b16 %v436
      %v473 = vunpack.c.l.b16 %v437
      %v474 = vunpack.c.l.b16 %v438
      %v475 = vunpack.c.l.b16 %v439
      %v476 = vunpack.c.l.b16 %v440
      %v477 = vunpack.c.l.b16 %v441
      %v478 = vunpack.c.l.b16 %v442
      %v479 = vunpack.c.l.b16 %v443
      %v480 = vunpack.c.l.b16 %v444
      %v481 = vunpack.c.l.b16 %v445
      %v482 = vunpack.c.l.b16 %v446
      %v483 = vpack.c.b16 %v468, %v467
      %v484 = vpack.c.b16 %v470, %v469
      %v485 = vpack.c.b16 %v472, %v471
      %v486 = vpack.c.b16 %v474, %v473
      %v487 = vpack.c.b16 %v476, %v475
      %v488 = vpack.c.b16 %v478, %v477
      %v489 = vpack.c.b16 %v480, %v479
      %v490 = vpack.c.b16 %v482, %v481
      %499 = vmatpush.bf16.msra.mxu0 %v490
      %500 = vmatpush.bf16.msra.mxu0 %v489
      %501 = vmatpush.bf16.msra.mxu0 %v488
      %502 = vmatpush.bf16.msra.mxu0 %v487
      %503 = vmatpush.bf16.msra.mxu0 %v486
      %504 = vmatpush.bf16.msra.mxu0 %v485
      %505 = vmatpush.bf16.msra.mxu0 %v484
      %506 = vmatpush.bf16.msra.mxu0 %v483
      %507 = vmatmul.bf16.gmra.mxu0 %v422
      %v508 = vpop.f32.mrf.mxu0
      %v509 = vadd.f32 %v449, %v508
      %v510 = vpop.f32.mrf.mxu0
      %511 = vdwg.mxu0
      %v512 = vld [vmem:[%s2] sm:$0xf]
      %v513 = vld [vmem:[%s2 + $0x4] sm:$0xf]
      %v514 = vld [vmem:[%s2 + $0x8] sm:$0xf]
      %v515 = vld [vmem:[%s2 + $0xc] sm:$0xf]
      %v516 = vld [vmem:[%s2 + $0x10] sm:$0xf]
      %v517 = vld [vmem:[%s2 + $0x14] sm:$0xf]
      %v518 = vld [vmem:[%s2 + $0x18] sm:$0xf]
      %v519 = vld [vmem:[%s2 + $0x1c] sm:$0xf]
      %v520 = vld [vmem:[%s2 + $0x20] sm:$0xf]
      %v521 = vld [vmem:[%s2 + $0x24] sm:$0xf]
      %v522 = vld [vmem:[%s2 + $0x28] sm:$0xf]
      %v523 = vld [vmem:[%s2 + $0x2c] sm:$0xf]
      %v524 = vld [vmem:[%s2 + $0x30] sm:$0xf]
      %v525 = vld [vmem:[%s2 + $0x34] sm:$0xf]
      %v526 = vld [vmem:[%s2 + $0x38] sm:$0xf]
      %v527 = vld [vmem:[%s2 + $0x3c] sm:$0xf]
      %v528 = vld [vmem:[%s5] sm:$0x1]
      %v530 = vperm.slane %v528, 0
      %v548 = vunpack.c.l.b16 %v512
      %v549 = vunpack.c.l.b16 %v513
      %v550 = vunpack.c.l.b16 %v514
      %v551 = vunpack.c.l.b16 %v515
      %v552 = vunpack.c.l.b16 %v516
      %v553 = vunpack.c.l.b16 %v517
      %v554 = vunpack.c.l.b16 %v518
      %v555 = vunpack.c.l.b16 %v519
      %v556 = vunpack.c.l.b16 %v520
      %v557 = vunpack.c.l.b16 %v521
      %v558 = vunpack.c.l.b16 %v522
      %v559 = vunpack.c.l.b16 %v523
      %v560 = vunpack.c.l.b16 %v524
      %v561 = vunpack.c.l.b16 %v525
      %v562 = vunpack.c.l.b16 %v526
      %v563 = vunpack.c.l.b16 %v527
      %v564 = vpack.c.b16 %v549, %v548
      %v565 = vpack.c.b16 %v551, %v550
      %v566 = vpack.c.b16 %v553, %v552
      %v567 = vpack.c.b16 %v555, %v554
      %v568 = vpack.c.b16 %v557, %v556
      %v569 = vpack.c.b16 %v559, %v558
      %v570 = vpack.c.b16 %v561, %v560
      %v571 = vpack.c.b16 %v563, %v562
      %580 = vmatpush.bf16.msra.mxu0 %v571
      %581 = vmatpush.bf16.msra.mxu0 %v570
      %582 = vmatpush.bf16.msra.mxu0 %v569
      %583 = vmatpush.bf16.msra.mxu0 %v568
      %584 = vmatpush.bf16.msra.mxu0 %v567
      %585 = vmatpush.bf16.msra.mxu0 %v566
      %586 = vmatpush.bf16.msra.mxu0 %v565
      %587 = vmatpush.bf16.msra.mxu0 %v564
      %588 = vmatmul.bf16.gmra.mxu0 %v422
      %v589 = vpop.f32.mrf.mxu0
      %v590 = vadd.f32 %v530, %v589
      %v591 = vpop.f32.mrf.mxu0
      %592 = vdwg.mxu0
      %v593 = vld [vmem:[%s3] sm:$0xf]
      %v594 = vld [vmem:[%s3 + $0x4] sm:$0xf]
      %v595 = vld [vmem:[%s3 + $0x8] sm:$0xf]
      %v596 = vld [vmem:[%s3 + $0xc] sm:$0xf]
      %v597 = vld [vmem:[%s3 + $0x10] sm:$0xf]
      %v598 = vld [vmem:[%s3 + $0x14] sm:$0xf]
      %v599 = vld [vmem:[%s3 + $0x18] sm:$0xf]
      %v600 = vld [vmem:[%s3 + $0x1c] sm:$0xf]
      %v601 = vld [vmem:[%s3 + $0x20] sm:$0xf]
      %v602 = vld [vmem:[%s3 + $0x24] sm:$0xf]
      %v603 = vld [vmem:[%s3 + $0x28] sm:$0xf]
      %v604 = vld [vmem:[%s3 + $0x2c] sm:$0xf]
      %v605 = vld [vmem:[%s3 + $0x30] sm:$0xf]
      %v606 = vld [vmem:[%s3 + $0x34] sm:$0xf]
      %v607 = vld [vmem:[%s3 + $0x38] sm:$0xf]
      %v608 = vld [vmem:[%s3 + $0x3c] sm:$0xf]
      %v609 = vld [vmem:[%s6] sm:$0x1]
      %v611 = vperm.slane %v609, 0
      %v629 = vunpack.c.l.b16 %v593
      %v630 = vunpack.c.l.b16 %v594
      %v631 = vunpack.c.l.b16 %v595
      %v632 = vunpack.c.l.b16 %v596
      %v633 = vunpack.c.l.b16 %v597
      %v634 = vunpack.c.l.b16 %v598
      %v635 = vunpack.c.l.b16 %v599
      %v636 = vunpack.c.l.b16 %v600
      %v637 = vunpack.c.l.b16 %v601
      %v638 = vunpack.c.l.b16 %v602
      %v639 = vunpack.c.l.b16 %v603
      %v640 = vunpack.c.l.b16 %v604
      %v641 = vunpack.c.l.b16 %v605
      %v642 = vunpack.c.l.b16 %v606
      %v643 = vunpack.c.l.b16 %v607
      %v644 = vunpack.c.l.b16 %v608
      %v645 = vpack.c.b16 %v630, %v629
      %v646 = vpack.c.b16 %v632, %v631
      %v647 = vpack.c.b16 %v634, %v633
      %v648 = vpack.c.b16 %v636, %v635
      %v649 = vpack.c.b16 %v638, %v637
      %v650 = vpack.c.b16 %v640, %v639
      %v651 = vpack.c.b16 %v642, %v641
      %v652 = vpack.c.b16 %v644, %v643
      %661 = vmatpush.bf16.msra.mxu0 %v652
      %662 = vmatpush.bf16.msra.mxu0 %v651
      %663 = vmatpush.bf16.msra.mxu0 %v650
      %664 = vmatpush.bf16.msra.mxu0 %v649
      %665 = vmatpush.bf16.msra.mxu0 %v648
      %666 = vmatpush.bf16.msra.mxu0 %v647
      %667 = vmatpush.bf16.msra.mxu0 %v646
      %668 = vmatpush.bf16.msra.mxu0 %v645
      %669 = vmatmul.bf16.gmra.mxu0 %v422
      %v670 = vpop.f32.mrf.mxu0
      %v671 = vadd.f32 %v611, %v670
      %v672 = vpop.f32.mrf.mxu0
      %673 = vdwg.mxu0
      %v674 = vpack.c.bf16 %v509, %v509
      %v675 = vpack.c.bf16 %v590, %v590
      %vm676 = vcmask 261120
      %v678 = vsel %vm676, %v674, 0
      %v681 = vsel %vm676, %v675, 0
      %683 = vmatpush.bf16.xpose.msra.mxu0 0
      %684 = vmatpush.bf16.xpose.msra.mxu0 0
      %685 = vmatpush.bf16.xpose.msra.mxu0 0
      %686 = vmatpush.bf16.xpose.msra.mxu0 0
      %687 = vmatpush.bf16.xpose.msra.mxu0 0
      %688 = vmatpush.bf16.xpose.msra.mxu0 0
      %689 = vmatpush.bf16.xpose.msra.mxu0 0
      %690 = vmatpush.bf16.xpose.msra.mxu0 %v681
      %691 = vmatmul.bf16.gmra.mxu0 %v678
      %v692 = vpop.f32.mrf.mxu0
      %v693 = vadd.f32 0.0, %v692
      %v694 = vpop.f32.mrf.mxu0
      %695 = vdwg.mxu0
      %v696 = vmul.f32 %v693, 0.17677669
      %v697 = vadd.f32 %v696, %v430
      %vm698 = vcmask 64512
      %v699 = vsel %vm698, %v697, -inf
      %700 = vmax.xlane.f32.xlu0 %v699
      %v701 = vpop.xlane.xlu0 %700
      %v702 = vsub.f32 %v697, %v701
      %v703 = vmul.f32 %v702, 1.442695
      %v704 = vpow.pop %v703
      %v705 = vsel %vm698, %v704, 0.0
      %706 = vadd.xlane.f32.xlu0 %v705
      %v707 = vpop.xlane.xlu0 %706
      %v708 = vrcp.pop %v707
      %v709 = vmul.f32 %v704, %v708
      %v710 = vpack.c.bf16 %v709, %v709
      %v711 = vpack.c.bf16 %v671, %v671
      %v713 = vsel %vm698, %v710, 0
      %vm715 = vcmask 1043456
      %v717 = vsel %vm715, %v711, 0
      %719 = vmatpush.bf16.msra.mxu0 0
      %720 = vmatpush.bf16.msra.mxu0 0
      %721 = vmatpush.bf16.msra.mxu0 0
      %722 = vmatpush.bf16.msra.mxu0 0
      %723 = vmatpush.bf16.msra.mxu0 0
      %724 = vmatpush.bf16.msra.mxu0 0
      %725 = vmatpush.bf16.msra.mxu0 0
      %726 = vmatpush.bf16.msra.mxu0 %v717
      %727 = vmatmul.bf16.gmra.mxu0 %v713
      %v728 = vpop.f32.mrf.mxu0
      %v729 = vadd.f32 0.0, %v728
      %v730 = vpop.f32.mrf.mxu0
      %731 = vdwg.mxu0
      %v732 = vpack.c.bf16 %v729, %v729
      %v733 = vld [vmem:[%s7] sm:$0xf]
      %v734 = vld [vmem:[%s7 + $0x4] sm:$0xf]
      %v735 = vld [vmem:[%s7 + $0x8] sm:$0xf]
      %v736 = vld [vmem:[%s7 + $0xc] sm:$0xf]
      %s737 = scalar_lea.vmem %s1, 64
      %v738 = vld [vmem:[%s737] sm:$0xf]
      %v739 = vld [vmem:[%s737 + $0x4] sm:$0xf]
      %v740 = vld [vmem:[%s737 + $0x8] sm:$0xf]
      %v741 = vld [vmem:[%s737 + $0xc] sm:$0xf]
      %v742 = vld [vmem:[%s737 + $0x10] sm:$0xf]
      %v743 = vld [vmem:[%s737 + $0x14] sm:$0xf]
      %v744 = vld [vmem:[%s737 + $0x18] sm:$0xf]
      %v745 = vld [vmem:[%s737 + $0x1c] sm:$0xf]
      %v746 = vld [vmem:[%s737 + $0x20] sm:$0xf]
      %v747 = vld [vmem:[%s737 + $0x24] sm:$0xf]
      %v748 = vld [vmem:[%s737 + $0x28] sm:$0xf]
      %v749 = vld [vmem:[%s737 + $0x2c] sm:$0xf]
      %v750 = vld [vmem:[%s737 + $0x30] sm:$0xf]
      %v751 = vld [vmem:[%s737 + $0x34] sm:$0xf]
      %v752 = vld [vmem:[%s737 + $0x38] sm:$0xf]
      %v753 = vld [vmem:[%s737 + $0x3c] sm:$0xf]
      %s754 = scalar_lea.vmem %s4, 1
      %v755 = vld [vmem:[%s754] sm:$0x1]
      %v757 = vperm.slane %v755, 0
      %v775 = vunpack.c.l.b16 %v738
      %v776 = vunpack.c.l.b16 %v739
      %v777 = vunpack.c.l.b16 %v740
      %v778 = vunpack.c.l.b16 %v741
      %v779 = vunpack.c.l.b16 %v742
      %v780 = vunpack.c.l.b16 %v743
      %v781 = vunpack.c.l.b16 %v744
      %v782 = vunpack.c.l.b16 %v745
      %v783 = vunpack.c.l.b16 %v746
      %v784 = vunpack.c.l.b16 %v747
      %v785 = vunpack.c.l.b16 %v748
      %v786 = vunpack.c.l.b16 %v749
      %v787 = vunpack.c.l.b16 %v750
      %v788 = vunpack.c.l.b16 %v751
      %v789 = vunpack.c.l.b16 %v752
      %v790 = vunpack.c.l.b16 %v753
      %v791 = vpack.c.b16 %v776, %v775
      %v792 = vpack.c.b16 %v778, %v777
      %v793 = vpack.c.b16 %v780, %v779
      %v794 = vpack.c.b16 %v782, %v781
      %v795 = vpack.c.b16 %v784, %v783
      %v796 = vpack.c.b16 %v786, %v785
      %v797 = vpack.c.b16 %v788, %v787
      %v798 = vpack.c.b16 %v790, %v789
      %807 = vmatpush.bf16.msra.mxu0 %v798
      %808 = vmatpush.bf16.msra.mxu0 %v797
      %809 = vmatpush.bf16.msra.mxu0 %v796
      %810 = vmatpush.bf16.msra.mxu0 %v795
      %811 = vmatpush.bf16.msra.mxu0 %v794
      %812 = vmatpush.bf16.msra.mxu0 %v793
      %813 = vmatpush.bf16.msra.mxu0 %v792
      %814 = vmatpush.bf16.msra.mxu0 %v791
      %815 = vmatmul.bf16.gmra.mxu0 %v422
      %v816 = vpop.f32.mrf.mxu0
      %v817 = vadd.f32 %v757, %v816
      %v818 = vpop.f32.mrf.mxu0
      %819 = vdwg.mxu0
      %s820 = scalar_lea.vmem %s2, 64
      %v821 = vld [vmem:[%s820] sm:$0xf]
      %v822 = vld [vmem:[%s820 + $0x4] sm:$0xf]
      %v823 = vld [vmem:[%s820 + $0x8] sm:$0xf]
      %v824 = vld [vmem:[%s820 + $0xc] sm:$0xf]
      %v825 = vld [vmem:[%s820 + $0x10] sm:$0xf]
      %v826 = vld [vmem:[%s820 + $0x14] sm:$0xf]
      %v827 = vld [vmem:[%s820 + $0x18] sm:$0xf]
      %v828 = vld [vmem:[%s820 + $0x1c] sm:$0xf]
      %v829 = vld [vmem:[%s820 + $0x20] sm:$0xf]
      %v830 = vld [vmem:[%s820 + $0x24] sm:$0xf]
      %v831 = vld [vmem:[%s820 + $0x28] sm:$0xf]
      %v832 = vld [vmem:[%s820 + $0x2c] sm:$0xf]
      %v833 = vld [vmem:[%s820 + $0x30] sm:$0xf]
      %v834 = vld [vmem:[%s820 + $0x34] sm:$0xf]
      %v835 = vld [vmem:[%s820 + $0x38] sm:$0xf]
      %v836 = vld [vmem:[%s820 + $0x3c] sm:$0xf]
      %s837 = scalar_lea.vmem %s5, 1
      %v838 = vld [vmem:[%s837] sm:$0x1]
      %v840 = vperm.slane %v838, 0
      %v858 = vunpack.c.l.b16 %v821
      %v859 = vunpack.c.l.b16 %v822
      %v860 = vunpack.c.l.b16 %v823
      %v861 = vunpack.c.l.b16 %v824
      %v862 = vunpack.c.l.b16 %v825
      %v863 = vunpack.c.l.b16 %v826
      %v864 = vunpack.c.l.b16 %v827
      %v865 = vunpack.c.l.b16 %v828
      %v866 = vunpack.c.l.b16 %v829
      %v867 = vunpack.c.l.b16 %v830
      %v868 = vunpack.c.l.b16 %v831
      %v869 = vunpack.c.l.b16 %v832
      %v870 = vunpack.c.l.b16 %v833
      %v871 = vunpack.c.l.b16 %v834
      %v872 = vunpack.c.l.b16 %v835
      %v873 = vunpack.c.l.b16 %v836
      %v874 = vpack.c.b16 %v859, %v858
      %v875 = vpack.c.b16 %v861, %v860
      %v876 = vpack.c.b16 %v863, %v862
      %v877 = vpack.c.b16 %v865, %v864
      %v878 = vpack.c.b16 %v867, %v866
      %v879 = vpack.c.b16 %v869, %v868
      %v880 = vpack.c.b16 %v871, %v870
      %v881 = vpack.c.b16 %v873, %v872
      %890 = vmatpush.bf16.msra.mxu0 %v881
      %891 = vmatpush.bf16.msra.mxu0 %v880
      %892 = vmatpush.bf16.msra.mxu0 %v879
      %893 = vmatpush.bf16.msra.mxu0 %v878
      %894 = vmatpush.bf16.msra.mxu0 %v877
      %895 = vmatpush.bf16.msra.mxu0 %v876
      %896 = vmatpush.bf16.msra.mxu0 %v875
      %897 = vmatpush.bf16.msra.mxu0 %v874
      %898 = vmatmul.bf16.gmra.mxu0 %v422
      %v899 = vpop.f32.mrf.mxu0
      %v900 = vadd.f32 %v840, %v899
      %v901 = vpop.f32.mrf.mxu0
      %902 = vdwg.mxu0
      %s903 = scalar_lea.vmem %s3, 64
      %v904 = vld [vmem:[%s903] sm:$0xf]
      %v905 = vld [vmem:[%s903 + $0x4] sm:$0xf]
      %v906 = vld [vmem:[%s903 + $0x8] sm:$0xf]
      %v907 = vld [vmem:[%s903 + $0xc] sm:$0xf]
      %v908 = vld [vmem:[%s903 + $0x10] sm:$0xf]
      %v909 = vld [vmem:[%s903 + $0x14] sm:$0xf]
      %v910 = vld [vmem:[%s903 + $0x18] sm:$0xf]
      %v911 = vld [vmem:[%s903 + $0x1c] sm:$0xf]
      %v912 = vld [vmem:[%s903 + $0x20] sm:$0xf]
      %v913 = vld [vmem:[%s903 + $0x24] sm:$0xf]
      %v914 = vld [vmem:[%s903 + $0x28] sm:$0xf]
      %v915 = vld [vmem:[%s903 + $0x2c] sm:$0xf]
      %v916 = vld [vmem:[%s903 + $0x30] sm:$0xf]
      %v917 = vld [vmem:[%s903 + $0x34] sm:$0xf]
      %v918 = vld [vmem:[%s903 + $0x38] sm:$0xf]
      %v919 = vld [vmem:[%s903 + $0x3c] sm:$0xf]
      %s920 = scalar_lea.vmem %s6, 1
      %v921 = vld [vmem:[%s920] sm:$0x1]
      %v923 = vperm.slane %v921, 0
      %v941 = vunpack.c.l.b16 %v904
      %v942 = vunpack.c.l.b16 %v905
      %v943 = vunpack.c.l.b16 %v906
      %v944 = vunpack.c.l.b16 %v907
      %v945 = vunpack.c.l.b16 %v908
      %v946 = vunpack.c.l.b16 %v909
      %v947 = vunpack.c.l.b16 %v910
      %v948 = vunpack.c.l.b16 %v911
      %v949 = vunpack.c.l.b16 %v912
      %v950 = vunpack.c.l.b16 %v913
      %v951 = vunpack.c.l.b16 %v914
      %v952 = vunpack.c.l.b16 %v915
      %v953 = vunpack.c.l.b16 %v916
      %v954 = vunpack.c.l.b16 %v917
      %v955 = vunpack.c.l.b16 %v918
      %v956 = vunpack.c.l.b16 %v919
      %v957 = vpack.c.b16 %v942, %v941
      %v958 = vpack.c.b16 %v944, %v943
      %v959 = vpack.c.b16 %v946, %v945
      %v960 = vpack.c.b16 %v948, %v947
      %v961 = vpack.c.b16 %v950, %v949
      %v962 = vpack.c.b16 %v952, %v951
      %v963 = vpack.c.b16 %v954, %v953
      %v964 = vpack.c.b16 %v956, %v955
      %973 = vmatpush.bf16.msra.mxu0 %v964
      %974 = vmatpush.bf16.msra.mxu0 %v963
      %975 = vmatpush.bf16.msra.mxu0 %v962
      %976 = vmatpush.bf16.msra.mxu0 %v961
      %977 = vmatpush.bf16.msra.mxu0 %v960
      %978 = vmatpush.bf16.msra.mxu0 %v959
      %979 = vmatpush.bf16.msra.mxu0 %v958
      %980 = vmatpush.bf16.msra.mxu0 %v957
      %981 = vmatmul.bf16.gmra.mxu0 %v422
      %v982 = vpop.f32.mrf.mxu0
      %v983 = vadd.f32 %v923, %v982
      %v984 = vpop.f32.mrf.mxu0
      %985 = vdwg.mxu0
      %v986 = vpack.c.bf16 %v817, %v817
      %v987 = vpack.c.bf16 %v900, %v900
      %v989 = vsel %vm676, %v986, 0
      %v992 = vsel %vm676, %v987, 0
      %994 = vmatpush.bf16.xpose.msra.mxu0 0
      %995 = vmatpush.bf16.xpose.msra.mxu0 0
      %996 = vmatpush.bf16.xpose.msra.mxu0 0
      %997 = vmatpush.bf16.xpose.msra.mxu0 0
      %998 = vmatpush.bf16.xpose.msra.mxu0 0
      %999 = vmatpush.bf16.xpose.msra.mxu0 0
      %1000 = vmatpush.bf16.xpose.msra.mxu0 0
      %1001 = vmatpush.bf16.xpose.msra.mxu0 %v992
      %1002 = vmatmul.bf16.gmra.mxu0 %v989
      %v1003 = vpop.f32.mrf.mxu0
      %v1004 = vadd.f32 0.0, %v1003
      %v1005 = vpop.f32.mrf.mxu0
      %1006 = vdwg.mxu0
      %v1007 = vmul.f32 %v1004, 0.17677669
      %v1008 = vadd.f32 %v1007, %v430
      %v1009 = vsel %vm698, %v1008, -inf
      %1010 = vmax.xlane.f32.xlu0 %v1009
      %v1011 = vpop.xlane.xlu0 %1010
      %v1012 = vsub.f32 %v1008, %v1011
      %v1013 = vmul.f32 %v1012, 1.442695
      %v1014 = vpow.pop %v1013
      %v1015 = vsel %vm698, %v1014, 0.0
      %1016 = vadd.xlane.f32.xlu0 %v1015
      %v1017 = vpop.xlane.xlu0 %1016
      %v1018 = vrcp.pop %v1017
      %v1019 = vmul.f32 %v1014, %v1018
      %v1020 = vpack.c.bf16 %v1019, %v1019
      %v1021 = vpack.c.bf16 %v983, %v983
      %v1023 = vsel %vm698, %v1020, 0
      %v1026 = vsel %vm715, %v1021, 0
      %1028 = vmatpush.bf16.msra.mxu0 0
      %1029 = vmatpush.bf16.msra.mxu0 0
      %1030 = vmatpush.bf16.msra.mxu0 0
      %1031 = vmatpush.bf16.msra.mxu0 0
      %1032 = vmatpush.bf16.msra.mxu0 0
      %1033 = vmatpush.bf16.msra.mxu0 0
      %1034 = vmatpush.bf16.msra.mxu0 0
      %1035 = vmatpush.bf16.msra.mxu0 %v1026
      %1036 = vmatmul.bf16.gmra.mxu0 %v1023
      %v1037 = vpop.f32.mrf.mxu0
      %v1038 = vadd.f32 0.0, %v1037
      %v1039 = vpop.f32.mrf.mxu0
      %1040 = vdwg.mxu0
      %v1041 = vpack.c.bf16 %v1038, %v1038
      %s1042 = scalar_lea.vmem %s7, 16
      %v1043 = vld [vmem:[%s1042] sm:$0xf]
      %v1044 = vld [vmem:[%s1042 + $0x4] sm:$0xf]
      %v1045 = vld [vmem:[%s1042 + $0x8] sm:$0xf]
      %v1046 = vld [vmem:[%s1042 + $0xc] sm:$0xf]
      %v1051 = vunpack.c.l.b16 %v1043
      %v1052 = vunpack.c.l.b16 %v1044
      %v1053 = vunpack.c.l.b16 %v1045
      %v1054 = vunpack.c.l.b16 %v1046
      %v1055 = vpack.c.b16 %v1052, %v1051
      %v1056 = vpack.c.b16 %v1054, %v1053
      %v1060 = vsel %vm676, %v1041, 0
      %1062 = vmatpush.bf16.msra.mxu0 0
      %1063 = vmatpush.bf16.msra.mxu0 0
      %1064 = vmatpush.bf16.msra.mxu0 0
      %1065 = vmatpush.bf16.msra.mxu0 0
      %1066 = vmatpush.bf16.msra.mxu0 0
      %1067 = vmatpush.bf16.msra.mxu0 0
      %1068 = vmatpush.bf16.msra.mxu0 %v1056
      %1069 = vmatpush.bf16.msra.mxu0 %v1055
      %1070 = vmatmul.bf16.gmra.mxu0 %v1060
      %v1071 = vpop.f32.mrf.mxu0
      %v1072 = vadd.f32 0.0, %v1071
      %v1073 = vpop.f32.mrf.mxu0
      %1074 = vdwg.mxu0
      %v1079 = vunpack.c.l.b16 %v733
      %v1080 = vunpack.c.l.b16 %v734
      %v1081 = vunpack.c.l.b16 %v735
      %v1082 = vunpack.c.l.b16 %v736
      %v1083 = vpack.c.b16 %v1080, %v1079
      %v1084 = vpack.c.b16 %v1082, %v1081
      %v1088 = vsel %vm676, %v732, 0
      %1090 = vmatpush.bf16.msra.mxu0 0
      %1091 = vmatpush.bf16.msra.mxu0 0
      %1092 = vmatpush.bf16.msra.mxu0 0
      %1093 = vmatpush.bf16.msra.mxu0 0
      %1094 = vmatpush.bf16.msra.mxu0 0
      %1095 = vmatpush.bf16.msra.mxu0 0
      %1096 = vmatpush.bf16.msra.mxu0 %v1084
      %1097 = vmatpush.bf16.msra.mxu0 %v1083
      %1098 = vmatmul.bf16.gmra.mxu0 %v1088
      %v1099 = vpop.f32.mrf.mxu0
      %v1100 = vadd.f32 %v1072, %v1099
      %v1101 = vpop.f32.mrf.mxu0
      %1102 = vdwg.mxu0
      %s1103 = scalar_lea.vmem %s1, 128
      %v1104 = vld [vmem:[%s1103] sm:$0xf]
      %v1105 = vld [vmem:[%s1103 + $0x4] sm:$0xf]
      %v1106 = vld [vmem:[%s1103 + $0x8] sm:$0xf]
      %v1107 = vld [vmem:[%s1103 + $0xc] sm:$0xf]
      %v1108 = vld [vmem:[%s1103 + $0x10] sm:$0xf]
      %v1109 = vld [vmem:[%s1103 + $0x14] sm:$0xf]
      %v1110 = vld [vmem:[%s1103 + $0x18] sm:$0xf]
      %v1111 = vld [vmem:[%s1103 + $0x1c] sm:$0xf]
      %v1112 = vld [vmem:[%s1103 + $0x20] sm:$0xf]
      %v1113 = vld [vmem:[%s1103 + $0x24] sm:$0xf]
      %v1114 = vld [vmem:[%s1103 + $0x28] sm:$0xf]
      %v1115 = vld [vmem:[%s1103 + $0x2c] sm:$0xf]
      %v1116 = vld [vmem:[%s1103 + $0x30] sm:$0xf]
      %v1117 = vld [vmem:[%s1103 + $0x34] sm:$0xf]
      %v1118 = vld [vmem:[%s1103 + $0x38] sm:$0xf]
      %v1119 = vld [vmem:[%s1103 + $0x3c] sm:$0xf]
      %s1120 = scalar_lea.vmem %s4, 2
      %v1121 = vld [vmem:[%s1120] sm:$0x1]
      %v1123 = vperm.slane %v1121, 0
      %v1141 = vunpack.c.l.b16 %v1104
      %v1142 = vunpack.c.l.b16 %v1105
      %v1143 = vunpack.c.l.b16 %v1106
      %v1144 = vunpack.c.l.b16 %v1107
      %v1145 = vunpack.c.l.b16 %v1108
      %v1146 = vunpack.c.l.b16 %v1109
      %v1147 = vunpack.c.l.b16 %v1110
      %v1148 = vunpack.c.l.b16 %v1111
      %v1149 = vunpack.c.l.b16 %v1112
      %v1150 = vunpack.c.l.b16 %v1113
      %v1151 = vunpack.c.l.b16 %v1114
      %v1152 = vunpack.c.l.b16 %v1115
      %v1153 = vunpack.c.l.b16 %v1116
      %v1154 = vunpack.c.l.b16 %v1117
      %v1155 = vunpack.c.l.b16 %v1118
      %v1156 = vunpack.c.l.b16 %v1119
      %v1157 = vpack.c.b16 %v1142, %v1141
      %v1158 = vpack.c.b16 %v1144, %v1143
      %v1159 = vpack.c.b16 %v1146, %v1145
      %v1160 = vpack.c.b16 %v1148, %v1147
      %v1161 = vpack.c.b16 %v1150, %v1149
      %v1162 = vpack.c.b16 %v1152, %v1151
      %v1163 = vpack.c.b16 %v1154, %v1153
      %v1164 = vpack.c.b16 %v1156, %v1155
      %1173 = vmatpush.bf16.msra.mxu0 %v1164
      %1174 = vmatpush.bf16.msra.mxu0 %v1163
      %1175 = vmatpush.bf16.msra.mxu0 %v1162
      %1176 = vmatpush.bf16.msra.mxu0 %v1161
      %1177 = vmatpush.bf16.msra.mxu0 %v1160
      %1178 = vmatpush.bf16.msra.mxu0 %v1159
      %1179 = vmatpush.bf16.msra.mxu0 %v1158
      %1180 = vmatpush.bf16.msra.mxu0 %v1157
      %1181 = vmatmul.bf16.gmra.mxu0 %v422
      %v1182 = vpop.f32.mrf.mxu0
      %v1183 = vadd.f32 %v1123, %v1182
      %v1184 = vpop.f32.mrf.mxu0
      %1185 = vdwg.mxu0
      %s1186 = scalar_lea.vmem %s2, 128
      %v1187 = vld [vmem:[%s1186] sm:$0xf]
      %v1188 = vld [vmem:[%s1186 + $0x4] sm:$0xf]
      %v1189 = vld [vmem:[%s1186 + $0x8] sm:$0xf]
      %v1190 = vld [vmem:[%s1186 + $0xc] sm:$0xf]
      %v1191 = vld [vmem:[%s1186 + $0x10] sm:$0xf]
      %v1192 = vld [vmem:[%s1186 + $0x14] sm:$0xf]
      %v1193 = vld [vmem:[%s1186 + $0x18] sm:$0xf]
      %v1194 = vld [vmem:[%s1186 + $0x1c] sm:$0xf]
      %v1195 = vld [vmem:[%s1186 + $0x20] sm:$0xf]
      %v1196 = vld [vmem:[%s1186 + $0x24] sm:$0xf]
      %v1197 = vld [vmem:[%s1186 + $0x28] sm:$0xf]
      %v1198 = vld [vmem:[%s1186 + $0x2c] sm:$0xf]
      %v1199 = vld [vmem:[%s1186 + $0x30] sm:$0xf]
      %v1200 = vld [vmem:[%s1186 + $0x34] sm:$0xf]
      %v1201 = vld [vmem:[%s1186 + $0x38] sm:$0xf]
      %v1202 = vld [vmem:[%s1186 + $0x3c] sm:$0xf]
      %s1203 = scalar_lea.vmem %s5, 2
      %v1204 = vld [vmem:[%s1203] sm:$0x1]
      %v1206 = vperm.slane %v1204, 0
      %v1224 = vunpack.c.l.b16 %v1187
      %v1225 = vunpack.c.l.b16 %v1188
      %v1226 = vunpack.c.l.b16 %v1189
      %v1227 = vunpack.c.l.b16 %v1190
      %v1228 = vunpack.c.l.b16 %v1191
      %v1229 = vunpack.c.l.b16 %v1192
      %v1230 = vunpack.c.l.b16 %v1193
      %v1231 = vunpack.c.l.b16 %v1194
      %v1232 = vunpack.c.l.b16 %v1195
      %v1233 = vunpack.c.l.b16 %v1196
      %v1234 = vunpack.c.l.b16 %v1197
      %v1235 = vunpack.c.l.b16 %v1198
      %v1236 = vunpack.c.l.b16 %v1199
      %v1237 = vunpack.c.l.b16 %v1200
      %v1238 = vunpack.c.l.b16 %v1201
      %v1239 = vunpack.c.l.b16 %v1202
      %v1240 = vpack.c.b16 %v1225, %v1224
      %v1241 = vpack.c.b16 %v1227, %v1226
      %v1242 = vpack.c.b16 %v1229, %v1228
      %v1243 = vpack.c.b16 %v1231, %v1230
      %v1244 = vpack.c.b16 %v1233, %v1232
      %v1245 = vpack.c.b16 %v1235, %v1234
      %v1246 = vpack.c.b16 %v1237, %v1236
      %v1247 = vpack.c.b16 %v1239, %v1238
      %1256 = vmatpush.bf16.msra.mxu0 %v1247
      %1257 = vmatpush.bf16.msra.mxu0 %v1246
      %1258 = vmatpush.bf16.msra.mxu0 %v1245
      %1259 = vmatpush.bf16.msra.mxu0 %v1244
      %1260 = vmatpush.bf16.msra.mxu0 %v1243
      %1261 = vmatpush.bf16.msra.mxu0 %v1242
      %1262 = vmatpush.bf16.msra.mxu0 %v1241
      %1263 = vmatpush.bf16.msra.mxu0 %v1240
      %1264 = vmatmul.bf16.gmra.mxu0 %v422
      %v1265 = vpop.f32.mrf.mxu0
      %v1266 = vadd.f32 %v1206, %v1265
      %v1267 = vpop.f32.mrf.mxu0
      %1268 = vdwg.mxu0
      %s1269 = scalar_lea.vmem %s3, 128
      %v1270 = vld [vmem:[%s1269] sm:$0xf]
      %v1271 = vld [vmem:[%s1269 + $0x4] sm:$0xf]
      %v1272 = vld [vmem:[%s1269 + $0x8] sm:$0xf]
      %v1273 = vld [vmem:[%s1269 + $0xc] sm:$0xf]
      %v1274 = vld [vmem:[%s1269 + $0x10] sm:$0xf]
      %v1275 = vld [vmem:[%s1269 + $0x14] sm:$0xf]
      %v1276 = vld [vmem:[%s1269 + $0x18] sm:$0xf]
      %v1277 = vld [vmem:[%s1269 + $0x1c] sm:$0xf]
      %v1278 = vld [vmem:[%s1269 + $0x20] sm:$0xf]
      %v1279 = vld [vmem:[%s1269 + $0x24] sm:$0xf]
      %v1280 = vld [vmem:[%s1269 + $0x28] sm:$0xf]
      %v1281 = vld [vmem:[%s1269 + $0x2c] sm:$0xf]
      %v1282 = vld [vmem:[%s1269 + $0x30] sm:$0xf]
      %v1283 = vld [vmem:[%s1269 + $0x34] sm:$0xf]
      %v1284 = vld [vmem:[%s1269 + $0x38] sm:$0xf]
      %v1285 = vld [vmem:[%s1269 + $0x3c] sm:$0xf]
      %s1286 = scalar_lea.vmem %s6, 2
      %v1287 = vld [vmem:[%s1286] sm:$0x1]
      %v1289 = vperm.slane %v1287, 0
      %v1307 = vunpack.c.l.b16 %v1270
      %v1308 = vunpack.c.l.b16 %v1271
      %v1309 = vunpack.c.l.b16 %v1272
      %v1310 = vunpack.c.l.b16 %v1273
      %v1311 = vunpack.c.l.b16 %v1274
      %v1312 = vunpack.c.l.b16 %v1275
      %v1313 = vunpack.c.l.b16 %v1276
      %v1314 = vunpack.c.l.b16 %v1277
      %v1315 = vunpack.c.l.b16 %v1278
      %v1316 = vunpack.c.l.b16 %v1279
      %v1317 = vunpack.c.l.b16 %v1280
      %v1318 = vunpack.c.l.b16 %v1281
      %v1319 = vunpack.c.l.b16 %v1282
      %v1320 = vunpack.c.l.b16 %v1283
      %v1321 = vunpack.c.l.b16 %v1284
      %v1322 = vunpack.c.l.b16 %v1285
      %v1323 = vpack.c.b16 %v1308, %v1307
      %v1324 = vpack.c.b16 %v1310, %v1309
      %v1325 = vpack.c.b16 %v1312, %v1311
      %v1326 = vpack.c.b16 %v1314, %v1313
      %v1327 = vpack.c.b16 %v1316, %v1315
      %v1328 = vpack.c.b16 %v1318, %v1317
      %v1329 = vpack.c.b16 %v1320, %v1319
      %v1330 = vpack.c.b16 %v1322, %v1321
      %1339 = vmatpush.bf16.msra.mxu0 %v1330
      %1340 = vmatpush.bf16.msra.mxu0 %v1329
      %1341 = vmatpush.bf16.msra.mxu0 %v1328
      %1342 = vmatpush.bf16.msra.mxu0 %v1327
      %1343 = vmatpush.bf16.msra.mxu0 %v1326
      %1344 = vmatpush.bf16.msra.mxu0 %v1325
      %1345 = vmatpush.bf16.msra.mxu0 %v1324
      %1346 = vmatpush.bf16.msra.mxu0 %v1323
      %1347 = vmatmul.bf16.gmra.mxu0 %v422
      %v1348 = vpop.f32.mrf.mxu0
      %v1349 = vadd.f32 %v1289, %v1348
      %v1350 = vpop.f32.mrf.mxu0
      %1351 = vdwg.mxu0
      %v1352 = vpack.c.bf16 %v1183, %v1183
      %v1353 = vpack.c.bf16 %v1266, %v1266
      %v1355 = vsel %vm676, %v1352, 0
      %v1358 = vsel %vm676, %v1353, 0
      %1360 = vmatpush.bf16.xpose.msra.mxu0 0
      %1361 = vmatpush.bf16.xpose.msra.mxu0 0
      %1362 = vmatpush.bf16.xpose.msra.mxu0 0
      %1363 = vmatpush.bf16.xpose.msra.mxu0 0
      %1364 = vmatpush.bf16.xpose.msra.mxu0 0
      %1365 = vmatpush.bf16.xpose.msra.mxu0 0
      %1366 = vmatpush.bf16.xpose.msra.mxu0 0
      %1367 = vmatpush.bf16.xpose.msra.mxu0 %v1358
      %1368 = vmatmul.bf16.gmra.mxu0 %v1355
      %v1369 = vpop.f32.mrf.mxu0
      %v1370 = vadd.f32 0.0, %v1369
      %v1371 = vpop.f32.mrf.mxu0
      %1372 = vdwg.mxu0
      %v1373 = vmul.f32 %v1370, 0.17677669
      %v1374 = vadd.f32 %v1373, %v430
      %v1375 = vsel %vm698, %v1374, -inf
      %1376 = vmax.xlane.f32.xlu0 %v1375
      %v1377 = vpop.xlane.xlu0 %1376
      %v1378 = vsub.f32 %v1374, %v1377
      %v1379 = vmul.f32 %v1378, 1.442695
      %v1380 = vpow.pop %v1379
      %v1381 = vsel %vm698, %v1380, 0.0
      %1382 = vadd.xlane.f32.xlu0 %v1381
      %v1383 = vpop.xlane.xlu0 %1382
      %v1384 = vrcp.pop %v1383
      %v1385 = vmul.f32 %v1380, %v1384
      %v1386 = vpack.c.bf16 %v1385, %v1385
      %v1387 = vpack.c.bf16 %v1349, %v1349
      %v1389 = vsel %vm698, %v1386, 0
      %v1392 = vsel %vm715, %v1387, 0
      %1394 = vmatpush.bf16.msra.mxu0 0
      %1395 = vmatpush.bf16.msra.mxu0 0
      %1396 = vmatpush.bf16.msra.mxu0 0
      %1397 = vmatpush.bf16.msra.mxu0 0
      %1398 = vmatpush.bf16.msra.mxu0 0
      %1399 = vmatpush.bf16.msra.mxu0 0
      %1400 = vmatpush.bf16.msra.mxu0 0
      %1401 = vmatpush.bf16.msra.mxu0 %v1392
      %1402 = vmatmul.bf16.gmra.mxu0 %v1389
      %v1403 = vpop.f32.mrf.mxu0
      %v1404 = vadd.f32 0.0, %v1403
      %v1405 = vpop.f32.mrf.mxu0
      %1406 = vdwg.mxu0
      %v1407 = vpack.c.bf16 %v1404, %v1404
      %s1408 = scalar_lea.vmem %s7, 32
      %v1409 = vld [vmem:[%s1408] sm:$0xf]
      %v1410 = vld [vmem:[%s1408 + $0x4] sm:$0xf]
      %v1411 = vld [vmem:[%s1408 + $0x8] sm:$0xf]
      %v1412 = vld [vmem:[%s1408 + $0xc] sm:$0xf]
      %v1417 = vunpack.c.l.b16 %v1409
      %v1418 = vunpack.c.l.b16 %v1410
      %v1419 = vunpack.c.l.b16 %v1411
      %v1420 = vunpack.c.l.b16 %v1412
      %v1421 = vpack.c.b16 %v1418, %v1417
      %v1422 = vpack.c.b16 %v1420, %v1419
      %v1426 = vsel %vm676, %v1407, 0
      %1428 = vmatpush.bf16.msra.mxu0 0
      %1429 = vmatpush.bf16.msra.mxu0 0
      %1430 = vmatpush.bf16.msra.mxu0 0
      %1431 = vmatpush.bf16.msra.mxu0 0
      %1432 = vmatpush.bf16.msra.mxu0 0
      %1433 = vmatpush.bf16.msra.mxu0 0
      %1434 = vmatpush.bf16.msra.mxu0 %v1422
      %1435 = vmatpush.bf16.msra.mxu0 %v1421
      %1436 = vmatmul.bf16.gmra.mxu0 %v1426
      %v1437 = vpop.f32.mrf.mxu0
      %v1438 = vadd.f32 0.0, %v1437
      %v1439 = vpop.f32.mrf.mxu0
      %1440 = vdwg.mxu0
      %v1441 = vadd.f32 %v1100, %v1438
      %s1442 = scalar_lea.vmem %s1, 192
      %v1443 = vld [vmem:[%s1442] sm:$0xf]
      %v1444 = vld [vmem:[%s1442 + $0x4] sm:$0xf]
      %v1445 = vld [vmem:[%s1442 + $0x8] sm:$0xf]
      %v1446 = vld [vmem:[%s1442 + $0xc] sm:$0xf]
      %v1447 = vld [vmem:[%s1442 + $0x10] sm:$0xf]
      %v1448 = vld [vmem:[%s1442 + $0x14] sm:$0xf]
      %v1449 = vld [vmem:[%s1442 + $0x18] sm:$0xf]
      %v1450 = vld [vmem:[%s1442 + $0x1c] sm:$0xf]
      %v1451 = vld [vmem:[%s1442 + $0x20] sm:$0xf]
      %v1452 = vld [vmem:[%s1442 + $0x24] sm:$0xf]
      %v1453 = vld [vmem:[%s1442 + $0x28] sm:$0xf]
      %v1454 = vld [vmem:[%s1442 + $0x2c] sm:$0xf]
      %v1455 = vld [vmem:[%s1442 + $0x30] sm:$0xf]
      %v1456 = vld [vmem:[%s1442 + $0x34] sm:$0xf]
      %v1457 = vld [vmem:[%s1442 + $0x38] sm:$0xf]
      %v1458 = vld [vmem:[%s1442 + $0x3c] sm:$0xf]
      %s1459 = scalar_lea.vmem %s4, 3
      %v1460 = vld [vmem:[%s1459] sm:$0x1]
      %v1462 = vperm.slane %v1460, 0
      %v1480 = vunpack.c.l.b16 %v1443
      %v1481 = vunpack.c.l.b16 %v1444
      %v1482 = vunpack.c.l.b16 %v1445
      %v1483 = vunpack.c.l.b16 %v1446
      %v1484 = vunpack.c.l.b16 %v1447
      %v1485 = vunpack.c.l.b16 %v1448
      %v1486 = vunpack.c.l.b16 %v1449
      %v1487 = vunpack.c.l.b16 %v1450
      %v1488 = vunpack.c.l.b16 %v1451
      %v1489 = vunpack.c.l.b16 %v1452
      %v1490 = vunpack.c.l.b16 %v1453
      %v1491 = vunpack.c.l.b16 %v1454
      %v1492 = vunpack.c.l.b16 %v1455
      %v1493 = vunpack.c.l.b16 %v1456
      %v1494 = vunpack.c.l.b16 %v1457
      %v1495 = vunpack.c.l.b16 %v1458
      %v1496 = vpack.c.b16 %v1481, %v1480
      %v1497 = vpack.c.b16 %v1483, %v1482
      %v1498 = vpack.c.b16 %v1485, %v1484
      %v1499 = vpack.c.b16 %v1487, %v1486
      %v1500 = vpack.c.b16 %v1489, %v1488
      %v1501 = vpack.c.b16 %v1491, %v1490
      %v1502 = vpack.c.b16 %v1493, %v1492
      %v1503 = vpack.c.b16 %v1495, %v1494
      %1512 = vmatpush.bf16.msra.mxu0 %v1503
      %1513 = vmatpush.bf16.msra.mxu0 %v1502
      %1514 = vmatpush.bf16.msra.mxu0 %v1501
      %1515 = vmatpush.bf16.msra.mxu0 %v1500
      %1516 = vmatpush.bf16.msra.mxu0 %v1499
      %1517 = vmatpush.bf16.msra.mxu0 %v1498
      %1518 = vmatpush.bf16.msra.mxu0 %v1497
      %1519 = vmatpush.bf16.msra.mxu0 %v1496
      %1520 = vmatmul.bf16.gmra.mxu0 %v422
      %v1521 = vpop.f32.mrf.mxu0
      %v1522 = vadd.f32 %v1462, %v1521
      %v1523 = vpop.f32.mrf.mxu0
      %1524 = vdwg.mxu0
      %s1525 = scalar_lea.vmem %s2, 192
      %v1526 = vld [vmem:[%s1525] sm:$0xf]
      %v1527 = vld [vmem:[%s1525 + $0x4] sm:$0xf]
      %v1528 = vld [vmem:[%s1525 + $0x8] sm:$0xf]
      %v1529 = vld [vmem:[%s1525 + $0xc] sm:$0xf]
      %v1530 = vld [vmem:[%s1525 + $0x10] sm:$0xf]
      %v1531 = vld [vmem:[%s1525 + $0x14] sm:$0xf]
      %v1532 = vld [vmem:[%s1525 + $0x18] sm:$0xf]
      %v1533 = vld [vmem:[%s1525 + $0x1c] sm:$0xf]
      %v1534 = vld [vmem:[%s1525 + $0x20] sm:$0xf]
      %v1535 = vld [vmem:[%s1525 + $0x24] sm:$0xf]
      %v1536 = vld [vmem:[%s1525 + $0x28] sm:$0xf]
      %v1537 = vld [vmem:[%s1525 + $0x2c] sm:$0xf]
      %v1538 = vld [vmem:[%s1525 + $0x30] sm:$0xf]
      %v1539 = vld [vmem:[%s1525 + $0x34] sm:$0xf]
      %v1540 = vld [vmem:[%s1525 + $0x38] sm:$0xf]
      %v1541 = vld [vmem:[%s1525 + $0x3c] sm:$0xf]
      %s1542 = scalar_lea.vmem %s5, 3
      %v1543 = vld [vmem:[%s1542] sm:$0x1]
      %v1545 = vperm.slane %v1543, 0
      %v1563 = vunpack.c.l.b16 %v1526
      %v1564 = vunpack.c.l.b16 %v1527
      %v1565 = vunpack.c.l.b16 %v1528
      %v1566 = vunpack.c.l.b16 %v1529
      %v1567 = vunpack.c.l.b16 %v1530
      %v1568 = vunpack.c.l.b16 %v1531
      %v1569 = vunpack.c.l.b16 %v1532
      %v1570 = vunpack.c.l.b16 %v1533
      %v1571 = vunpack.c.l.b16 %v1534
      %v1572 = vunpack.c.l.b16 %v1535
      %v1573 = vunpack.c.l.b16 %v1536
      %v1574 = vunpack.c.l.b16 %v1537
      %v1575 = vunpack.c.l.b16 %v1538
      %v1576 = vunpack.c.l.b16 %v1539
      %v1577 = vunpack.c.l.b16 %v1540
      %v1578 = vunpack.c.l.b16 %v1541
      %v1579 = vpack.c.b16 %v1564, %v1563
      %v1580 = vpack.c.b16 %v1566, %v1565
      %v1581 = vpack.c.b16 %v1568, %v1567
      %v1582 = vpack.c.b16 %v1570, %v1569
      %v1583 = vpack.c.b16 %v1572, %v1571
      %v1584 = vpack.c.b16 %v1574, %v1573
      %v1585 = vpack.c.b16 %v1576, %v1575
      %v1586 = vpack.c.b16 %v1578, %v1577
      %1595 = vmatpush.bf16.msra.mxu0 %v1586
      %1596 = vmatpush.bf16.msra.mxu0 %v1585
      %1597 = vmatpush.bf16.msra.mxu0 %v1584
      %1598 = vmatpush.bf16.msra.mxu0 %v1583
      %1599 = vmatpush.bf16.msra.mxu0 %v1582
      %1600 = vmatpush.bf16.msra.mxu0 %v1581
      %1601 = vmatpush.bf16.msra.mxu0 %v1580
      %1602 = vmatpush.bf16.msra.mxu0 %v1579
      %1603 = vmatmul.bf16.gmra.mxu0 %v422
      %v1604 = vpop.f32.mrf.mxu0
      %v1605 = vadd.f32 %v1545, %v1604
      %v1606 = vpop.f32.mrf.mxu0
      %1607 = vdwg.mxu0
      %s1608 = scalar_lea.vmem %s3, 192
      %v1609 = vld [vmem:[%s1608] sm:$0xf]
      %v1610 = vld [vmem:[%s1608 + $0x4] sm:$0xf]
      %v1611 = vld [vmem:[%s1608 + $0x8] sm:$0xf]
      %v1612 = vld [vmem:[%s1608 + $0xc] sm:$0xf]
      %v1613 = vld [vmem:[%s1608 + $0x10] sm:$0xf]
      %v1614 = vld [vmem:[%s1608 + $0x14] sm:$0xf]
      %v1615 = vld [vmem:[%s1608 + $0x18] sm:$0xf]
      %v1616 = vld [vmem:[%s1608 + $0x1c] sm:$0xf]
      %v1617 = vld [vmem:[%s1608 + $0x20] sm:$0xf]
      %v1618 = vld [vmem:[%s1608 + $0x24] sm:$0xf]
      %v1619 = vld [vmem:[%s1608 + $0x28] sm:$0xf]
      %v1620 = vld [vmem:[%s1608 + $0x2c] sm:$0xf]
      %v1621 = vld [vmem:[%s1608 + $0x30] sm:$0xf]
      %v1622 = vld [vmem:[%s1608 + $0x34] sm:$0xf]
      %v1623 = vld [vmem:[%s1608 + $0x38] sm:$0xf]
      %v1624 = vld [vmem:[%s1608 + $0x3c] sm:$0xf]
      %s1625 = scalar_lea.vmem %s6, 3
      %v1626 = vld [vmem:[%s1625] sm:$0x1]
      %v1628 = vperm.slane %v1626, 0
      %v1646 = vunpack.c.l.b16 %v1609
      %v1647 = vunpack.c.l.b16 %v1610
      %v1648 = vunpack.c.l.b16 %v1611
      %v1649 = vunpack.c.l.b16 %v1612
      %v1650 = vunpack.c.l.b16 %v1613
      %v1651 = vunpack.c.l.b16 %v1614
      %v1652 = vunpack.c.l.b16 %v1615
      %v1653 = vunpack.c.l.b16 %v1616
      %v1654 = vunpack.c.l.b16 %v1617
      %v1655 = vunpack.c.l.b16 %v1618
      %v1656 = vunpack.c.l.b16 %v1619
      %v1657 = vunpack.c.l.b16 %v1620
      %v1658 = vunpack.c.l.b16 %v1621
      %v1659 = vunpack.c.l.b16 %v1622
      %v1660 = vunpack.c.l.b16 %v1623
      %v1661 = vunpack.c.l.b16 %v1624
      %v1662 = vpack.c.b16 %v1647, %v1646
      %v1663 = vpack.c.b16 %v1649, %v1648
      %v1664 = vpack.c.b16 %v1651, %v1650
      %v1665 = vpack.c.b16 %v1653, %v1652
      %v1666 = vpack.c.b16 %v1655, %v1654
      %v1667 = vpack.c.b16 %v1657, %v1656
      %v1668 = vpack.c.b16 %v1659, %v1658
      %v1669 = vpack.c.b16 %v1661, %v1660
      %1678 = vmatpush.bf16.msra.mxu0 %v1669
      %1679 = vmatpush.bf16.msra.mxu0 %v1668
      %1680 = vmatpush.bf16.msra.mxu0 %v1667
      %1681 = vmatpush.bf16.msra.mxu0 %v1666
      %1682 = vmatpush.bf16.msra.mxu0 %v1665
      %1683 = vmatpush.bf16.msra.mxu0 %v1664
      %1684 = vmatpush.bf16.msra.mxu0 %v1663
      %1685 = vmatpush.bf16.msra.mxu0 %v1662
      %1686 = vmatmul.bf16.gmra.mxu0 %v422
      %v1687 = vpop.f32.mrf.mxu0
      %v1688 = vadd.f32 %v1628, %v1687
      %v1689 = vpop.f32.mrf.mxu0
      %1690 = vdwg.mxu0
      %v1691 = vpack.c.bf16 %v1522, %v1522
      %v1692 = vpack.c.bf16 %v1605, %v1605
      %v1694 = vsel %vm676, %v1691, 0
      %v1697 = vsel %vm676, %v1692, 0
      %1699 = vmatpush.bf16.xpose.msra.mxu0 0
      %1700 = vmatpush.bf16.xpose.msra.mxu0 0
      %1701 = vmatpush.bf16.xpose.msra.mxu0 0
      %1702 = vmatpush.bf16.xpose.msra.mxu0 0
      %1703 = vmatpush.bf16.xpose.msra.mxu0 0
      %1704 = vmatpush.bf16.xpose.msra.mxu0 0
      %1705 = vmatpush.bf16.xpose.msra.mxu0 0
      %1706 = vmatpush.bf16.xpose.msra.mxu0 %v1697
      %1707 = vmatmul.bf16.gmra.mxu0 %v1694
      %v1708 = vpop.f32.mrf.mxu0
      %v1709 = vadd.f32 0.0, %v1708
      %v1710 = vpop.f32.mrf.mxu0
      %1711 = vdwg.mxu0
      %v1712 = vmul.f32 %v1709, 0.17677669
      %v1713 = vadd.f32 %v1712, %v430
      %v1714 = vsel %vm698, %v1713, -inf
      %1715 = vmax.xlane.f32.xlu0 %v1714
      %v1716 = vpop.xlane.xlu0 %1715
      %v1717 = vsub.f32 %v1713, %v1716
      %v1718 = vmul.f32 %v1717, 1.442695
      %v1719 = vpow.pop %v1718
      %v1720 = vsel %vm698, %v1719, 0.0
      %1721 = vadd.xlane.f32.xlu0 %v1720
      %v1722 = vpop.xlane.xlu0 %1721
      %v1723 = vrcp.pop %v1722
      %v1724 = vmul.f32 %v1719, %v1723
      %v1725 = vpack.c.bf16 %v1724, %v1724
      %v1726 = vpack.c.bf16 %v1688, %v1688
      %v1728 = vsel %vm698, %v1725, 0
      %v1731 = vsel %vm715, %v1726, 0
      %1733 = vmatpush.bf16.msra.mxu0 0
      %1734 = vmatpush.bf16.msra.mxu0 0
      %1735 = vmatpush.bf16.msra.mxu0 0
      %1736 = vmatpush.bf16.msra.mxu0 0
      %1737 = vmatpush.bf16.msra.mxu0 0
      %1738 = vmatpush.bf16.msra.mxu0 0
      %1739 = vmatpush.bf16.msra.mxu0 0
      %1740 = vmatpush.bf16.msra.mxu0 %v1731
      %1741 = vmatmul.bf16.gmra.mxu0 %v1728
      %v1742 = vpop.f32.mrf.mxu0
      %v1743 = vadd.f32 0.0, %v1742
      %v1744 = vpop.f32.mrf.mxu0
      %1745 = vdwg.mxu0
      %v1746 = vpack.c.bf16 %v1743, %v1743
      %s1747 = scalar_lea.vmem %s7, 48
      %v1748 = vld [vmem:[%s1747] sm:$0xf]
      %v1749 = vld [vmem:[%s1747 + $0x4] sm:$0xf]
      %v1750 = vld [vmem:[%s1747 + $0x8] sm:$0xf]
      %v1751 = vld [vmem:[%s1747 + $0xc] sm:$0xf]
      %v1756 = vunpack.c.l.b16 %v1748
      %v1757 = vunpack.c.l.b16 %v1749
      %v1758 = vunpack.c.l.b16 %v1750
      %v1759 = vunpack.c.l.b16 %v1751
      %v1760 = vpack.c.b16 %v1757, %v1756
      %v1761 = vpack.c.b16 %v1759, %v1758
      %v1765 = vsel %vm676, %v1746, 0
      %1767 = vmatpush.bf16.msra.mxu0 0
      %1768 = vmatpush.bf16.msra.mxu0 0
      %1769 = vmatpush.bf16.msra.mxu0 0
      %1770 = vmatpush.bf16.msra.mxu0 0
      %1771 = vmatpush.bf16.msra.mxu0 0
      %1772 = vmatpush.bf16.msra.mxu0 0
      %1773 = vmatpush.bf16.msra.mxu0 %v1761
      %1774 = vmatpush.bf16.msra.mxu0 %v1760
      %1775 = vmatmul.bf16.gmra.mxu0 %v1765
      %v1776 = vpop.f32.mrf.mxu0
      %v1777 = vadd.f32 0.0, %v1776
      %v1778 = vpop.f32.mrf.mxu0
      %1779 = vdwg.mxu0
      %v1780 = vadd.f32 %v1441, %v1777
      %v1781 = vld [vmem:[%s8] sm:$0x1]
      %v1783 = vperm.slane %v1781, 0
      %v1785 = vadd.f32 %v1780, %v1783
      %v1786 = vadd.f32 %v1785, %v384
      %v1787 = vpack.c.bf16 %v1786, %v1786
      %1788 = vst [vmem:[%s381] sm:$0xf] %v1787
      %p1789 = scmp.lt.s32.totalorder %s22, 9
      %s1790 = scalar_select %p1789, %s22, 9
      %s1791 = smul.addr %s1790, 4
      %s1792 = scalar_lea.vmem %s11, %s1791
      // Predicated region
      $region65: #{tcclip_forward.24} parent=63 // pred_check
        %p1793 = pneg %p276
      $region66: #{tcclip_forward.24} parent=63 // pred_check_branch
        %1795 = sbr.rel (%p1793) target = $region68
      $region67: #{tcclip_forward.24} parent=63 // pred_region
        _
      $region68: #{tcclip_forward.24} parent=63 // pred_fallthru
        _
    $region64: #{tcclip_forward.24} parent=5 // pred_fallthru
      _
    %p1796 = scmp.le.s32.totalorder 2, %s17
    // Predicated region
    $region69: #{tcclip_forward.24} parent=5 // pred_check
      %p1797 = pneg %p1796
    $region70: #{tcclip_forward.24} parent=5 // pred_check_branch
      %1799 = sbr.rel (%p1797) target = $region72
    $region71: #{tcclip_forward.24} parent=5 // pred_region
      %s1800 = ssub.s32 %s17, 2
      // Predicated region
      $region73: #{tcclip_forward.24} parent=71 // pred_check
        %p1801 = pneg %p282
      $region74: #{tcclip_forward.24} parent=71 // pred_check_branch
        %1803 = sbr.rel (%p1801) target = $region76
      $region75: #{tcclip_forward.24} parent=71 // pred_region
        %p1804 = scmp.lt.s32.totalorder %s23, 9
        %s1805 = scalar_select %p1804, %s23, 9
        %s1806 = smul.addr %s1805, 4
        %s1807 = scalar_lea.vmem %s11, %s1806
      $region76: #{tcclip_forward.24} parent=71 // pred_fallthru
        _
    $region72: #{tcclip_forward.24} parent=5 // pred_fallthru
      _
  $region6: #{tcclip_forward.24} parent=0 // loop_footer
    %s21 = sadd.s32 1, %s17
  $region7: #{tcclip_forward.24} parent=0 // loop_footer_branch
    %16 = sbr.rel target = $region3
  $region8: #{tcclip_forward.24} parent=0 // loop_exit
    _

// kernel: tcclip_forward.29
$region0: #{tcclip_forward.29}
  #allocation0 [shape = 'u32[]', space=smem, size = 0x4, offset = 0x4, fixed_abs, tag = 'smem constant byte address 0x4 - core index']
  #allocation1 [shape = 'u32[72,128]{1,0:T(1,128)}', space=vmem, size = 0x9000, scoped, tag = 'internal scratch']
  #allocation2 [shape = 'f32[1,1]{1,0:T(1,128)S(1)}', space=vmem, size = 0x200, scoped, tag = 'scoped memory for tcclip_forward.29']
  %s0 = inlined_call_operand.vmem [shape: f32[2,1,128], index: 0, kind: input, shape index: {}]
  %s1 = inlined_call_operand.vmem [shape: bf16[2,128,128], index: 1, kind: input, shape index: {}]
  %s2 = inlined_call_operand.<no memory space> [shape: f32[1,1], index: 2, kind: input, shape index: {}]
  %s3 = inlined_call_operand.hbm [shape: f32[2,1,128], index: 3, kind: output, shape index: {}]
  %s4 = sld [smem:[#allocation0]]
  $region45: #{tcclip_forward.29} parent=0
    _
  %s6 = ssub.s32 1, %s4
  %s7 = scalar_select 0, %s6, %s4
  %v8 = vstv %s2
  %9 = vst [vmem:[#allocation2] sm:$0x1] %v8
  $region1: #{tcclip_forward.29} parent=0
    #allocation3 [shape = 'u8[1024]{0}', space=vmem, size = 0x400, scoped, tag = 'output window, operand 0']
    #allocation4 [shape = 's32[2]{0}', space=sflag, size = 0x8, scoped, tag = 'scoped memory for tcclip_forward.29']
    %10 = vsyncpa [#allocation4], 0
    %s11 = scalar_lea.sflag [#allocation4], 1
    %12 = vsyncpa %s11, 0
    loop: start=0, step=1, limit=4
    $region2: #{tcclip_forward.29} parent=1 // loop_pre_header
      _
    $region3: #{tcclip_forward.29} parent=1 // loop_header
      %s14 = sphi 0, %s18
      %p15 = scmp.ge.s32.totalorder %s14, 4
      %s24 = sphi 0, %s26
      %s27 = sphi 0, %s24
      %s28 = sphi 0, %s27
      %s44 = sphi 0, %s28
      %s50 = sphi 0, %s52
      %s53 = sphi 0, %s50
      %s54 = sphi 0, %s53
      %s70 = sphi 0, %s54
      %s74 = sphi 0, %s74
      %s76 = sphi 0, %s74
      %s77 = sphi 0, %s76
      %s91 = sphi 0, %s77
      %s97 = sphi 0, %s99
      %s100 = sphi 0, %s97
      %s101 = sphi 0, %s100
      %s117 = sphi 0, %s101
    $region4: #{tcclip_forward.29} parent=1 // loop_header_branch
      %17 = sbr.rel (%p15) target = $region8
    $region5: #{tcclip_forward.29} parent=1 // loop_body
      %s19 = ssub.s32 %s14, 1
      %s20 = ssub.s32 %s14, 2
      %s21 = sadd.s32 %s14, 1
      %s22 = ssub.s32 %s14, %s21
      %p23 = scmp.eq.s32.totalorder %s22, 0
      %s25 = sadd.s32 %s24, 1
      %s26 = scalar_select %p23, %s24, %s25
      %p29 = pneg %p23
      %p30 = scmp.eq.s32.totalorder %s14, 1
      %p31 = por %p29, %p30
      %p32 = scmp.ne.s32.totalorder %s24, %s27
      %p33 = scmp.eq.s32.totalorder %s14, 0
      %p34 = por %p32, %p33
      %p35 = scmp.ne.s32.totalorder %s24, %s27
      %p36 = scmp.eq.s32.totalorder %s19, 1
      %p37 = por %p35, %p36
      %p38 = scmp.ne.s32.totalorder %s27, %s28
      %p39 = scmp.eq.s32.totalorder %s19, 0
      %p40 = por %p38, %p39
      %p41 = scmp.ne.s32.totalorder %s27, %s28
      %p42 = scmp.eq.s32.totalorder %s20, 1
      %p43 = por %p41, %p42
      %p45 = scmp.ne.s32.totalorder %s28, %s44
      %p46 = scmp.eq.s32.totalorder %s20, 0
      %p47 = por %p45, %p46
      %s48 = ssub.s32 %s14, %s21
      %p49 = scmp.eq.s32.totalorder %s48, 0
      %s51 = sadd.s32 %s50, 1
      %s52 = scalar_select %p49, %s50, %s51
      %p55 = pneg %p49
      %p56 = scmp.eq.s32.totalorder %s14, 1
      %p57 = por %p55, %p56
      %p58 = scmp.ne.s32.totalorder %s50, %s53
      %p59 = scmp.eq.s32.totalorder %s14, 0
      %p60 = por %p58, %p59
      %p61 = scmp.ne.s32.totalorder %s50, %s53
      %p62 = scmp.eq.s32.totalorder %s19, 1
      %p63 = por %p61, %p62
      %p64 = scmp.ne.s32.totalorder %s53, %s54
      %p65 = scmp.eq.s32.totalorder %s19, 0
      %p66 = por %p64, %p65
      %p67 = scmp.ne.s32.totalorder %s53, %s54
      %p68 = scmp.eq.s32.totalorder %s20, 1
      %p69 = por %p67, %p68
      %p71 = scmp.ne.s32.totalorder %s54, %s70
      %p72 = scmp.eq.s32.totalorder %s20, 0
      %p73 = por %p71, %p72
      %s75 = sadd.s32 %s74, 1
      %p78 = scmp.eq.s32.totalorder %s14, 1
      %p79 = scmp.ne.s32.totalorder %s74, %s76
      %p80 = scmp.eq.s32.totalorder %s14, 0
      %p81 = por %p79, %p80
      %p82 = scmp.ne.s32.totalorder %s74, %s76
      %p83 = scmp.eq.s32.totalorder %s19, 1
      %p84 = por %p82, %p83
      %p85 = scmp.ne.s32.totalorder %s76, %s77
      %p86 = scmp.eq.s32.totalorder %s19, 0
      %p87 = por %p85, %p86
      %p88 = scmp.ne.s32.totalorder %s76, %s77
      %p89 = scmp.eq.s32.totalorder %s20, 1
      %p90 = por %p88, %p89
      %p92 = scmp.ne.s32.totalorder %s77, %s91
      %p93 = scmp.eq.s32.totalorder %s20, 0
      %p94 = por %p92, %p93
      %s95 = ssub.s32 %s14, %s21
      %p96 = scmp.eq.s32.totalorder %s95, 0
      %s98 = sadd.s32 %s97, 1
      %s99 = scalar_select %p96, %s97, %s98
      %p102 = pneg %p96
      %p103 = scmp.eq.s32.totalorder %s14, 1
      %p104 = por %p102, %p103
      %p105 = scmp.ne.s32.totalorder %s97, %s100
      %p106 = scmp.eq.s32.totalorder %s14, 0
      %p107 = por %p105, %p106
      %p108 = scmp.ne.s32.totalorder %s97, %s100
      %p109 = scmp.eq.s32.totalorder %s19, 1
      %p110 = por %p108, %p109
      %p111 = scmp.ne.s32.totalorder %s100, %s101
      %p112 = scmp.eq.s32.totalorder %s19, 0
      %p113 = por %p111, %p112
      %p114 = scmp.ne.s32.totalorder %s100, %s101
      %p115 = scmp.eq.s32.totalorder %s20, 1
      %p116 = por %p114, %p115
      %p118 = scmp.ne.s32.totalorder %s101, %s117
      %p119 = scmp.eq.s32.totalorder %s20, 0
      %p120 = por %p118, %p119
      %p121 = scmp.le.s32.totalorder 1, %s14
      %p122 = scmp.lt.s32.totalorder %s14, 3
      %p123 = pnand %p121, %p122
      %p124 = pneg %p123
      // Predicated region
      $region9: #{tcclip_forward.29} parent=5 // pred_check
        _
      $region10: #{tcclip_forward.29} parent=5 // pred_check_branch
        %126 = sbr.rel (%p123) target = $region12
      $region11: #{tcclip_forward.29} parent=5 // pred_region
        %s127 = ssub.s32 %s14, 1
        // Predicated region
        $region13: #{tcclip_forward.29} parent=11 // pred_check
          %p128 = pneg %p87
        $region14: #{tcclip_forward.29} parent=11 // pred_check_branch
          %130 = sbr.rel (%p128) target = $region16
        $region15: #{tcclip_forward.29} parent=11 // pred_region
          _
        $region16: #{tcclip_forward.29} parent=11 // pred_fallthru
          _
      $region12: #{tcclip_forward.29} parent=5 // pred_fallthru
        _
      %p131 = scmp.lt.s32.totalorder %s14, 2
      // Predicated region
      $region17: #{tcclip_forward.29} parent=5 // pred_check
        %p132 = pneg %p131
      $region18: #{tcclip_forward.29} parent=5 // pred_check_branch
        %134 = sbr.rel (%p132) target = $region20
      $region19: #{tcclip_forward.29} parent=5 // pred_region
        // Predicated region
        $region21: #{tcclip_forward.29} parent=19 // pred_check
          %p135 = pneg %p34
        $region22: #{tcclip_forward.29} parent=19 // pred_check_branch
          %137 = sbr.rel (%p135) target = $region24
        $region23: #{tcclip_forward.29} parent=19 // pred_region
          %p138 = scmp.lt.s32.totalorder %s14, 1
          %s139 = scalar_select %p138, %s14, 1
          %s140 = scalar_lea.vmem %s0, %s139
        $region24: #{tcclip_forward.29} parent=19 // pred_fallthru
          _
        // Predicated region
        $region25: #{tcclip_forward.29} parent=19 // pred_check
          %p141 = pneg %p60
        $region26: #{tcclip_forward.29} parent=19 // pred_check_branch
          %143 = sbr.rel (%p141) target = $region28
        $region27: #{tcclip_forward.29} parent=19 // pred_region
          %p144 = scmp.lt.s32.totalorder %s14, 1
          %s145 = scalar_select %p144, %s14, 1
          %s146 = smul.addr %s145, 16
          %s147 = smul.addr %s146, 4
          %s148 = scalar_lea.vmem %s1, %s147
        $region28: #{tcclip_forward.29} parent=19 // pred_fallthru
          _
      $region20: #{tcclip_forward.29} parent=5 // pred_fallthru
        _
      %p149 = scmp.le.s32.totalorder 1, %s14
      %p150 = scmp.lt.s32.totalorder %s14, 3
      %p151 = pnand %p149, %p150
      %p152 = pneg %p151
      // Predicated region
      $region29: #{tcclip_forward.29} parent=5 // pred_check
        _
      $region30: #{tcclip_forward.29} parent=5 // pred_check_branch
        %154 = sbr.rel (%p151) target = $region32
      $region31: #{tcclip_forward.29} parent=5 // pred_region
        %s155 = ssub.s32 %s14, 1
        %p156 = scmp.lt.s32.totalorder %s19, 1
        %s157 = scalar_select %p156, %s19, 1
        %s158 = scalar_lea.vmem %s0, %s157
        %p159 = pneg %p40
        %p160 = pneg %p37
        %p161 = scmp.lt.s32.totalorder %s19, 1
        %s162 = scalar_select %p161, %s19, 1
        %s163 = smul.addr %s162, 16
        %s164 = smul.addr %s163, 4
        %s165 = scalar_lea.vmem %s1, %s164
        %p166 = pneg %p66
        %p167 = pneg %p63
        %p168 = pneg %p87
        %p169 = pneg %p84
        %p170 = pneg %p113
        %p171 = pneg %p110
        %s172 = sand.u32 %s100, 1
        %s173 = scalar_lea.sflag [#allocation4], %s172
        %s174 = sand.u32 %s100, 1
        %s175 = scalar_lea.vmem [#allocation3], %s174
        %p176 = scmp.lt.s32.totalorder %s19, 1
        %s177 = scalar_select %p176, %s19, 1
        %s178 = scalar_lea.vmem %s0, %s177
        %p179 = scmp.lt.s32.totalorder %s19, 1
        %s180 = scalar_select %p179, %s19, 1
        %s181 = smul.addr %s180, 16
        %s182 = smul.addr %s181, 4
        %s183 = scalar_lea.vmem %s1, %s182
        %v184 = vld [vmem:[%s178] sm:$0x1]
        %v185 = vld [vmem:[%s183] sm:$0xf]
        %v186 = vld [vmem:[%s183 + $0x4] sm:$0xf]
        %v187 = vld [vmem:[%s183 + $0x8] sm:$0xf]
        %v188 = vld [vmem:[%s183 + $0xc] sm:$0xf]
        %v189 = vld [vmem:[%s183 + $0x10] sm:$0xf]
        %v190 = vld [vmem:[%s183 + $0x14] sm:$0xf]
        %v191 = vld [vmem:[%s183 + $0x18] sm:$0xf]
        %v192 = vld [vmem:[%s183 + $0x1c] sm:$0xf]
        %v193 = vld [vmem:[%s183 + $0x20] sm:$0xf]
        %v194 = vld [vmem:[%s183 + $0x24] sm:$0xf]
        %v195 = vld [vmem:[%s183 + $0x28] sm:$0xf]
        %v196 = vld [vmem:[%s183 + $0x2c] sm:$0xf]
        %v197 = vld [vmem:[%s183 + $0x30] sm:$0xf]
        %v198 = vld [vmem:[%s183 + $0x34] sm:$0xf]
        %v199 = vld [vmem:[%s183 + $0x38] sm:$0xf]
        %v200 = vld [vmem:[%s183 + $0x3c] sm:$0xf]
        %v201 = vunpack.c.l.bf16 %v185
        %v202 = vunpack.c.l.bf16 %v186
        %v203 = vunpack.c.l.bf16 %v187
        %v204 = vunpack.c.l.bf16 %v188
        %v205 = vunpack.c.l.bf16 %v189
        %v206 = vunpack.c.l.bf16 %v190
        %v207 = vunpack.c.l.bf16 %v191
        %v208 = vunpack.c.l.bf16 %v192
        %v209 = vunpack.c.l.bf16 %v193
        %v210 = vunpack.c.l.bf16 %v194
        %v211 = vunpack.c.l.bf16 %v195
        %v212 = vunpack.c.l.bf16 %v196
        %v213 = vunpack.c.l.bf16 %v197
        %v214 = vunpack.c.l.bf16 %v198
        %v215 = vunpack.c.l.bf16 %v199
        %v216 = vunpack.c.l.bf16 %v200
        %v217 = vmul.f32 %v184, %v184
        %vm218 = vcmask 1040384
        %v219 = vsel %vm218, %v217, 0.0
        %220 = vadd.xlane.f32.xlu0 %v219
        %v221 = vpop.xlane.xlu0 %220
        %v222 = vadd.f32 %v221, 1e-12
        %v223 = vrsqrt.pop %v222
        %v224 = vmul.f32 %v223, %v222
        %v225 = vmul.f32 %v224, %v223
        %v226 = vmul.f32 0.5, %v225
        %v227 = vsub.f32 1.5, %v226
        %v228 = vmul.f32 %v223, %v227
        %vm229 = vweird.f32 %v222
        %vm230 = vweird.f32 %v223
        %vm231 = vmor %vm229, %vm230
        %v232 = vsel %vm231, %v223, %v228
        %v233 = vmul.f32 %v184, %v232
        %v234 = vmul.f32 %v201, %v201
        %v235 = vmul.f32 %v202, %v202
        %v236 = vmul.f32 %v203, %v203
        %v237 = vmul.f32 %v204, %v204
        %v238 = vmul.f32 %v205, %v205
        %v239 = vmul.f32 %v206, %v206
        %v240 = vmul.f32 %v207, %v207
        %v241 = vmul.f32 %v208, %v208
        %v242 = vmul.f32 %v209, %v209
        %v243 = vmul.f32 %v210, %v210
        %v244 = vmul.f32 %v211, %v211
        %v245 = vmul.f32 %v212, %v212
        %v246 = vmul.f32 %v213, %v213
        %v247 = vmul.f32 %v214, %v214
        %v248 = vmul.f32 %v215, %v215
        %v249 = vmul.f32 %v216, %v216
        %250 = vadd.xlane.f32.xlu0 %v234
        %v251 = vpop.xlane.xlu0 %250
        %252 = vadd.xlane.f32.xlu0 %v235
        %v253 = vpop.xlane.xlu0 %252
        %254 = vadd.xlane.f32.xlu0 %v236
        %v255 = vpop.xlane.xlu0 %254
        %256 = vadd.xlane.f32.xlu0 %v237
        %v257 = vpop.xlane.xlu0 %256
        %258 = vadd.xlane.f32.xlu0 %v238
        %v259 = vpop.xlane.xlu0 %258
        %260 = vadd.xlane.f32.xlu0 %v239
        %v261 = vpop.xlane.xlu0 %260
        %262 = vadd.xlane.f32.xlu0 %v240
        %v263 = vpop.xlane.xlu0 %262
        %264 = vadd.xlane.f32.xlu0 %v241
        %v265 = vpop.xlane.xlu0 %264
        %266 = vadd.xlane.f32.xlu0 %v242
        %v267 = vpop.xlane.xlu0 %266
        %268 = vadd.xlane.f32.xlu0 %v243
        %v269 = vpop.xlane.xlu0 %268
        %270 = vadd.xlane.f32.xlu0 %v244
        %v271 = vpop.xlane.xlu0 %270
        %272 = vadd.xlane.f32.xlu0 %v245
        %v273 = vpop.xlane.xlu0 %272
        %274 = vadd.xlane.f32.xlu0 %v246
        %v275 = vpop.xlane.xlu0 %274
        %276 = vadd.xlane.f32.xlu0 %v247
        %v277 = vpop.xlane.xlu0 %276
        %278 = vadd.xlane.f32.xlu0 %v248
        %v279 = vpop.xlane.xlu0 %278
        %280 = vadd.xlane.f32.xlu0 %v249
        %v281 = vpop.xlane.xlu0 %280
        %v282 = vadd.f32 %v251, 1e-12
        %v283 = vadd.f32 %v253, 1e-12
        %v284 = vadd.f32 %v255, 1e-12
        %v285 = vadd.f32 %v257, 1e-12
        %v286 = vadd.f32 %v259, 1e-12
        %v287 = vadd.f32 %v261, 1e-12
        %v288 = vadd.f32 %v263, 1e-12
        %v289 = vadd.f32 %v265, 1e-12
        %v290 = vadd.f32 %v267, 1e-12
        %v291 = vadd.f32 %v269, 1e-12
        %v292 = vadd.f32 %v271, 1e-12
        %v293 = vadd.f32 %v273, 1e-12
        %v294 = vadd.f32 %v275, 1e-12
        %v295 = vadd.f32 %v277, 1e-12
        %v296 = vadd.f32 %v279, 1e-12
        %v297 = vadd.f32 %v281, 1e-12
        %v298 = vrsqrt.pop %v282
        %v299 = vmul.f32 %v298, %v282
        %v300 = vmul.f32 %v299, %v298
        %v301 = vmul.f32 0.5, %v300
        %v302 = vsub.f32 1.5, %v301
        %v303 = vmul.f32 %v298, %v302
        %vm304 = vweird.f32 %v282
        %vm305 = vweird.f32 %v298
        %vm306 = vmor %vm304, %vm305
        %v307 = vsel %vm306, %v298, %v303
        %v308 = vrsqrt.pop %v283
        %v309 = vmul.f32 %v308, %v283
        %v310 = vmul.f32 %v309, %v308
        %v311 = vmul.f32 0.5, %v310
        %v312 = vsub.f32 1.5, %v311
        %v313 = vmul.f32 %v308, %v312
        %vm314 = vweird.f32 %v283
        %vm315 = vweird.f32 %v308
        %vm316 = vmor %vm314, %vm315
        %v317 = vsel %vm316, %v308, %v313
        %v318 = vrsqrt.pop %v284
        %v319 = vmul.f32 %v318, %v284
        %v320 = vmul.f32 %v319, %v318
        %v321 = vmul.f32 0.5, %v320
        %v322 = vsub.f32 1.5, %v321
        %v323 = vmul.f32 %v318, %v322
        %vm324 = vweird.f32 %v284
        %vm325 = vweird.f32 %v318
        %vm326 = vmor %vm324, %vm325
        %v327 = vsel %vm326, %v318, %v323
        %v328 = vrsqrt.pop %v285
        %v329 = vmul.f32 %v328, %v285
        %v330 = vmul.f32 %v329, %v328
        %v331 = vmul.f32 0.5, %v330
        %v332 = vsub.f32 1.5, %v331
        %v333 = vmul.f32 %v328, %v332
        %vm334 = vweird.f32 %v285
        %vm335 = vweird.f32 %v328
        %vm336 = vmor %vm334, %vm335
        %v337 = vsel %vm336, %v328, %v333
        %v338 = vrsqrt.pop %v286
        %v339 = vmul.f32 %v338, %v286
        %v340 = vmul.f32 %v339, %v338
        %v341 = vmul.f32 0.5, %v340
        %v342 = vsub.f32 1.5, %v341
        %v343 = vmul.f32 %v338, %v342
        %vm344 = vweird.f32 %v286
        %vm345 = vweird.f32 %v338
        %vm346 = vmor %vm344, %vm345
        %v347 = vsel %vm346, %v338, %v343
        %v348 = vrsqrt.pop %v287
        %v349 = vmul.f32 %v348, %v287
        %v350 = vmul.f32 %v349, %v348
        %v351 = vmul.f32 0.5, %v350
        %v352 = vsub.f32 1.5, %v351
        %v353 = vmul.f32 %v348, %v352
        %vm354 = vweird.f32 %v287
        %vm355 = vweird.f32 %v348
        %vm356 = vmor %vm354, %vm355
        %v357 = vsel %vm356, %v348, %v353
        %v358 = vrsqrt.pop %v288
        %v359 = vmul.f32 %v358, %v288
        %v360 = vmul.f32 %v359, %v358
        %v361 = vmul.f32 0.5, %v360
        %v362 = vsub.f32 1.5, %v361
        %v363 = vmul.f32 %v358, %v362
        %vm364 = vweird.f32 %v288
        %vm365 = vweird.f32 %v358
        %vm366 = vmor %vm364, %vm365
        %v367 = vsel %vm366, %v358, %v363
        %v368 = vrsqrt.pop %v289
        %v369 = vmul.f32 %v368, %v289
        %v370 = vmul.f32 %v369, %v368
        %v371 = vmul.f32 0.5, %v370
        %v372 = vsub.f32 1.5, %v371
        %v373 = vmul.f32 %v368, %v372
        %vm374 = vweird.f32 %v289
        %vm375 = vweird.f32 %v368
        %vm376 = vmor %vm374, %vm375
        %v377 = vsel %vm376, %v368, %v373
        %v378 = vrsqrt.pop %v290
        %v379 = vmul.f32 %v378, %v290
        %v380 = vmul.f32 %v379, %v378
        %v381 = vmul.f32 0.5, %v380
        %v382 = vsub.f32 1.5, %v381
        %v383 = vmul.f32 %v378, %v382
        %vm384 = vweird.f32 %v290
        %vm385 = vweird.f32 %v378
        %vm386 = vmor %vm384, %vm385
        %v387 = vsel %vm386, %v378, %v383
        %v388 = vrsqrt.pop %v291
        %v389 = vmul.f32 %v388, %v291
        %v390 = vmul.f32 %v389, %v388
        %v391 = vmul.f32 0.5, %v390
        %v392 = vsub.f32 1.5, %v391
        %v393 = vmul.f32 %v388, %v392
        %vm394 = vweird.f32 %v291
        %vm395 = vweird.f32 %v388
        %vm396 = vmor %vm394, %vm395
        %v397 = vsel %vm396, %v388, %v393
        %v398 = vrsqrt.pop %v292
        %v399 = vmul.f32 %v398, %v292
        %v400 = vmul.f32 %v399, %v398
        %v401 = vmul.f32 0.5, %v400
        %v402 = vsub.f32 1.5, %v401
        %v403 = vmul.f32 %v398, %v402
        %vm404 = vweird.f32 %v292
        %vm405 = vweird.f32 %v398
        %vm406 = vmor %vm404, %vm405
        %v407 = vsel %vm406, %v398, %v403
        %v408 = vrsqrt.pop %v293
        %v409 = vmul.f32 %v408, %v293
        %v410 = vmul.f32 %v409, %v408
        %v411 = vmul.f32 0.5, %v410
        %v412 = vsub.f32 1.5, %v411
        %v413 = vmul.f32 %v408, %v412
        %vm414 = vweird.f32 %v293
        %vm415 = vweird.f32 %v408
        %vm416 = vmor %vm414, %vm415
        %v417 = vsel %vm416, %v408, %v413
        %v418 = vrsqrt.pop %v294
        %v419 = vmul.f32 %v418, %v294
        %v420 = vmul.f32 %v419, %v418
        %v421 = vmul.f32 0.5, %v420
        %v422 = vsub.f32 1.5, %v421
        %v423 = vmul.f32 %v418, %v422
        %vm424 = vweird.f32 %v294
        %vm425 = vweird.f32 %v418
        %vm426 = vmor %vm424, %vm425
        %v427 = vsel %vm426, %v418, %v423
        %v428 = vrsqrt.pop %v295
        %v429 = vmul.f32 %v428, %v295
        %v430 = vmul.f32 %v429, %v428
        %v431 = vmul.f32 0.5, %v430
        %v432 = vsub.f32 1.5, %v431
        %v433 = vmul.f32 %v428, %v432
        %vm434 = vweird.f32 %v295
        %vm435 = vweird.f32 %v428
        %vm436 = vmor %vm434, %vm435
        %v437 = vsel %vm436, %v428, %v433
        %v438 = vrsqrt.pop %v296
        %v439 = vmul.f32 %v438, %v296
        %v440 = vmul.f32 %v439, %v438
        %v441 = vmul.f32 0.5, %v440
        %v442 = vsub.f32 1.5, %v441
        %v443 = vmul.f32 %v438, %v442
        %vm444 = vweird.f32 %v296
        %vm445 = vweird.f32 %v438
        %vm446 = vmor %vm444, %vm445
        %v447 = vsel %vm446, %v438, %v443
        %v448 = vrsqrt.pop %v297
        %v449 = vmul.f32 %v448, %v297
        %v450 = vmul.f32 %v449, %v448
        %v451 = vmul.f32 0.5, %v450
        %v452 = vsub.f32 1.5, %v451
        %v453 = vmul.f32 %v448, %v452
        %vm454 = vweird.f32 %v297
        %vm455 = vweird.f32 %v448
        %vm456 = vmor %vm454, %vm455
        %v457 = vsel %vm456, %v448, %v453
        %v458 = vmul.f32 %v201, %v307
        %v459 = vmul.f32 %v202, %v317
        %v460 = vmul.f32 %v203, %v327
        %v461 = vmul.f32 %v204, %v337
        %v462 = vmul.f32 %v205, %v347
        %v463 = vmul.f32 %v206, %v357
        %v464 = vmul.f32 %v207, %v367
        %v465 = vmul.f32 %v208, %v377
        %v466 = vmul.f32 %v209, %v387
        %v467 = vmul.f32 %v210, %v397
        %v468 = vmul.f32 %v211, %v407
        %v469 = vmul.f32 %v212, %v417
        %v470 = vmul.f32 %v213, %v427
        %v471 = vmul.f32 %v214, %v437
        %v472 = vmul.f32 %v215, %v447
        %v473 = vmul.f32 %v216, %v457
        %474 = vmatpush.xpose.msra.mxu0 %v473
        %475 = vmatpush.xpose.msra.mxu0 %v472
        %476 = vmatpush.xpose.msra.mxu0 %v471
        %477 = vmatpush.xpose.msra.mxu0 %v470
        %478 = vmatpush.xpose.msra.mxu0 %v469
        %479 = vmatpush.xpose.msra.mxu0 %v468
        %480 = vmatpush.xpose.msra.mxu0 %v467
        %481 = vmatpush.xpose.msra.mxu0 %v466
        %482 = vmatpush.xpose.msra.mxu0 %v465
        %483 = vmatpush.xpose.msra.mxu0 %v464
        %484 = vmatpush.xpose.msra.mxu0 %v463
        %485 = vmatpush.xpose.msra.mxu0 %v462
        %486 = vmatpush.xpose.msra.mxu0 %v461
        %487 = vmatpush.xpose.msra.mxu0 %v460
        %488 = vmatpush.xpose.msra.mxu0 %v459
        %489 = vmatpush.xpose.msra.mxu0 %v458
        %490 = vmatmul.f32.gmra.mxu0 %v233
        %v491 = vpop.f32.mrf.mxu0
        %v492 = vadd.f32 0.0, %v491
        %493 = vdwg.mxu0
        %v494 = vld [vmem:[#allocation2] sm:$0x1]
        %s495 = vtos %v494
        %v496 = vstv %s495
        %v497 = vmul.f32 %v496, %v492
        %498 = vst [vmem:[%s175] sm:$0x1] %v497
        %s499 = sand.u32 %s100, 1
        %s500 = scalar_lea.sflag [#allocation4], %s499
        %s501 = sand.u32 %s100, 1
        %s502 = scalar_lea.vmem [#allocation3], %s501
        // Predicated region
        $region33: #{tcclip_forward.29} parent=31 // pred_check
          %p503 = pneg %p110
        $region34: #{tcclip_forward.29} parent=31 // pred_check_branch
          %505 = sbr.rel (%p503) target = $region36
        $region35: #{tcclip_forward.29} parent=31 // pred_region
          %507 = vsyncadd %s500, 0
          %s508 = scalar_lea.hbm %s3, %s19
          %s510 = sshll.u32 %s502, 4
          %s511 = int_to_ptr.vmem [resolvable:$true] %s510
          %s512 = sshll.u32 %s508, 4
          %s513 = int_to_ptr.hbm [resolvable:$true] %s512
          %515 = dma.vmem_to_hbm [thread:$0]  %s511, 16, %s513, %s500
        $region36: #{tcclip_forward.29} parent=31 // pred_fallthru
          _
      $region32: #{tcclip_forward.29} parent=5 // pred_fallthru
        _
      %p516 = scmp.le.s32.totalorder 2, %s14
      // Predicated region
      $region37: #{tcclip_forward.29} parent=5 // pred_check
        %p517 = pneg %p516
      $region38: #{tcclip_forward.29} parent=5 // pred_check_branch
        %519 = sbr.rel (%p517) target = $region40
      $region39: #{tcclip_forward.29} parent=5 // pred_region
        %s520 = ssub.s32 %s14, 2
        // Predicated region
        $region41: #{tcclip_forward.29} parent=39 // pred_check
          %p521 = pneg %p116
        $region42: #{tcclip_forward.29} parent=39 // pred_check_branch
          %523 = sbr.rel (%p521) target = $region44
        $region43: #{tcclip_forward.29} parent=39 // pred_region
          %s524 = sand.u32 %s101, 1
          %s525 = scalar_lea.sflag [#allocation4], %s524
          %s526 = sand.u32 %s101, 1
          %s527 = scalar_lea.vmem [#allocation3], %s526
          %529 = dma.done %s525, 16
        $region44: #{tcclip_forward.29} parent=39 // pred_fallthru
          _
      $region40: #{tcclip_forward.29} parent=5 // pred_fallthru
        _
    $region6: #{tcclip_forward.29} parent=1 // loop_footer
      %s18 = sadd.s32 1, %s14
    $region7: #{tcclip_forward.29} parent=1 // loop_footer_branch
      %13 = sbr.rel target = $region3
    $region8: #{tcclip_forward.29} parent=1 // loop_exit
      _
    %530 = vsyncpa [#allocation4], 1
    %s531 = scalar_lea.sflag [#allocation4], 1
    %532 = vsyncpa %s531, 1

</llo_original>
